<compile_context>
chip_gen: v6e
topology: v6e:2x2x1
jax: 0.10.0
libtpu: 0.0.40
codegen_flags: <defaults>
</compile_context>

<pallas_src>
import numpy as np

import jax
import jax.numpy as jnp
from jax.experimental import pallas as pl
from jax.experimental.pallas import tpu as pltpu


# ---------------------------------------------------------------------------
# Host-side precompute: fold conv weights / interpolation coeffs into matrices
# ---------------------------------------------------------------------------
def _interp_coords(out_size, in_size):
    """Source coords for F.interpolate(mode='bilinear', align_corners=False)."""
    scale = in_size / out_size
    src = (np.arange(out_size, dtype=np.float64) + 0.5) * scale - 0.5
    src = np.maximum(src, 0.0)
    i0 = np.minimum(np.floor(src).astype(np.int64), in_size - 1)
    i1 = np.minimum(i0 + 1, in_size - 1)
    frac = (src - i0).astype(np.float32)
    return i0.astype(np.int32), i1.astype(np.int32), frac


def _interp_matrix(out_size, in_size):
    """R (out, in) so that  y = R @ x  is the 1-D bilinear resize (rows sum to 1)."""
    i0, i1, frac = _interp_coords(out_size, in_size)
    R = np.zeros((out_size, in_size), np.float32)
    rows = np.arange(out_size)
    np.add.at(R, (rows, i0), 1.0 - frac)
    np.add.at(R, (rows, i1), frac)
    return R


def _conv_band_taps(w, h):
    """w (KH, KW, Cin, Cout) -> L (KW, Cout*h, Cin*h); H zero padding folded into the band."""
    kh_n, kw_n, cin, cout = w.shape
    ph = kh_n // 2
    L = np.zeros((kw_n, cout * h, cin * h), np.float32)
    for kh in range(kh_n):
        lo, hi = max(0, ph - kh), min(h, h + ph - kh)
        if lo >= hi:
            continue
        hs = np.arange(lo, hi)
        rs = hs + (kh - ph)
        for kw in range(kw_n):
            for c in range(cin):
                for o in range(cout):
                    L[kw, o * h + hs, c * h + rs] = w[kh, kw, c, o]
    return L


def _conv_wide(w, h):
    """Wide-K left matrix (Cout*h, KW*Cin*h): column block kw = banded matrix of tap kw."""
    return np.concatenate(list(_conv_band_taps(w, h)), axis=1)


def _bias_rows(b, h):
    """Bias replicated to the (Cout*h, 1) row layout."""
    return np.repeat(np.asarray(b, np.float32), h)[:, None]


def _row_resize(c, h_in, h_out):
    """(I_c kron Rh): (c*h_out, c*h_in) row-side bilinear resize."""
    return np.kron(np.eye(c, dtype=np.float32), _interp_matrix(h_out, h_in))


def _col_resize_packed(w_in, w_out, pw_in, pw_out, pack):
    """Block-diagonal packed Rw^T: (pack*(w_in+2*pw_in), pack*(w_out+2*pw_out)).

    Maps the valid columns of each image slab to the valid columns of the next layout and
    writes exact zeros into the output pad columns (they double as conv zero padding).
    Pad *input* columns hit zero rows, so any garbage living there is discarded.
    """
    wp_in, wp_out = w_in + 2 * pw_in, w_out + 2 * pw_out
    blk = np.zeros((wp_in, wp_out), np.float32)
    blk[pw_in:pw_in + w_in, pw_out:pw_out + w_out] = _interp_matrix(w_out, w_in).T
    return np.kron(np.eye(pack, dtype=np.float32), blk)


# ---------------------------------------------------------------------------
# Wrapper-side activation packing (plain XLA ops, outside the kernel)
# ---------------------------------------------------------------------------
def _pack_lanes(x, n_steps, pack):
    """(N, C, H, Wp) -> (n_steps, C*H, pack*Wp): `pack` images side by side per step."""
    n, c, h, wp = x.shape
    x = x.reshape(n_steps, pack, c, h, wp)
    x = jnp.transpose(x, (0, 2, 3, 1, 4))
    return x.reshape(n_steps, c * h, pack * wp)


def _stack_taps_host(x, kw_n, pw, n_steps, pack):
    """(N, C, H, W) -> (n_steps, KW*C*H, pack*(W+2*pw)) bf16.

    Tap-kw row block holds the image shifted so that column (slab_base + pw + j) of block
    kw reads original pixel (j + kw - pw) (zeros outside) -- i.e. exactly the RHS rows
    the wide-K conv matmul needs.
    """
    blocks = []
    for kw in range(kw_n):
        xp = jnp.pad(x, ((0, 0), (0, 0), (0, 0), (2 * pw - kw, kw)))
        blocks.append(_pack_lanes(xp, n_steps, pack))
    return jnp.concatenate(blocks, axis=1).astype(jnp.bfloat16)


# ---------------------------------------------------------------------------
# Fused forward pass (single pallas_call)
# ---------------------------------------------------------------------------
def density_regressor_forward(params, features, smaps, img_shape=(64, 64)):
    """features/smaps: lists (idx 0 = largest map) of NCHW arrays. Returns (N,1,H,W)."""
    n = features[0].shape[0]
    cd = params["conv0_w"].shape[3]
    hs = [f.shape[2] for f in features]
    ws = [f.shape[3] for f in features]
    h_out, w_out = img_shape
    ksz = [params["conv0_w"].shape[0], params["conv1_w"].shape[0],
           params["conv2_w"].shape[0], params["conv3_w"].shape[0]]
    pad3, pad2, pad1, pad0 = ksz[0] // 2, ksz[1] // 2, ksz[2] // 2, ksz[3] // 2

    # Lane-packing factor: pack several images side-by-side along the lane axis so the
    # GEMMs / stores are lane-dense (largest divisor of n not exceeding the target).
    target = max(1, -(-128 // min(w_out, ws[0] + 2 * pad0)))
    pack = next(d for d in range(min(n, target), 0, -1) if n % d == 0)
    n_steps = n // pack

    # ----- fold conv weights / bilinear coeffs into matrices (host, numpy, once) ------
    to_np = lambda a: np.asarray(a, np.float32)
    w0, w1 = to_np(params["conv0_w"]), to_np(params["conv1_w"])
    w2, w3 = to_np(params["conv2_w"]), to_np(params["conv3_w"])
    wu, w4 = to_np(params["up2x_w"]), to_np(params["conv4_w"])
    bf = lambda a: jnp.asarray(a, jnp.bfloat16)
    f32 = lambda a: jnp.asarray(a, jnp.float32)

    # conv0: all input channels come straight from cat([features[3], smaps[3]]).
    L0 = bf(_conv_wide(w0, hs[3]))
    # conv1..3: split input channels into [resized (cd) | skip (cd+1)] column blocks.
    Lr1, Ls1 = bf(_conv_wide(w1[:, :, :cd, :], hs[2])), bf(_conv_wide(w1[:, :, cd:, :], hs[2]))
    Lr2, Ls2 = bf(_conv_wide(w2[:, :, :cd, :], hs[1])), bf(_conv_wide(w2[:, :, cd:, :], hs[1]))
    Lr3, Ls3 = bf(_conv_wide(w3[:, :, :cd, :], hs[0])), bf(_conv_wide(w3[:, :, cd:, :], hs[0]))
    Lu = bf(_conv_wide(wu, hs[0]))
    b0 = f32(_bias_rows(params["conv0_b"], hs[3]))
    b1 = f32(_bias_rows(params["conv1_b"], hs[2]))
    b2 = f32(_bias_rows(params["conv2_b"], hs[1]))
    b3 = f32(_bias_rows(params["conv3_b"], hs[0]))
    bu = f32(_bias_rows(params["up2x_b"], hs[0]))
    b4 = float(to_np(params["conv4_b"]).reshape(-1)[0])

    # Bilinear matrices stay f32 (accuracy; MXU has plenty of slack at these shapes).
    Rh1, Rw1 = f32(_row_resize(cd, hs[3], hs[2])), f32(_col_resize_packed(ws[3], ws[2], pad3, pad2, pack))
    Rh2, Rw2 = f32(_row_resize(cd, hs[2], hs[1])), f32(_col_resize_packed(ws[2], ws[1], pad2, pad1, pack))
    Rh3, Rw3 = f32(_row_resize(cd, hs[1], hs[0])), f32(_col_resize_packed(ws[1], ws[0], pad1, pad0, pack))
    # Final stage: conv4 (1x1, linear, no ReLU before it) commuted with the last bilinear
    # resize and folded into the row-resize:  out = (Rh_img @ L4) @ h @ Rw_final + b4.
    Mfin = f32(_interp_matrix(h_out, hs[0]) @ _conv_wide(w4, hs[0]))
    Rwf = f32(_col_resize_packed(ws[0], w_out, pad0, 0, pack))

    # ----- pack activations: batch along lanes, taps pre-stacked, bf16 (XLA side) -----
    def skip(level, pad, k):
        s = jnp.concatenate([features[level], smaps[level]], axis=1).astype(jnp.float32)
        return _stack_taps_host(s, k, pad, n_steps, pack)

    fs3 = skip(3, pad3, ksz[0])   # conv0 RHS (its only input source)
    sk1 = skip(2, pad2, ksz[1])
    sk2 = skip(1, pad1, ksz[2])
    sk3 = skip(0, pad0, ksz[3])

    # --------------------------------- kernel -----------------------------------------
    def kernel(fs3_ref, sk1_ref, sk2_ref, sk3_ref,
               l0_ref, b0_ref,
               lr1_ref, ls1_ref, b1_ref, rh1_ref, rw1_ref,
               lr2_ref, ls2_ref, b2_ref, rh2_ref, rw2_ref,
               lr3_ref, ls3_ref, b3_ref, rh3_ref, rw3_ref,
               lu_ref, bu_ref, m_ref, rwf_ref,
               out_ref):
        dot = lambda a, b: jnp.dot(a, b, preferred_element_type=jnp.float32)

        def rot(x, s):  # Y[:, q] = X[:, (q + s) mod W]  (static lane rotation)
            w = x.shape[-1]
            s = s % w
            return x if s == 0 else jnp.concatenate([x[:, s:], x[:, :s]], axis=1)

        def conv_step(xprev, rh, rwt, lr, ls, sk, bias, taps, pw):
            # skip-feature GEMM first: independent of the resize result
            acc = dot(ls[...], sk[0]) + bias[...]
            # bilinear resize of the previous stage, kept in f32
            r = dot(rh[...], dot(xprev, rwt[...]))
            rb = r.astype(jnp.bfloat16)
            stacked = jnp.concatenate([rot(rb, kw - pw) for kw in range(taps)], axis=0)
            return jnp.maximum(acc + dot(lr[...], stacked), 0.0)

        x1 = jnp.maximum(dot(l0_ref[...], fs3_ref[0]) + b0_ref[...], 0.0)
        x2 = conv_step(x1, rh1_ref, rw1_ref, lr1_ref, ls1_ref, sk1_ref, b1_ref, ksz[1], pad2)
        x3 = conv_step(x2, rh2_ref, rw2_ref, lr2_ref, ls2_ref, sk2_ref, b2_ref, ksz[2], pad1)
        x4 = conv_step(x3, rh3_ref, rw3_ref, lr3_ref, ls3_ref, sk3_ref, b3_ref, ksz[3], pad0)
        h = jnp.maximum(dot(lu_ref[...], x4.astype(jnp.bfloat16)) + bu_ref[...], 0.0)
        # conv4 folded into Mfin; final store is lane-dense (pack * w_out columns)
        out = dot(dot(m_ref[...], h), rwf_ref[...]) + b4
        out_ref[0] = out.astype(out_ref.dtype)

    operands = [fs3, sk1, sk2, sk3,
                L0, b0,
                Lr1, Ls1, b1, Rh1, Rw1,
                Lr2, Ls2, b2, Rh2, Rw2,
                Lr3, Ls3, b3, Rh3, Rw3,
                Lu, bu, Mfin, Rwf]

    def batched_spec(a):  # `pack` images per grid step
        return pl.BlockSpec((1,) + a.shape[1:], lambda i: (i, 0, 0))

    def shared_spec(a):   # weights / coefficients, same (full) block for every step
        zeros = (0,) * a.ndim
        return pl.BlockSpec(a.shape, lambda i, _z=zeros: _z)
    # TODO(synk): mark the invariant weight operands pipeline_mode=pl.Buffered(1) (single
    # buffering) and set vmem_limit_bytes explicitly once production GroundingDINO sizes
    # are known (banded-L footprint grows ~O(H^2); v7x VMEM is only 64 MiB).

    in_specs = [batched_spec(a) for a in operands[:4]] + \
               [shared_spec(a) for a in operands[4:]]

    # Advisory cost estimate so XLA schedules this fused custom call sensibly.
    pw3 = pack * (ws[3] + 2 * pad3)
    pw2 = pack * (ws[2] + 2 * pad2)
    pw1 = pack * (ws[1] + 2 * pad1)
    pw0 = pack * (ws[0] + 2 * pad0)
    flops = 2 * n_steps * (
        L0.size * pw3
        + Rw1.size * cd * hs[3] + Rh1.size * pw2 + (Lr1.size + Ls1.size) * pw2
        + Rw2.size * cd * hs[2] + Rh2.size * pw1 + (Lr2.size + Ls2.size) * pw1
        + Rw3.size * cd * hs[1] + Rh3.size * pw0 + (Lr3.size + Ls3.size) * pw0
        + Lu.size * pw0 + Mfin.size * pw0 + Rwf.size * h_out)
    out_nbytes = n_steps * h_out * pack * w_out * 4
    bytes_accessed = out_nbytes + sum(int(a.size) * a.dtype.itemsize for a in operands)

    out = pl.pallas_call(
        kernel,
        out_shape=jax.ShapeDtypeStruct((n_steps, h_out, pack * w_out), jnp.float32),
        grid_spec=pltpu.PrefetchScalarGridSpec(
            num_scalar_prefetch=0,
            grid=(n_steps,),
            in_specs=in_specs,
            out_specs=pl.BlockSpec((1, h_out, pack * w_out), lambda i: (i, 0, 0)),
        ),
        compiler_params=pltpu.CompilerParams(dimension_semantics=("parallel",)),
        cost_estimate=pl.CostEstimate(flops=int(flops), transcendentals=0,
                                      bytes_accessed=int(bytes_accessed)),
    )(*operands)

    # un-pack the lane-packed batch: (n_steps, H, pack*W) -> (N, 1, H, W)
    out = out.reshape(n_steps, h_out, pack, w_out)
    out = jnp.transpose(out, (0, 2, 1, 3)).reshape(n, 1, h_out, w_out)
    # TODO(synk): hidden_output=True ([x4, x3, x2, x1]) is computed inside the fused
    # kernel but not wired out as extra pallas outputs.
    return out


# ---------------------------------------------------------------------------
# Pure-JAX (XLA) reference for a correctness check
# ---------------------------------------------------------------------------
def _ref_conv(x, w, b, relu):
    out = jax.lax.conv_general_dilated(
        x, w, window_strides=(1, 1), padding="SAME",
        dimension_numbers=("NCHW", "HWIO", "NCHW"),
        precision=jax.lax.Precision.HIGHEST)
    out = out + b[None, :, None, None]
    return jnp.maximum(out, 0.0) if relu else out


def _ref_bilinear(x, out_h, out_w):
    _, _, h, w = x.shape
    y0, y1, fy = _interp_coords(out_h, h)
    x0, x1, fx = _interp_coords(out_w, w)
    fy = jnp.asarray(fy)[None, None, :, None]
    fx = jnp.asarray(fx)[None, None, None, :]
    rows = x[:, :, y0, :] * (1.0 - fy) + x[:, :, y1, :] * fy
    return rows[:, :, :, x0] * (1.0 - fx) + rows[:, :, :, x1] * fx


def density_regressor_reference(params, features, smaps, img_shape=(64, 64)):
    x = jnp.concatenate([features[3], smaps[3]], axis=1)
    x1 = _ref_conv(x, params["conv0_w"], params["conv0_b"], True)
    x = _ref_bilinear(x1, features[2].shape[2], features[2].shape[3])
    x = jnp.concatenate([x, features[2], smaps[2]], axis=1)
    x2 = _ref_conv(x, params["conv1_w"], params["conv1_b"], True)
    x = _ref_bilinear(x2, features[1].shape[2], features[1].shape[3])
    x = jnp.concatenate([x, features[1], smaps[1]], axis=1)
    x3 = _ref_conv(x, params["conv2_w"], params["conv2_b"], True)
    x = _ref_bilinear(x3, features[0].shape[2], features[0].shape[3])
    x = jnp.concatenate([x, features[0], smaps[0]], axis=1)
    x4 = _ref_conv(x, params["conv3_w"], params["conv3_b"], True)
    x = _ref_conv(x4, params["up2x_w"], params["up2x_b"], True)
    x = _ref_bilinear(x, img_shape[0], img_shape[1])
    x = _ref_conv(x, params["conv4_w"], params["conv4_b"], False)
    return x


# ---------------------------------------------------------------------------
# Parameters (nn.init.normal_(std=0.01) weights, zero biases)
# ---------------------------------------------------------------------------
def init_params(key, counter_dim):
    ks = jax.random.split(key, 6)

    def conv_w(k, kh, kw, cin, cout):
        return jax.random.normal(k, (kh, kw, cin, cout), jnp.float32) * 0.01

    return {
        "conv0_w": conv_w(ks[0], 7, 7, counter_dim + 1, counter_dim),
        "conv0_b": jnp.zeros((counter_dim,), jnp.float32),
        "conv1_w": conv_w(ks[1], 5, 5, counter_dim * 2 + 1, counter_dim),
        "conv1_b": jnp.zeros((counter_dim,), jnp.float32),
        "conv2_w": conv_w(ks[2], 3, 3, counter_dim * 2 + 1, counter_dim),
        "conv2_b": jnp.zeros((counter_dim,), jnp.float32),
        "conv3_w": conv_w(ks[3], 3, 3, counter_dim * 2 + 1, counter_dim),
        "conv3_b": jnp.zeros((counter_dim,), jnp.float32),
        "up2x_w": conv_w(ks[4], 1, 1, counter_dim, counter_dim // 2),
        "up2x_b": jnp.zeros((counter_dim // 2,), jnp.float32),
        "conv4_w": conv_w(ks[5], 1, 1, counter_dim // 2, 1),
        "conv4_b": jnp.zeros((1,), jnp.float32),
    }


if __name__ == "__main__":
    key = jax.random.PRNGKey(0)
    counter_dim = 8
    n = 2
    spatial = [32, 16, 8, 4]          # features[0] .. features[3]  (NCHW)
    img_shape = (64, 64)

    keys = jax.random.split(key, 9)
    params = init_params(keys[0], counter_dim)
    features = [jax.random.normal(keys[1 + i], (n, counter_dim, s, s), jnp.float32)
                for i, s in enumerate(spatial)]
    smaps = [jax.random.normal(keys[5 + i], (n, 1, s, s), jnp.float32)
             for i, s in enumerate(spatial)]

    out = density_regressor_forward(params, features, smaps, img_shape=img_shape)
    out = jax.block_until_ready(out)
    assert out.shape == (n, 1, img_shape[0], img_shape[1]), out.shape
    assert bool(jnp.all(jnp.isfinite(out)))

    # Correctness check vs. a pure-JAX/XLA reference (conv GEMMs run in bf16 with f32
    # accumulation; bilinear resizes now run in f32).
    ref = jax.block_until_ready(
        density_regressor_reference(params, features, smaps, img_shape=img_shape))
    err = float(jnp.max(jnp.abs(out - ref)))
    scale = float(jnp.max(jnp.abs(ref)))
    assert err <= 0.1 * scale + 1e-6, (err, scale)

    print("KERNEL_OK")
</pallas_src>

<mosaic_0001>
module attributes {stable_mosaic.version = 11 : i64} {
  func.func @kernel(%arg0: i32, %arg1: memref<1x252x20xbf16, #tpu.memory_space<vmem>>, %arg2: memref<1x360x24xbf16, #tpu.memory_space<vmem>>, %arg3: memref<1x432x36xbf16, #tpu.memory_space<vmem>>, %arg4: memref<1x864x68xbf16, #tpu.memory_space<vmem>>, %arg5: memref<32x252xbf16, #tpu.memory_space<vmem>>, %arg6: memref<32x1xf32, #tpu.memory_space<vmem>>, %arg7: memref<64x320xbf16, #tpu.memory_space<vmem>>, %arg8: memref<64x360xbf16, #tpu.memory_space<vmem>>, %arg9: memref<64x1xf32, #tpu.memory_space<vmem>>, %arg10: memref<64x32xf32, #tpu.memory_space<vmem>>, %arg11: memref<20x24xf32, #tpu.memory_space<vmem>>, %arg12: memref<128x384xbf16, #tpu.memory_space<vmem>>, %arg13: memref<128x432xbf16, #tpu.memory_space<vmem>>, %arg14: memref<128x1xf32, #tpu.memory_space<vmem>>, %arg15: memref<128x64xf32, #tpu.memory_space<vmem>>, %arg16: memref<24x36xf32, #tpu.memory_space<vmem>>, %arg17: memref<256x768xbf16, #tpu.memory_space<vmem>>, %arg18: memref<256x864xbf16, #tpu.memory_space<vmem>>, %arg19: memref<256x1xf32, #tpu.memory_space<vmem>>, %arg20: memref<256x128xf32, #tpu.memory_space<vmem>>, %arg21: memref<36x68xf32, #tpu.memory_space<vmem>>, %arg22: memref<128x256xbf16, #tpu.memory_space<vmem>>, %arg23: memref<128x1xf32, #tpu.memory_space<vmem>>, %arg24: memref<64x128xf32, #tpu.memory_space<vmem>>, %arg25: memref<68x128xf32, #tpu.memory_space<vmem>>, %arg26: memref<1x64x128xf32, #tpu.memory_space<vmem>>) attributes {dimension_semantics = [#tpu.dimension_semantics<parallel>], iteration_bounds = array<i64: 1>, scalar_prefetch = 0 : i64, scratch_operands = 0 : i64, tpu.core_type = #tpu.core_type<tc>, window_params = [{transform_indices = @transform_0, window_bounds = array<i64: 1, 252, 20>}, {transform_indices = @transform_1, window_bounds = array<i64: 1, 360, 24>}, {transform_indices = @transform_2, window_bounds = array<i64: 1, 432, 36>}, {transform_indices = @transform_3, window_bounds = array<i64: 1, 864, 68>}, {pipeline_mode = #tpu.pipeline_mode<synchronous>, transform_indices = @transform_4, window_bounds = array<i64: 32, 252>}, {pipeline_mode = #tpu.pipeline_mode<synchronous>, transform_indices = @transform_5, window_bounds = array<i64: 32, 1>}, {pipeline_mode = #tpu.pipeline_mode<synchronous>, transform_indices = @transform_6, window_bounds = array<i64: 64, 320>}, {pipeline_mode = #tpu.pipeline_mode<synchronous>, transform_indices = @transform_7, window_bounds = array<i64: 64, 360>}, {pipeline_mode = #tpu.pipeline_mode<synchronous>, transform_indices = @transform_8, window_bounds = array<i64: 64, 1>}, {pipeline_mode = #tpu.pipeline_mode<synchronous>, transform_indices = @transform_9, window_bounds = array<i64: 64, 32>}, {pipeline_mode = #tpu.pipeline_mode<synchronous>, transform_indices = @transform_10, window_bounds = array<i64: 20, 24>}, {pipeline_mode = #tpu.pipeline_mode<synchronous>, transform_indices = @transform_11, window_bounds = array<i64: 128, 384>}, {pipeline_mode = #tpu.pipeline_mode<synchronous>, transform_indices = @transform_12, window_bounds = array<i64: 128, 432>}, {pipeline_mode = #tpu.pipeline_mode<synchronous>, transform_indices = @transform_13, window_bounds = array<i64: 128, 1>}, {pipeline_mode = #tpu.pipeline_mode<synchronous>, transform_indices = @transform_14, window_bounds = array<i64: 128, 64>}, {pipeline_mode = #tpu.pipeline_mode<synchronous>, transform_indices = @transform_15, window_bounds = array<i64: 24, 36>}, {pipeline_mode = #tpu.pipeline_mode<synchronous>, transform_indices = @transform_16, window_bounds = array<i64: 256, 768>}, {pipeline_mode = #tpu.pipeline_mode<synchronous>, transform_indices = @transform_17, window_bounds = array<i64: 256, 864>}, {pipeline_mode = #tpu.pipeline_mode<synchronous>, transform_indices = @transform_18, window_bounds = array<i64: 256, 1>}, {pipeline_mode = #tpu.pipeline_mode<synchronous>, transform_indices = @transform_19, window_bounds = array<i64: 256, 128>}, {pipeline_mode = #tpu.pipeline_mode<synchronous>, transform_indices = @transform_20, window_bounds = array<i64: 36, 68>}, {pipeline_mode = #tpu.pipeline_mode<synchronous>, transform_indices = @transform_21, window_bounds = array<i64: 128, 256>}, {pipeline_mode = #tpu.pipeline_mode<synchronous>, transform_indices = @transform_22, window_bounds = array<i64: 128, 1>}, {pipeline_mode = #tpu.pipeline_mode<synchronous>, transform_indices = @transform_23, window_bounds = array<i64: 64, 128>}, {pipeline_mode = #tpu.pipeline_mode<synchronous>, transform_indices = @transform_24, window_bounds = array<i64: 68, 128>}, {transform_indices = @transform_25, window_bounds = array<i64: 1, 64, 128>}]} {
    %c0 = arith.constant 0 : index
    %c0_0 = arith.constant 0 : index
    %0 = vector.load %arg5[%c0, %c0_0] : memref<32x252xbf16, #tpu.memory_space<vmem>>, vector<32x252xbf16>
    %c0_1 = arith.constant 0 : index
    %c0_2 = arith.constant 0 : index
    %c0_3 = arith.constant 0 : index
    %1 = vector.load %arg1[%c0_1, %c0_2, %c0_3] : memref<1x252x20xbf16, #tpu.memory_space<vmem>>, vector<1x252x20xbf16>
    %2 = vector.shape_cast %1 : vector<1x252x20xbf16> to vector<252x20xbf16>
    %cst = arith.constant dense<0.000000e+00> : vector<32x20xf32>
    %3 = tpu.matmul %0, %2, %cst {dimension_numbers = #tpu.dot_dimension_numbers<[1], [0], [0], [1], [0, 0, 1, 1], [], []>} : vector<32x252xbf16>, vector<252x20xbf16>, vector<32x20xf32> -> vector<32x20xf32>
    %c0_4 = arith.constant 0 : index
    %c0_5 = arith.constant 0 : index
    %4 = vector.load %arg6[%c0_4, %c0_5] : memref<32x1xf32, #tpu.memory_space<vmem>>, vector<32x1xf32>
    %5 = vector.broadcast %4 : vector<32x1xf32> to vector<32x20xf32>
    %6 = arith.addf %3, %5 : vector<32x20xf32>
    %cst_6 = arith.constant 0.000000e+00 : f32
    %7 = vector.broadcast %cst_6 : f32 to vector<32x20xf32>
    %8 = arith.maximumf %6, %7 : vector<32x20xf32>
    %c0_7 = arith.constant 0 : index
    %c0_8 = arith.constant 0 : index
    %9 = vector.load %arg8[%c0_7, %c0_8] : memref<64x360xbf16, #tpu.memory_space<vmem>>, vector<64x360xbf16>
    %c0_9 = arith.constant 0 : index
    %c0_10 = arith.constant 0 : index
    %c0_11 = arith.constant 0 : index
    %10 = vector.load %arg2[%c0_9, %c0_10, %c0_11] : memref<1x360x24xbf16, #tpu.memory_space<vmem>>, vector<1x360x24xbf16>
    %11 = vector.shape_cast %10 : vector<1x360x24xbf16> to vector<360x24xbf16>
    %cst_12 = arith.constant dense<0.000000e+00> : vector<64x24xf32>
    %12 = tpu.matmul %9, %11, %cst_12 {dimension_numbers = #tpu.dot_dimension_numbers<[1], [0], [0], [1], [0, 0, 1, 1], [], []>} : vector<64x360xbf16>, vector<360x24xbf16>, vector<64x24xf32> -> vector<64x24xf32>
    %c0_13 = arith.constant 0 : index
    %c0_14 = arith.constant 0 : index
    %13 = vector.load %arg9[%c0_13, %c0_14] : memref<64x1xf32, #tpu.memory_space<vmem>>, vector<64x1xf32>
    %14 = vector.broadcast %13 : vector<64x1xf32> to vector<64x24xf32>
    %15 = arith.addf %12, %14 : vector<64x24xf32>
    %c0_15 = arith.constant 0 : index
    %c0_16 = arith.constant 0 : index
    %16 = vector.load %arg10[%c0_15, %c0_16] : memref<64x32xf32, #tpu.memory_space<vmem>>, vector<64x32xf32>
    %c0_17 = arith.constant 0 : index
    %c0_18 = arith.constant 0 : index
    %17 = vector.load %arg11[%c0_17, %c0_18] : memref<20x24xf32, #tpu.memory_space<vmem>>, vector<20x24xf32>
    %cst_19 = arith.constant dense<0.000000e+00> : vector<32x24xf32>
    %18 = tpu.matmul %8, %17, %cst_19 {dimension_numbers = #tpu.dot_dimension_numbers<[1], [0], [0], [1], [0, 0, 1, 1], [], []>} : vector<32x20xf32>, vector<20x24xf32>, vector<32x24xf32> -> vector<32x24xf32>
    %cst_20 = arith.constant dense<0.000000e+00> : vector<64x24xf32>
    %19 = tpu.matmul %16, %18, %cst_20 {dimension_numbers = #tpu.dot_dimension_numbers<[1], [0], [0], [1], [0, 0, 1, 1], [], []>} : vector<64x32xf32>, vector<32x24xf32>, vector<64x24xf32> -> vector<64x24xf32>
    %20 = arith.truncf %19 : vector<64x24xf32> to vector<64x24xbf16>
    %21 = vector.extract_strided_slice %20 {offsets = [0, 22], sizes = [64, 2], strides = [1, 1]} : vector<64x24xbf16> to vector<64x2xbf16>
    %22 = vector.extract_strided_slice %20 {offsets = [0, 0], sizes = [64, 22], strides = [1, 1]} : vector<64x24xbf16> to vector<64x22xbf16>
    %23 = tpu.concatenate %21, %22 in 1 : vector<64x2xbf16>, vector<64x22xbf16> -> vector<64x24xbf16>
    %24 = vector.extract_strided_slice %20 {offsets = [0, 23], sizes = [64, 1], strides = [1, 1]} : vector<64x24xbf16> to vector<64x1xbf16>
    %25 = vector.extract_strided_slice %20 {offsets = [0, 0], sizes = [64, 23], strides = [1, 1]} : vector<64x24xbf16> to vector<64x23xbf16>
    %26 = tpu.concatenate %24, %25 in 1 : vector<64x1xbf16>, vector<64x23xbf16> -> vector<64x24xbf16>
    %27 = vector.extract_strided_slice %20 {offsets = [0, 1], sizes = [64, 23], strides = [1, 1]} : vector<64x24xbf16> to vector<64x23xbf16>
    %28 = vector.extract_strided_slice %20 {offsets = [0, 0], sizes = [64, 1], strides = [1, 1]} : vector<64x24xbf16> to vector<64x1xbf16>
    %29 = tpu.concatenate %27, %28 in 1 : vector<64x23xbf16>, vector<64x1xbf16> -> vector<64x24xbf16>
    %30 = vector.extract_strided_slice %20 {offsets = [0, 2], sizes = [64, 22], strides = [1, 1]} : vector<64x24xbf16> to vector<64x22xbf16>
    %31 = vector.extract_strided_slice %20 {offsets = [0, 0], sizes = [64, 2], strides = [1, 1]} : vector<64x24xbf16> to vector<64x2xbf16>
    %32 = tpu.concatenate %30, %31 in 1 : vector<64x22xbf16>, vector<64x2xbf16> -> vector<64x24xbf16>
    %33 = tpu.concatenate %23, %26, %20, %29, %32 in 0 : vector<64x24xbf16>, vector<64x24xbf16>, vector<64x24xbf16>, vector<64x24xbf16>, vector<64x24xbf16> -> vector<320x24xbf16>
    %c0_21 = arith.constant 0 : index
    %c0_22 = arith.constant 0 : index
    %34 = vector.load %arg7[%c0_21, %c0_22] : memref<64x320xbf16, #tpu.memory_space<vmem>>, vector<64x320xbf16>
    %cst_23 = arith.constant dense<0.000000e+00> : vector<64x24xf32>
    %35 = tpu.matmul %34, %33, %cst_23 {dimension_numbers = #tpu.dot_dimension_numbers<[1], [0], [0], [1], [0, 0, 1, 1], [], []>} : vector<64x320xbf16>, vector<320x24xbf16>, vector<64x24xf32> -> vector<64x24xf32>
    %36 = arith.addf %15, %35 : vector<64x24xf32>
    %cst_24 = arith.constant 0.000000e+00 : f32
    %37 = vector.broadcast %cst_24 : f32 to vector<64x24xf32>
    %38 = arith.maximumf %36, %37 : vector<64x24xf32>
    %c0_25 = arith.constant 0 : index
    %c0_26 = arith.constant 0 : index
    %39 = vector.load %arg13[%c0_25, %c0_26] : memref<128x432xbf16, #tpu.memory_space<vmem>>, vector<128x432xbf16>
    %c0_27 = arith.constant 0 : index
    %c0_28 = arith.constant 0 : index
    %c0_29 = arith.constant 0 : index
    %40 = vector.load %arg3[%c0_27, %c0_28, %c0_29] : memref<1x432x36xbf16, #tpu.memory_space<vmem>>, vector<1x432x36xbf16>
    %41 = vector.shape_cast %40 : vector<1x432x36xbf16> to vector<432x36xbf16>
    %cst_30 = arith.constant dense<0.000000e+00> : vector<128x36xf32>
    %42 = tpu.matmul %39, %41, %cst_30 {dimension_numbers = #tpu.dot_dimension_numbers<[1], [0], [0], [1], [0, 0, 1, 1], [], []>} : vector<128x432xbf16>, vector<432x36xbf16>, vector<128x36xf32> -> vector<128x36xf32>
    %c0_31 = arith.constant 0 : index
    %c0_32 = arith.constant 0 : index
    %43 = vector.load %arg14[%c0_31, %c0_32] : memref<128x1xf32, #tpu.memory_space<vmem>>, vector<128x1xf32>
    %44 = vector.broadcast %43 : vector<128x1xf32> to vector<128x36xf32>
    %45 = arith.addf %42, %44 : vector<128x36xf32>
    %c0_33 = arith.constant 0 : index
    %c0_34 = arith.constant 0 : index
    %46 = vector.load %arg15[%c0_33, %c0_34] : memref<128x64xf32, #tpu.memory_space<vmem>>, vector<128x64xf32>
    %c0_35 = arith.constant 0 : index
    %c0_36 = arith.constant 0 : index
    %47 = vector.load %arg16[%c0_35, %c0_36] : memref<24x36xf32, #tpu.memory_space<vmem>>, vector<24x36xf32>
    %cst_37 = arith.constant dense<0.000000e+00> : vector<64x36xf32>
    %48 = tpu.matmul %38, %47, %cst_37 {dimension_numbers = #tpu.dot_dimension_numbers<[1], [0], [0], [1], [0, 0, 1, 1], [], []>} : vector<64x24xf32>, vector<24x36xf32>, vector<64x36xf32> -> vector<64x36xf32>
    %cst_38 = arith.constant dense<0.000000e+00> : vector<128x36xf32>
    %49 = tpu.matmul %46, %48, %cst_38 {dimension_numbers = #tpu.dot_dimension_numbers<[1], [0], [0], [1], [0, 0, 1, 1], [], []>} : vector<128x64xf32>, vector<64x36xf32>, vector<128x36xf32> -> vector<128x36xf32>
    %50 = arith.truncf %49 : vector<128x36xf32> to vector<128x36xbf16>
    %51 = vector.extract_strided_slice %50 {offsets = [0, 35], sizes = [128, 1], strides = [1, 1]} : vector<128x36xbf16> to vector<128x1xbf16>
    %52 = vector.extract_strided_slice %50 {offsets = [0, 0], sizes = [128, 35], strides = [1, 1]} : vector<128x36xbf16> to vector<128x35xbf16>
    %53 = tpu.concatenate %51, %52 in 1 : vector<128x1xbf16>, vector<128x35xbf16> -> vector<128x36xbf16>
    %54 = vector.extract_strided_slice %50 {offsets = [0, 1], sizes = [128, 35], strides = [1, 1]} : vector<128x36xbf16> to vector<128x35xbf16>
    %55 = vector.extract_strided_slice %50 {offsets = [0, 0], sizes = [128, 1], strides = [1, 1]} : vector<128x36xbf16> to vector<128x1xbf16>
    %56 = tpu.concatenate %54, %55 in 1 : vector<128x35xbf16>, vector<128x1xbf16> -> vector<128x36xbf16>
    %57 = tpu.concatenate %53, %50, %56 in 0 : vector<128x36xbf16>, vector<128x36xbf16>, vector<128x36xbf16> -> vector<384x36xbf16>
    %c0_39 = arith.constant 0 : index
    %c0_40 = arith.constant 0 : index
    %58 = vector.load %arg12[%c0_39, %c0_40] : memref<128x384xbf16, #tpu.memory_space<vmem>>, vector<128x384xbf16>
    %cst_41 = arith.constant dense<0.000000e+00> : vector<128x36xf32>
    %59 = tpu.matmul %58, %57, %cst_41 {dimension_numbers = #tpu.dot_dimension_numbers<[1], [0], [0], [1], [0, 0, 1, 1], [], []>} : vector<128x384xbf16>, vector<384x36xbf16>, vector<128x36xf32> -> vector<128x36xf32>
    %60 = arith.addf %45, %59 : vector<128x36xf32>
    %cst_42 = arith.constant 0.000000e+00 : f32
    %61 = vector.broadcast %cst_42 : f32 to vector<128x36xf32>
    %62 = arith.maximumf %60, %61 : vector<128x36xf32>
    %c0_43 = arith.constant 0 : index
    %c0_44 = arith.constant 0 : index
    %63 = vector.load %arg18[%c0_43, %c0_44] : memref<256x864xbf16, #tpu.memory_space<vmem>>, vector<256x864xbf16>
    %c0_45 = arith.constant 0 : index
    %c0_46 = arith.constant 0 : index
    %c0_47 = arith.constant 0 : index
    %64 = vector.load %arg4[%c0_45, %c0_46, %c0_47] : memref<1x864x68xbf16, #tpu.memory_space<vmem>>, vector<1x864x68xbf16>
    %65 = vector.shape_cast %64 : vector<1x864x68xbf16> to vector<864x68xbf16>
    %cst_48 = arith.constant dense<0.000000e+00> : vector<256x68xf32>
    %66 = tpu.matmul %63, %65, %cst_48 {dimension_numbers = #tpu.dot_dimension_numbers<[1], [0], [0], [1], [0, 0, 1, 1], [], []>} : vector<256x864xbf16>, vector<864x68xbf16>, vector<256x68xf32> -> vector<256x68xf32>
    %c0_49 = arith.constant 0 : index
    %c0_50 = arith.constant 0 : index
    %67 = vector.load %arg19[%c0_49, %c0_50] : memref<256x1xf32, #tpu.memory_space<vmem>>, vector<256x1xf32>
    %68 = vector.broadcast %67 : vector<256x1xf32> to vector<256x68xf32>
    %69 = arith.addf %66, %68 : vector<256x68xf32>
    %c0_51 = arith.constant 0 : index
    %c0_52 = arith.constant 0 : index
    %70 = vector.load %arg20[%c0_51, %c0_52] : memref<256x128xf32, #tpu.memory_space<vmem>>, vector<256x128xf32>
    %c0_53 = arith.constant 0 : index
    %c0_54 = arith.constant 0 : index
    %71 = vector.load %arg21[%c0_53, %c0_54] : memref<36x68xf32, #tpu.memory_space<vmem>>, vector<36x68xf32>
    %cst_55 = arith.constant dense<0.000000e+00> : vector<128x68xf32>
    %72 = tpu.matmul %62, %71, %cst_55 {dimension_numbers = #tpu.dot_dimension_numbers<[1], [0], [0], [1], [0, 0, 1, 1], [], []>} : vector<128x36xf32>, vector<36x68xf32>, vector<128x68xf32> -> vector<128x68xf32>
    %cst_56 = arith.constant dense<0.000000e+00> : vector<256x68xf32>
    %73 = tpu.matmul %70, %72, %cst_56 {dimension_numbers = #tpu.dot_dimension_numbers<[1], [0], [0], [1], [0, 0, 1, 1], [], []>} : vector<256x128xf32>, vector<128x68xf32>, vector<256x68xf32> -> vector<256x68xf32>
    %74 = arith.truncf %73 : vector<256x68xf32> to vector<256x68xbf16>
    %75 = vector.extract_strided_slice %74 {offsets = [0, 67], sizes = [256, 1], strides = [1, 1]} : vector<256x68xbf16> to vector<256x1xbf16>
    %76 = vector.extract_strided_slice %74 {offsets = [0, 0], sizes = [256, 67], strides = [1, 1]} : vector<256x68xbf16> to vector<256x67xbf16>
    %77 = tpu.concatenate %75, %76 in 1 : vector<256x1xbf16>, vector<256x67xbf16> -> vector<256x68xbf16>
    %78 = vector.extract_strided_slice %74 {offsets = [0, 1], sizes = [256, 67], strides = [1, 1]} : vector<256x68xbf16> to vector<256x67xbf16>
    %79 = vector.extract_strided_slice %74 {offsets = [0, 0], sizes = [256, 1], strides = [1, 1]} : vector<256x68xbf16> to vector<256x1xbf16>
    %80 = tpu.concatenate %78, %79 in 1 : vector<256x67xbf16>, vector<256x1xbf16> -> vector<256x68xbf16>
    %81 = tpu.concatenate %77, %74, %80 in 0 : vector<256x68xbf16>, vector<256x68xbf16>, vector<256x68xbf16> -> vector<768x68xbf16>
    %c0_57 = arith.constant 0 : index
    %c0_58 = arith.constant 0 : index
    %82 = vector.load %arg17[%c0_57, %c0_58] : memref<256x768xbf16, #tpu.memory_space<vmem>>, vector<256x768xbf16>
    %cst_59 = arith.constant dense<0.000000e+00> : vector<256x68xf32>
    %83 = tpu.matmul %82, %81, %cst_59 {dimension_numbers = #tpu.dot_dimension_numbers<[1], [0], [0], [1], [0, 0, 1, 1], [], []>} : vector<256x768xbf16>, vector<768x68xbf16>, vector<256x68xf32> -> vector<256x68xf32>
    %84 = arith.addf %69, %83 : vector<256x68xf32>
    %cst_60 = arith.constant 0.000000e+00 : f32
    %85 = vector.broadcast %cst_60 : f32 to vector<256x68xf32>
    %86 = arith.maximumf %84, %85 : vector<256x68xf32>
    %c0_61 = arith.constant 0 : index
    %c0_62 = arith.constant 0 : index
    %87 = vector.load %arg22[%c0_61, %c0_62] : memref<128x256xbf16, #tpu.memory_space<vmem>>, vector<128x256xbf16>
    %88 = arith.truncf %86 : vector<256x68xf32> to vector<256x68xbf16>
    %cst_63 = arith.constant dense<0.000000e+00> : vector<128x68xf32>
    %89 = tpu.matmul %87, %88, %cst_63 {dimension_numbers = #tpu.dot_dimension_numbers<[1], [0], [0], [1], [0, 0, 1, 1], [], []>} : vector<128x256xbf16>, vector<256x68xbf16>, vector<128x68xf32> -> vector<128x68xf32>
    %c0_64 = arith.constant 0 : index
    %c0_65 = arith.constant 0 : index
    %90 = vector.load %arg23[%c0_64, %c0_65] : memref<128x1xf32, #tpu.memory_space<vmem>>, vector<128x1xf32>
    %91 = vector.broadcast %90 : vector<128x1xf32> to vector<128x68xf32>
    %92 = arith.addf %89, %91 : vector<128x68xf32>
    %cst_66 = arith.constant 0.000000e+00 : f32
    %93 = vector.broadcast %cst_66 : f32 to vector<128x68xf32>
    %94 = arith.maximumf %92, %93 : vector<128x68xf32>
    %c0_67 = arith.constant 0 : index
    %c0_68 = arith.constant 0 : index
    %95 = vector.load %arg24[%c0_67, %c0_68] : memref<64x128xf32, #tpu.memory_space<vmem>>, vector<64x128xf32>
    %cst_69 = arith.constant dense<0.000000e+00> : vector<64x68xf32>
    %96 = tpu.matmul %95, %94, %cst_69 {dimension_numbers = #tpu.dot_dimension_numbers<[1], [0], [0], [1], [0, 0, 1, 1], [], []>} : vector<64x128xf32>, vector<128x68xf32>, vector<64x68xf32> -> vector<64x68xf32>
    %c0_70 = arith.constant 0 : index
    %c0_71 = arith.constant 0 : index
    %97 = vector.load %arg25[%c0_70, %c0_71] : memref<68x128xf32, #tpu.memory_space<vmem>>, vector<68x128xf32>
    %cst_72 = arith.constant dense<0.000000e+00> : vector<64x128xf32>
    %98 = tpu.matmul %96, %97, %cst_72 {dimension_numbers = #tpu.dot_dimension_numbers<[1], [0], [0], [1], [0, 0, 1, 1], [], []>} : vector<64x68xf32>, vector<68x128xf32>, vector<64x128xf32> -> vector<64x128xf32>
    %cst_73 = arith.constant 0.000000e+00 : f32
    %99 = vector.broadcast %cst_73 : f32 to vector<64x128xf32>
    %100 = arith.addf %98, %99 : vector<64x128xf32>
    %c0_74 = arith.constant 0 : index
    %c0_75 = arith.constant 0 : index
    %c0_76 = arith.constant 0 : index
    %101 = vector.load %arg26[%c0_74, %c0_75, %c0_76] : memref<1x64x128xf32, #tpu.memory_space<vmem>>, vector<1x64x128xf32>
    %102 = vector.shape_cast %101 : vector<1x64x128xf32> to vector<64x128xf32>
    %103 = vector.shape_cast %100 : vector<64x128xf32> to vector<1x64x128xf32>
    tpu.vector_store %arg26[%c0_74, %c0_75, %c0_76], %103 {strides = array<i32>} : memref<1x64x128xf32, #tpu.memory_space<vmem>>, vector<1x64x128xf32>,
    return
  }
  func.func @transform_0(%arg0: i32) -> (i32, i32, i32) {
    %c0_i32 = arith.constant 0 : i32
    %c0_i32_0 = arith.constant 0 : i32
    %c0_i32_1 = arith.constant 0 : i32
    return %arg0, %c0_i32, %c0_i32_0 : i32, i32, i32
  }
  func.func @transform_1(%arg0: i32) -> (i32, i32, i32) {
    %c0_i32 = arith.constant 0 : i32
    %c0_i32_0 = arith.constant 0 : i32
    %c0_i32_1 = arith.constant 0 : i32
    return %arg0, %c0_i32, %c0_i32_0 : i32, i32, i32
  }
  func.func @transform_2(%arg0: i32) -> (i32, i32, i32) {
    %c0_i32 = arith.constant 0 : i32
    %c0_i32_0 = arith.constant 0 : i32
    %c0_i32_1 = arith.constant 0 : i32
    return %arg0, %c0_i32, %c0_i32_0 : i32, i32, i32
  }
  func.func @transform_3(%arg0: i32) -> (i32, i32, i32) {
    %c0_i32 = arith.constant 0 : i32
    %c0_i32_0 = arith.constant 0 : i32
    %c0_i32_1 = arith.constant 0 : i32
    return %arg0, %c0_i32, %c0_i32_0 : i32, i32, i32
  }
  func.func @transform_4(%arg0: i32) -> (i32, i32) {
    %c0_i32 = arith.constant 0 : i32
    %c0_i32_0 = arith.constant 0 : i32
    %c0_i32_1 = arith.constant 0 : i32
    return %c0_i32, %c0_i32_0 : i32, i32
  }
  func.func @transform_5(%arg0: i32) -> (i32, i32) {
    %c0_i32 = arith.constant 0 : i32
    %c0_i32_0 = arith.constant 0 : i32
    %c0_i32_1 = arith.constant 0 : i32
    return %c0_i32, %c0_i32_0 : i32, i32
  }
  func.func @transform_6(%arg0: i32) -> (i32, i32) {
    %c0_i32 = arith.constant 0 : i32
    %c0_i32_0 = arith.constant 0 : i32
    %c0_i32_1 = arith.constant 0 : i32
    return %c0_i32, %c0_i32_0 : i32, i32
  }
  func.func @transform_7(%arg0: i32) -> (i32, i32) {
    %c0_i32 = arith.constant 0 : i32
    %c0_i32_0 = arith.constant 0 : i32
    %c0_i32_1 = arith.constant 0 : i32
    return %c0_i32, %c0_i32_0 : i32, i32
  }
  func.func @transform_8(%arg0: i32) -> (i32, i32) {
    %c0_i32 = arith.constant 0 : i32
    %c0_i32_0 = arith.constant 0 : i32
    %c0_i32_1 = arith.constant 0 : i32
    return %c0_i32, %c0_i32_0 : i32, i32
  }
  func.func @transform_9(%arg0: i32) -> (i32, i32) {
    %c0_i32 = arith.constant 0 : i32
    %c0_i32_0 = arith.constant 0 : i32
    %c0_i32_1 = arith.constant 0 : i32
    return %c0_i32, %c0_i32_0 : i32, i32
  }
  func.func @transform_10(%arg0: i32) -> (i32, i32) {
    %c0_i32 = arith.constant 0 : i32
    %c0_i32_0 = arith.constant 0 : i32
    %c0_i32_1 = arith.constant 0 : i32
    return %c0_i32, %c0_i32_0 : i32, i32
  }
  func.func @transform_11(%arg0: i32) -> (i32, i32) {
    %c0_i32 = arith.constant 0 : i32
    %c0_i32_0 = arith.constant 0 : i32
    %c0_i32_1 = arith.constant 0 : i32
    return %c0_i32, %c0_i32_0 : i32, i32
  }
  func.func @transform_12(%arg0: i32) -> (i32, i32) {
    %c0_i32 = arith.constant 0 : i32
    %c0_i32_0 = arith.constant 0 : i32
    %c0_i32_1 = arith.constant 0 : i32
    return %c0_i32, %c0_i32_0 : i32, i32
  }
  func.func @transform_13(%arg0: i32) -> (i32, i32) {
    %c0_i32 = arith.constant 0 : i32
    %c0_i32_0 = arith.constant 0 : i32
    %c0_i32_1 = arith.constant 0 : i32
    return %c0_i32, %c0_i32_0 : i32, i32
  }
  func.func @transform_14(%arg0: i32) -> (i32, i32) {
    %c0_i32 = arith.constant 0 : i32
    %c0_i32_0 = arith.constant 0 : i32
    %c0_i32_1 = arith.constant 0 : i32
    return %c0_i32, %c0_i32_0 : i32, i32
  }
  func.func @transform_15(%arg0: i32) -> (i32, i32) {
    %c0_i32 = arith.constant 0 : i32
    %c0_i32_0 = arith.constant 0 : i32
    %c0_i32_1 = arith.constant 0 : i32
    return %c0_i32, %c0_i32_0 : i32, i32
  }
  func.func @transform_16(%arg0: i32) -> (i32, i32) {
    %c0_i32 = arith.constant 0 : i32
    %c0_i32_0 = arith.constant 0 : i32
    %c0_i32_1 = arith.constant 0 : i32
    return %c0_i32, %c0_i32_0 : i32, i32
  }
  func.func @transform_17(%arg0: i32) -> (i32, i32) {
    %c0_i32 = arith.constant 0 : i32
    %c0_i32_0 = arith.constant 0 : i32
    %c0_i32_1 = arith.constant 0 : i32
    return %c0_i32, %c0_i32_0 : i32, i32
  }
  func.func @transform_18(%arg0: i32) -> (i32, i32) {
    %c0_i32 = arith.constant 0 : i32
    %c0_i32_0 = arith.constant 0 : i32
    %c0_i32_1 = arith.constant 0 : i32
    return %c0_i32, %c0_i32_0 : i32, i32
  }
  func.func @transform_19(%arg0: i32) -> (i32, i32) {
    %c0_i32 = arith.constant 0 : i32
    %c0_i32_0 = arith.constant 0 : i32
    %c0_i32_1 = arith.constant 0 : i32
    return %c0_i32, %c0_i32_0 : i32, i32
  }
  func.func @transform_20(%arg0: i32) -> (i32, i32) {
    %c0_i32 = arith.constant 0 : i32
    %c0_i32_0 = arith.constant 0 : i32
    %c0_i32_1 = arith.constant 0 : i32
    return %c0_i32, %c0_i32_0 : i32, i32
  }
  func.func @transform_21(%arg0: i32) -> (i32, i32) {
    %c0_i32 = arith.constant 0 : i32
    %c0_i32_0 = arith.constant 0 : i32
    %c0_i32_1 = arith.constant 0 : i32
    return %c0_i32, %c0_i32_0 : i32, i32
  }
  func.func @transform_22(%arg0: i32) -> (i32, i32) {
    %c0_i32 = arith.constant 0 : i32
    %c0_i32_0 = arith.constant 0 : i32
    %c0_i32_1 = arith.constant 0 : i32
    return %c0_i32, %c0_i32_0 : i32, i32
  }
  func.func @transform_23(%arg0: i32) -> (i32, i32) {
    %c0_i32 = arith.constant 0 : i32
    %c0_i32_0 = arith.constant 0 : i32
    %c0_i32_1 = arith.constant 0 : i32
    return %c0_i32, %c0_i32_0 : i32, i32
  }
  func.func @transform_24(%arg0: i32) -> (i32, i32) {
    %c0_i32 = arith.constant 0 : i32
    %c0_i32_0 = arith.constant 0 : i32
    %c0_i32_1 = arith.constant 0 : i32
    return %c0_i32, %c0_i32_0 : i32, i32
  }
  func.func @transform_25(%arg0: i32) -> (i32, i32, i32) {
    %c0_i32 = arith.constant 0 : i32
    %c0_i32_0 = arith.constant 0 : i32
    %c0_i32_1 = arith.constant 0 : i32
    return %arg0, %c0_i32, %c0_i32_0 : i32, i32, i32
  }
}

</mosaic_0001>

<llo_original>
// kernel: tpu_custom_call.1
$region0: #{tpu_custom_call.1}
  #allocation0 [shape = 'u32[]', space=smem, size = 0x4, offset = 0x4, fixed_abs, tag = 'smem constant byte address 0x4 - core index']
  #allocation1 [shape = 'u32[144,128]{1,0:T(1,128)}', space=vmem, size = 0x12000, scoped, tag = 'internal scratch']
  %s0 = inlined_call_operand.vmem [shape: bf16[1,252,20], index: 0, kind: input, shape index: {}]
  %s1 = inlined_call_operand.vmem [shape: bf16[1,360,24], index: 1, kind: input, shape index: {}]
  %s2 = inlined_call_operand.vmem [shape: bf16[1,432,36], index: 2, kind: input, shape index: {}]
  %s3 = inlined_call_operand.vmem [shape: bf16[1,864,68], index: 3, kind: input, shape index: {}]
  %s4 = inlined_call_operand.vmem [shape: bf16[32,252], index: 4, kind: input, shape index: {}]
  %s5 = inlined_call_operand.vmem [shape: f32[32,1], index: 5, kind: input, shape index: {}]
  %s6 = inlined_call_operand.vmem [shape: bf16[64,320], index: 6, kind: input, shape index: {}]
  %s7 = inlined_call_operand.vmem [shape: bf16[64,360], index: 7, kind: input, shape index: {}]
  %s8 = inlined_call_operand.vmem [shape: f32[64,1], index: 8, kind: input, shape index: {}]
  %s9 = inlined_call_operand.vmem [shape: f32[64,32], index: 9, kind: input, shape index: {}]
  %s10 = inlined_call_operand.vmem [shape: f32[20,24], index: 10, kind: input, shape index: {}]
  %s11 = inlined_call_operand.vmem [shape: bf16[128,384], index: 11, kind: input, shape index: {}]
  %s12 = inlined_call_operand.vmem [shape: bf16[128,432], index: 12, kind: input, shape index: {}]
  %s13 = inlined_call_operand.vmem [shape: f32[128,1], index: 13, kind: input, shape index: {}]
  %s14 = inlined_call_operand.vmem [shape: f32[128,64], index: 14, kind: input, shape index: {}]
  %s15 = inlined_call_operand.vmem [shape: f32[24,36], index: 15, kind: input, shape index: {}]
  %s16 = inlined_call_operand.vmem [shape: bf16[256,768], index: 16, kind: input, shape index: {}]
  %s17 = inlined_call_operand.vmem [shape: bf16[256,864], index: 17, kind: input, shape index: {}]
  %s18 = inlined_call_operand.vmem [shape: f32[256,1], index: 18, kind: input, shape index: {}]
  %s19 = inlined_call_operand.vmem [shape: f32[256,128], index: 19, kind: input, shape index: {}]
  %s20 = inlined_call_operand.vmem [shape: f32[36,68], index: 20, kind: input, shape index: {}]
  %s21 = inlined_call_operand.vmem [shape: bf16[128,256], index: 21, kind: input, shape index: {}]
  %s22 = inlined_call_operand.vmem [shape: f32[128,1], index: 22, kind: input, shape index: {}]
  %s23 = inlined_call_operand.vmem [shape: f32[64,128], index: 23, kind: input, shape index: {}]
  %s24 = inlined_call_operand.vmem [shape: f32[68,128], index: 24, kind: input, shape index: {}]
  %s25 = inlined_call_operand.hbm [shape: f32[1,64,128], index: 25, kind: output, shape index: {}]
  %s26 = sld [smem:[#allocation0]]
  $region110: #{tpu_custom_call.1} parent=0
    _
  %s28 = ssub.s32 1, %s26
  %s29 = scalar_select 0, %s28, %s26
  $region1: #{tpu_custom_call.1} parent=0
    #allocation2 [shape = 'u8[32768]{0}', space=vmem, size = 0x8000, scoped, tag = 'output window, operand 0, single buffered']
    #allocation3 [shape = 's32[1]{0}', space=sflag, size = 0x4, scoped, tag = 'scoped memory for tpu_custom_call.1']
    %30 = vsyncpa [#allocation3], 0
    // Predicated region
    $region2: #{tpu_custom_call.1} parent=1 // pred_check
      _
    $region3: #{tpu_custom_call.1} parent=1 // pred_check_branch
      %32 = sbr.rel (0) target = $region5
    $region4: #{tpu_custom_call.1} parent=1 // pred_region
      _
    $region5: #{tpu_custom_call.1} parent=1 // pred_fallthru
      _
    // Predicated region
    $region6: #{tpu_custom_call.1} parent=1 // pred_check
      _
    $region7: #{tpu_custom_call.1} parent=1 // pred_check_branch
      %34 = sbr.rel (0) target = $region9
    $region8: #{tpu_custom_call.1} parent=1 // pred_region
      _
    $region9: #{tpu_custom_call.1} parent=1 // pred_fallthru
      _
    // Predicated region
    $region10: #{tpu_custom_call.1} parent=1 // pred_check
      _
    $region11: #{tpu_custom_call.1} parent=1 // pred_check_branch
      %36 = sbr.rel (0) target = $region13
    $region12: #{tpu_custom_call.1} parent=1 // pred_region
      _
    $region13: #{tpu_custom_call.1} parent=1 // pred_fallthru
      _
    // Predicated region
    $region14: #{tpu_custom_call.1} parent=1 // pred_check
      _
    $region15: #{tpu_custom_call.1} parent=1 // pred_check_branch
      %38 = sbr.rel (0) target = $region17
    $region16: #{tpu_custom_call.1} parent=1 // pred_region
      _
    $region17: #{tpu_custom_call.1} parent=1 // pred_fallthru
      _
    // Predicated region
    $region18: #{tpu_custom_call.1} parent=1 // pred_check
      _
    $region19: #{tpu_custom_call.1} parent=1 // pred_check_branch
      %40 = sbr.rel (0) target = $region21
    $region20: #{tpu_custom_call.1} parent=1 // pred_region
      _
    $region21: #{tpu_custom_call.1} parent=1 // pred_fallthru
      _
    // Predicated region
    $region22: #{tpu_custom_call.1} parent=1 // pred_check
      _
    $region23: #{tpu_custom_call.1} parent=1 // pred_check_branch
      %42 = sbr.rel (0) target = $region25
    $region24: #{tpu_custom_call.1} parent=1 // pred_region
      _
    $region25: #{tpu_custom_call.1} parent=1 // pred_fallthru
      _
    // Predicated region
    $region26: #{tpu_custom_call.1} parent=1 // pred_check
      _
    $region27: #{tpu_custom_call.1} parent=1 // pred_check_branch
      %44 = sbr.rel (0) target = $region29
    $region28: #{tpu_custom_call.1} parent=1 // pred_region
      _
    $region29: #{tpu_custom_call.1} parent=1 // pred_fallthru
      _
    // Predicated region
    $region30: #{tpu_custom_call.1} parent=1 // pred_check
      _
    $region31: #{tpu_custom_call.1} parent=1 // pred_check_branch
      %46 = sbr.rel (0) target = $region33
    $region32: #{tpu_custom_call.1} parent=1 // pred_region
      _
    $region33: #{tpu_custom_call.1} parent=1 // pred_fallthru
      _
    // Predicated region
    $region34: #{tpu_custom_call.1} parent=1 // pred_check
      _
    $region35: #{tpu_custom_call.1} parent=1 // pred_check_branch
      %48 = sbr.rel (0) target = $region37
    $region36: #{tpu_custom_call.1} parent=1 // pred_region
      _
    $region37: #{tpu_custom_call.1} parent=1 // pred_fallthru
      _
    // Predicated region
    $region38: #{tpu_custom_call.1} parent=1 // pred_check
      _
    $region39: #{tpu_custom_call.1} parent=1 // pred_check_branch
      %50 = sbr.rel (0) target = $region41
    $region40: #{tpu_custom_call.1} parent=1 // pred_region
      _
    $region41: #{tpu_custom_call.1} parent=1 // pred_fallthru
      _
    // Predicated region
    $region42: #{tpu_custom_call.1} parent=1 // pred_check
      _
    $region43: #{tpu_custom_call.1} parent=1 // pred_check_branch
      %52 = sbr.rel (0) target = $region45
    $region44: #{tpu_custom_call.1} parent=1 // pred_region
      _
    $region45: #{tpu_custom_call.1} parent=1 // pred_fallthru
      _
    // Predicated region
    $region46: #{tpu_custom_call.1} parent=1 // pred_check
      _
    $region47: #{tpu_custom_call.1} parent=1 // pred_check_branch
      %54 = sbr.rel (0) target = $region49
    $region48: #{tpu_custom_call.1} parent=1 // pred_region
      _
    $region49: #{tpu_custom_call.1} parent=1 // pred_fallthru
      _
    // Predicated region
    $region50: #{tpu_custom_call.1} parent=1 // pred_check
      _
    $region51: #{tpu_custom_call.1} parent=1 // pred_check_branch
      %56 = sbr.rel (0) target = $region53
    $region52: #{tpu_custom_call.1} parent=1 // pred_region
      _
    $region53: #{tpu_custom_call.1} parent=1 // pred_fallthru
      _
    // Predicated region
    $region54: #{tpu_custom_call.1} parent=1 // pred_check
      _
    $region55: #{tpu_custom_call.1} parent=1 // pred_check_branch
      %58 = sbr.rel (0) target = $region57
    $region56: #{tpu_custom_call.1} parent=1 // pred_region
      _
    $region57: #{tpu_custom_call.1} parent=1 // pred_fallthru
      _
    // Predicated region
    $region58: #{tpu_custom_call.1} parent=1 // pred_check
      _
    $region59: #{tpu_custom_call.1} parent=1 // pred_check_branch
      %60 = sbr.rel (0) target = $region61
    $region60: #{tpu_custom_call.1} parent=1 // pred_region
      _
    $region61: #{tpu_custom_call.1} parent=1 // pred_fallthru
      _
    // Predicated region
    $region62: #{tpu_custom_call.1} parent=1 // pred_check
      _
    $region63: #{tpu_custom_call.1} parent=1 // pred_check_branch
      %62 = sbr.rel (0) target = $region65
    $region64: #{tpu_custom_call.1} parent=1 // pred_region
      _
    $region65: #{tpu_custom_call.1} parent=1 // pred_fallthru
      _
    // Predicated region
    $region66: #{tpu_custom_call.1} parent=1 // pred_check
      _
    $region67: #{tpu_custom_call.1} parent=1 // pred_check_branch
      %64 = sbr.rel (0) target = $region69
    $region68: #{tpu_custom_call.1} parent=1 // pred_region
      _
    $region69: #{tpu_custom_call.1} parent=1 // pred_fallthru
      _
    // Predicated region
    $region70: #{tpu_custom_call.1} parent=1 // pred_check
      _
    $region71: #{tpu_custom_call.1} parent=1 // pred_check_branch
      %66 = sbr.rel (0) target = $region73
    $region72: #{tpu_custom_call.1} parent=1 // pred_region
      _
    $region73: #{tpu_custom_call.1} parent=1 // pred_fallthru
      _
    // Predicated region
    $region74: #{tpu_custom_call.1} parent=1 // pred_check
      _
    $region75: #{tpu_custom_call.1} parent=1 // pred_check_branch
      %68 = sbr.rel (0) target = $region77
    $region76: #{tpu_custom_call.1} parent=1 // pred_region
      _
    $region77: #{tpu_custom_call.1} parent=1 // pred_fallthru
      _
    // Predicated region
    $region78: #{tpu_custom_call.1} parent=1 // pred_check
      _
    $region79: #{tpu_custom_call.1} parent=1 // pred_check_branch
      %70 = sbr.rel (0) target = $region81
    $region80: #{tpu_custom_call.1} parent=1 // pred_region
      _
    $region81: #{tpu_custom_call.1} parent=1 // pred_fallthru
      _
    // Predicated region
    $region82: #{tpu_custom_call.1} parent=1 // pred_check
      _
    $region83: #{tpu_custom_call.1} parent=1 // pred_check_branch
      %72 = sbr.rel (0) target = $region85
    $region84: #{tpu_custom_call.1} parent=1 // pred_region
      _
    $region85: #{tpu_custom_call.1} parent=1 // pred_fallthru
      _
    // Predicated region
    $region86: #{tpu_custom_call.1} parent=1 // pred_check
      _
    $region87: #{tpu_custom_call.1} parent=1 // pred_check_branch
      %74 = sbr.rel (0) target = $region89
    $region88: #{tpu_custom_call.1} parent=1 // pred_region
      _
    $region89: #{tpu_custom_call.1} parent=1 // pred_fallthru
      _
    // Predicated region
    $region90: #{tpu_custom_call.1} parent=1 // pred_check
      _
    $region91: #{tpu_custom_call.1} parent=1 // pred_check_branch
      %76 = sbr.rel (0) target = $region93
    $region92: #{tpu_custom_call.1} parent=1 // pred_region
      _
    $region93: #{tpu_custom_call.1} parent=1 // pred_fallthru
      _
    // Predicated region
    $region94: #{tpu_custom_call.1} parent=1 // pred_check
      _
    $region95: #{tpu_custom_call.1} parent=1 // pred_check_branch
      %78 = sbr.rel (0) target = $region97
    $region96: #{tpu_custom_call.1} parent=1 // pred_region
      _
    $region97: #{tpu_custom_call.1} parent=1 // pred_fallthru
      _
    // Predicated region
    $region98: #{tpu_custom_call.1} parent=1 // pred_check
      _
    $region99: #{tpu_custom_call.1} parent=1 // pred_check_branch
      %80 = sbr.rel (0) target = $region101
    $region100: #{tpu_custom_call.1} parent=1 // pred_region
      _
    $region101: #{tpu_custom_call.1} parent=1 // pred_fallthru
      _
    %v82 = vld [vmem:[%s4] sm:$0xff]
    %v83 = vld [vmem:[%s4 + $0x8] sm:$0xff]
    %v84 = vld [vmem:[%s4 + $0x10] sm:$0xff]
    %v85 = vld [vmem:[%s4 + $0x18] sm:$0xff]
    %v86 = vld [vmem:[%s0] sm:$0xf]
    %v87 = vld [vmem:[%s0 + $0x4] sm:$0xf]
    %v88 = vld [vmem:[%s0 + $0x8] sm:$0xf]
    %v89 = vld [vmem:[%s0 + $0xc] sm:$0xf]
    %v90 = vld [vmem:[%s0 + $0x10] sm:$0xf]
    %v91 = vld [vmem:[%s0 + $0x14] sm:$0xf]
    %v92 = vld [vmem:[%s0 + $0x18] sm:$0xf]
    %v93 = vld [vmem:[%s0 + $0x1c] sm:$0xf]
    %v94 = vld [vmem:[%s0 + $0x20] sm:$0xf]
    %v95 = vld [vmem:[%s0 + $0x24] sm:$0xf]
    %v96 = vld [vmem:[%s0 + $0x28] sm:$0xf]
    %v97 = vld [vmem:[%s0 + $0x2c] sm:$0xf]
    %v98 = vld [vmem:[%s0 + $0x30] sm:$0xf]
    %v99 = vld [vmem:[%s0 + $0x34] sm:$0xf]
    %v100 = vld [vmem:[%s0 + $0x38] sm:$0xf]
    %v101 = vld [vmem:[%s0 + $0x3c] sm:$0xf]
    %v102 = vld [vmem:[%s0 + $0x40] sm:$0xf]
    %v103 = vld [vmem:[%s0 + $0x44] sm:$0xf]
    %v104 = vld [vmem:[%s0 + $0x48] sm:$0xf]
    %v105 = vld [vmem:[%s0 + $0x4c] sm:$0xf]
    %v106 = vld [vmem:[%s0 + $0x50] sm:$0xf]
    %v107 = vld [vmem:[%s0 + $0x54] sm:$0xf]
    %v108 = vld [vmem:[%s0 + $0x58] sm:$0xf]
    %v109 = vld [vmem:[%s0 + $0x5c] sm:$0xf]
    %v110 = vld [vmem:[%s0 + $0x60] sm:$0xf]
    %v111 = vld [vmem:[%s0 + $0x64] sm:$0xf]
    %v112 = vld [vmem:[%s0 + $0x68] sm:$0xf]
    %v113 = vld [vmem:[%s0 + $0x6c] sm:$0xf]
    %v114 = vld [vmem:[%s0 + $0x70] sm:$0xf]
    %v115 = vld [vmem:[%s0 + $0x74] sm:$0xf]
    %v116 = vld [vmem:[%s0 + $0x78] sm:$0xf]
    %v117 = vld [vmem:[%s0 + $0x7c] sm:$0x3]
    %v118 = vld [vmem:[%s5] sm:$0xff]
    %v119 = vld [vmem:[%s5 + $0x8] sm:$0xff]
    %v120 = vld [vmem:[%s5 + $0x10] sm:$0xff]
    %v121 = vld [vmem:[%s5 + $0x18] sm:$0xff]
    %123 = vset.pattern.permute.xlu0 0
    %124 = vperm.xlu0 %123, %v118
    %v125 = vpop.permute.xlu0 %124
    %128 = vset.pattern.permute.xlu0 0
    %129 = vperm.xlu0 %128, %v119
    %v130 = vpop.permute.xlu0 %129
    %133 = vset.pattern.permute.xlu0 0
    %134 = vperm.xlu0 %133, %v120
    %v135 = vpop.permute.xlu0 %134
    %138 = vset.pattern.permute.xlu0 0
    %139 = vperm.xlu0 %138, %v121
    %v140 = vpop.permute.xlu0 %139
    %v146 = vunpack.c.l.b16 %v82
    %v147 = vunpack.c.h.b16 %v82
    %v148 = vunpack.c.l.b16 %v83
    %v149 = vunpack.c.h.b16 %v83
    %v150 = vunpack.c.l.b16 %v84
    %v151 = vunpack.c.h.b16 %v84
    %v152 = vunpack.c.l.b16 %v85
    %v153 = vunpack.c.h.b16 %v85
    %v154 = vpack.c.b16 %v148, %v146
    %v155 = vpack.c.b16 %v149, %v147
    %v156 = vpack.c.b16 %v152, %v150
    %v157 = vpack.c.b16 %v153, %v151
    %v192 = vunpack.c.l.b16 %v86
    %v193 = vunpack.c.l.b16 %v87
    %v194 = vunpack.c.l.b16 %v88
    %v195 = vunpack.c.l.b16 %v89
    %v196 = vunpack.c.l.b16 %v90
    %v197 = vunpack.c.l.b16 %v91
    %v198 = vunpack.c.l.b16 %v92
    %v199 = vunpack.c.l.b16 %v93
    %v200 = vunpack.c.l.b16 %v94
    %v201 = vunpack.c.l.b16 %v95
    %v202 = vunpack.c.l.b16 %v96
    %v203 = vunpack.c.l.b16 %v97
    %v204 = vunpack.c.l.b16 %v98
    %v205 = vunpack.c.l.b16 %v99
    %v206 = vunpack.c.l.b16 %v100
    %v207 = vunpack.c.l.b16 %v101
    %v208 = vunpack.c.l.b16 %v102
    %v209 = vunpack.c.l.b16 %v103
    %v210 = vunpack.c.l.b16 %v104
    %v211 = vunpack.c.l.b16 %v105
    %v212 = vunpack.c.l.b16 %v106
    %v213 = vunpack.c.l.b16 %v107
    %v214 = vunpack.c.l.b16 %v108
    %v215 = vunpack.c.l.b16 %v109
    %v216 = vunpack.c.l.b16 %v110
    %v217 = vunpack.c.l.b16 %v111
    %v218 = vunpack.c.l.b16 %v112
    %v219 = vunpack.c.l.b16 %v113
    %v220 = vunpack.c.l.b16 %v114
    %v221 = vunpack.c.l.b16 %v115
    %v222 = vunpack.c.l.b16 %v116
    %v223 = vunpack.c.l.b16 %v117
    %v224 = vpack.c.b16 %v193, %v192
    %v225 = vpack.c.b16 %v195, %v194
    %v226 = vpack.c.b16 %v197, %v196
    %v227 = vpack.c.b16 %v199, %v198
    %v228 = vpack.c.b16 %v201, %v200
    %v229 = vpack.c.b16 %v203, %v202
    %v230 = vpack.c.b16 %v205, %v204
    %v231 = vpack.c.b16 %v207, %v206
    %v232 = vpack.c.b16 %v209, %v208
    %v233 = vpack.c.b16 %v211, %v210
    %v234 = vpack.c.b16 %v213, %v212
    %v235 = vpack.c.b16 %v215, %v214
    %v236 = vpack.c.b16 %v217, %v216
    %v237 = vpack.c.b16 %v219, %v218
    %v238 = vpack.c.b16 %v221, %v220
    %v239 = vpack.c.b16 %v223, %v222
    %vm255 = vcmask 1014784
    %v257 = vsel %vm255, %v155, 0
    %v260 = vsel %vm255, %v157, 0
    %vm262 = vcmask 1045504
    %v264 = vsel %vm262, %v239, 0
    %266 = vmatprep.subr.bf16.mxu0 0
    %267 = vmatpush1.bf16.msra.mxu0 %v231
    %268 = vmatprep.subr.bf16.mxu0 0
    %269 = vmatpush1.bf16.msra.mxu0 %v230
    %270 = vmatprep.subr.bf16.mxu0 0
    %271 = vmatpush1.bf16.msra.mxu0 %v229
    %272 = vmatprep.subr.bf16.mxu0 0
    %273 = vmatpush1.bf16.msra.mxu0 %v228
    %274 = vmatprep.subr.bf16.mxu0 0
    %275 = vmatpush1.bf16.msra.mxu0 %v227
    %276 = vmatprep.subr.bf16.mxu0 0
    %277 = vmatpush1.bf16.msra.mxu0 %v226
    %278 = vmatprep.subr.bf16.mxu0 0
    %279 = vmatpush1.bf16.msra.mxu0 %v225
    %280 = vmatprep.subr.bf16.mxu0 0
    %281 = vmatpush1.bf16.msra.mxu0 %v224
    %282 = vmatprep.subr.bf16.mxu0 0
    %283 = vmatpush2.bf16.msra.mxu0 %v264
    %284 = vmatprep.subr.bf16.mxu0 0
    %285 = vmatpush2.bf16.msra.mxu0 %v238
    %286 = vmatprep.subr.bf16.mxu0 0
    %287 = vmatpush2.bf16.msra.mxu0 %v237
    %288 = vmatprep.subr.bf16.mxu0 0
    %289 = vmatpush2.bf16.msra.mxu0 %v236
    %290 = vmatprep.subr.bf16.mxu0 0
    %291 = vmatpush2.bf16.msra.mxu0 %v235
    %292 = vmatprep.subr.bf16.mxu0 0
    %293 = vmatpush2.bf16.msra.mxu0 %v234
    %294 = vmatprep.subr.bf16.mxu0 0
    %295 = vmatpush2.bf16.msra.mxu0 %v233
    %296 = vmatprep.subr.bf16.mxu0 0
    %297 = vmatpush2.bf16.msra.mxu0 %v232
    %298 = vmatprep.mubr.bf16.mxu0 %v257
    %299 = vmatmul.mubr.bf16.gmra.mxu0 %v154
    %v300 = vpop.f32.mrf.mxu0
    %v301 = vadd.f32 %v125, %v300
    %v302 = vpop.f32.mrf.mxu0
    %v303 = vpop.f32.mrf.mxu0
    %v304 = vadd.f32 %v130, %v303
    %v305 = vpop.f32.mrf.mxu0
    %306 = vmatprep.mubr.bf16.mxu0 %v260
    %307 = vmatmul.mubr.bf16.gmra.mxu0 %v156
    %v308 = vpop.f32.mrf.mxu0
    %v309 = vadd.f32 %v135, %v308
    %v310 = vpop.f32.mrf.mxu0
    %v311 = vpop.f32.mrf.mxu0
    %v312 = vadd.f32 %v140, %v311
    %v313 = vpop.f32.mrf.mxu0
    %314 = vdwg.mxu0
    %v315 = vmax.f32 %v301, 0.0
    %v316 = vmax.f32 %v304, 0.0
    %v317 = vmax.f32 %v309, 0.0
    %v318 = vmax.f32 %v312, 0.0
    %v319 = vld [vmem:[%s7] sm:$0xff]
    %v320 = vld [vmem:[%s7 + $0x8] sm:$0xf]
    %v321 = vld [vmem:[%s7 + $0xc] sm:$0xff]
    %v322 = vld [vmem:[%s7 + $0x14] sm:$0xf]
    %v323 = vld [vmem:[%s7 + $0x18] sm:$0xff]
    %v324 = vld [vmem:[%s7 + $0x20] sm:$0xf]
    %v325 = vld [vmem:[%s7 + $0x24] sm:$0xff]
    %v326 = vld [vmem:[%s7 + $0x2c] sm:$0xf]
    %v327 = vld [vmem:[%s7 + $0x30] sm:$0xff]
    %v328 = vld [vmem:[%s7 + $0x38] sm:$0xf]
    %v329 = vld [vmem:[%s7 + $0x3c] sm:$0xff]
    %v330 = vld [vmem:[%s7 + $0x44] sm:$0xf]
    %v331 = vld [vmem:[%s7 + $0x48] sm:$0xff]
    %v332 = vld [vmem:[%s7 + $0x50] sm:$0xf]
    %v333 = vld [vmem:[%s7 + $0x54] sm:$0xff]
    %v334 = vld [vmem:[%s7 + $0x5c] sm:$0xf]
    %v335 = vld [vmem:[%s1] sm:$0xf]
    %v336 = vld [vmem:[%s1 + $0x4] sm:$0xf]
    %v337 = vld [vmem:[%s1 + $0x8] sm:$0xf]
    %v338 = vld [vmem:[%s1 + $0xc] sm:$0xf]
    %v339 = vld [vmem:[%s1 + $0x10] sm:$0xf]
    %v340 = vld [vmem:[%s1 + $0x14] sm:$0xf]
    %v341 = vld [vmem:[%s1 + $0x18] sm:$0xf]
    %v342 = vld [vmem:[%s1 + $0x1c] sm:$0xf]
    %v343 = vld [vmem:[%s1 + $0x20] sm:$0xf]
    %v344 = vld [vmem:[%s1 + $0x24] sm:$0xf]
    %v345 = vld [vmem:[%s1 + $0x28] sm:$0xf]
    %v346 = vld [vmem:[%s1 + $0x2c] sm:$0xf]
    %v347 = vld [vmem:[%s1 + $0x30] sm:$0xf]
    %v348 = vld [vmem:[%s1 + $0x34] sm:$0xf]
    %v349 = vld [vmem:[%s1 + $0x38] sm:$0xf]
    %v350 = vld [vmem:[%s1 + $0x3c] sm:$0xf]
    %v351 = vld [vmem:[%s1 + $0x40] sm:$0xf]
    %v352 = vld [vmem:[%s1 + $0x44] sm:$0xf]
    %v353 = vld [vmem:[%s1 + $0x48] sm:$0xf]
    %v354 = vld [vmem:[%s1 + $0x4c] sm:$0xf]
    %v355 = vld [vmem:[%s1 + $0x50] sm:$0xf]
    %v356 = vld [vmem:[%s1 + $0x54] sm:$0xf]
    %v357 = vld [vmem:[%s1 + $0x58] sm:$0xf]
    %v358 = vld [vmem:[%s1 + $0x5c] sm:$0xf]
    %v359 = vld [vmem:[%s1 + $0x60] sm:$0xf]
    %v360 = vld [vmem:[%s1 + $0x64] sm:$0xf]
    %v361 = vld [vmem:[%s1 + $0x68] sm:$0xf]
    %v362 = vld [vmem:[%s1 + $0x6c] sm:$0xf]
    %v363 = vld [vmem:[%s1 + $0x70] sm:$0xf]
    %v364 = vld [vmem:[%s1 + $0x74] sm:$0xf]
    %v365 = vld [vmem:[%s1 + $0x78] sm:$0xf]
    %v366 = vld [vmem:[%s1 + $0x7c] sm:$0xf]
    %v367 = vld [vmem:[%s1 + $0x80] sm:$0xf]
    %v368 = vld [vmem:[%s1 + $0x84] sm:$0xf]
    %v369 = vld [vmem:[%s1 + $0x88] sm:$0xf]
    %v370 = vld [vmem:[%s1 + $0x8c] sm:$0xf]
    %v371 = vld [vmem:[%s1 + $0x90] sm:$0xf]
    %v372 = vld [vmem:[%s1 + $0x94] sm:$0xf]
    %v373 = vld [vmem:[%s1 + $0x98] sm:$0xf]
    %v374 = vld [vmem:[%s1 + $0x9c] sm:$0xf]
    %v375 = vld [vmem:[%s1 + $0xa0] sm:$0xf]
    %v376 = vld [vmem:[%s1 + $0xa4] sm:$0xf]
    %v377 = vld [vmem:[%s1 + $0xa8] sm:$0xf]
    %v378 = vld [vmem:[%s1 + $0xac] sm:$0xf]
    %v379 = vld [vmem:[%s1 + $0xb0] sm:$0xf]
    %v380 = vld [vmem:[%s8] sm:$0xff]
    %v381 = vld [vmem:[%s8 + $0x8] sm:$0xff]
    %v382 = vld [vmem:[%s8 + $0x10] sm:$0xff]
    %v383 = vld [vmem:[%s8 + $0x18] sm:$0xff]
    %v384 = vld [vmem:[%s8 + $0x20] sm:$0xff]
    %v385 = vld [vmem:[%s8 + $0x28] sm:$0xff]
    %v386 = vld [vmem:[%s8 + $0x30] sm:$0xff]
    %v387 = vld [vmem:[%s8 + $0x38] sm:$0xff]
    %389 = vset.pattern.permute.xlu0 0
    %390 = vperm.xlu0 %389, %v380
    %v391 = vpop.permute.xlu0 %390
    %394 = vset.pattern.permute.xlu0 0
    %395 = vperm.xlu0 %394, %v381
    %v396 = vpop.permute.xlu0 %395
    %399 = vset.pattern.permute.xlu0 0
    %400 = vperm.xlu0 %399, %v382
    %v401 = vpop.permute.xlu0 %400
    %404 = vset.pattern.permute.xlu0 0
    %405 = vperm.xlu0 %404, %v383
    %v406 = vpop.permute.xlu0 %405
    %409 = vset.pattern.permute.xlu0 0
    %410 = vperm.xlu0 %409, %v384
    %v411 = vpop.permute.xlu0 %410
    %414 = vset.pattern.permute.xlu0 0
    %415 = vperm.xlu0 %414, %v385
    %v416 = vpop.permute.xlu0 %415
    %419 = vset.pattern.permute.xlu0 0
    %420 = vperm.xlu0 %419, %v386
    %v421 = vpop.permute.xlu0 %420
    %424 = vset.pattern.permute.xlu0 0
    %425 = vperm.xlu0 %424, %v387
    %v426 = vpop.permute.xlu0 %425
    %v444 = vunpack.c.l.b16 %v319
    %v445 = vunpack.c.h.b16 %v319
    %v446 = vunpack.c.l.b16 %v320
    %v447 = vunpack.c.l.b16 %v321
    %v448 = vunpack.c.h.b16 %v321
    %v449 = vunpack.c.l.b16 %v322
    %v450 = vunpack.c.l.b16 %v323
    %v451 = vunpack.c.h.b16 %v323
    %v452 = vunpack.c.l.b16 %v324
    %v453 = vunpack.c.l.b16 %v325
    %v454 = vunpack.c.h.b16 %v325
    %v455 = vunpack.c.l.b16 %v326
    %v456 = vunpack.c.l.b16 %v327
    %v457 = vunpack.c.h.b16 %v327
    %v458 = vunpack.c.l.b16 %v328
    %v459 = vunpack.c.l.b16 %v329
    %v460 = vunpack.c.h.b16 %v329
    %v461 = vunpack.c.l.b16 %v330
    %v462 = vunpack.c.l.b16 %v331
    %v463 = vunpack.c.h.b16 %v331
    %v464 = vunpack.c.l.b16 %v332
    %v465 = vunpack.c.l.b16 %v333
    %v466 = vunpack.c.h.b16 %v333
    %v467 = vunpack.c.l.b16 %v334
    %v468 = vpack.c.b16 %v447, %v444
    %v469 = vpack.c.b16 %v448, %v445
    %v470 = vpack.c.b16 %v449, %v446
    %v471 = vpack.c.b16 %v453, %v450
    %v472 = vpack.c.b16 %v454, %v451
    %v473 = vpack.c.b16 %v455, %v452
    %v474 = vpack.c.b16 %v459, %v456
    %v475 = vpack.c.b16 %v460, %v457
    %v476 = vpack.c.b16 %v461, %v458
    %v477 = vpack.c.b16 %v465, %v462
    %v478 = vpack.c.b16 %v466, %v463
    %v479 = vpack.c.b16 %v467, %v464
    %v533 = vunpack.c.l.b16 %v335
    %v534 = vunpack.c.l.b16 %v336
    %v535 = vunpack.c.l.b16 %v337
    %v536 = vunpack.c.l.b16 %v338
    %v537 = vunpack.c.l.b16 %v339
    %v538 = vunpack.c.l.b16 %v340
    %v539 = vunpack.c.l.b16 %v341
    %v540 = vunpack.c.l.b16 %v342
    %v541 = vunpack.c.l.b16 %v343
    %v542 = vunpack.c.l.b16 %v344
    %v543 = vunpack.c.l.b16 %v345
    %v544 = vunpack.c.l.b16 %v346
    %v545 = vunpack.c.l.b16 %v347
    %v546 = vunpack.c.l.b16 %v348
    %v547 = vunpack.c.l.b16 %v349
    %v548 = vunpack.c.l.b16 %v350
    %v549 = vunpack.c.l.b16 %v351
    %v550 = vunpack.c.l.b16 %v352
    %v551 = vunpack.c.l.b16 %v353
    %v552 = vunpack.c.l.b16 %v354
    %v553 = vunpack.c.l.b16 %v355
    %v554 = vunpack.c.l.b16 %v356
    %v555 = vunpack.c.l.b16 %v357
    %v556 = vunpack.c.l.b16 %v358
    %v557 = vunpack.c.l.b16 %v359
    %v558 = vunpack.c.l.b16 %v360
    %v559 = vunpack.c.l.b16 %v361
    %v560 = vunpack.c.l.b16 %v362
    %v561 = vunpack.c.l.b16 %v363
    %v562 = vunpack.c.l.b16 %v364
    %v563 = vunpack.c.l.b16 %v365
    %v564 = vunpack.c.l.b16 %v366
    %v565 = vunpack.c.l.b16 %v367
    %v566 = vunpack.c.l.b16 %v368
    %v567 = vunpack.c.l.b16 %v369
    %v568 = vunpack.c.l.b16 %v370
    %v569 = vunpack.c.l.b16 %v371
    %v570 = vunpack.c.l.b16 %v372
    %v571 = vunpack.c.l.b16 %v373
    %v572 = vunpack.c.l.b16 %v374
    %v573 = vunpack.c.l.b16 %v375
    %v574 = vunpack.c.l.b16 %v376
    %v575 = vunpack.c.l.b16 %v377
    %v576 = vunpack.c.l.b16 %v378
    %v577 = vunpack.c.l.b16 %v379
    %v578 = vpack.c.b16 %v534, %v533
    %v579 = vpack.c.b16 %v536, %v535
    %v580 = vpack.c.b16 %v538, %v537
    %v581 = vpack.c.b16 %v540, %v539
    %v582 = vpack.c.b16 %v542, %v541
    %v583 = vpack.c.b16 %v544, %v543
    %v584 = vpack.c.b16 %v546, %v545
    %v585 = vpack.c.b16 %v548, %v547
    %v586 = vpack.c.b16 %v550, %v549
    %v587 = vpack.c.b16 %v552, %v551
    %v588 = vpack.c.b16 %v554, %v553
    %v589 = vpack.c.b16 %v556, %v555
    %v590 = vpack.c.b16 %v558, %v557
    %v591 = vpack.c.b16 %v560, %v559
    %v592 = vpack.c.b16 %v562, %v561
    %v593 = vpack.c.b16 %v564, %v563
    %v594 = vpack.c.b16 %v566, %v565
    %v595 = vpack.c.b16 %v568, %v567
    %v596 = vpack.c.b16 %v570, %v569
    %v597 = vpack.c.b16 %v572, %v571
    %v598 = vpack.c.b16 %v574, %v573
    %v599 = vpack.c.b16 %v576, %v575
    %v600 = vpack.c.b16 %v577, %v577
    %vm623 = vcmask 850944
    %v625 = vsel %vm623, %v470, 0
    %v628 = vsel %vm623, %v473, 0
    %v631 = vsel %vm623, %v476, 0
    %v634 = vsel %vm623, %v479, 0
    %vm636 = vcmask 1043456
    %v638 = vsel %vm636, %v600, 0
    %640 = vmatprep.subr.bf16.mxu0 0
    %641 = vmatpush1.bf16.msra.mxu0 %v585
    %642 = vmatprep.subr.bf16.mxu0 0
    %643 = vmatpush1.bf16.msra.mxu0 %v584
    %644 = vmatprep.subr.bf16.mxu0 0
    %645 = vmatpush1.bf16.msra.mxu0 %v583
    %646 = vmatprep.subr.bf16.mxu0 0
    %647 = vmatpush1.bf16.msra.mxu0 %v582
    %648 = vmatprep.subr.bf16.mxu0 0
    %649 = vmatpush1.bf16.msra.mxu0 %v581
    %650 = vmatprep.subr.bf16.mxu0 0
    %651 = vmatpush1.bf16.msra.mxu0 %v580
    %652 = vmatprep.subr.bf16.mxu0 0
    %653 = vmatpush1.bf16.msra.mxu0 %v579
    %654 = vmatprep.subr.bf16.mxu0 0
    %655 = vmatpush1.bf16.msra.mxu0 %v578
    %656 = vmatprep.subr.bf16.mxu0 0
    %657 = vmatpush2.bf16.msra.mxu0 %v593
    %658 = vmatprep.subr.bf16.mxu0 0
    %659 = vmatpush2.bf16.msra.mxu0 %v592
    %660 = vmatprep.subr.bf16.mxu0 0
    %661 = vmatpush2.bf16.msra.mxu0 %v591
    %662 = vmatprep.subr.bf16.mxu0 0
    %663 = vmatpush2.bf16.msra.mxu0 %v590
    %664 = vmatprep.subr.bf16.mxu0 0
    %665 = vmatpush2.bf16.msra.mxu0 %v589
    %666 = vmatprep.subr.bf16.mxu0 0
    %667 = vmatpush2.bf16.msra.mxu0 %v588
    %668 = vmatprep.subr.bf16.mxu0 0
    %669 = vmatpush2.bf16.msra.mxu0 %v587
    %670 = vmatprep.subr.bf16.mxu0 0
    %671 = vmatpush2.bf16.msra.mxu0 %v586
    %672 = vmatprep.mubr.bf16.mxu0 %v469
    %673 = vmatmul.mubr.bf16.gmra.mxu0 %v468
    %v674 = vpop.f32.mrf.mxu0
    %v675 = vadd.f32 %v391, %v674
    %v676 = vpop.f32.mrf.mxu0
    %v677 = vpop.f32.mrf.mxu0
    %v678 = vadd.f32 %v396, %v677
    %v679 = vpop.f32.mrf.mxu0
    %680 = vmatprep.mubr.bf16.mxu0 %v472
    %681 = vmatmul.mubr.bf16.gmra.mxu0 %v471
    %v682 = vpop.f32.mrf.mxu0
    %v683 = vadd.f32 %v401, %v682
    %v684 = vpop.f32.mrf.mxu0
    %v685 = vpop.f32.mrf.mxu0
    %v686 = vadd.f32 %v406, %v685
    %v687 = vpop.f32.mrf.mxu0
    %688 = vmatprep.mubr.bf16.mxu0 %v475
    %689 = vmatmul.mubr.bf16.gmra.mxu0 %v474
    %v690 = vpop.f32.mrf.mxu0
    %v691 = vadd.f32 %v411, %v690
    %v692 = vpop.f32.mrf.mxu0
    %v693 = vpop.f32.mrf.mxu0
    %v694 = vadd.f32 %v416, %v693
    %v695 = vpop.f32.mrf.mxu0
    %696 = vmatprep.mubr.bf16.mxu0 %v478
    %697 = vmatmul.mubr.bf16.gmra.mxu0 %v477
    %v698 = vpop.f32.mrf.mxu0
    %v699 = vadd.f32 %v421, %v698
    %v700 = vpop.f32.mrf.mxu0
    %v701 = vpop.f32.mrf.mxu0
    %v702 = vadd.f32 %v426, %v701
    %v703 = vpop.f32.mrf.mxu0
    %704 = vdwg.mxu0
    %705 = vmatprep.subr.bf16.mxu0 0
    %706 = vmatpush1.bf16.msra.mxu0 0
    %707 = vmatprep.subr.bf16.mxu0 0
    %708 = vmatpush1.bf16.msra.mxu0 %v638
    %709 = vmatprep.subr.bf16.mxu0 0
    %710 = vmatpush1.bf16.msra.mxu0 %v599
    %711 = vmatprep.subr.bf16.mxu0 0
    %712 = vmatpush1.bf16.msra.mxu0 %v598
    %713 = vmatprep.subr.bf16.mxu0 0
    %714 = vmatpush1.bf16.msra.mxu0 %v597
    %715 = vmatprep.subr.bf16.mxu0 0
    %716 = vmatpush1.bf16.msra.mxu0 %v596
    %717 = vmatprep.subr.bf16.mxu0 0
    %718 = vmatpush1.bf16.msra.mxu0 %v595
    %719 = vmatprep.subr.bf16.mxu0 0
    %720 = vmatpush1.bf16.msra.mxu0 %v594
    %721 = vmatprep.subr.bf16.mxu0 0
    %722 = vmatpush2.bf16.msra.mxu0 0
    %723 = vmatprep.subr.bf16.mxu0 0
    %724 = vmatpush2.bf16.msra.mxu0 0
    %725 = vmatprep.subr.bf16.mxu0 0
    %726 = vmatpush2.bf16.msra.mxu0 0
    %727 = vmatprep.subr.bf16.mxu0 0
    %728 = vmatpush2.bf16.msra.mxu0 0
    %729 = vmatprep.subr.bf16.mxu0 0
    %730 = vmatpush2.bf16.msra.mxu0 0
    %731 = vmatprep.subr.bf16.mxu0 0
    %732 = vmatpush2.bf16.msra.mxu0 0
    %733 = vmatprep.subr.bf16.mxu0 0
    %734 = vmatpush2.bf16.msra.mxu0 0
    %735 = vmatprep.subr.bf16.mxu0 0
    %736 = vmatpush2.bf16.msra.mxu0 0
    %737 = vmatprep.mubr.bf16.mxu0 0
    %738 = vmatmul.mubr.bf16.gmra.mxu0 %v625
    %v739 = vpop.f32.mrf.mxu0
    %v740 = vadd.f32 %v675, %v739
    %v741 = vpop.f32.mrf.mxu0
    %v742 = vpop.f32.mrf.mxu0
    %v743 = vadd.f32 %v678, %v742
    %v744 = vpop.f32.mrf.mxu0
    %745 = vmatprep.mubr.bf16.mxu0 0
    %746 = vmatmul.mubr.bf16.gmra.mxu0 %v628
    %v747 = vpop.f32.mrf.mxu0
    %v748 = vadd.f32 %v683, %v747
    %v749 = vpop.f32.mrf.mxu0
    %v750 = vpop.f32.mrf.mxu0
    %v751 = vadd.f32 %v686, %v750
    %v752 = vpop.f32.mrf.mxu0
    %753 = vmatprep.mubr.bf16.mxu0 0
    %754 = vmatmul.mubr.bf16.gmra.mxu0 %v631
    %v755 = vpop.f32.mrf.mxu0
    %v756 = vadd.f32 %v691, %v755
    %v757 = vpop.f32.mrf.mxu0
    %v758 = vpop.f32.mrf.mxu0
    %v759 = vadd.f32 %v694, %v758
    %v760 = vpop.f32.mrf.mxu0
    %761 = vmatprep.mubr.bf16.mxu0 0
    %762 = vmatmul.mubr.bf16.gmra.mxu0 %v634
    %v763 = vpop.f32.mrf.mxu0
    %v764 = vadd.f32 %v699, %v763
    %v765 = vpop.f32.mrf.mxu0
    %v766 = vpop.f32.mrf.mxu0
    %v767 = vadd.f32 %v702, %v766
    %v768 = vpop.f32.mrf.mxu0
    %769 = vdwg.mxu0
    %v770 = vld [vmem:[%s9] sm:$0xff]
    %v771 = vld [vmem:[%s9 + $0x8] sm:$0xff]
    %v772 = vld [vmem:[%s9 + $0x10] sm:$0xff]
    %v773 = vld [vmem:[%s9 + $0x18] sm:$0xff]
    %v774 = vld [vmem:[%s9 + $0x20] sm:$0xff]
    %v775 = vld [vmem:[%s9 + $0x28] sm:$0xff]
    %v776 = vld [vmem:[%s9 + $0x30] sm:$0xff]
    %v777 = vld [vmem:[%s9 + $0x38] sm:$0xff]
    %v778 = vld [vmem:[%s10] sm:$0xff]
    %v779 = vld [vmem:[%s10 + $0x8] sm:$0xff]
    %v780 = vld [vmem:[%s10 + $0x10] sm:$0xf]
    %vm781 = vcmask 162816
    %v783 = vsel %vm781, %v315, 0
    %v786 = vsel %vm781, %v316, 0
    %v789 = vsel %vm781, %v317, 0
    %v792 = vsel %vm781, %v318, 0
    %v795 = vsel %vm636, %v780, 0
    %797 = vmatprep.subr.mxu0 0.0
    %798 = vmatpush1.msra.mxu0 0.0
    %799 = vmatprep.subr.mxu0 0.0
    %800 = vmatpush1.msra.mxu0 0.0
    %801 = vmatprep.subr.mxu0 0.0
    %802 = vmatpush1.msra.mxu0 0.0
    %803 = vmatprep.subr.mxu0 0.0
    %804 = vmatpush1.msra.mxu0 0.0
    %805 = vmatprep.subr.mxu0 0.0
    %806 = vmatpush1.msra.mxu0 0.0
    %807 = vmatprep.subr.mxu0 0.0
    %808 = vmatpush1.msra.mxu0 0.0
    %809 = vmatprep.subr.mxu0 0.0
    %810 = vmatpush1.msra.mxu0 0.0
    %811 = vmatprep.subr.mxu0 0.0
    %812 = vmatpush1.msra.mxu0 0.0
    %813 = vmatprep.subr.mxu0 0.0
    %814 = vmatpush1.msra.mxu0 0.0
    %815 = vmatprep.subr.mxu0 0.0
    %816 = vmatpush1.msra.mxu0 0.0
    %817 = vmatprep.subr.mxu0 0.0
    %818 = vmatpush1.msra.mxu0 0.0
    %819 = vmatprep.subr.mxu0 0.0
    %820 = vmatpush1.msra.mxu0 0.0
    %821 = vmatprep.subr.mxu0 0.0
    %822 = vmatpush1.msra.mxu0 0.0
    %823 = vmatprep.subr.mxu0 0.0
    %824 = vmatpush1.msra.mxu0 %v795
    %825 = vmatprep.subr.mxu0 0.0
    %826 = vmatpush1.msra.mxu0 %v779
    %827 = vmatprep.subr.mxu0 0.0
    %828 = vmatpush1.msra.mxu0 %v778
    %829 = vmatprep.subr.mxu0 0.0
    %830 = vmatpush2.msra.mxu0 0.0
    %831 = vmatprep.subr.mxu0 0.0
    %832 = vmatpush2.msra.mxu0 0.0
    %833 = vmatprep.subr.mxu0 0.0
    %834 = vmatpush2.msra.mxu0 0.0
    %835 = vmatprep.subr.mxu0 0.0
    %836 = vmatpush2.msra.mxu0 0.0
    %837 = vmatprep.subr.mxu0 0.0
    %838 = vmatpush2.msra.mxu0 0.0
    %839 = vmatprep.subr.mxu0 0.0
    %840 = vmatpush2.msra.mxu0 0.0
    %841 = vmatprep.subr.mxu0 0.0
    %842 = vmatpush2.msra.mxu0 0.0
    %843 = vmatprep.subr.mxu0 0.0
    %844 = vmatpush2.msra.mxu0 0.0
    %845 = vmatprep.subr.mxu0 0.0
    %846 = vmatpush2.msra.mxu0 0.0
    %847 = vmatprep.subr.mxu0 0.0
    %848 = vmatpush2.msra.mxu0 0.0
    %849 = vmatprep.subr.mxu0 0.0
    %850 = vmatpush2.msra.mxu0 0.0
    %851 = vmatprep.subr.mxu0 0.0
    %852 = vmatpush2.msra.mxu0 0.0
    %853 = vmatprep.subr.mxu0 0.0
    %854 = vmatpush2.msra.mxu0 0.0
    %855 = vmatprep.subr.mxu0 0.0
    %856 = vmatpush2.msra.mxu0 0.0
    %857 = vmatprep.subr.mxu0 0.0
    %858 = vmatpush2.msra.mxu0 0.0
    %859 = vmatprep.subr.mxu0 0.0
    %860 = vmatpush2.msra.mxu0 0.0
    %861 = vmatprep.mubr.f32.mxu0 0.0
    %862 = vmatmul.mubr.f32.gmra.mxu0 %v783
    %v863 = vpop.f32.mrf.mxu0
    %v864 = vadd.f32 0.0, %v863
    %v865 = vpop.f32.mrf.mxu0
    %866 = vmatprep.mubr.f32.mxu0 0.0
    %867 = vmatmul.mubr.f32.gmra.mxu0 %v786
    %v868 = vpop.f32.mrf.mxu0
    %v869 = vadd.f32 0.0, %v868
    %v870 = vpop.f32.mrf.mxu0
    %871 = vmatprep.mubr.f32.mxu0 0.0
    %872 = vmatmul.mubr.f32.gmra.mxu0 %v789
    %v873 = vpop.f32.mrf.mxu0
    %v874 = vadd.f32 0.0, %v873
    %v875 = vpop.f32.mrf.mxu0
    %876 = vmatprep.mubr.f32.mxu0 0.0
    %877 = vmatmul.mubr.f32.gmra.mxu0 %v792
    %v878 = vpop.f32.mrf.mxu0
    %v879 = vadd.f32 0.0, %v878
    %v880 = vpop.f32.mrf.mxu0
    %881 = vdwg.mxu0
    %vm882 = vcmask 261120
    %v884 = vsel %vm882, %v770, 0
    %v887 = vsel %vm882, %v771, 0
    %v890 = vsel %vm882, %v772, 0
    %v893 = vsel %vm882, %v773, 0
    %v896 = vsel %vm882, %v774, 0
    %v899 = vsel %vm882, %v775, 0
    %v902 = vsel %vm882, %v776, 0
    %v905 = vsel %vm882, %v777, 0
    %907 = vmatprep.subr.mxu0 0.0
    %908 = vmatpush1.msra.mxu0 0.0
    %909 = vmatprep.subr.mxu0 0.0
    %910 = vmatpush1.msra.mxu0 0.0
    %911 = vmatprep.subr.mxu0 0.0
    %912 = vmatpush1.msra.mxu0 0.0
    %913 = vmatprep.subr.mxu0 0.0
    %914 = vmatpush1.msra.mxu0 0.0
    %915 = vmatprep.subr.mxu0 0.0
    %916 = vmatpush1.msra.mxu0 0.0
    %917 = vmatprep.subr.mxu0 0.0
    %918 = vmatpush1.msra.mxu0 0.0
    %919 = vmatprep.subr.mxu0 0.0
    %920 = vmatpush1.msra.mxu0 0.0
    %921 = vmatprep.subr.mxu0 0.0
    %922 = vmatpush1.msra.mxu0 0.0
    %923 = vmatprep.subr.mxu0 0.0
    %924 = vmatpush1.msra.mxu0 0.0
    %925 = vmatprep.subr.mxu0 0.0
    %926 = vmatpush1.msra.mxu0 0.0
    %927 = vmatprep.subr.mxu0 0.0
    %928 = vmatpush1.msra.mxu0 0.0
    %929 = vmatprep.subr.mxu0 0.0
    %930 = vmatpush1.msra.mxu0 0.0
    %931 = vmatprep.subr.mxu0 0.0
    %932 = vmatpush1.msra.mxu0 %v879
    %933 = vmatprep.subr.mxu0 0.0
    %934 = vmatpush1.msra.mxu0 %v874
    %935 = vmatprep.subr.mxu0 0.0
    %936 = vmatpush1.msra.mxu0 %v869
    %937 = vmatprep.subr.mxu0 0.0
    %938 = vmatpush1.msra.mxu0 %v864
    %939 = vmatprep.subr.mxu0 0.0
    %940 = vmatpush2.msra.mxu0 0.0
    %941 = vmatprep.subr.mxu0 0.0
    %942 = vmatpush2.msra.mxu0 0.0
    %943 = vmatprep.subr.mxu0 0.0
    %944 = vmatpush2.msra.mxu0 0.0
    %945 = vmatprep.subr.mxu0 0.0
    %946 = vmatpush2.msra.mxu0 0.0
    %947 = vmatprep.subr.mxu0 0.0
    %948 = vmatpush2.msra.mxu0 0.0
    %949 = vmatprep.subr.mxu0 0.0
    %950 = vmatpush2.msra.mxu0 0.0
    %951 = vmatprep.subr.mxu0 0.0
    %952 = vmatpush2.msra.mxu0 0.0
    %953 = vmatprep.subr.mxu0 0.0
    %954 = vmatpush2.msra.mxu0 0.0
    %955 = vmatprep.subr.mxu0 0.0
    %956 = vmatpush2.msra.mxu0 0.0
    %957 = vmatprep.subr.mxu0 0.0
    %958 = vmatpush2.msra.mxu0 0.0
    %959 = vmatprep.subr.mxu0 0.0
    %960 = vmatpush2.msra.mxu0 0.0
    %961 = vmatprep.subr.mxu0 0.0
    %962 = vmatpush2.msra.mxu0 0.0
    %963 = vmatprep.subr.mxu0 0.0
    %964 = vmatpush2.msra.mxu0 0.0
    %965 = vmatprep.subr.mxu0 0.0
    %966 = vmatpush2.msra.mxu0 0.0
    %967 = vmatprep.subr.mxu0 0.0
    %968 = vmatpush2.msra.mxu0 0.0
    %969 = vmatprep.subr.mxu0 0.0
    %970 = vmatpush2.msra.mxu0 0.0
    %971 = vmatprep.mubr.f32.mxu0 0.0
    %972 = vmatmul.mubr.f32.gmra.mxu0 %v884
    %v973 = vpop.f32.mrf.mxu0
    %v974 = vadd.f32 0.0, %v973
    %v975 = vpop.f32.mrf.mxu0
    %976 = vmatprep.mubr.f32.mxu0 0.0
    %977 = vmatmul.mubr.f32.gmra.mxu0 %v887
    %v978 = vpop.f32.mrf.mxu0
    %v979 = vadd.f32 0.0, %v978
    %v980 = vpop.f32.mrf.mxu0
    %981 = vmatprep.mubr.f32.mxu0 0.0
    %982 = vmatmul.mubr.f32.gmra.mxu0 %v890
    %v983 = vpop.f32.mrf.mxu0
    %v984 = vadd.f32 0.0, %v983
    %v985 = vpop.f32.mrf.mxu0
    %986 = vmatprep.mubr.f32.mxu0 0.0
    %987 = vmatmul.mubr.f32.gmra.mxu0 %v893
    %v988 = vpop.f32.mrf.mxu0
    %v989 = vadd.f32 0.0, %v988
    %v990 = vpop.f32.mrf.mxu0
    %991 = vmatprep.mubr.f32.mxu0 0.0
    %992 = vmatmul.mubr.f32.gmra.mxu0 %v896
    %v993 = vpop.f32.mrf.mxu0
    %v994 = vadd.f32 0.0, %v993
    %v995 = vpop.f32.mrf.mxu0
    %996 = vmatprep.mubr.f32.mxu0 0.0
    %997 = vmatmul.mubr.f32.gmra.mxu0 %v899
    %v998 = vpop.f32.mrf.mxu0
    %v999 = vadd.f32 0.0, %v998
    %v1000 = vpop.f32.mrf.mxu0
    %1001 = vmatprep.mubr.f32.mxu0 0.0
    %1002 = vmatmul.mubr.f32.gmra.mxu0 %v902
    %v1003 = vpop.f32.mrf.mxu0
    %v1004 = vadd.f32 0.0, %v1003
    %v1005 = vpop.f32.mrf.mxu0
    %1006 = vmatprep.mubr.f32.mxu0 0.0
    %1007 = vmatmul.mubr.f32.gmra.mxu0 %v905
    %v1008 = vpop.f32.mrf.mxu0
    %v1009 = vadd.f32 0.0, %v1008
    %v1010 = vpop.f32.mrf.mxu0
    %1011 = vdwg.mxu0
    %v1012 = vpack.c.bf16 %v979, %v974
    %v1013 = vpack.c.bf16 %v989, %v984
    %v1014 = vpack.c.bf16 %v999, %v994
    %v1015 = vpack.c.bf16 %v1009, %v1004
    %1020 = vrot.lane.b32.xlu0 %v1012, 106
    %v1021 = vpop.permute.xlu0 %1020
    %1022 = vrot.lane.b32.xlu0 %v1013, 106
    %v1023 = vpop.permute.xlu0 %1022
    %1024 = vrot.lane.b32.xlu0 %v1014, 106
    %v1025 = vpop.permute.xlu0 %1024
    %1026 = vrot.lane.b32.xlu0 %v1015, 106
    %v1027 = vpop.permute.xlu0 %1026
    %1028 = vrot.lane.b32.xlu0 %v1012, 2
    %v1029 = vpop.permute.xlu0 %1028
    %1030 = vrot.lane.b32.xlu0 %v1013, 2
    %v1031 = vpop.permute.xlu0 %1030
    %1032 = vrot.lane.b32.xlu0 %v1014, 2
    %v1033 = vpop.permute.xlu0 %1032
    %1034 = vrot.lane.b32.xlu0 %v1015, 2
    %v1035 = vpop.permute.xlu0 %1034
    %vm1036 = vcmask 15360
    %v1039 = vsel %vm1036, %v1021, %v1029
    %v1043 = vsel %vm1036, %v1023, %v1031
    %v1047 = vsel %vm1036, %v1025, %v1033
    %v1051 = vsel %vm1036, %v1027, %v1035
    %1053 = vrot.lane.b32.xlu0 %v1012, 105
    %v1054 = vpop.permute.xlu0 %1053
    %1055 = vrot.lane.b32.xlu0 %v1013, 105
    %v1056 = vpop.permute.xlu0 %1055
    %1057 = vrot.lane.b32.xlu0 %v1014, 105
    %v1058 = vpop.permute.xlu0 %1057
    %1059 = vrot.lane.b32.xlu0 %v1015, 105
    %v1060 = vpop.permute.xlu0 %1059
    %1061 = vrot.lane.b32.xlu0 %v1012, 1
    %v1062 = vpop.permute.xlu0 %1061
    %1063 = vrot.lane.b32.xlu0 %v1013, 1
    %v1064 = vpop.permute.xlu0 %1063
    %1065 = vrot.lane.b32.xlu0 %v1014, 1
    %v1066 = vpop.permute.xlu0 %1065
    %1067 = vrot.lane.b32.xlu0 %v1015, 1
    %v1068 = vpop.permute.xlu0 %1067
    %vm1069 = vcmask 7168
    %v1072 = vsel %vm1069, %v1054, %v1062
    %v1076 = vsel %vm1069, %v1056, %v1064
    %v1080 = vsel %vm1069, %v1058, %v1066
    %v1084 = vsel %vm1069, %v1060, %v1068
    %1086 = vrot.lane.b32.xlu0 %v1012, 127
    %v1087 = vpop.permute.xlu0 %1086
    %1088 = vrot.lane.b32.xlu0 %v1013, 127
    %v1089 = vpop.permute.xlu0 %1088
    %1090 = vrot.lane.b32.xlu0 %v1014, 127
    %v1091 = vpop.permute.xlu0 %1090
    %1092 = vrot.lane.b32.xlu0 %v1015, 127
    %v1093 = vpop.permute.xlu0 %1092
    %1094 = vrot.lane.b32.xlu0 %v1012, 23
    %v1095 = vpop.permute.xlu0 %1094
    %1096 = vrot.lane.b32.xlu0 %v1013, 23
    %v1097 = vpop.permute.xlu0 %1096
    %1098 = vrot.lane.b32.xlu0 %v1014, 23
    %v1099 = vpop.permute.xlu0 %1098
    %1100 = vrot.lane.b32.xlu0 %v1015, 23
    %v1101 = vpop.permute.xlu0 %1100
    %vm1102 = vcmask 187392
    %v1105 = vsel %vm1102, %v1087, %v1095
    %v1109 = vsel %vm1102, %v1089, %v1097
    %v1113 = vsel %vm1102, %v1091, %v1099
    %v1117 = vsel %vm1102, %v1093, %v1101
    %1119 = vrot.lane.b32.xlu0 %v1012, 126
    %v1120 = vpop.permute.xlu0 %1119
    %1121 = vrot.lane.b32.xlu0 %v1013, 126
    %v1122 = vpop.permute.xlu0 %1121
    %1123 = vrot.lane.b32.xlu0 %v1014, 126
    %v1124 = vpop.permute.xlu0 %1123
    %1125 = vrot.lane.b32.xlu0 %v1015, 126
    %v1126 = vpop.permute.xlu0 %1125
    %1127 = vrot.lane.b32.xlu0 %v1012, 22
    %v1128 = vpop.permute.xlu0 %1127
    %1129 = vrot.lane.b32.xlu0 %v1013, 22
    %v1130 = vpop.permute.xlu0 %1129
    %1131 = vrot.lane.b32.xlu0 %v1014, 22
    %v1132 = vpop.permute.xlu0 %1131
    %1133 = vrot.lane.b32.xlu0 %v1015, 22
    %v1134 = vpop.permute.xlu0 %1133
    %vm1135 = vcmask 179200
    %v1138 = vsel %vm1135, %v1120, %v1128
    %v1142 = vsel %vm1135, %v1122, %v1130
    %v1146 = vsel %vm1135, %v1124, %v1132
    %v1150 = vsel %vm1135, %v1126, %v1134
    %v1152 = vld [vmem:[%s6] sm:$0xff]
    %v1153 = vld [vmem:[%s6 + $0x8] sm:$0xf]
    %v1154 = vld [vmem:[%s6 + $0xc] sm:$0xff]
    %v1155 = vld [vmem:[%s6 + $0x14] sm:$0xf]
    %v1156 = vld [vmem:[%s6 + $0x18] sm:$0xff]
    %v1157 = vld [vmem:[%s6 + $0x20] sm:$0xf]
    %v1158 = vld [vmem:[%s6 + $0x24] sm:$0xff]
    %v1159 = vld [vmem:[%s6 + $0x2c] sm:$0xf]
    %v1160 = vld [vmem:[%s6 + $0x30] sm:$0xff]
    %v1161 = vld [vmem:[%s6 + $0x38] sm:$0xf]
    %v1162 = vld [vmem:[%s6 + $0x3c] sm:$0xff]
    %v1163 = vld [vmem:[%s6 + $0x44] sm:$0xf]
    %v1164 = vld [vmem:[%s6 + $0x48] sm:$0xff]
    %v1165 = vld [vmem:[%s6 + $0x50] sm:$0xf]
    %v1166 = vld [vmem:[%s6 + $0x54] sm:$0xff]
    %v1167 = vld [vmem:[%s6 + $0x5c] sm:$0xf]
    %v1184 = vunpack.c.l.b16 %v1152
    %v1185 = vunpack.c.h.b16 %v1152
    %v1186 = vunpack.c.l.b16 %v1153
    %v1187 = vunpack.c.l.b16 %v1154
    %v1188 = vunpack.c.h.b16 %v1154
    %v1189 = vunpack.c.l.b16 %v1155
    %v1190 = vunpack.c.l.b16 %v1156
    %v1191 = vunpack.c.h.b16 %v1156
    %v1192 = vunpack.c.l.b16 %v1157
    %v1193 = vunpack.c.l.b16 %v1158
    %v1194 = vunpack.c.h.b16 %v1158
    %v1195 = vunpack.c.l.b16 %v1159
    %v1196 = vunpack.c.l.b16 %v1160
    %v1197 = vunpack.c.h.b16 %v1160
    %v1198 = vunpack.c.l.b16 %v1161
    %v1199 = vunpack.c.l.b16 %v1162
    %v1200 = vunpack.c.h.b16 %v1162
    %v1201 = vunpack.c.l.b16 %v1163
    %v1202 = vunpack.c.l.b16 %v1164
    %v1203 = vunpack.c.h.b16 %v1164
    %v1204 = vunpack.c.l.b16 %v1165
    %v1205 = vunpack.c.l.b16 %v1166
    %v1206 = vunpack.c.h.b16 %v1166
    %v1207 = vunpack.c.l.b16 %v1167
    %v1208 = vpack.c.b16 %v1187, %v1184
    %v1209 = vpack.c.b16 %v1188, %v1185
    %v1210 = vpack.c.b16 %v1189, %v1186
    %v1211 = vpack.c.b16 %v1193, %v1190
    %v1212 = vpack.c.b16 %v1194, %v1191
    %v1213 = vpack.c.b16 %v1195, %v1192
    %v1214 = vpack.c.b16 %v1199, %v1196
    %v1215 = vpack.c.b16 %v1200, %v1197
    %v1216 = vpack.c.b16 %v1201, %v1198
    %v1217 = vpack.c.b16 %v1205, %v1202
    %v1218 = vpack.c.b16 %v1206, %v1203
    %v1219 = vpack.c.b16 %v1207, %v1204
    %vm1228 = vcmask 523264
    %v1230 = vsel %vm1228, %v1210, 0
    %v1233 = vsel %vm1228, %v1213, 0
    %v1236 = vsel %vm1228, %v1216, 0
    %v1239 = vsel %vm1228, %v1219, 0
    %1241 = vmatprep.subr.bf16.mxu0 0
    %1242 = vmatpush1.bf16.msra.mxu0 %v1084
    %1243 = vmatprep.subr.bf16.mxu0 0
    %1244 = vmatpush1.bf16.msra.mxu0 %v1080
    %1245 = vmatprep.subr.bf16.mxu0 0
    %1246 = vmatpush1.bf16.msra.mxu0 %v1076
    %1247 = vmatprep.subr.bf16.mxu0 0
    %1248 = vmatpush1.bf16.msra.mxu0 %v1072
    %1249 = vmatprep.subr.bf16.mxu0 0
    %1250 = vmatpush1.bf16.msra.mxu0 %v1051
    %1251 = vmatprep.subr.bf16.mxu0 0
    %1252 = vmatpush1.bf16.msra.mxu0 %v1047
    %1253 = vmatprep.subr.bf16.mxu0 0
    %1254 = vmatpush1.bf16.msra.mxu0 %v1043
    %1255 = vmatprep.subr.bf16.mxu0 0
    %1256 = vmatpush1.bf16.msra.mxu0 %v1039
    %1257 = vmatprep.subr.bf16.mxu0 0
    %1258 = vmatpush2.bf16.msra.mxu0 %v1117
    %1259 = vmatprep.subr.bf16.mxu0 0
    %1260 = vmatpush2.bf16.msra.mxu0 %v1113
    %1261 = vmatprep.subr.bf16.mxu0 0
    %1262 = vmatpush2.bf16.msra.mxu0 %v1109
    %1263 = vmatprep.subr.bf16.mxu0 0
    %1264 = vmatpush2.bf16.msra.mxu0 %v1105
    %1265 = vmatprep.subr.bf16.mxu0 0
    %1266 = vmatpush2.bf16.msra.mxu0 %v1015
    %1267 = vmatprep.subr.bf16.mxu0 0
    %1268 = vmatpush2.bf16.msra.mxu0 %v1014
    %1269 = vmatprep.subr.bf16.mxu0 0
    %1270 = vmatpush2.bf16.msra.mxu0 %v1013
    %1271 = vmatprep.subr.bf16.mxu0 0
    %1272 = vmatpush2.bf16.msra.mxu0 %v1012
    %1273 = vmatprep.mubr.bf16.mxu0 %v1209
    %1274 = vmatmul.mubr.bf16.gmra.mxu0 %v1208
    %v1275 = vpop.f32.mrf.mxu0
    %v1276 = vadd.f32 0.0, %v1275
    %v1277 = vpop.f32.mrf.mxu0
    %v1278 = vpop.f32.mrf.mxu0
    %v1279 = vadd.f32 0.0, %v1278
    %v1280 = vpop.f32.mrf.mxu0
    %1281 = vmatprep.mubr.bf16.mxu0 %v1212
    %1282 = vmatmul.mubr.bf16.gmra.mxu0 %v1211
    %v1283 = vpop.f32.mrf.mxu0
    %v1284 = vadd.f32 0.0, %v1283
    %v1285 = vpop.f32.mrf.mxu0
    %v1286 = vpop.f32.mrf.mxu0
    %v1287 = vadd.f32 0.0, %v1286
    %v1288 = vpop.f32.mrf.mxu0
    %1289 = vmatprep.mubr.bf16.mxu0 %v1215
    %1290 = vmatmul.mubr.bf16.gmra.mxu0 %v1214
    %v1291 = vpop.f32.mrf.mxu0
    %v1292 = vadd.f32 0.0, %v1291
    %v1293 = vpop.f32.mrf.mxu0
    %v1294 = vpop.f32.mrf.mxu0
    %v1295 = vadd.f32 0.0, %v1294
    %v1296 = vpop.f32.mrf.mxu0
    %1297 = vmatprep.mubr.bf16.mxu0 %v1218
    %1298 = vmatmul.mubr.bf16.gmra.mxu0 %v1217
    %v1299 = vpop.f32.mrf.mxu0
    %v1300 = vadd.f32 0.0, %v1299
    %v1301 = vpop.f32.mrf.mxu0
    %v1302 = vpop.f32.mrf.mxu0
    %v1303 = vadd.f32 0.0, %v1302
    %v1304 = vpop.f32.mrf.mxu0
    %1305 = vdwg.mxu0
    %1306 = vmatprep.subr.bf16.mxu0 0
    %1307 = vmatpush1.bf16.msra.mxu0 0
    %1308 = vmatprep.subr.bf16.mxu0 0
    %1309 = vmatpush1.bf16.msra.mxu0 0
    %1310 = vmatprep.subr.bf16.mxu0 0
    %1311 = vmatpush1.bf16.msra.mxu0 0
    %1312 = vmatprep.subr.bf16.mxu0 0
    %1313 = vmatpush1.bf16.msra.mxu0 0
    %1314 = vmatprep.subr.bf16.mxu0 0
    %1315 = vmatpush1.bf16.msra.mxu0 %v1150
    %1316 = vmatprep.subr.bf16.mxu0 0
    %1317 = vmatpush1.bf16.msra.mxu0 %v1146
    %1318 = vmatprep.subr.bf16.mxu0 0
    %1319 = vmatpush1.bf16.msra.mxu0 %v1142
    %1320 = vmatprep.subr.bf16.mxu0 0
    %1321 = vmatpush1.bf16.msra.mxu0 %v1138
    %1322 = vmatprep.subr.bf16.mxu0 0
    %1323 = vmatpush2.bf16.msra.mxu0 0
    %1324 = vmatprep.subr.bf16.mxu0 0
    %1325 = vmatpush2.bf16.msra.mxu0 0
    %1326 = vmatprep.subr.bf16.mxu0 0
    %1327 = vmatpush2.bf16.msra.mxu0 0
    %1328 = vmatprep.subr.bf16.mxu0 0
    %1329 = vmatpush2.bf16.msra.mxu0 0
    %1330 = vmatprep.subr.bf16.mxu0 0
    %1331 = vmatpush2.bf16.msra.mxu0 0
    %1332 = vmatprep.subr.bf16.mxu0 0
    %1333 = vmatpush2.bf16.msra.mxu0 0
    %1334 = vmatprep.subr.bf16.mxu0 0
    %1335 = vmatpush2.bf16.msra.mxu0 0
    %1336 = vmatprep.subr.bf16.mxu0 0
    %1337 = vmatpush2.bf16.msra.mxu0 0
    %1338 = vmatprep.mubr.bf16.mxu0 0
    %1339 = vmatmul.mubr.bf16.gmra.mxu0 %v1230
    %v1340 = vpop.f32.mrf.mxu0
    %v1341 = vadd.f32 %v1276, %v1340
    %v1342 = vpop.f32.mrf.mxu0
    %v1343 = vpop.f32.mrf.mxu0
    %v1344 = vadd.f32 %v1279, %v1343
    %v1345 = vpop.f32.mrf.mxu0
    %1346 = vmatprep.mubr.bf16.mxu0 0
    %1347 = vmatmul.mubr.bf16.gmra.mxu0 %v1233
    %v1348 = vpop.f32.mrf.mxu0
    %v1349 = vadd.f32 %v1284, %v1348
    %v1350 = vpop.f32.mrf.mxu0
    %v1351 = vpop.f32.mrf.mxu0
    %v1352 = vadd.f32 %v1287, %v1351
    %v1353 = vpop.f32.mrf.mxu0
    %1354 = vmatprep.mubr.bf16.mxu0 0
    %1355 = vmatmul.mubr.bf16.gmra.mxu0 %v1236
    %v1356 = vpop.f32.mrf.mxu0
    %v1357 = vadd.f32 %v1292, %v1356
    %v1358 = vpop.f32.mrf.mxu0
    %v1359 = vpop.f32.mrf.mxu0
    %v1360 = vadd.f32 %v1295, %v1359
    %v1361 = vpop.f32.mrf.mxu0
    %1362 = vmatprep.mubr.bf16.mxu0 0
    %1363 = vmatmul.mubr.bf16.gmra.mxu0 %v1239
    %v1364 = vpop.f32.mrf.mxu0
    %v1365 = vadd.f32 %v1300, %v1364
    %v1366 = vpop.f32.mrf.mxu0
    %v1367 = vpop.f32.mrf.mxu0
    %v1368 = vadd.f32 %v1303, %v1367
    %v1369 = vpop.f32.mrf.mxu0
    %1370 = vdwg.mxu0
    %v1371 = vadd.f32 %v740, %v1341
    %v1372 = vadd.f32 %v743, %v1344
    %v1373 = vadd.f32 %v748, %v1349
    %v1374 = vadd.f32 %v751, %v1352
    %v1375 = vadd.f32 %v756, %v1357
    %v1376 = vadd.f32 %v759, %v1360
    %v1377 = vadd.f32 %v764, %v1365
    %v1378 = vadd.f32 %v767, %v1368
    %v1379 = vmax.f32 %v1371, 0.0
    %v1380 = vmax.f32 %v1372, 0.0
    %v1381 = vmax.f32 %v1373, 0.0
    %v1382 = vmax.f32 %v1374, 0.0
    %v1383 = vmax.f32 %v1375, 0.0
    %v1384 = vmax.f32 %v1376, 0.0
    %v1385 = vmax.f32 %v1377, 0.0
    %v1386 = vmax.f32 %v1378, 0.0
    %v1387 = vld [vmem:[%s12] sm:$0xff]
    %v1388 = vld [vmem:[%s12 + $0x8] sm:$0xff]
    %v1389 = vld [vmem:[%s12 + $0x10] sm:$0xff]
    %v1390 = vld [vmem:[%s12 + $0x18] sm:$0xff]
    %v1391 = vld [vmem:[%s12 + $0x20] sm:$0xff]
    %v1392 = vld [vmem:[%s12 + $0x28] sm:$0xff]
    %v1393 = vld [vmem:[%s12 + $0x30] sm:$0xff]
    %v1394 = vld [vmem:[%s12 + $0x38] sm:$0xff]
    %v1395 = vld [vmem:[%s12 + $0x40] sm:$0xff]
    %v1396 = vld [vmem:[%s12 + $0x48] sm:$0xff]
    %v1397 = vld [vmem:[%s12 + $0x50] sm:$0xff]
    %v1398 = vld [vmem:[%s12 + $0x58] sm:$0xff]
    %v1399 = vld [vmem:[%s12 + $0x60] sm:$0xff]
    %v1400 = vld [vmem:[%s12 + $0x68] sm:$0xff]
    %v1401 = vld [vmem:[%s12 + $0x70] sm:$0xff]
    %v1402 = vld [vmem:[%s12 + $0x78] sm:$0xff]
    %v1403 = vld [vmem:[%s12 + $0x80] sm:$0xff]
    %v1404 = vld [vmem:[%s12 + $0x88] sm:$0xff]
    %v1405 = vld [vmem:[%s12 + $0x90] sm:$0xff]
    %v1406 = vld [vmem:[%s12 + $0x98] sm:$0xff]
    %v1407 = vld [vmem:[%s12 + $0xa0] sm:$0xff]
    %v1408 = vld [vmem:[%s12 + $0xa8] sm:$0xff]
    %v1409 = vld [vmem:[%s12 + $0xb0] sm:$0xff]
    %v1410 = vld [vmem:[%s12 + $0xb8] sm:$0xff]
    %v1411 = vld [vmem:[%s12 + $0xc0] sm:$0xff]
    %v1412 = vld [vmem:[%s12 + $0xc8] sm:$0xff]
    %v1413 = vld [vmem:[%s12 + $0xd0] sm:$0xff]
    %v1414 = vld [vmem:[%s12 + $0xd8] sm:$0xff]
    %v1415 = vld [vmem:[%s12 + $0xe0] sm:$0xff]
    %v1416 = vld [vmem:[%s12 + $0xe8] sm:$0xff]
    %v1417 = vld [vmem:[%s12 + $0xf0] sm:$0xff]
    %v1418 = vld [vmem:[%s12 + $0xf8] sm:$0xff]
    %v1419 = vld [vmem:[%s2] sm:$0xf]
    %v1420 = vld [vmem:[%s2 + $0x4] sm:$0xf]
    %v1421 = vld [vmem:[%s2 + $0x8] sm:$0xf]
    %v1422 = vld [vmem:[%s2 + $0xc] sm:$0xf]
    %v1423 = vld [vmem:[%s2 + $0x10] sm:$0xf]
    %v1424 = vld [vmem:[%s2 + $0x14] sm:$0xf]
    %v1425 = vld [vmem:[%s2 + $0x18] sm:$0xf]
    %v1426 = vld [vmem:[%s2 + $0x1c] sm:$0xf]
    %v1427 = vld [vmem:[%s2 + $0x20] sm:$0xf]
    %v1428 = vld [vmem:[%s2 + $0x24] sm:$0xf]
    %v1429 = vld [vmem:[%s2 + $0x28] sm:$0xf]
    %v1430 = vld [vmem:[%s2 + $0x2c] sm:$0xf]
    %v1431 = vld [vmem:[%s2 + $0x30] sm:$0xf]
    %v1432 = vld [vmem:[%s2 + $0x34] sm:$0xf]
    %v1433 = vld [vmem:[%s2 + $0x38] sm:$0xf]
    %v1434 = vld [vmem:[%s2 + $0x3c] sm:$0xf]
    %v1435 = vld [vmem:[%s2 + $0x40] sm:$0xf]
    %v1436 = vld [vmem:[%s2 + $0x44] sm:$0xf]
    %v1437 = vld [vmem:[%s2 + $0x48] sm:$0xf]
    %v1438 = vld [vmem:[%s2 + $0x4c] sm:$0xf]
    %v1439 = vld [vmem:[%s2 + $0x50] sm:$0xf]
    %v1440 = vld [vmem:[%s2 + $0x54] sm:$0xf]
    %v1441 = vld [vmem:[%s2 + $0x58] sm:$0xf]
    %v1442 = vld [vmem:[%s2 + $0x5c] sm:$0xf]
    %v1443 = vld [vmem:[%s2 + $0x60] sm:$0xf]
    %v1444 = vld [vmem:[%s2 + $0x64] sm:$0xf]
    %v1445 = vld [vmem:[%s2 + $0x68] sm:$0xf]
    %v1446 = vld [vmem:[%s2 + $0x6c] sm:$0xf]
    %v1447 = vld [vmem:[%s2 + $0x70] sm:$0xf]
    %v1448 = vld [vmem:[%s2 + $0x74] sm:$0xf]
    %v1449 = vld [vmem:[%s2 + $0x78] sm:$0xf]
    %v1450 = vld [vmem:[%s2 + $0x7c] sm:$0xf]
    %v1451 = vld [vmem:[%s2 + $0x80] sm:$0xf]
    %v1452 = vld [vmem:[%s2 + $0x84] sm:$0xf]
    %v1453 = vld [vmem:[%s2 + $0x88] sm:$0xf]
    %v1454 = vld [vmem:[%s2 + $0x8c] sm:$0xf]
    %v1455 = vld [vmem:[%s2 + $0x90] sm:$0xf]
    %v1456 = vld [vmem:[%s2 + $0x94] sm:$0xf]
    %v1457 = vld [vmem:[%s2 + $0x98] sm:$0xf]
    %v1458 = vld [vmem:[%s2 + $0x9c] sm:$0xf]
    %v1459 = vld [vmem:[%s2 + $0xa0] sm:$0xf]
    %v1460 = vld [vmem:[%s2 + $0xa4] sm:$0xf]
    %v1461 = vld [vmem:[%s2 + $0xa8] sm:$0xf]
    %v1462 = vld [vmem:[%s2 + $0xac] sm:$0xf]
    %v1463 = vld [vmem:[%s2 + $0xb0] sm:$0xf]
    %v1464 = vld [vmem:[%s2 + $0xb4] sm:$0xf]
    %v1465 = vld [vmem:[%s2 + $0xb8] sm:$0xf]
    %v1466 = vld [vmem:[%s2 + $0xbc] sm:$0xf]
    %v1467 = vld [vmem:[%s2 + $0xc0] sm:$0xf]
    %v1468 = vld [vmem:[%s2 + $0xc4] sm:$0xf]
    %v1469 = vld [vmem:[%s2 + $0xc8] sm:$0xf]
    %v1470 = vld [vmem:[%s2 + $0xcc] sm:$0xf]
    %v1471 = vld [vmem:[%s2 + $0xd0] sm:$0xf]
    %v1472 = vld [vmem:[%s2 + $0xd4] sm:$0xf]
    %v1473 = vld [vmem:[%s13] sm:$0xff]
    %v1474 = vld [vmem:[%s13 + $0x8] sm:$0xff]
    %v1475 = vld [vmem:[%s13 + $0x10] sm:$0xff]
    %v1476 = vld [vmem:[%s13 + $0x18] sm:$0xff]
    %v1477 = vld [vmem:[%s13 + $0x20] sm:$0xff]
    %v1478 = vld [vmem:[%s13 + $0x28] sm:$0xff]
    %v1479 = vld [vmem:[%s13 + $0x30] sm:$0xff]
    %v1480 = vld [vmem:[%s13 + $0x38] sm:$0xff]
    %v1481 = vld [vmem:[%s13 + $0x40] sm:$0xff]
    %v1482 = vld [vmem:[%s13 + $0x48] sm:$0xff]
    %v1483 = vld [vmem:[%s13 + $0x50] sm:$0xff]
    %v1484 = vld [vmem:[%s13 + $0x58] sm:$0xff]
    %v1485 = vld [vmem:[%s13 + $0x60] sm:$0xff]
    %v1486 = vld [vmem:[%s13 + $0x68] sm:$0xff]
    %v1487 = vld [vmem:[%s13 + $0x70] sm:$0xff]
    %v1488 = vld [vmem:[%s13 + $0x78] sm:$0xff]
    %1490 = vset.pattern.permute.xlu0 0
    %1491 = vperm.xlu0 %1490, %v1473
    %v1492 = vpop.permute.xlu0 %1491
    %1495 = vset.pattern.permute.xlu0 0
    %1496 = vperm.xlu0 %1495, %v1474
    %v1497 = vpop.permute.xlu0 %1496
    %1500 = vset.pattern.permute.xlu0 0
    %1501 = vperm.xlu0 %1500, %v1475
    %v1502 = vpop.permute.xlu0 %1501
    %1505 = vset.pattern.permute.xlu0 0
    %1506 = vperm.xlu0 %1505, %v1476
    %v1507 = vpop.permute.xlu0 %1506
    %1510 = vset.pattern.permute.xlu0 0
    %1511 = vperm.xlu0 %1510, %v1477
    %v1512 = vpop.permute.xlu0 %1511
    %1515 = vset.pattern.permute.xlu0 0
    %1516 = vperm.xlu0 %1515, %v1478
    %v1517 = vpop.permute.xlu0 %1516
    %1520 = vset.pattern.permute.xlu0 0
    %1521 = vperm.xlu0 %1520, %v1479
    %v1522 = vpop.permute.xlu0 %1521
    %1525 = vset.pattern.permute.xlu0 0
    %1526 = vperm.xlu0 %1525, %v1480
    %v1527 = vpop.permute.xlu0 %1526
    %1530 = vset.pattern.permute.xlu0 0
    %1531 = vperm.xlu0 %1530, %v1481
    %v1532 = vpop.permute.xlu0 %1531
    %1535 = vset.pattern.permute.xlu0 0
    %1536 = vperm.xlu0 %1535, %v1482
    %v1537 = vpop.permute.xlu0 %1536
    %1540 = vset.pattern.permute.xlu0 0
    %1541 = vperm.xlu0 %1540, %v1483
    %v1542 = vpop.permute.xlu0 %1541
    %1545 = vset.pattern.permute.xlu0 0
    %1546 = vperm.xlu0 %1545, %v1484
    %v1547 = vpop.permute.xlu0 %1546
    %1550 = vset.pattern.permute.xlu0 0
    %1551 = vperm.xlu0 %1550, %v1485
    %v1552 = vpop.permute.xlu0 %1551
    %1555 = vset.pattern.permute.xlu0 0
    %1556 = vperm.xlu0 %1555, %v1486
    %v1557 = vpop.permute.xlu0 %1556
    %1560 = vset.pattern.permute.xlu0 0
    %1561 = vperm.xlu0 %1560, %v1487
    %v1562 = vpop.permute.xlu0 %1561
    %1565 = vset.pattern.permute.xlu0 0
    %1566 = vperm.xlu0 %1565, %v1488
    %v1567 = vpop.permute.xlu0 %1566
    %v1601 = vunpack.c.l.b16 %v1387
    %v1602 = vunpack.c.h.b16 %v1387
    %v1603 = vunpack.c.l.b16 %v1388
    %v1604 = vunpack.c.h.b16 %v1388
    %v1605 = vunpack.c.l.b16 %v1389
    %v1606 = vunpack.c.h.b16 %v1389
    %v1607 = vunpack.c.l.b16 %v1390
    %v1608 = vunpack.c.h.b16 %v1390
    %v1609 = vunpack.c.l.b16 %v1391
    %v1610 = vunpack.c.h.b16 %v1391
    %v1611 = vunpack.c.l.b16 %v1392
    %v1612 = vunpack.c.h.b16 %v1392
    %v1613 = vunpack.c.l.b16 %v1393
    %v1614 = vunpack.c.h.b16 %v1393
    %v1615 = vunpack.c.l.b16 %v1394
    %v1616 = vunpack.c.h.b16 %v1394
    %v1617 = vunpack.c.l.b16 %v1395
    %v1618 = vunpack.c.h.b16 %v1395
    %v1619 = vunpack.c.l.b16 %v1396
    %v1620 = vunpack.c.h.b16 %v1396
    %v1621 = vunpack.c.l.b16 %v1397
    %v1622 = vunpack.c.h.b16 %v1397
    %v1623 = vunpack.c.l.b16 %v1398
    %v1624 = vunpack.c.h.b16 %v1398
    %v1625 = vunpack.c.l.b16 %v1399
    %v1626 = vunpack.c.h.b16 %v1399
    %v1627 = vunpack.c.l.b16 %v1400
    %v1628 = vunpack.c.h.b16 %v1400
    %v1629 = vunpack.c.l.b16 %v1401
    %v1630 = vunpack.c.h.b16 %v1401
    %v1631 = vunpack.c.l.b16 %v1402
    %v1632 = vunpack.c.h.b16 %v1402
    %v1633 = vunpack.c.l.b16 %v1403
    %v1634 = vunpack.c.h.b16 %v1403
    %v1635 = vunpack.c.l.b16 %v1404
    %v1636 = vunpack.c.h.b16 %v1404
    %v1637 = vunpack.c.l.b16 %v1405
    %v1638 = vunpack.c.h.b16 %v1405
    %v1639 = vunpack.c.l.b16 %v1406
    %v1640 = vunpack.c.h.b16 %v1406
    %v1641 = vunpack.c.l.b16 %v1407
    %v1642 = vunpack.c.h.b16 %v1407
    %v1643 = vunpack.c.l.b16 %v1408
    %v1644 = vunpack.c.h.b16 %v1408
    %v1645 = vunpack.c.l.b16 %v1409
    %v1646 = vunpack.c.h.b16 %v1409
    %v1647 = vunpack.c.l.b16 %v1410
    %v1648 = vunpack.c.h.b16 %v1410
    %v1649 = vunpack.c.l.b16 %v1411
    %v1650 = vunpack.c.h.b16 %v1411
    %v1651 = vunpack.c.l.b16 %v1412
    %v1652 = vunpack.c.h.b16 %v1412
    %v1653 = vunpack.c.l.b16 %v1413
    %v1654 = vunpack.c.h.b16 %v1413
    %v1655 = vunpack.c.l.b16 %v1414
    %v1656 = vunpack.c.h.b16 %v1414
    %v1657 = vunpack.c.l.b16 %v1415
    %v1658 = vunpack.c.h.b16 %v1415
    %v1659 = vunpack.c.l.b16 %v1416
    %v1660 = vunpack.c.h.b16 %v1416
    %v1661 = vunpack.c.l.b16 %v1417
    %v1662 = vunpack.c.h.b16 %v1417
    %v1663 = vunpack.c.l.b16 %v1418
    %v1664 = vunpack.c.h.b16 %v1418
    %v1665 = vpack.c.b16 %v1605, %v1601
    %v1666 = vpack.c.b16 %v1606, %v1602
    %v1667 = vpack.c.b16 %v1607, %v1603
    %v1668 = vpack.c.b16 %v1608, %v1604
    %v1669 = vpack.c.b16 %v1613, %v1609
    %v1670 = vpack.c.b16 %v1614, %v1610
    %v1671 = vpack.c.b16 %v1615, %v1611
    %v1672 = vpack.c.b16 %v1616, %v1612
    %v1673 = vpack.c.b16 %v1621, %v1617
    %v1674 = vpack.c.b16 %v1622, %v1618
    %v1675 = vpack.c.b16 %v1623, %v1619
    %v1676 = vpack.c.b16 %v1624, %v1620
    %v1677 = vpack.c.b16 %v1629, %v1625
    %v1678 = vpack.c.b16 %v1630, %v1626
    %v1679 = vpack.c.b16 %v1631, %v1627
    %v1680 = vpack.c.b16 %v1632, %v1628
    %v1681 = vpack.c.b16 %v1637, %v1633
    %v1682 = vpack.c.b16 %v1638, %v1634
    %v1683 = vpack.c.b16 %v1639, %v1635
    %v1684 = vpack.c.b16 %v1640, %v1636
    %v1685 = vpack.c.b16 %v1645, %v1641
    %v1686 = vpack.c.b16 %v1646, %v1642
    %v1687 = vpack.c.b16 %v1647, %v1643
    %v1688 = vpack.c.b16 %v1648, %v1644
    %v1689 = vpack.c.b16 %v1653, %v1649
    %v1690 = vpack.c.b16 %v1654, %v1650
    %v1691 = vpack.c.b16 %v1655, %v1651
    %v1692 = vpack.c.b16 %v1656, %v1652
    %v1693 = vpack.c.b16 %v1661, %v1657
    %v1694 = vpack.c.b16 %v1662, %v1658
    %v1695 = vpack.c.b16 %v1663, %v1659
    %v1696 = vpack.c.b16 %v1664, %v1660
    %v1775 = vunpack.c.l.b16 %v1419
    %v1776 = vunpack.c.l.b16 %v1420
    %v1777 = vunpack.c.l.b16 %v1421
    %v1778 = vunpack.c.l.b16 %v1422
    %v1779 = vunpack.c.l.b16 %v1423
    %v1780 = vunpack.c.l.b16 %v1424
    %v1781 = vunpack.c.l.b16 %v1425
    %v1782 = vunpack.c.l.b16 %v1426
    %v1783 = vunpack.c.l.b16 %v1427
    %v1784 = vunpack.c.l.b16 %v1428
    %v1785 = vunpack.c.l.b16 %v1429
    %v1786 = vunpack.c.l.b16 %v1430
    %v1787 = vunpack.c.l.b16 %v1431
    %v1788 = vunpack.c.l.b16 %v1432
    %v1789 = vunpack.c.l.b16 %v1433
    %v1790 = vunpack.c.l.b16 %v1434
    %v1791 = vunpack.c.l.b16 %v1435
    %v1792 = vunpack.c.l.b16 %v1436
    %v1793 = vunpack.c.l.b16 %v1437
    %v1794 = vunpack.c.l.b16 %v1438
    %v1795 = vunpack.c.l.b16 %v1439
    %v1796 = vunpack.c.l.b16 %v1440
    %v1797 = vunpack.c.l.b16 %v1441
    %v1798 = vunpack.c.l.b16 %v1442
    %v1799 = vunpack.c.l.b16 %v1443
    %v1800 = vunpack.c.l.b16 %v1444
    %v1801 = vunpack.c.l.b16 %v1445
    %v1802 = vunpack.c.l.b16 %v1446
    %v1803 = vunpack.c.l.b16 %v1447
    %v1804 = vunpack.c.l.b16 %v1448
    %v1805 = vunpack.c.l.b16 %v1449
    %v1806 = vunpack.c.l.b16 %v1450
    %v1807 = vunpack.c.l.b16 %v1451
    %v1808 = vunpack.c.l.b16 %v1452
    %v1809 = vunpack.c.l.b16 %v1453
    %v1810 = vunpack.c.l.b16 %v1454
    %v1811 = vunpack.c.l.b16 %v1455
    %v1812 = vunpack.c.l.b16 %v1456
    %v1813 = vunpack.c.l.b16 %v1457
    %v1814 = vunpack.c.l.b16 %v1458
    %v1815 = vunpack.c.l.b16 %v1459
    %v1816 = vunpack.c.l.b16 %v1460
    %v1817 = vunpack.c.l.b16 %v1461
    %v1818 = vunpack.c.l.b16 %v1462
    %v1819 = vunpack.c.l.b16 %v1463
    %v1820 = vunpack.c.l.b16 %v1464
    %v1821 = vunpack.c.l.b16 %v1465
    %v1822 = vunpack.c.l.b16 %v1466
    %v1823 = vunpack.c.l.b16 %v1467
    %v1824 = vunpack.c.l.b16 %v1468
    %v1825 = vunpack.c.l.b16 %v1469
    %v1826 = vunpack.c.l.b16 %v1470
    %v1827 = vunpack.c.l.b16 %v1471
    %v1828 = vunpack.c.l.b16 %v1472
    %v1829 = vpack.c.b16 %v1776, %v1775
    %v1830 = vpack.c.b16 %v1778, %v1777
    %v1831 = vpack.c.b16 %v1780, %v1779
    %v1832 = vpack.c.b16 %v1782, %v1781
    %v1833 = vpack.c.b16 %v1784, %v1783
    %v1834 = vpack.c.b16 %v1786, %v1785
    %v1835 = vpack.c.b16 %v1788, %v1787
    %v1836 = vpack.c.b16 %v1790, %v1789
    %v1837 = vpack.c.b16 %v1792, %v1791
    %v1838 = vpack.c.b16 %v1794, %v1793
    %v1839 = vpack.c.b16 %v1796, %v1795
    %v1840 = vpack.c.b16 %v1798, %v1797
    %v1841 = vpack.c.b16 %v1800, %v1799
    %v1842 = vpack.c.b16 %v1802, %v1801
    %v1843 = vpack.c.b16 %v1804, %v1803
    %v1844 = vpack.c.b16 %v1806, %v1805
    %v1845 = vpack.c.b16 %v1808, %v1807
    %v1846 = vpack.c.b16 %v1810, %v1809
    %v1847 = vpack.c.b16 %v1812, %v1811
    %v1848 = vpack.c.b16 %v1814, %v1813
    %v1849 = vpack.c.b16 %v1816, %v1815
    %v1850 = vpack.c.b16 %v1818, %v1817
    %v1851 = vpack.c.b16 %v1820, %v1819
    %v1852 = vpack.c.b16 %v1822, %v1821
    %v1853 = vpack.c.b16 %v1824, %v1823
    %v1854 = vpack.c.b16 %v1826, %v1825
    %v1855 = vpack.c.b16 %v1828, %v1827
    %vm1883 = vcmask 392192
    %v1885 = vsel %vm1883, %v1668, 0
    %v1888 = vsel %vm1883, %v1672, 0
    %v1891 = vsel %vm1883, %v1676, 0
    %v1894 = vsel %vm1883, %v1680, 0
    %v1897 = vsel %vm1883, %v1684, 0
    %v1900 = vsel %vm1883, %v1688, 0
    %v1903 = vsel %vm1883, %v1692, 0
    %v1906 = vsel %vm1883, %v1696, 0
    %1908 = vmatprep.subr.bf16.mxu0 0
    %1909 = vmatpush1.bf16.msra.mxu0 %v1836
    %1910 = vmatprep.subr.bf16.mxu0 0
    %1911 = vmatpush1.bf16.msra.mxu0 %v1835
    %1912 = vmatprep.subr.bf16.mxu0 0
    %1913 = vmatpush1.bf16.msra.mxu0 %v1834
    %1914 = vmatprep.subr.bf16.mxu0 0
    %1915 = vmatpush1.bf16.msra.mxu0 %v1833
    %1916 = vmatprep.subr.bf16.mxu0 0
    %1917 = vmatpush1.bf16.msra.mxu0 %v1832
    %1918 = vmatprep.subr.bf16.mxu0 0
    %1919 = vmatpush1.bf16.msra.mxu0 %v1831
    %1920 = vmatprep.subr.bf16.mxu0 0
    %1921 = vmatpush1.bf16.msra.mxu0 %v1830
    %1922 = vmatprep.subr.bf16.mxu0 0
    %1923 = vmatpush1.bf16.msra.mxu0 %v1829
    %1924 = vmatprep.subr.bf16.mxu0 0
    %1925 = vmatpush2.bf16.msra.mxu0 %v1844
    %1926 = vmatprep.subr.bf16.mxu0 0
    %1927 = vmatpush2.bf16.msra.mxu0 %v1843
    %1928 = vmatprep.subr.bf16.mxu0 0
    %1929 = vmatpush2.bf16.msra.mxu0 %v1842
    %1930 = vmatprep.subr.bf16.mxu0 0
    %1931 = vmatpush2.bf16.msra.mxu0 %v1841
    %1932 = vmatprep.subr.bf16.mxu0 0
    %1933 = vmatpush2.bf16.msra.mxu0 %v1840
    %1934 = vmatprep.subr.bf16.mxu0 0
    %1935 = vmatpush2.bf16.msra.mxu0 %v1839
    %1936 = vmatprep.subr.bf16.mxu0 0
    %1937 = vmatpush2.bf16.msra.mxu0 %v1838
    %1938 = vmatprep.subr.bf16.mxu0 0
    %1939 = vmatpush2.bf16.msra.mxu0 %v1837
    %1940 = vmatprep.mubr.bf16.mxu0 %v1666
    %1941 = vmatmul.mubr.bf16.gmra.mxu0 %v1665
    %v1942 = vpop.f32.mrf.mxu0
    %v1943 = vadd.f32 %v1492, %v1942
    %v1944 = vpop.f32.mrf.mxu0
    %v1945 = vpop.f32.mrf.mxu0
    %v1946 = vadd.f32 %v1497, %v1945
    %v1947 = vpop.f32.mrf.mxu0
    %1948 = vmatprep.mubr.bf16.mxu0 %v1670
    %1949 = vmatmul.mubr.bf16.gmra.mxu0 %v1669
    %v1950 = vpop.f32.mrf.mxu0
    %v1951 = vadd.f32 %v1502, %v1950
    %v1952 = vpop.f32.mrf.mxu0
    %v1953 = vpop.f32.mrf.mxu0
    %v1954 = vadd.f32 %v1507, %v1953
    %v1955 = vpop.f32.mrf.mxu0
    %1956 = vmatprep.mubr.bf16.mxu0 %v1674
    %1957 = vmatmul.mubr.bf16.gmra.mxu0 %v1673
    %v1958 = vpop.f32.mrf.mxu0
    %v1959 = vadd.f32 %v1512, %v1958
    %v1960 = vpop.f32.mrf.mxu0
    %v1961 = vpop.f32.mrf.mxu0
    %v1962 = vadd.f32 %v1517, %v1961
    %v1963 = vpop.f32.mrf.mxu0
    %1964 = vmatprep.mubr.bf16.mxu0 %v1678
    %1965 = vmatmul.mubr.bf16.gmra.mxu0 %v1677
    %v1966 = vpop.f32.mrf.mxu0
    %v1967 = vadd.f32 %v1522, %v1966
    %v1968 = vpop.f32.mrf.mxu0
    %v1969 = vpop.f32.mrf.mxu0
    %v1970 = vadd.f32 %v1527, %v1969
    %v1971 = vpop.f32.mrf.mxu0
    %1972 = vmatprep.mubr.bf16.mxu0 %v1682
    %1973 = vmatmul.mubr.bf16.gmra.mxu0 %v1681
    %v1974 = vpop.f32.mrf.mxu0
    %v1975 = vadd.f32 %v1532, %v1974
    %v1976 = vpop.f32.mrf.mxu0
    %v1977 = vpop.f32.mrf.mxu0
    %v1978 = vadd.f32 %v1537, %v1977
    %v1979 = vpop.f32.mrf.mxu0
    %1980 = vmatprep.mubr.bf16.mxu0 %v1686
    %1981 = vmatmul.mubr.bf16.gmra.mxu0 %v1685
    %v1982 = vpop.f32.mrf.mxu0
    %v1983 = vadd.f32 %v1542, %v1982
    %v1984 = vpop.f32.mrf.mxu0
    %v1985 = vpop.f32.mrf.mxu0
    %v1986 = vadd.f32 %v1547, %v1985
    %v1987 = vpop.f32.mrf.mxu0
    %1988 = vmatprep.mubr.bf16.mxu0 %v1690
    %1989 = vmatmul.mubr.bf16.gmra.mxu0 %v1689
    %v1990 = vpop.f32.mrf.mxu0
    %v1991 = vadd.f32 %v1552, %v1990
    %v1992 = vpop.f32.mrf.mxu0
    %v1993 = vpop.f32.mrf.mxu0
    %v1994 = vadd.f32 %v1557, %v1993
    %v1995 = vpop.f32.mrf.mxu0
    %1996 = vmatprep.mubr.bf16.mxu0 %v1694
    %1997 = vmatmul.mubr.bf16.gmra.mxu0 %v1693
    %v1998 = vpop.f32.mrf.mxu0
    %v1999 = vadd.f32 %v1562, %v1998
    %v2000 = vpop.f32.mrf.mxu0
    %v2001 = vpop.f32.mrf.mxu0
    %v2002 = vadd.f32 %v1567, %v2001
    %v2003 = vpop.f32.mrf.mxu0
    %2004 = vdwg.mxu0
    %2005 = vmatprep.subr.bf16.mxu0 0
    %2006 = vmatpush1.bf16.msra.mxu0 %v1852
    %2007 = vmatprep.subr.bf16.mxu0 0
    %2008 = vmatpush1.bf16.msra.mxu0 %v1851
    %2009 = vmatprep.subr.bf16.mxu0 0
    %2010 = vmatpush1.bf16.msra.mxu0 %v1850
    %2011 = vmatprep.subr.bf16.mxu0 0
    %2012 = vmatpush1.bf16.msra.mxu0 %v1849
    %2013 = vmatprep.subr.bf16.mxu0 0
    %2014 = vmatpush1.bf16.msra.mxu0 %v1848
    %2015 = vmatprep.subr.bf16.mxu0 0
    %2016 = vmatpush1.bf16.msra.mxu0 %v1847
    %2017 = vmatprep.subr.bf16.mxu0 0
    %2018 = vmatpush1.bf16.msra.mxu0 %v1846
    %2019 = vmatprep.subr.bf16.mxu0 0
    %2020 = vmatpush1.bf16.msra.mxu0 %v1845
    %2021 = vmatprep.subr.bf16.mxu0 0
    %2022 = vmatpush2.bf16.msra.mxu0 0
    %2023 = vmatprep.subr.bf16.mxu0 0
    %2024 = vmatpush2.bf16.msra.mxu0 0
    %2025 = vmatprep.subr.bf16.mxu0 0
    %2026 = vmatpush2.bf16.msra.mxu0 0
    %2027 = vmatprep.subr.bf16.mxu0 0
    %2028 = vmatpush2.bf16.msra.mxu0 0
    %2029 = vmatprep.subr.bf16.mxu0 0
    %2030 = vmatpush2.bf16.msra.mxu0 0
    %2031 = vmatprep.subr.bf16.mxu0 0
    %2032 = vmatpush2.bf16.msra.mxu0 %v1855
    %2033 = vmatprep.subr.bf16.mxu0 0
    %2034 = vmatpush2.bf16.msra.mxu0 %v1854
    %2035 = vmatprep.subr.bf16.mxu0 0
    %2036 = vmatpush2.bf16.msra.mxu0 %v1853
    %2037 = vmatprep.mubr.bf16.mxu0 %v1885
    %2038 = vmatmul.mubr.bf16.gmra.mxu0 %v1667
    %v2039 = vpop.f32.mrf.mxu0
    %v2040 = vadd.f32 %v1943, %v2039
    %v2041 = vpop.f32.mrf.mxu0
    %v2042 = vpop.f32.mrf.mxu0
    %v2043 = vadd.f32 %v1946, %v2042
    %v2044 = vpop.f32.mrf.mxu0
    %2045 = vmatprep.mubr.bf16.mxu0 %v1888
    %2046 = vmatmul.mubr.bf16.gmra.mxu0 %v1671
    %v2047 = vpop.f32.mrf.mxu0
    %v2048 = vadd.f32 %v1951, %v2047
    %v2049 = vpop.f32.mrf.mxu0
    %v2050 = vpop.f32.mrf.mxu0
    %v2051 = vadd.f32 %v1954, %v2050
    %v2052 = vpop.f32.mrf.mxu0
    %2053 = vmatprep.mubr.bf16.mxu0 %v1891
    %2054 = vmatmul.mubr.bf16.gmra.mxu0 %v1675
    %v2055 = vpop.f32.mrf.mxu0
    %v2056 = vadd.f32 %v1959, %v2055
    %v2057 = vpop.f32.mrf.mxu0
    %v2058 = vpop.f32.mrf.mxu0
    %v2059 = vadd.f32 %v1962, %v2058
    %v2060 = vpop.f32.mrf.mxu0
    %2061 = vmatprep.mubr.bf16.mxu0 %v1894
    %2062 = vmatmul.mubr.bf16.gmra.mxu0 %v1679
    %v2063 = vpop.f32.mrf.mxu0
    %v2064 = vadd.f32 %v1967, %v2063
    %v2065 = vpop.f32.mrf.mxu0
    %v2066 = vpop.f32.mrf.mxu0
    %v2067 = vadd.f32 %v1970, %v2066
    %v2068 = vpop.f32.mrf.mxu0
    %2069 = vmatprep.mubr.bf16.mxu0 %v1897
    %2070 = vmatmul.mubr.bf16.gmra.mxu0 %v1683
    %v2071 = vpop.f32.mrf.mxu0
    %v2072 = vadd.f32 %v1975, %v2071
    %v2073 = vpop.f32.mrf.mxu0
    %v2074 = vpop.f32.mrf.mxu0
    %v2075 = vadd.f32 %v1978, %v2074
    %v2076 = vpop.f32.mrf.mxu0
    %2077 = vmatprep.mubr.bf16.mxu0 %v1900
    %2078 = vmatmul.mubr.bf16.gmra.mxu0 %v1687
    %v2079 = vpop.f32.mrf.mxu0
    %v2080 = vadd.f32 %v1983, %v2079
    %v2081 = vpop.f32.mrf.mxu0
    %v2082 = vpop.f32.mrf.mxu0
    %v2083 = vadd.f32 %v1986, %v2082
    %v2084 = vpop.f32.mrf.mxu0
    %2085 = vmatprep.mubr.bf16.mxu0 %v1903
    %2086 = vmatmul.mubr.bf16.gmra.mxu0 %v1691
    %v2087 = vpop.f32.mrf.mxu0
    %v2088 = vadd.f32 %v1991, %v2087
    %v2089 = vpop.f32.mrf.mxu0
    %v2090 = vpop.f32.mrf.mxu0
    %v2091 = vadd.f32 %v1994, %v2090
    %v2092 = vpop.f32.mrf.mxu0
    %2093 = vmatprep.mubr.bf16.mxu0 %v1906
    %2094 = vmatmul.mubr.bf16.gmra.mxu0 %v1695
    %v2095 = vpop.f32.mrf.mxu0
    %v2096 = vadd.f32 %v1999, %v2095
    %v2097 = vpop.f32.mrf.mxu0
    %v2098 = vpop.f32.mrf.mxu0
    %v2099 = vadd.f32 %v2002, %v2098
    %v2100 = vpop.f32.mrf.mxu0
    %2101 = vdwg.mxu0
    %v2102 = vld [vmem:[%s14] sm:$0xff]
    %v2103 = vld [vmem:[%s14 + $0x8] sm:$0xff]
    %v2104 = vld [vmem:[%s14 + $0x10] sm:$0xff]
    %v2105 = vld [vmem:[%s14 + $0x18] sm:$0xff]
    %v2106 = vld [vmem:[%s14 + $0x20] sm:$0xff]
    %v2107 = vld [vmem:[%s14 + $0x28] sm:$0xff]
    %v2108 = vld [vmem:[%s14 + $0x30] sm:$0xff]
    %v2109 = vld [vmem:[%s14 + $0x38] sm:$0xff]
    %v2110 = vld [vmem:[%s14 + $0x40] sm:$0xff]
    %v2111 = vld [vmem:[%s14 + $0x48] sm:$0xff]
    %v2112 = vld [vmem:[%s14 + $0x50] sm:$0xff]
    %v2113 = vld [vmem:[%s14 + $0x58] sm:$0xff]
    %v2114 = vld [vmem:[%s14 + $0x60] sm:$0xff]
    %v2115 = vld [vmem:[%s14 + $0x68] sm:$0xff]
    %v2116 = vld [vmem:[%s14 + $0x70] sm:$0xff]
    %v2117 = vld [vmem:[%s14 + $0x78] sm:$0xff]
    %v2118 = vld [vmem:[%s15] sm:$0xff]
    %v2119 = vld [vmem:[%s15 + $0x8] sm:$0xff]
    %v2120 = vld [vmem:[%s15 + $0x10] sm:$0xff]
    %vm2121 = vcmask 195584
    %v2123 = vsel %vm2121, %v1379, 0
    %v2126 = vsel %vm2121, %v1380, 0
    %v2129 = vsel %vm2121, %v1381, 0
    %v2132 = vsel %vm2121, %v1382, 0
    %v2135 = vsel %vm2121, %v1383, 0
    %v2138 = vsel %vm2121, %v1384, 0
    %v2141 = vsel %vm2121, %v1385, 0
    %v2144 = vsel %vm2121, %v1386, 0
    %2146 = vmatprep.subr.mxu0 0.0
    %2147 = vmatpush1.msra.mxu0 0.0
    %2148 = vmatprep.subr.mxu0 0.0
    %2149 = vmatpush1.msra.mxu0 0.0
    %2150 = vmatprep.subr.mxu0 0.0
    %2151 = vmatpush1.msra.mxu0 0.0
    %2152 = vmatprep.subr.mxu0 0.0
    %2153 = vmatpush1.msra.mxu0 0.0
    %2154 = vmatprep.subr.mxu0 0.0
    %2155 = vmatpush1.msra.mxu0 0.0
    %2156 = vmatprep.subr.mxu0 0.0
    %2157 = vmatpush1.msra.mxu0 0.0
    %2158 = vmatprep.subr.mxu0 0.0
    %2159 = vmatpush1.msra.mxu0 0.0
    %2160 = vmatprep.subr.mxu0 0.0
    %2161 = vmatpush1.msra.mxu0 0.0
    %2162 = vmatprep.subr.mxu0 0.0
    %2163 = vmatpush1.msra.mxu0 0.0
    %2164 = vmatprep.subr.mxu0 0.0
    %2165 = vmatpush1.msra.mxu0 0.0
    %2166 = vmatprep.subr.mxu0 0.0
    %2167 = vmatpush1.msra.mxu0 0.0
    %2168 = vmatprep.subr.mxu0 0.0
    %2169 = vmatpush1.msra.mxu0 0.0
    %2170 = vmatprep.subr.mxu0 0.0
    %2171 = vmatpush1.msra.mxu0 0.0
    %2172 = vmatprep.subr.mxu0 0.0
    %2173 = vmatpush1.msra.mxu0 %v2120
    %2174 = vmatprep.subr.mxu0 0.0
    %2175 = vmatpush1.msra.mxu0 %v2119
    %2176 = vmatprep.subr.mxu0 0.0
    %2177 = vmatpush1.msra.mxu0 %v2118
    %2178 = vmatprep.subr.mxu0 0.0
    %2179 = vmatpush2.msra.mxu0 0.0
    %2180 = vmatprep.subr.mxu0 0.0
    %2181 = vmatpush2.msra.mxu0 0.0
    %2182 = vmatprep.subr.mxu0 0.0
    %2183 = vmatpush2.msra.mxu0 0.0
    %2184 = vmatprep.subr.mxu0 0.0
    %2185 = vmatpush2.msra.mxu0 0.0
    %2186 = vmatprep.subr.mxu0 0.0
    %2187 = vmatpush2.msra.mxu0 0.0
    %2188 = vmatprep.subr.mxu0 0.0
    %2189 = vmatpush2.msra.mxu0 0.0
    %2190 = vmatprep.subr.mxu0 0.0
    %2191 = vmatpush2.msra.mxu0 0.0
    %2192 = vmatprep.subr.mxu0 0.0
    %2193 = vmatpush2.msra.mxu0 0.0
    %2194 = vmatprep.subr.mxu0 0.0
    %2195 = vmatpush2.msra.mxu0 0.0
    %2196 = vmatprep.subr.mxu0 0.0
    %2197 = vmatpush2.msra.mxu0 0.0
    %2198 = vmatprep.subr.mxu0 0.0
    %2199 = vmatpush2.msra.mxu0 0.0
    %2200 = vmatprep.subr.mxu0 0.0
    %2201 = vmatpush2.msra.mxu0 0.0
    %2202 = vmatprep.subr.mxu0 0.0
    %2203 = vmatpush2.msra.mxu0 0.0
    %2204 = vmatprep.subr.mxu0 0.0
    %2205 = vmatpush2.msra.mxu0 0.0
    %2206 = vmatprep.subr.mxu0 0.0
    %2207 = vmatpush2.msra.mxu0 0.0
    %2208 = vmatprep.subr.mxu0 0.0
    %2209 = vmatpush2.msra.mxu0 0.0
    %2210 = vmatprep.mubr.f32.mxu0 0.0
    %2211 = vmatmul.mubr.f32.gmra.mxu0 %v2123
    %v2212 = vpop.f32.mrf.mxu0
    %v2213 = vadd.f32 0.0, %v2212
    %v2214 = vpop.f32.mrf.mxu0
    %2215 = vmatprep.mubr.f32.mxu0 0.0
    %2216 = vmatmul.mubr.f32.gmra.mxu0 %v2126
    %v2217 = vpop.f32.mrf.mxu0
    %v2218 = vadd.f32 0.0, %v2217
    %v2219 = vpop.f32.mrf.mxu0
    %2220 = vmatprep.mubr.f32.mxu0 0.0
    %2221 = vmatmul.mubr.f32.gmra.mxu0 %v2129
    %v2222 = vpop.f32.mrf.mxu0
    %v2223 = vadd.f32 0.0, %v2222
    %v2224 = vpop.f32.mrf.mxu0
    %2225 = vmatprep.mubr.f32.mxu0 0.0
    %2226 = vmatmul.mubr.f32.gmra.mxu0 %v2132
    %v2227 = vpop.f32.mrf.mxu0
    %v2228 = vadd.f32 0.0, %v2227
    %v2229 = vpop.f32.mrf.mxu0
    %2230 = vmatprep.mubr.f32.mxu0 0.0
    %2231 = vmatmul.mubr.f32.gmra.mxu0 %v2135
    %v2232 = vpop.f32.mrf.mxu0
    %v2233 = vadd.f32 0.0, %v2232
    %v2234 = vpop.f32.mrf.mxu0
    %2235 = vmatprep.mubr.f32.mxu0 0.0
    %2236 = vmatmul.mubr.f32.gmra.mxu0 %v2138
    %v2237 = vpop.f32.mrf.mxu0
    %v2238 = vadd.f32 0.0, %v2237
    %v2239 = vpop.f32.mrf.mxu0
    %2240 = vmatprep.mubr.f32.mxu0 0.0
    %2241 = vmatmul.mubr.f32.gmra.mxu0 %v2141
    %v2242 = vpop.f32.mrf.mxu0
    %v2243 = vadd.f32 0.0, %v2242
    %v2244 = vpop.f32.mrf.mxu0
    %2245 = vmatprep.mubr.f32.mxu0 0.0
    %2246 = vmatmul.mubr.f32.gmra.mxu0 %v2144
    %v2247 = vpop.f32.mrf.mxu0
    %v2248 = vadd.f32 0.0, %v2247
    %v2249 = vpop.f32.mrf.mxu0
    %2250 = vdwg.mxu0
    %v2252 = vsel %vm1228, %v2102, 0
    %v2255 = vsel %vm1228, %v2103, 0
    %v2258 = vsel %vm1228, %v2104, 0
    %v2261 = vsel %vm1228, %v2105, 0
    %v2264 = vsel %vm1228, %v2106, 0
    %v2267 = vsel %vm1228, %v2107, 0
    %v2270 = vsel %vm1228, %v2108, 0
    %v2273 = vsel %vm1228, %v2109, 0
    %v2276 = vsel %vm1228, %v2110, 0
    %v2279 = vsel %vm1228, %v2111, 0
    %v2282 = vsel %vm1228, %v2112, 0
    %v2285 = vsel %vm1228, %v2113, 0
    %v2288 = vsel %vm1228, %v2114, 0
    %v2291 = vsel %vm1228, %v2115, 0
    %v2294 = vsel %vm1228, %v2116, 0
    %v2297 = vsel %vm1228, %v2117, 0
    %2299 = vmatprep.subr.mxu0 0.0
    %2300 = vmatpush1.msra.mxu0 0.0
    %2301 = vmatprep.subr.mxu0 0.0
    %2302 = vmatpush1.msra.mxu0 0.0
    %2303 = vmatprep.subr.mxu0 0.0
    %2304 = vmatpush1.msra.mxu0 0.0
    %2305 = vmatprep.subr.mxu0 0.0
    %2306 = vmatpush1.msra.mxu0 0.0
    %2307 = vmatprep.subr.mxu0 0.0
    %2308 = vmatpush1.msra.mxu0 0.0
    %2309 = vmatprep.subr.mxu0 0.0
    %2310 = vmatpush1.msra.mxu0 0.0
    %2311 = vmatprep.subr.mxu0 0.0
    %2312 = vmatpush1.msra.mxu0 0.0
    %2313 = vmatprep.subr.mxu0 0.0
    %2314 = vmatpush1.msra.mxu0 0.0
    %2315 = vmatprep.subr.mxu0 0.0
    %2316 = vmatpush1.msra.mxu0 %v2248
    %2317 = vmatprep.subr.mxu0 0.0
    %2318 = vmatpush1.msra.mxu0 %v2243
    %2319 = vmatprep.subr.mxu0 0.0
    %2320 = vmatpush1.msra.mxu0 %v2238
    %2321 = vmatprep.subr.mxu0 0.0
    %2322 = vmatpush1.msra.mxu0 %v2233
    %2323 = vmatprep.subr.mxu0 0.0
    %2324 = vmatpush1.msra.mxu0 %v2228
    %2325 = vmatprep.subr.mxu0 0.0
    %2326 = vmatpush1.msra.mxu0 %v2223
    %2327 = vmatprep.subr.mxu0 0.0
    %2328 = vmatpush1.msra.mxu0 %v2218
    %2329 = vmatprep.subr.mxu0 0.0
    %2330 = vmatpush1.msra.mxu0 %v2213
    %2331 = vmatprep.subr.mxu0 0.0
    %2332 = vmatpush2.msra.mxu0 0.0
    %2333 = vmatprep.subr.mxu0 0.0
    %2334 = vmatpush2.msra.mxu0 0.0
    %2335 = vmatprep.subr.mxu0 0.0
    %2336 = vmatpush2.msra.mxu0 0.0
    %2337 = vmatprep.subr.mxu0 0.0
    %2338 = vmatpush2.msra.mxu0 0.0
    %2339 = vmatprep.subr.mxu0 0.0
    %2340 = vmatpush2.msra.mxu0 0.0
    %2341 = vmatprep.subr.mxu0 0.0
    %2342 = vmatpush2.msra.mxu0 0.0
    %2343 = vmatprep.subr.mxu0 0.0
    %2344 = vmatpush2.msra.mxu0 0.0
    %2345 = vmatprep.subr.mxu0 0.0
    %2346 = vmatpush2.msra.mxu0 0.0
    %2347 = vmatprep.subr.mxu0 0.0
    %2348 = vmatpush2.msra.mxu0 0.0
    %2349 = vmatprep.subr.mxu0 0.0
    %2350 = vmatpush2.msra.mxu0 0.0
    %2351 = vmatprep.subr.mxu0 0.0
    %2352 = vmatpush2.msra.mxu0 0.0
    %2353 = vmatprep.subr.mxu0 0.0
    %2354 = vmatpush2.msra.mxu0 0.0
    %2355 = vmatprep.subr.mxu0 0.0
    %2356 = vmatpush2.msra.mxu0 0.0
    %2357 = vmatprep.subr.mxu0 0.0
    %2358 = vmatpush2.msra.mxu0 0.0
    %2359 = vmatprep.subr.mxu0 0.0
    %2360 = vmatpush2.msra.mxu0 0.0
    %2361 = vmatprep.subr.mxu0 0.0
    %2362 = vmatpush2.msra.mxu0 0.0
    %2363 = vmatprep.mubr.f32.mxu0 0.0
    %2364 = vmatmul.mubr.f32.gmra.mxu0 %v2252
    %v2365 = vpop.f32.mrf.mxu0
    %v2366 = vadd.f32 0.0, %v2365
    %v2367 = vpop.f32.mrf.mxu0
    %2368 = vmatprep.mubr.f32.mxu0 0.0
    %2369 = vmatmul.mubr.f32.gmra.mxu0 %v2255
    %v2370 = vpop.f32.mrf.mxu0
    %v2371 = vadd.f32 0.0, %v2370
    %v2372 = vpop.f32.mrf.mxu0
    %2373 = vmatprep.mubr.f32.mxu0 0.0
    %2374 = vmatmul.mubr.f32.gmra.mxu0 %v2258
    %v2375 = vpop.f32.mrf.mxu0
    %v2376 = vadd.f32 0.0, %v2375
    %v2377 = vpop.f32.mrf.mxu0
    %2378 = vmatprep.mubr.f32.mxu0 0.0
    %2379 = vmatmul.mubr.f32.gmra.mxu0 %v2261
    %v2380 = vpop.f32.mrf.mxu0
    %v2381 = vadd.f32 0.0, %v2380
    %v2382 = vpop.f32.mrf.mxu0
    %2383 = vmatprep.mubr.f32.mxu0 0.0
    %2384 = vmatmul.mubr.f32.gmra.mxu0 %v2264
    %v2385 = vpop.f32.mrf.mxu0
    %v2386 = vadd.f32 0.0, %v2385
    %v2387 = vpop.f32.mrf.mxu0
    %2388 = vmatprep.mubr.f32.mxu0 0.0
    %2389 = vmatmul.mubr.f32.gmra.mxu0 %v2267
    %v2390 = vpop.f32.mrf.mxu0
    %v2391 = vadd.f32 0.0, %v2390
    %v2392 = vpop.f32.mrf.mxu0
    %2393 = vmatprep.mubr.f32.mxu0 0.0
    %2394 = vmatmul.mubr.f32.gmra.mxu0 %v2270
    %v2395 = vpop.f32.mrf.mxu0
    %v2396 = vadd.f32 0.0, %v2395
    %v2397 = vpop.f32.mrf.mxu0
    %2398 = vmatprep.mubr.f32.mxu0 0.0
    %2399 = vmatmul.mubr.f32.gmra.mxu0 %v2273
    %v2400 = vpop.f32.mrf.mxu0
    %v2401 = vadd.f32 0.0, %v2400
    %v2402 = vpop.f32.mrf.mxu0
    %2403 = vmatprep.mubr.f32.mxu0 0.0
    %2404 = vmatmul.mubr.f32.gmra.mxu0 %v2276
    %v2405 = vpop.f32.mrf.mxu0
    %v2406 = vadd.f32 0.0, %v2405
    %v2407 = vpop.f32.mrf.mxu0
    %2408 = vmatprep.mubr.f32.mxu0 0.0
    %2409 = vmatmul.mubr.f32.gmra.mxu0 %v2279
    %v2410 = vpop.f32.mrf.mxu0
    %v2411 = vadd.f32 0.0, %v2410
    %v2412 = vpop.f32.mrf.mxu0
    %2413 = vmatprep.mubr.f32.mxu0 0.0
    %2414 = vmatmul.mubr.f32.gmra.mxu0 %v2282
    %v2415 = vpop.f32.mrf.mxu0
    %v2416 = vadd.f32 0.0, %v2415
    %v2417 = vpop.f32.mrf.mxu0
    %2418 = vmatprep.mubr.f32.mxu0 0.0
    %2419 = vmatmul.mubr.f32.gmra.mxu0 %v2285
    %v2420 = vpop.f32.mrf.mxu0
    %v2421 = vadd.f32 0.0, %v2420
    %v2422 = vpop.f32.mrf.mxu0
    %2423 = vmatprep.mubr.f32.mxu0 0.0
    %2424 = vmatmul.mubr.f32.gmra.mxu0 %v2288
    %v2425 = vpop.f32.mrf.mxu0
    %v2426 = vadd.f32 0.0, %v2425
    %v2427 = vpop.f32.mrf.mxu0
    %2428 = vmatprep.mubr.f32.mxu0 0.0
    %2429 = vmatmul.mubr.f32.gmra.mxu0 %v2291
    %v2430 = vpop.f32.mrf.mxu0
    %v2431 = vadd.f32 0.0, %v2430
    %v2432 = vpop.f32.mrf.mxu0
    %2433 = vmatprep.mubr.f32.mxu0 0.0
    %2434 = vmatmul.mubr.f32.gmra.mxu0 %v2294
    %v2435 = vpop.f32.mrf.mxu0
    %v2436 = vadd.f32 0.0, %v2435
    %v2437 = vpop.f32.mrf.mxu0
    %2438 = vmatprep.mubr.f32.mxu0 0.0
    %2439 = vmatmul.mubr.f32.gmra.mxu0 %v2297
    %v2440 = vpop.f32.mrf.mxu0
    %v2441 = vadd.f32 0.0, %v2440
    %v2442 = vpop.f32.mrf.mxu0
    %2443 = vdwg.mxu0
    %v2444 = vpack.c.bf16 %v2371, %v2366
    %v2445 = vpack.c.bf16 %v2381, %v2376
    %v2446 = vpack.c.bf16 %v2391, %v2386
    %v2447 = vpack.c.bf16 %v2401, %v2396
    %v2448 = vpack.c.bf16 %v2411, %v2406
    %v2449 = vpack.c.bf16 %v2421, %v2416
    %v2450 = vpack.c.bf16 %v2431, %v2426
    %v2451 = vpack.c.bf16 %v2441, %v2436
    %2460 = vrot.lane.b32.xlu0 %v2444, 93
    %v2461 = vpop.permute.xlu0 %2460
    %2462 = vrot.lane.b32.xlu0 %v2445, 93
    %v2463 = vpop.permute.xlu0 %2462
    %2464 = vrot.lane.b32.xlu0 %v2446, 93
    %v2465 = vpop.permute.xlu0 %2464
    %2466 = vrot.lane.b32.xlu0 %v2447, 93
    %v2467 = vpop.permute.xlu0 %2466
    %2468 = vrot.lane.b32.xlu0 %v2448, 93
    %v2469 = vpop.permute.xlu0 %2468
    %2470 = vrot.lane.b32.xlu0 %v2449, 93
    %v2471 = vpop.permute.xlu0 %2470
    %2472 = vrot.lane.b32.xlu0 %v2450, 93
    %v2473 = vpop.permute.xlu0 %2472
    %2474 = vrot.lane.b32.xlu0 %v2451, 93
    %v2475 = vpop.permute.xlu0 %2474
    %2476 = vrot.lane.b32.xlu0 %v2444, 1
    %v2477 = vpop.permute.xlu0 %2476
    %2478 = vrot.lane.b32.xlu0 %v2445, 1
    %v2479 = vpop.permute.xlu0 %2478
    %2480 = vrot.lane.b32.xlu0 %v2446, 1
    %v2481 = vpop.permute.xlu0 %2480
    %2482 = vrot.lane.b32.xlu0 %v2447, 1
    %v2483 = vpop.permute.xlu0 %2482
    %2484 = vrot.lane.b32.xlu0 %v2448, 1
    %v2485 = vpop.permute.xlu0 %2484
    %2486 = vrot.lane.b32.xlu0 %v2449, 1
    %v2487 = vpop.permute.xlu0 %2486
    %2488 = vrot.lane.b32.xlu0 %v2450, 1
    %v2489 = vpop.permute.xlu0 %2488
    %2490 = vrot.lane.b32.xlu0 %v2451, 1
    %v2491 = vpop.permute.xlu0 %2490
    %v2494 = vsel %vm1069, %v2461, %v2477
    %v2498 = vsel %vm1069, %v2463, %v2479
    %v2502 = vsel %vm1069, %v2465, %v2481
    %v2506 = vsel %vm1069, %v2467, %v2483
    %v2510 = vsel %vm1069, %v2469, %v2485
    %v2514 = vsel %vm1069, %v2471, %v2487
    %v2518 = vsel %vm1069, %v2473, %v2489
    %v2522 = vsel %vm1069, %v2475, %v2491
    %2524 = vrot.lane.b32.xlu0 %v2444, 127
    %v2525 = vpop.permute.xlu0 %2524
    %2526 = vrot.lane.b32.xlu0 %v2445, 127
    %v2527 = vpop.permute.xlu0 %2526
    %2528 = vrot.lane.b32.xlu0 %v2446, 127
    %v2529 = vpop.permute.xlu0 %2528
    %2530 = vrot.lane.b32.xlu0 %v2447, 127
    %v2531 = vpop.permute.xlu0 %2530
    %2532 = vrot.lane.b32.xlu0 %v2448, 127
    %v2533 = vpop.permute.xlu0 %2532
    %2534 = vrot.lane.b32.xlu0 %v2449, 127
    %v2535 = vpop.permute.xlu0 %2534
    %2536 = vrot.lane.b32.xlu0 %v2450, 127
    %v2537 = vpop.permute.xlu0 %2536
    %2538 = vrot.lane.b32.xlu0 %v2451, 127
    %v2539 = vpop.permute.xlu0 %2538
    %2540 = vrot.lane.b32.xlu0 %v2444, 35
    %v2541 = vpop.permute.xlu0 %2540
    %2542 = vrot.lane.b32.xlu0 %v2445, 35
    %v2543 = vpop.permute.xlu0 %2542
    %2544 = vrot.lane.b32.xlu0 %v2446, 35
    %v2545 = vpop.permute.xlu0 %2544
    %2546 = vrot.lane.b32.xlu0 %v2447, 35
    %v2547 = vpop.permute.xlu0 %2546
    %2548 = vrot.lane.b32.xlu0 %v2448, 35
    %v2549 = vpop.permute.xlu0 %2548
    %2550 = vrot.lane.b32.xlu0 %v2449, 35
    %v2551 = vpop.permute.xlu0 %2550
    %2552 = vrot.lane.b32.xlu0 %v2450, 35
    %v2553 = vpop.permute.xlu0 %2552
    %2554 = vrot.lane.b32.xlu0 %v2451, 35
    %v2555 = vpop.permute.xlu0 %2554
    %vm2556 = vcmask 285696
    %v2559 = vsel %vm2556, %v2525, %v2541
    %v2563 = vsel %vm2556, %v2527, %v2543
    %v2567 = vsel %vm2556, %v2529, %v2545
    %v2571 = vsel %vm2556, %v2531, %v2547
    %v2575 = vsel %vm2556, %v2533, %v2549
    %v2579 = vsel %vm2556, %v2535, %v2551
    %v2583 = vsel %vm2556, %v2537, %v2553
    %v2587 = vsel %vm2556, %v2539, %v2555
    %v2589 = vld [vmem:[%s11] sm:$0xff]
    %v2590 = vld [vmem:[%s11 + $0x8] sm:$0xf]
    %v2591 = vld [vmem:[%s11 + $0xc] sm:$0xff]
    %v2592 = vld [vmem:[%s11 + $0x14] sm:$0xf]
    %v2593 = vld [vmem:[%s11 + $0x18] sm:$0xff]
    %v2594 = vld [vmem:[%s11 + $0x20] sm:$0xf]
    %v2595 = vld [vmem:[%s11 + $0x24] sm:$0xff]
    %v2596 = vld [vmem:[%s11 + $0x2c] sm:$0xf]
    %v2597 = vld [vmem:[%s11 + $0x30] sm:$0xff]
    %v2598 = vld [vmem:[%s11 + $0x38] sm:$0xf]
    %v2599 = vld [vmem:[%s11 + $0x3c] sm:$0xff]
    %v2600 = vld [vmem:[%s11 + $0x44] sm:$0xf]
    %v2601 = vld [vmem:[%s11 + $0x48] sm:$0xff]
    %v2602 = vld [vmem:[%s11 + $0x50] sm:$0xf]
    %v2603 = vld [vmem:[%s11 + $0x54] sm:$0xff]
    %v2604 = vld [vmem:[%s11 + $0x5c] sm:$0xf]
    %v2605 = vld [vmem:[%s11 + $0x60] sm:$0xff]
    %v2606 = vld [vmem:[%s11 + $0x68] sm:$0xf]
    %v2607 = vld [vmem:[%s11 + $0x6c] sm:$0xff]
    %v2608 = vld [vmem:[%s11 + $0x74] sm:$0xf]
    %v2609 = vld [vmem:[%s11 + $0x78] sm:$0xff]
    %v2610 = vld [vmem:[%s11 + $0x80] sm:$0xf]
    %v2611 = vld [vmem:[%s11 + $0x84] sm:$0xff]
    %v2612 = vld [vmem:[%s11 + $0x8c] sm:$0xf]
    %v2613 = vld [vmem:[%s11 + $0x90] sm:$0xff]
    %v2614 = vld [vmem:[%s11 + $0x98] sm:$0xf]
    %v2615 = vld [vmem:[%s11 + $0x9c] sm:$0xff]
    %v2616 = vld [vmem:[%s11 + $0xa4] sm:$0xf]
    %v2617 = vld [vmem:[%s11 + $0xa8] sm:$0xff]
    %v2618 = vld [vmem:[%s11 + $0xb0] sm:$0xf]
    %v2619 = vld [vmem:[%s11 + $0xb4] sm:$0xff]
    %v2620 = vld [vmem:[%s11 + $0xbc] sm:$0xf]
    %v2653 = vunpack.c.l.b16 %v2589
    %v2654 = vunpack.c.h.b16 %v2589
    %v2655 = vunpack.c.l.b16 %v2590
    %v2656 = vunpack.c.l.b16 %v2591
    %v2657 = vunpack.c.h.b16 %v2591
    %v2658 = vunpack.c.l.b16 %v2592
    %v2659 = vunpack.c.l.b16 %v2593
    %v2660 = vunpack.c.h.b16 %v2593
    %v2661 = vunpack.c.l.b16 %v2594
    %v2662 = vunpack.c.l.b16 %v2595
    %v2663 = vunpack.c.h.b16 %v2595
    %v2664 = vunpack.c.l.b16 %v2596
    %v2665 = vunpack.c.l.b16 %v2597
    %v2666 = vunpack.c.h.b16 %v2597
    %v2667 = vunpack.c.l.b16 %v2598
    %v2668 = vunpack.c.l.b16 %v2599
    %v2669 = vunpack.c.h.b16 %v2599
    %v2670 = vunpack.c.l.b16 %v2600
    %v2671 = vunpack.c.l.b16 %v2601
    %v2672 = vunpack.c.h.b16 %v2601
    %v2673 = vunpack.c.l.b16 %v2602
    %v2674 = vunpack.c.l.b16 %v2603
    %v2675 = vunpack.c.h.b16 %v2603
    %v2676 = vunpack.c.l.b16 %v2604
    %v2677 = vunpack.c.l.b16 %v2605
    %v2678 = vunpack.c.h.b16 %v2605
    %v2679 = vunpack.c.l.b16 %v2606
    %v2680 = vunpack.c.l.b16 %v2607
    %v2681 = vunpack.c.h.b16 %v2607
    %v2682 = vunpack.c.l.b16 %v2608
    %v2683 = vunpack.c.l.b16 %v2609
    %v2684 = vunpack.c.h.b16 %v2609
    %v2685 = vunpack.c.l.b16 %v2610
    %v2686 = vunpack.c.l.b16 %v2611
    %v2687 = vunpack.c.h.b16 %v2611
    %v2688 = vunpack.c.l.b16 %v2612
    %v2689 = vunpack.c.l.b16 %v2613
    %v2690 = vunpack.c.h.b16 %v2613
    %v2691 = vunpack.c.l.b16 %v2614
    %v2692 = vunpack.c.l.b16 %v2615
    %v2693 = vunpack.c.h.b16 %v2615
    %v2694 = vunpack.c.l.b16 %v2616
    %v2695 = vunpack.c.l.b16 %v2617
    %v2696 = vunpack.c.h.b16 %v2617
    %v2697 = vunpack.c.l.b16 %v2618
    %v2698 = vunpack.c.l.b16 %v2619
    %v2699 = vunpack.c.h.b16 %v2619
    %v2700 = vunpack.c.l.b16 %v2620
    %v2701 = vpack.c.b16 %v2656, %v2653
    %v2702 = vpack.c.b16 %v2657, %v2654
    %v2703 = vpack.c.b16 %v2658, %v2655
    %v2704 = vpack.c.b16 %v2662, %v2659
    %v2705 = vpack.c.b16 %v2663, %v2660
    %v2706 = vpack.c.b16 %v2664, %v2661
    %v2707 = vpack.c.b16 %v2668, %v2665
    %v2708 = vpack.c.b16 %v2669, %v2666
    %v2709 = vpack.c.b16 %v2670, %v2667
    %v2710 = vpack.c.b16 %v2674, %v2671
    %v2711 = vpack.c.b16 %v2675, %v2672
    %v2712 = vpack.c.b16 %v2676, %v2673
    %v2713 = vpack.c.b16 %v2680, %v2677
    %v2714 = vpack.c.b16 %v2681, %v2678
    %v2715 = vpack.c.b16 %v2682, %v2679
    %v2716 = vpack.c.b16 %v2686, %v2683
    %v2717 = vpack.c.b16 %v2687, %v2684
    %v2718 = vpack.c.b16 %v2688, %v2685
    %v2719 = vpack.c.b16 %v2692, %v2689
    %v2720 = vpack.c.b16 %v2693, %v2690
    %v2721 = vpack.c.b16 %v2694, %v2691
    %v2722 = vpack.c.b16 %v2698, %v2695
    %v2723 = vpack.c.b16 %v2699, %v2696
    %v2724 = vpack.c.b16 %v2700, %v2697
    %2749 = vmatprep.subr.bf16.mxu0 0
    %2750 = vmatpush1.bf16.msra.mxu0 %v2522
    %2751 = vmatprep.subr.bf16.mxu0 0
    %2752 = vmatpush1.bf16.msra.mxu0 %v2518
    %2753 = vmatprep.subr.bf16.mxu0 0
    %2754 = vmatpush1.bf16.msra.mxu0 %v2514
    %2755 = vmatprep.subr.bf16.mxu0 0
    %2756 = vmatpush1.bf16.msra.mxu0 %v2510
    %2757 = vmatprep.subr.bf16.mxu0 0
    %2758 = vmatpush1.bf16.msra.mxu0 %v2506
    %2759 = vmatprep.subr.bf16.mxu0 0
    %2760 = vmatpush1.bf16.msra.mxu0 %v2502
    %2761 = vmatprep.subr.bf16.mxu0 0
    %2762 = vmatpush1.bf16.msra.mxu0 %v2498
    %2763 = vmatprep.subr.bf16.mxu0 0
    %2764 = vmatpush1.bf16.msra.mxu0 %v2494
    %2765 = vmatprep.subr.bf16.mxu0 0
    %2766 = vmatpush2.bf16.msra.mxu0 %v2451
    %2767 = vmatprep.subr.bf16.mxu0 0
    %2768 = vmatpush2.bf16.msra.mxu0 %v2450
    %2769 = vmatprep.subr.bf16.mxu0 0
    %2770 = vmatpush2.bf16.msra.mxu0 %v2449
    %2771 = vmatprep.subr.bf16.mxu0 0
    %2772 = vmatpush2.bf16.msra.mxu0 %v2448
    %2773 = vmatprep.subr.bf16.mxu0 0
    %2774 = vmatpush2.bf16.msra.mxu0 %v2447
    %2775 = vmatprep.subr.bf16.mxu0 0
    %2776 = vmatpush2.bf16.msra.mxu0 %v2446
    %2777 = vmatprep.subr.bf16.mxu0 0
    %2778 = vmatpush2.bf16.msra.mxu0 %v2445
    %2779 = vmatprep.subr.bf16.mxu0 0
    %2780 = vmatpush2.bf16.msra.mxu0 %v2444
    %2781 = vmatprep.mubr.bf16.mxu0 %v2702
    %2782 = vmatmul.mubr.bf16.gmra.mxu0 %v2701
    %v2783 = vpop.f32.mrf.mxu0
    %v2784 = vadd.f32 0.0, %v2783
    %v2785 = vpop.f32.mrf.mxu0
    %v2786 = vpop.f32.mrf.mxu0
    %v2787 = vadd.f32 0.0, %v2786
    %v2788 = vpop.f32.mrf.mxu0
    %2789 = vmatprep.mubr.bf16.mxu0 %v2705
    %2790 = vmatmul.mubr.bf16.gmra.mxu0 %v2704
    %v2791 = vpop.f32.mrf.mxu0
    %v2792 = vadd.f32 0.0, %v2791
    %v2793 = vpop.f32.mrf.mxu0
    %v2794 = vpop.f32.mrf.mxu0
    %v2795 = vadd.f32 0.0, %v2794
    %v2796 = vpop.f32.mrf.mxu0
    %2797 = vmatprep.mubr.bf16.mxu0 %v2708
    %2798 = vmatmul.mubr.bf16.gmra.mxu0 %v2707
    %v2799 = vpop.f32.mrf.mxu0
    %v2800 = vadd.f32 0.0, %v2799
    %v2801 = vpop.f32.mrf.mxu0
    %v2802 = vpop.f32.mrf.mxu0
    %v2803 = vadd.f32 0.0, %v2802
    %v2804 = vpop.f32.mrf.mxu0
    %2805 = vmatprep.mubr.bf16.mxu0 %v2711
    %2806 = vmatmul.mubr.bf16.gmra.mxu0 %v2710
    %v2807 = vpop.f32.mrf.mxu0
    %v2808 = vadd.f32 0.0, %v2807
    %v2809 = vpop.f32.mrf.mxu0
    %v2810 = vpop.f32.mrf.mxu0
    %v2811 = vadd.f32 0.0, %v2810
    %v2812 = vpop.f32.mrf.mxu0
    %2813 = vmatprep.mubr.bf16.mxu0 %v2714
    %2814 = vmatmul.mubr.bf16.gmra.mxu0 %v2713
    %v2815 = vpop.f32.mrf.mxu0
    %v2816 = vadd.f32 0.0, %v2815
    %v2817 = vpop.f32.mrf.mxu0
    %v2818 = vpop.f32.mrf.mxu0
    %v2819 = vadd.f32 0.0, %v2818
    %v2820 = vpop.f32.mrf.mxu0
    %2821 = vmatprep.mubr.bf16.mxu0 %v2717
    %2822 = vmatmul.mubr.bf16.gmra.mxu0 %v2716
    %v2823 = vpop.f32.mrf.mxu0
    %v2824 = vadd.f32 0.0, %v2823
    %v2825 = vpop.f32.mrf.mxu0
    %v2826 = vpop.f32.mrf.mxu0
    %v2827 = vadd.f32 0.0, %v2826
    %v2828 = vpop.f32.mrf.mxu0
    %2829 = vmatprep.mubr.bf16.mxu0 %v2720
    %2830 = vmatmul.mubr.bf16.gmra.mxu0 %v2719
    %v2831 = vpop.f32.mrf.mxu0
    %v2832 = vadd.f32 0.0, %v2831
    %v2833 = vpop.f32.mrf.mxu0
    %v2834 = vpop.f32.mrf.mxu0
    %v2835 = vadd.f32 0.0, %v2834
    %v2836 = vpop.f32.mrf.mxu0
    %2837 = vmatprep.mubr.bf16.mxu0 %v2723
    %2838 = vmatmul.mubr.bf16.gmra.mxu0 %v2722
    %v2839 = vpop.f32.mrf.mxu0
    %v2840 = vadd.f32 0.0, %v2839
    %v2841 = vpop.f32.mrf.mxu0
    %v2842 = vpop.f32.mrf.mxu0
    %v2843 = vadd.f32 0.0, %v2842
    %v2844 = vpop.f32.mrf.mxu0
    %2845 = vdwg.mxu0
    %2846 = vmatprep.subr.bf16.mxu0 0
    %2847 = vmatpush1.bf16.msra.mxu0 %v2587
    %2848 = vmatprep.subr.bf16.mxu0 0
    %2849 = vmatpush1.bf16.msra.mxu0 %v2583
    %2850 = vmatprep.subr.bf16.mxu0 0
    %2851 = vmatpush1.bf16.msra.mxu0 %v2579
    %2852 = vmatprep.subr.bf16.mxu0 0
    %2853 = vmatpush1.bf16.msra.mxu0 %v2575
    %2854 = vmatprep.subr.bf16.mxu0 0
    %2855 = vmatpush1.bf16.msra.mxu0 %v2571
    %2856 = vmatprep.subr.bf16.mxu0 0
    %2857 = vmatpush1.bf16.msra.mxu0 %v2567
    %2858 = vmatprep.subr.bf16.mxu0 0
    %2859 = vmatpush1.bf16.msra.mxu0 %v2563
    %2860 = vmatprep.subr.bf16.mxu0 0
    %2861 = vmatpush1.bf16.msra.mxu0 %v2559
    %2862 = vmatprep.subr.bf16.mxu0 0
    %2863 = vmatpush2.bf16.msra.mxu0 0
    %2864 = vmatprep.subr.bf16.mxu0 0
    %2865 = vmatpush2.bf16.msra.mxu0 0
    %2866 = vmatprep.subr.bf16.mxu0 0
    %2867 = vmatpush2.bf16.msra.mxu0 0
    %2868 = vmatprep.subr.bf16.mxu0 0
    %2869 = vmatpush2.bf16.msra.mxu0 0
    %2870 = vmatprep.subr.bf16.mxu0 0
    %2871 = vmatpush2.bf16.msra.mxu0 0
    %2872 = vmatprep.subr.bf16.mxu0 0
    %2873 = vmatpush2.bf16.msra.mxu0 0
    %2874 = vmatprep.subr.bf16.mxu0 0
    %2875 = vmatpush2.bf16.msra.mxu0 0
    %2876 = vmatprep.subr.bf16.mxu0 0
    %2877 = vmatpush2.bf16.msra.mxu0 0
    %2878 = vmatprep.mubr.bf16.mxu0 0
    %2879 = vmatmul.mubr.bf16.gmra.mxu0 %v2703
    %v2880 = vpop.f32.mrf.mxu0
    %v2881 = vadd.f32 %v2784, %v2880
    %v2882 = vpop.f32.mrf.mxu0
    %v2883 = vpop.f32.mrf.mxu0
    %v2884 = vadd.f32 %v2787, %v2883
    %v2885 = vpop.f32.mrf.mxu0
    %2886 = vmatprep.mubr.bf16.mxu0 0
    %2887 = vmatmul.mubr.bf16.gmra.mxu0 %v2706
    %v2888 = vpop.f32.mrf.mxu0
    %v2889 = vadd.f32 %v2792, %v2888
    %v2890 = vpop.f32.mrf.mxu0
    %v2891 = vpop.f32.mrf.mxu0
    %v2892 = vadd.f32 %v2795, %v2891
    %v2893 = vpop.f32.mrf.mxu0
    %2894 = vmatprep.mubr.bf16.mxu0 0
    %2895 = vmatmul.mubr.bf16.gmra.mxu0 %v2709
    %v2896 = vpop.f32.mrf.mxu0
    %v2897 = vadd.f32 %v2800, %v2896
    %v2898 = vpop.f32.mrf.mxu0
    %v2899 = vpop.f32.mrf.mxu0
    %v2900 = vadd.f32 %v2803, %v2899
    %v2901 = vpop.f32.mrf.mxu0
    %2902 = vmatprep.mubr.bf16.mxu0 0
    %2903 = vmatmul.mubr.bf16.gmra.mxu0 %v2712
    %v2904 = vpop.f32.mrf.mxu0
    %v2905 = vadd.f32 %v2808, %v2904
    %v2906 = vpop.f32.mrf.mxu0
    %v2907 = vpop.f32.mrf.mxu0
    %v2908 = vadd.f32 %v2811, %v2907
    %v2909 = vpop.f32.mrf.mxu0
    %2910 = vmatprep.mubr.bf16.mxu0 0
    %2911 = vmatmul.mubr.bf16.gmra.mxu0 %v2715
    %v2912 = vpop.f32.mrf.mxu0
    %v2913 = vadd.f32 %v2816, %v2912
    %v2914 = vpop.f32.mrf.mxu0
    %v2915 = vpop.f32.mrf.mxu0
    %v2916 = vadd.f32 %v2819, %v2915
    %v2917 = vpop.f32.mrf.mxu0
    %2918 = vmatprep.mubr.bf16.mxu0 0
    %2919 = vmatmul.mubr.bf16.gmra.mxu0 %v2718
    %v2920 = vpop.f32.mrf.mxu0
    %v2921 = vadd.f32 %v2824, %v2920
    %v2922 = vpop.f32.mrf.mxu0
    %v2923 = vpop.f32.mrf.mxu0
    %v2924 = vadd.f32 %v2827, %v2923
    %v2925 = vpop.f32.mrf.mxu0
    %2926 = vmatprep.mubr.bf16.mxu0 0
    %2927 = vmatmul.mubr.bf16.gmra.mxu0 %v2721
    %v2928 = vpop.f32.mrf.mxu0
    %v2929 = vadd.f32 %v2832, %v2928
    %v2930 = vpop.f32.mrf.mxu0
    %v2931 = vpop.f32.mrf.mxu0
    %v2932 = vadd.f32 %v2835, %v2931
    %v2933 = vpop.f32.mrf.mxu0
    %2934 = vmatprep.mubr.bf16.mxu0 0
    %2935 = vmatmul.mubr.bf16.gmra.mxu0 %v2724
    %v2936 = vpop.f32.mrf.mxu0
    %v2937 = vadd.f32 %v2840, %v2936
    %v2938 = vpop.f32.mrf.mxu0
    %v2939 = vpop.f32.mrf.mxu0
    %v2940 = vadd.f32 %v2843, %v2939
    %v2941 = vpop.f32.mrf.mxu0
    %2942 = vdwg.mxu0
    %v2943 = vadd.f32 %v2040, %v2881
    %v2944 = vadd.f32 %v2043, %v2884
    %v2945 = vadd.f32 %v2048, %v2889
    %v2946 = vadd.f32 %v2051, %v2892
    %v2947 = vadd.f32 %v2056, %v2897
    %v2948 = vadd.f32 %v2059, %v2900
    %v2949 = vadd.f32 %v2064, %v2905
    %v2950 = vadd.f32 %v2067, %v2908
    %v2951 = vadd.f32 %v2072, %v2913
    %v2952 = vadd.f32 %v2075, %v2916
    %v2953 = vadd.f32 %v2080, %v2921
    %v2954 = vadd.f32 %v2083, %v2924
    %v2955 = vadd.f32 %v2088, %v2929
    %v2956 = vadd.f32 %v2091, %v2932
    %v2957 = vadd.f32 %v2096, %v2937
    %v2958 = vadd.f32 %v2099, %v2940
    %v2959 = vmax.f32 %v2943, 0.0
    %v2960 = vmax.f32 %v2944, 0.0
    %v2961 = vmax.f32 %v2945, 0.0
    %v2962 = vmax.f32 %v2946, 0.0
    %v2963 = vmax.f32 %v2947, 0.0
    %v2964 = vmax.f32 %v2948, 0.0
    %v2965 = vmax.f32 %v2949, 0.0
    %v2966 = vmax.f32 %v2950, 0.0
    %v2967 = vmax.f32 %v2951, 0.0
    %v2968 = vmax.f32 %v2952, 0.0
    %v2969 = vmax.f32 %v2953, 0.0
    %v2970 = vmax.f32 %v2954, 0.0
    %v2971 = vmax.f32 %v2955, 0.0
    %v2972 = vmax.f32 %v2956, 0.0
    %v2973 = vmax.f32 %v2957, 0.0
    %v2974 = vmax.f32 %v2958, 0.0
    %v2975 = vld [vmem:[%s17] sm:$0xff]
    %v2976 = vld [vmem:[%s17 + $0x8] sm:$0xff]
    %v2977 = vld [vmem:[%s17 + $0x10] sm:$0xff]
    %v2978 = vld [vmem:[%s17 + $0x18] sm:$0xf]
    %v2979 = vld [vmem:[%s17 + $0x1c] sm:$0xff]
    %v2980 = vld [vmem:[%s17 + $0x24] sm:$0xff]
    %v2981 = vld [vmem:[%s17 + $0x2c] sm:$0xff]
    %v2982 = vld [vmem:[%s17 + $0x34] sm:$0xf]
    %v2983 = vld [vmem:[%s17 + $0x38] sm:$0xff]
    %v2984 = vld [vmem:[%s17 + $0x40] sm:$0xff]
    %v2985 = vld [vmem:[%s17 + $0x48] sm:$0xff]
    %v2986 = vld [vmem:[%s17 + $0x50] sm:$0xf]
    %v2987 = vld [vmem:[%s17 + $0x54] sm:$0xff]
    %v2988 = vld [vmem:[%s17 + $0x5c] sm:$0xff]
    %v2989 = vld [vmem:[%s17 + $0x64] sm:$0xff]
    %v2990 = vld [vmem:[%s17 + $0x6c] sm:$0xf]
    %v2991 = vld [vmem:[%s17 + $0x70] sm:$0xff]
    %v2992 = vld [vmem:[%s17 + $0x78] sm:$0xff]
    %v2993 = vld [vmem:[%s17 + $0x80] sm:$0xff]
    %v2994 = vld [vmem:[%s17 + $0x88] sm:$0xf]
    %v2995 = vld [vmem:[%s17 + $0x8c] sm:$0xff]
    %v2996 = vld [vmem:[%s17 + $0x94] sm:$0xff]
    %v2997 = vld [vmem:[%s17 + $0x9c] sm:$0xff]
    %v2998 = vld [vmem:[%s17 + $0xa4] sm:$0xf]
    %v2999 = vld [vmem:[%s17 + $0xa8] sm:$0xff]
    %v3000 = vld [vmem:[%s17 + $0xb0] sm:$0xff]
    %v3001 = vld [vmem:[%s17 + $0xb8] sm:$0xff]
    %v3002 = vld [vmem:[%s17 + $0xc0] sm:$0xf]
    %v3003 = vld [vmem:[%s17 + $0xc4] sm:$0xff]
    %v3004 = vld [vmem:[%s17 + $0xcc] sm:$0xff]
    %v3005 = vld [vmem:[%s17 + $0xd4] sm:$0xff]
    %v3006 = vld [vmem:[%s17 + $0xdc] sm:$0xf]
    %v3007 = vld [vmem:[%s17 + $0xe0] sm:$0xff]
    %v3008 = vld [vmem:[%s17 + $0xe8] sm:$0xff]
    %v3009 = vld [vmem:[%s17 + $0xf0] sm:$0xff]
    %v3010 = vld [vmem:[%s17 + $0xf8] sm:$0xf]
    %v3011 = vld [vmem:[%s17 + $0xfc] sm:$0xff]
    %v3012 = vld [vmem:[%s17 + $0x104] sm:$0xff]
    %v3013 = vld [vmem:[%s17 + $0x10c] sm:$0xff]
    %v3014 = vld [vmem:[%s17 + $0x114] sm:$0xf]
    %v3015 = vld [vmem:[%s17 + $0x118] sm:$0xff]
    %v3016 = vld [vmem:[%s17 + $0x120] sm:$0xff]
    %v3017 = vld [vmem:[%s17 + $0x128] sm:$0xff]
    %v3018 = vld [vmem:[%s17 + $0x130] sm:$0xf]
    %v3019 = vld [vmem:[%s17 + $0x134] sm:$0xff]
    %v3020 = vld [vmem:[%s17 + $0x13c] sm:$0xff]
    %v3021 = vld [vmem:[%s17 + $0x144] sm:$0xff]
    %v3022 = vld [vmem:[%s17 + $0x14c] sm:$0xf]
    %v3023 = vld [vmem:[%s17 + $0x150] sm:$0xff]
    %v3024 = vld [vmem:[%s17 + $0x158] sm:$0xff]
    %v3025 = vld [vmem:[%s17 + $0x160] sm:$0xff]
    %v3026 = vld [vmem:[%s17 + $0x168] sm:$0xf]
    %v3027 = vld [vmem:[%s17 + $0x16c] sm:$0xff]
    %v3028 = vld [vmem:[%s17 + $0x174] sm:$0xff]
    %v3029 = vld [vmem:[%s17 + $0x17c] sm:$0xff]
    %v3030 = vld [vmem:[%s17 + $0x184] sm:$0xf]
    %v3031 = vld [vmem:[%s17 + $0x188] sm:$0xff]
    %v3032 = vld [vmem:[%s17 + $0x190] sm:$0xff]
    %v3033 = vld [vmem:[%s17 + $0x198] sm:$0xff]
    %v3034 = vld [vmem:[%s17 + $0x1a0] sm:$0xf]
    %v3035 = vld [vmem:[%s17 + $0x1a4] sm:$0xff]
    %v3036 = vld [vmem:[%s17 + $0x1ac] sm:$0xff]
    %v3037 = vld [vmem:[%s17 + $0x1b4] sm:$0xff]
    %v3038 = vld [vmem:[%s17 + $0x1bc] sm:$0xf]
    %v3039 = vld [vmem:[%s17 + $0x1c0] sm:$0xff]
    %v3040 = vld [vmem:[%s17 + $0x1c8] sm:$0xff]
    %v3041 = vld [vmem:[%s17 + $0x1d0] sm:$0xff]
    %v3042 = vld [vmem:[%s17 + $0x1d8] sm:$0xf]
    %v3043 = vld [vmem:[%s17 + $0x1dc] sm:$0xff]
    %v3044 = vld [vmem:[%s17 + $0x1e4] sm:$0xff]
    %v3045 = vld [vmem:[%s17 + $0x1ec] sm:$0xff]
    %v3046 = vld [vmem:[%s17 + $0x1f4] sm:$0xf]
    %v3047 = vld [vmem:[%s17 + $0x1f8] sm:$0xff]
    %v3048 = vld [vmem:[%s17 + $0x200] sm:$0xff]
    %v3049 = vld [vmem:[%s17 + $0x208] sm:$0xff]
    %v3050 = vld [vmem:[%s17 + $0x210] sm:$0xf]
    %v3051 = vld [vmem:[%s17 + $0x214] sm:$0xff]
    %v3052 = vld [vmem:[%s17 + $0x21c] sm:$0xff]
    %v3053 = vld [vmem:[%s17 + $0x224] sm:$0xff]
    %v3054 = vld [vmem:[%s17 + $0x22c] sm:$0xf]
    %v3055 = vld [vmem:[%s17 + $0x230] sm:$0xff]
    %v3056 = vld [vmem:[%s17 + $0x238] sm:$0xff]
    %v3057 = vld [vmem:[%s17 + $0x240] sm:$0xff]
    %v3058 = vld [vmem:[%s17 + $0x248] sm:$0xf]
    %v3059 = vld [vmem:[%s17 + $0x24c] sm:$0xff]
    %v3060 = vld [vmem:[%s17 + $0x254] sm:$0xff]
    %v3061 = vld [vmem:[%s17 + $0x25c] sm:$0xff]
    %v3062 = vld [vmem:[%s17 + $0x264] sm:$0xf]
    %v3063 = vld [vmem:[%s17 + $0x268] sm:$0xff]
    %v3064 = vld [vmem:[%s17 + $0x270] sm:$0xff]
    %v3065 = vld [vmem:[%s17 + $0x278] sm:$0xff]
    %v3066 = vld [vmem:[%s17 + $0x280] sm:$0xf]
    %v3067 = vld [vmem:[%s17 + $0x284] sm:$0xff]
    %v3068 = vld [vmem:[%s17 + $0x28c] sm:$0xff]
    %v3069 = vld [vmem:[%s17 + $0x294] sm:$0xff]
    %v3070 = vld [vmem:[%s17 + $0x29c] sm:$0xf]
    %v3071 = vld [vmem:[%s17 + $0x2a0] sm:$0xff]
    %v3072 = vld [vmem:[%s17 + $0x2a8] sm:$0xff]
    %v3073 = vld [vmem:[%s17 + $0x2b0] sm:$0xff]
    %v3074 = vld [vmem:[%s17 + $0x2b8] sm:$0xf]
    %v3075 = vld [vmem:[%s17 + $0x2bc] sm:$0xff]
    %v3076 = vld [vmem:[%s17 + $0x2c4] sm:$0xff]
    %v3077 = vld [vmem:[%s17 + $0x2cc] sm:$0xff]
    %v3078 = vld [vmem:[%s17 + $0x2d4] sm:$0xf]
    %v3079 = vld [vmem:[%s17 + $0x2d8] sm:$0xff]
    %v3080 = vld [vmem:[%s17 + $0x2e0] sm:$0xff]
    %v3081 = vld [vmem:[%s17 + $0x2e8] sm:$0xff]
    %v3082 = vld [vmem:[%s17 + $0x2f0] sm:$0xf]
    %v3083 = vld [vmem:[%s17 + $0x2f4] sm:$0xff]
    %v3084 = vld [vmem:[%s17 + $0x2fc] sm:$0xff]
    %v3085 = vld [vmem:[%s17 + $0x304] sm:$0xff]
    %v3086 = vld [vmem:[%s17 + $0x30c] sm:$0xf]
    %v3087 = vld [vmem:[%s17 + $0x310] sm:$0xff]
    %v3088 = vld [vmem:[%s17 + $0x318] sm:$0xff]
    %v3089 = vld [vmem:[%s17 + $0x320] sm:$0xff]
    %v3090 = vld [vmem:[%s17 + $0x328] sm:$0xf]
    %v3091 = vld [vmem:[%s17 + $0x32c] sm:$0xff]
    %v3092 = vld [vmem:[%s17 + $0x334] sm:$0xff]
    %v3093 = vld [vmem:[%s17 + $0x33c] sm:$0xff]
    %v3094 = vld [vmem:[%s17 + $0x344] sm:$0xf]
    %v3095 = vld [vmem:[%s17 + $0x348] sm:$0xff]
    %v3096 = vld [vmem:[%s17 + $0x350] sm:$0xff]
    %v3097 = vld [vmem:[%s17 + $0x358] sm:$0xff]
    %v3098 = vld [vmem:[%s17 + $0x360] sm:$0xf]
    %v3099 = vld [vmem:[%s17 + $0x364] sm:$0xff]
    %v3100 = vld [vmem:[%s17 + $0x36c] sm:$0xff]
    %v3101 = vld [vmem:[%s17 + $0x374] sm:$0xff]
    %v3102 = vld [vmem:[%s17 + $0x37c] sm:$0xf]
    %v3103 = vld [vmem:[%s3] sm:$0xf]
    %v3104 = vld [vmem:[%s3 + $0x4] sm:$0xf]
    %v3105 = vld [vmem:[%s3 + $0x8] sm:$0xf]
    %v3106 = vld [vmem:[%s3 + $0xc] sm:$0xf]
    %v3107 = vld [vmem:[%s3 + $0x10] sm:$0xf]
    %v3108 = vld [vmem:[%s3 + $0x14] sm:$0xf]
    %v3109 = vld [vmem:[%s3 + $0x18] sm:$0xf]
    %v3110 = vld [vmem:[%s3 + $0x1c] sm:$0xf]
    %v3111 = vld [vmem:[%s3 + $0x20] sm:$0xf]
    %v3112 = vld [vmem:[%s3 + $0x24] sm:$0xf]
    %v3113 = vld [vmem:[%s3 + $0x28] sm:$0xf]
    %v3114 = vld [vmem:[%s3 + $0x2c] sm:$0xf]
    %v3115 = vld [vmem:[%s3 + $0x30] sm:$0xf]
    %v3116 = vld [vmem:[%s3 + $0x34] sm:$0xf]
    %v3117 = vld [vmem:[%s3 + $0x38] sm:$0xf]
    %v3118 = vld [vmem:[%s3 + $0x3c] sm:$0xf]
    %v3119 = vld [vmem:[%s3 + $0x40] sm:$0xf]
    %v3120 = vld [vmem:[%s3 + $0x44] sm:$0xf]
    %v3121 = vld [vmem:[%s3 + $0x48] sm:$0xf]
    %v3122 = vld [vmem:[%s3 + $0x4c] sm:$0xf]
    %v3123 = vld [vmem:[%s3 + $0x50] sm:$0xf]
    %v3124 = vld [vmem:[%s3 + $0x54] sm:$0xf]
    %v3125 = vld [vmem:[%s3 + $0x58] sm:$0xf]
    %v3126 = vld [vmem:[%s3 + $0x5c] sm:$0xf]
    %v3127 = vld [vmem:[%s3 + $0x60] sm:$0xf]
    %v3128 = vld [vmem:[%s3 + $0x64] sm:$0xf]
    %v3129 = vld [vmem:[%s3 + $0x68] sm:$0xf]
    %v3130 = vld [vmem:[%s3 + $0x6c] sm:$0xf]
    %v3131 = vld [vmem:[%s3 + $0x70] sm:$0xf]
    %v3132 = vld [vmem:[%s3 + $0x74] sm:$0xf]
    %v3133 = vld [vmem:[%s3 + $0x78] sm:$0xf]
    %v3134 = vld [vmem:[%s3 + $0x7c] sm:$0xf]
    %v3135 = vld [vmem:[%s3 + $0x80] sm:$0xf]
    %v3136 = vld [vmem:[%s3 + $0x84] sm:$0xf]
    %v3137 = vld [vmem:[%s3 + $0x88] sm:$0xf]
    %v3138 = vld [vmem:[%s3 + $0x8c] sm:$0xf]
    %v3139 = vld [vmem:[%s3 + $0x90] sm:$0xf]
    %v3140 = vld [vmem:[%s3 + $0x94] sm:$0xf]
    %v3141 = vld [vmem:[%s3 + $0x98] sm:$0xf]
    %v3142 = vld [vmem:[%s3 + $0x9c] sm:$0xf]
    %v3143 = vld [vmem:[%s3 + $0xa0] sm:$0xf]
    %v3144 = vld [vmem:[%s3 + $0xa4] sm:$0xf]
    %v3145 = vld [vmem:[%s3 + $0xa8] sm:$0xf]
    %v3146 = vld [vmem:[%s3 + $0xac] sm:$0xf]
    %v3147 = vld [vmem:[%s3 + $0xb0] sm:$0xf]
    %v3148 = vld [vmem:[%s3 + $0xb4] sm:$0xf]
    %v3149 = vld [vmem:[%s3 + $0xb8] sm:$0xf]
    %v3150 = vld [vmem:[%s3 + $0xbc] sm:$0xf]
    %v3151 = vld [vmem:[%s3 + $0xc0] sm:$0xf]
    %v3152 = vld [vmem:[%s3 + $0xc4] sm:$0xf]
    %v3153 = vld [vmem:[%s3 + $0xc8] sm:$0xf]
    %v3154 = vld [vmem:[%s3 + $0xcc] sm:$0xf]
    %v3155 = vld [vmem:[%s3 + $0xd0] sm:$0xf]
    %v3156 = vld [vmem:[%s3 + $0xd4] sm:$0xf]
    %v3157 = vld [vmem:[%s3 + $0xd8] sm:$0xf]
    %v3158 = vld [vmem:[%s3 + $0xdc] sm:$0xf]
    %v3159 = vld [vmem:[%s3 + $0xe0] sm:$0xf]
    %v3160 = vld [vmem:[%s3 + $0xe4] sm:$0xf]
    %v3161 = vld [vmem:[%s3 + $0xe8] sm:$0xf]
    %v3162 = vld [vmem:[%s3 + $0xec] sm:$0xf]
    %v3163 = vld [vmem:[%s3 + $0xf0] sm:$0xf]
    %v3164 = vld [vmem:[%s3 + $0xf4] sm:$0xf]
    %v3165 = vld [vmem:[%s3 + $0xf8] sm:$0xf]
    %v3166 = vld [vmem:[%s3 + $0xfc] sm:$0xf]
    %v3167 = vld [vmem:[%s3 + $0x100] sm:$0xf]
    %v3168 = vld [vmem:[%s3 + $0x104] sm:$0xf]
    %v3169 = vld [vmem:[%s3 + $0x108] sm:$0xf]
    %v3170 = vld [vmem:[%s3 + $0x10c] sm:$0xf]
    %v3171 = vld [vmem:[%s3 + $0x110] sm:$0xf]
    %v3172 = vld [vmem:[%s3 + $0x114] sm:$0xf]
    %v3173 = vld [vmem:[%s3 + $0x118] sm:$0xf]
    %v3174 = vld [vmem:[%s3 + $0x11c] sm:$0xf]
    %v3175 = vld [vmem:[%s3 + $0x120] sm:$0xf]
    %v3176 = vld [vmem:[%s3 + $0x124] sm:$0xf]
    %v3177 = vld [vmem:[%s3 + $0x128] sm:$0xf]
    %v3178 = vld [vmem:[%s3 + $0x12c] sm:$0xf]
    %v3179 = vld [vmem:[%s3 + $0x130] sm:$0xf]
    %v3180 = vld [vmem:[%s3 + $0x134] sm:$0xf]
    %v3181 = vld [vmem:[%s3 + $0x138] sm:$0xf]
    %v3182 = vld [vmem:[%s3 + $0x13c] sm:$0xf]
    %v3183 = vld [vmem:[%s3 + $0x140] sm:$0xf]
    %v3184 = vld [vmem:[%s3 + $0x144] sm:$0xf]
    %v3185 = vld [vmem:[%s3 + $0x148] sm:$0xf]
    %v3186 = vld [vmem:[%s3 + $0x14c] sm:$0xf]
    %v3187 = vld [vmem:[%s3 + $0x150] sm:$0xf]
    %v3188 = vld [vmem:[%s3 + $0x154] sm:$0xf]
    %v3189 = vld [vmem:[%s3 + $0x158] sm:$0xf]
    %v3190 = vld [vmem:[%s3 + $0x15c] sm:$0xf]
    %v3191 = vld [vmem:[%s3 + $0x160] sm:$0xf]
    %v3192 = vld [vmem:[%s3 + $0x164] sm:$0xf]
    %v3193 = vld [vmem:[%s3 + $0x168] sm:$0xf]
    %v3194 = vld [vmem:[%s3 + $0x16c] sm:$0xf]
    %v3195 = vld [vmem:[%s3 + $0x170] sm:$0xf]
    %v3196 = vld [vmem:[%s3 + $0x174] sm:$0xf]
    %v3197 = vld [vmem:[%s3 + $0x178] sm:$0xf]
    %v3198 = vld [vmem:[%s3 + $0x17c] sm:$0xf]
    %v3199 = vld [vmem:[%s3 + $0x180] sm:$0xf]
    %v3200 = vld [vmem:[%s3 + $0x184] sm:$0xf]
    %v3201 = vld [vmem:[%s3 + $0x188] sm:$0xf]
    %v3202 = vld [vmem:[%s3 + $0x18c] sm:$0xf]
    %v3203 = vld [vmem:[%s3 + $0x190] sm:$0xf]
    %v3204 = vld [vmem:[%s3 + $0x194] sm:$0xf]
    %v3205 = vld [vmem:[%s3 + $0x198] sm:$0xf]
    %v3206 = vld [vmem:[%s3 + $0x19c] sm:$0xf]
    %v3207 = vld [vmem:[%s3 + $0x1a0] sm:$0xf]
    %v3208 = vld [vmem:[%s3 + $0x1a4] sm:$0xf]
    %v3209 = vld [vmem:[%s3 + $0x1a8] sm:$0xf]
    %v3210 = vld [vmem:[%s3 + $0x1ac] sm:$0xf]
    %v3211 = vld [vmem:[%s18] sm:$0xff]
    %v3212 = vld [vmem:[%s18 + $0x8] sm:$0xff]
    %v3213 = vld [vmem:[%s18 + $0x10] sm:$0xff]
    %v3214 = vld [vmem:[%s18 + $0x18] sm:$0xff]
    %v3215 = vld [vmem:[%s18 + $0x20] sm:$0xff]
    %v3216 = vld [vmem:[%s18 + $0x28] sm:$0xff]
    %v3217 = vld [vmem:[%s18 + $0x30] sm:$0xff]
    %v3218 = vld [vmem:[%s18 + $0x38] sm:$0xff]
    %v3219 = vld [vmem:[%s18 + $0x40] sm:$0xff]
    %v3220 = vld [vmem:[%s18 + $0x48] sm:$0xff]
    %v3221 = vld [vmem:[%s18 + $0x50] sm:$0xff]
    %v3222 = vld [vmem:[%s18 + $0x58] sm:$0xff]
    %v3223 = vld [vmem:[%s18 + $0x60] sm:$0xff]
    %v3224 = vld [vmem:[%s18 + $0x68] sm:$0xff]
    %v3225 = vld [vmem:[%s18 + $0x70] sm:$0xff]
    %v3226 = vld [vmem:[%s18 + $0x78] sm:$0xff]
    %v3227 = vld [vmem:[%s18 + $0x80] sm:$0xff]
    %v3228 = vld [vmem:[%s18 + $0x88] sm:$0xff]
    %v3229 = vld [vmem:[%s18 + $0x90] sm:$0xff]
    %v3230 = vld [vmem:[%s18 + $0x98] sm:$0xff]
    %v3231 = vld [vmem:[%s18 + $0xa0] sm:$0xff]
    %v3232 = vld [vmem:[%s18 + $0xa8] sm:$0xff]
    %v3233 = vld [vmem:[%s18 + $0xb0] sm:$0xff]
    %v3234 = vld [vmem:[%s18 + $0xb8] sm:$0xff]
    %v3235 = vld [vmem:[%s18 + $0xc0] sm:$0xff]
    %v3236 = vld [vmem:[%s18 + $0xc8] sm:$0xff]
    %v3237 = vld [vmem:[%s18 + $0xd0] sm:$0xff]
    %v3238 = vld [vmem:[%s18 + $0xd8] sm:$0xff]
    %v3239 = vld [vmem:[%s18 + $0xe0] sm:$0xff]
    %v3240 = vld [vmem:[%s18 + $0xe8] sm:$0xff]
    %v3241 = vld [vmem:[%s18 + $0xf0] sm:$0xff]
    %v3242 = vld [vmem:[%s18 + $0xf8] sm:$0xff]
    %3244 = vset.pattern.permute.xlu0 0
    %3245 = vperm.xlu0 %3244, %v3211
    %v3246 = vpop.permute.xlu0 %3245
    %3249 = vset.pattern.permute.xlu0 0
    %3250 = vperm.xlu0 %3249, %v3212
    %v3251 = vpop.permute.xlu0 %3250
    %3254 = vset.pattern.permute.xlu0 0
    %3255 = vperm.xlu0 %3254, %v3213
    %v3256 = vpop.permute.xlu0 %3255
    %3259 = vset.pattern.permute.xlu0 0
    %3260 = vperm.xlu0 %3259, %v3214
    %v3261 = vpop.permute.xlu0 %3260
    %3264 = vset.pattern.permute.xlu0 0
    %3265 = vperm.xlu0 %3264, %v3215
    %v3266 = vpop.permute.xlu0 %3265
    %3269 = vset.pattern.permute.xlu0 0
    %3270 = vperm.xlu0 %3269, %v3216
    %v3271 = vpop.permute.xlu0 %3270
    %3274 = vset.pattern.permute.xlu0 0
    %3275 = vperm.xlu0 %3274, %v3217
    %v3276 = vpop.permute.xlu0 %3275
    %3279 = vset.pattern.permute.xlu0 0
    %3280 = vperm.xlu0 %3279, %v3218
    %v3281 = vpop.permute.xlu0 %3280
    %3284 = vset.pattern.permute.xlu0 0
    %3285 = vperm.xlu0 %3284, %v3219
    %v3286 = vpop.permute.xlu0 %3285
    %3289 = vset.pattern.permute.xlu0 0
    %3290 = vperm.xlu0 %3289, %v3220
    %v3291 = vpop.permute.xlu0 %3290
    %3294 = vset.pattern.permute.xlu0 0
    %3295 = vperm.xlu0 %3294, %v3221
    %v3296 = vpop.permute.xlu0 %3295
    %3299 = vset.pattern.permute.xlu0 0
    %3300 = vperm.xlu0 %3299, %v3222
    %v3301 = vpop.permute.xlu0 %3300
    %3304 = vset.pattern.permute.xlu0 0
    %3305 = vperm.xlu0 %3304, %v3223
    %v3306 = vpop.permute.xlu0 %3305
    %3309 = vset.pattern.permute.xlu0 0
    %3310 = vperm.xlu0 %3309, %v3224
    %v3311 = vpop.permute.xlu0 %3310
    %3314 = vset.pattern.permute.xlu0 0
    %3315 = vperm.xlu0 %3314, %v3225
    %v3316 = vpop.permute.xlu0 %3315
    %3319 = vset.pattern.permute.xlu0 0
    %3320 = vperm.xlu0 %3319, %v3226
    %v3321 = vpop.permute.xlu0 %3320
    %3324 = vset.pattern.permute.xlu0 0
    %3325 = vperm.xlu0 %3324, %v3227
    %v3326 = vpop.permute.xlu0 %3325
    %3329 = vset.pattern.permute.xlu0 0
    %3330 = vperm.xlu0 %3329, %v3228
    %v3331 = vpop.permute.xlu0 %3330
    %3334 = vset.pattern.permute.xlu0 0
    %3335 = vperm.xlu0 %3334, %v3229
    %v3336 = vpop.permute.xlu0 %3335
    %3339 = vset.pattern.permute.xlu0 0
    %3340 = vperm.xlu0 %3339, %v3230
    %v3341 = vpop.permute.xlu0 %3340
    %3344 = vset.pattern.permute.xlu0 0
    %3345 = vperm.xlu0 %3344, %v3231
    %v3346 = vpop.permute.xlu0 %3345
    %3349 = vset.pattern.permute.xlu0 0
    %3350 = vperm.xlu0 %3349, %v3232
    %v3351 = vpop.permute.xlu0 %3350
    %3354 = vset.pattern.permute.xlu0 0
    %3355 = vperm.xlu0 %3354, %v3233
    %v3356 = vpop.permute.xlu0 %3355
    %3359 = vset.pattern.permute.xlu0 0
    %3360 = vperm.xlu0 %3359, %v3234
    %v3361 = vpop.permute.xlu0 %3360
    %3364 = vset.pattern.permute.xlu0 0
    %3365 = vperm.xlu0 %3364, %v3235
    %v3366 = vpop.permute.xlu0 %3365
    %3369 = vset.pattern.permute.xlu0 0
    %3370 = vperm.xlu0 %3369, %v3236
    %v3371 = vpop.permute.xlu0 %3370
    %3374 = vset.pattern.permute.xlu0 0
    %3375 = vperm.xlu0 %3374, %v3237
    %v3376 = vpop.permute.xlu0 %3375
    %3379 = vset.pattern.permute.xlu0 0
    %3380 = vperm.xlu0 %3379, %v3238
    %v3381 = vpop.permute.xlu0 %3380
    %3384 = vset.pattern.permute.xlu0 0
    %3385 = vperm.xlu0 %3384, %v3239
    %v3386 = vpop.permute.xlu0 %3385
    %3389 = vset.pattern.permute.xlu0 0
    %3390 = vperm.xlu0 %3389, %v3240
    %v3391 = vpop.permute.xlu0 %3390
    %3394 = vset.pattern.permute.xlu0 0
    %3395 = vperm.xlu0 %3394, %v3241
    %v3396 = vpop.permute.xlu0 %3395
    %3399 = vset.pattern.permute.xlu0 0
    %3400 = vperm.xlu0 %3399, %v3242
    %v3401 = vpop.permute.xlu0 %3400
    %v3531 = vunpack.c.l.b16 %v2975
    %v3532 = vunpack.c.h.b16 %v2975
    %v3533 = vunpack.c.l.b16 %v2976
    %v3534 = vunpack.c.h.b16 %v2976
    %v3535 = vunpack.c.l.b16 %v2977
    %v3536 = vunpack.c.h.b16 %v2977
    %v3537 = vunpack.c.l.b16 %v2978
    %v3538 = vunpack.c.l.b16 %v2979
    %v3539 = vunpack.c.h.b16 %v2979
    %v3540 = vunpack.c.l.b16 %v2980
    %v3541 = vunpack.c.h.b16 %v2980
    %v3542 = vunpack.c.l.b16 %v2981
    %v3543 = vunpack.c.h.b16 %v2981
    %v3544 = vunpack.c.l.b16 %v2982
    %v3545 = vunpack.c.l.b16 %v2983
    %v3546 = vunpack.c.h.b16 %v2983
    %v3547 = vunpack.c.l.b16 %v2984
    %v3548 = vunpack.c.h.b16 %v2984
    %v3549 = vunpack.c.l.b16 %v2985
    %v3550 = vunpack.c.h.b16 %v2985
    %v3551 = vunpack.c.l.b16 %v2986
    %v3552 = vunpack.c.l.b16 %v2987
    %v3553 = vunpack.c.h.b16 %v2987
    %v3554 = vunpack.c.l.b16 %v2988
    %v3555 = vunpack.c.h.b16 %v2988
    %v3556 = vunpack.c.l.b16 %v2989
    %v3557 = vunpack.c.h.b16 %v2989
    %v3558 = vunpack.c.l.b16 %v2990
    %v3559 = vunpack.c.l.b16 %v2991
    %v3560 = vunpack.c.h.b16 %v2991
    %v3561 = vunpack.c.l.b16 %v2992
    %v3562 = vunpack.c.h.b16 %v2992
    %v3563 = vunpack.c.l.b16 %v2993
    %v3564 = vunpack.c.h.b16 %v2993
    %v3565 = vunpack.c.l.b16 %v2994
    %v3566 = vunpack.c.l.b16 %v2995
    %v3567 = vunpack.c.h.b16 %v2995
    %v3568 = vunpack.c.l.b16 %v2996
    %v3569 = vunpack.c.h.b16 %v2996
    %v3570 = vunpack.c.l.b16 %v2997
    %v3571 = vunpack.c.h.b16 %v2997
    %v3572 = vunpack.c.l.b16 %v2998
    %v3573 = vunpack.c.l.b16 %v2999
    %v3574 = vunpack.c.h.b16 %v2999
    %v3575 = vunpack.c.l.b16 %v3000
    %v3576 = vunpack.c.h.b16 %v3000
    %v3577 = vunpack.c.l.b16 %v3001
    %v3578 = vunpack.c.h.b16 %v3001
    %v3579 = vunpack.c.l.b16 %v3002
    %v3580 = vunpack.c.l.b16 %v3003
    %v3581 = vunpack.c.h.b16 %v3003
    %v3582 = vunpack.c.l.b16 %v3004
    %v3583 = vunpack.c.h.b16 %v3004
    %v3584 = vunpack.c.l.b16 %v3005
    %v3585 = vunpack.c.h.b16 %v3005
    %v3586 = vunpack.c.l.b16 %v3006
    %v3587 = vunpack.c.l.b16 %v3007
    %v3588 = vunpack.c.h.b16 %v3007
    %v3589 = vunpack.c.l.b16 %v3008
    %v3590 = vunpack.c.h.b16 %v3008
    %v3591 = vunpack.c.l.b16 %v3009
    %v3592 = vunpack.c.h.b16 %v3009
    %v3593 = vunpack.c.l.b16 %v3010
    %v3594 = vunpack.c.l.b16 %v3011
    %v3595 = vunpack.c.h.b16 %v3011
    %v3596 = vunpack.c.l.b16 %v3012
    %v3597 = vunpack.c.h.b16 %v3012
    %v3598 = vunpack.c.l.b16 %v3013
    %v3599 = vunpack.c.h.b16 %v3013
    %v3600 = vunpack.c.l.b16 %v3014
    %v3601 = vunpack.c.l.b16 %v3015
    %v3602 = vunpack.c.h.b16 %v3015
    %v3603 = vunpack.c.l.b16 %v3016
    %v3604 = vunpack.c.h.b16 %v3016
    %v3605 = vunpack.c.l.b16 %v3017
    %v3606 = vunpack.c.h.b16 %v3017
    %v3607 = vunpack.c.l.b16 %v3018
    %v3608 = vunpack.c.l.b16 %v3019
    %v3609 = vunpack.c.h.b16 %v3019
    %v3610 = vunpack.c.l.b16 %v3020
    %v3611 = vunpack.c.h.b16 %v3020
    %v3612 = vunpack.c.l.b16 %v3021
    %v3613 = vunpack.c.h.b16 %v3021
    %v3614 = vunpack.c.l.b16 %v3022
    %v3615 = vunpack.c.l.b16 %v3023
    %v3616 = vunpack.c.h.b16 %v3023
    %v3617 = vunpack.c.l.b16 %v3024
    %v3618 = vunpack.c.h.b16 %v3024
    %v3619 = vunpack.c.l.b16 %v3025
    %v3620 = vunpack.c.h.b16 %v3025
    %v3621 = vunpack.c.l.b16 %v3026
    %v3622 = vunpack.c.l.b16 %v3027
    %v3623 = vunpack.c.h.b16 %v3027
    %v3624 = vunpack.c.l.b16 %v3028
    %v3625 = vunpack.c.h.b16 %v3028
    %v3626 = vunpack.c.l.b16 %v3029
    %v3627 = vunpack.c.h.b16 %v3029
    %v3628 = vunpack.c.l.b16 %v3030
    %v3629 = vunpack.c.l.b16 %v3031
    %v3630 = vunpack.c.h.b16 %v3031
    %v3631 = vunpack.c.l.b16 %v3032
    %v3632 = vunpack.c.h.b16 %v3032
    %v3633 = vunpack.c.l.b16 %v3033
    %v3634 = vunpack.c.h.b16 %v3033
    %v3635 = vunpack.c.l.b16 %v3034
    %v3636 = vunpack.c.l.b16 %v3035
    %v3637 = vunpack.c.h.b16 %v3035
    %v3638 = vunpack.c.l.b16 %v3036
    %v3639 = vunpack.c.h.b16 %v3036
    %v3640 = vunpack.c.l.b16 %v3037
    %v3641 = vunpack.c.h.b16 %v3037
    %v3642 = vunpack.c.l.b16 %v3038
    %v3643 = vunpack.c.l.b16 %v3039
    %v3644 = vunpack.c.h.b16 %v3039
    %v3645 = vunpack.c.l.b16 %v3040
    %v3646 = vunpack.c.h.b16 %v3040
    %v3647 = vunpack.c.l.b16 %v3041
    %v3648 = vunpack.c.h.b16 %v3041
    %v3649 = vunpack.c.l.b16 %v3042
    %v3650 = vunpack.c.l.b16 %v3043
    %v3651 = vunpack.c.h.b16 %v3043
    %v3652 = vunpack.c.l.b16 %v3044
    %v3653 = vunpack.c.h.b16 %v3044
    %v3654 = vunpack.c.l.b16 %v3045
    %v3655 = vunpack.c.h.b16 %v3045
    %v3656 = vunpack.c.l.b16 %v3046
    %v3657 = vunpack.c.l.b16 %v3047
    %v3658 = vunpack.c.h.b16 %v3047
    %v3659 = vunpack.c.l.b16 %v3048
    %v3660 = vunpack.c.h.b16 %v3048
    %v3661 = vunpack.c.l.b16 %v3049
    %v3662 = vunpack.c.h.b16 %v3049
    %v3663 = vunpack.c.l.b16 %v3050
    %v3664 = vunpack.c.l.b16 %v3051
    %v3665 = vunpack.c.h.b16 %v3051
    %v3666 = vunpack.c.l.b16 %v3052
    %v3667 = vunpack.c.h.b16 %v3052
    %v3668 = vunpack.c.l.b16 %v3053
    %v3669 = vunpack.c.h.b16 %v3053
    %v3670 = vunpack.c.l.b16 %v3054
    %v3671 = vunpack.c.l.b16 %v3055
    %v3672 = vunpack.c.h.b16 %v3055
    %v3673 = vunpack.c.l.b16 %v3056
    %v3674 = vunpack.c.h.b16 %v3056
    %v3675 = vunpack.c.l.b16 %v3057
    %v3676 = vunpack.c.h.b16 %v3057
    %v3677 = vunpack.c.l.b16 %v3058
    %v3678 = vunpack.c.l.b16 %v3059
    %v3679 = vunpack.c.h.b16 %v3059
    %v3680 = vunpack.c.l.b16 %v3060
    %v3681 = vunpack.c.h.b16 %v3060
    %v3682 = vunpack.c.l.b16 %v3061
    %v3683 = vunpack.c.h.b16 %v3061
    %v3684 = vunpack.c.l.b16 %v3062
    %v3685 = vunpack.c.l.b16 %v3063
    %v3686 = vunpack.c.h.b16 %v3063
    %v3687 = vunpack.c.l.b16 %v3064
    %v3688 = vunpack.c.h.b16 %v3064
    %v3689 = vunpack.c.l.b16 %v3065
    %v3690 = vunpack.c.h.b16 %v3065
    %v3691 = vunpack.c.l.b16 %v3066
    %v3692 = vunpack.c.l.b16 %v3067
    %v3693 = vunpack.c.h.b16 %v3067
    %v3694 = vunpack.c.l.b16 %v3068
    %v3695 = vunpack.c.h.b16 %v3068
    %v3696 = vunpack.c.l.b16 %v3069
    %v3697 = vunpack.c.h.b16 %v3069
    %v3698 = vunpack.c.l.b16 %v3070
    %v3699 = vunpack.c.l.b16 %v3071
    %v3700 = vunpack.c.h.b16 %v3071
    %v3701 = vunpack.c.l.b16 %v3072
    %v3702 = vunpack.c.h.b16 %v3072
    %v3703 = vunpack.c.l.b16 %v3073
    %v3704 = vunpack.c.h.b16 %v3073
    %v3705 = vunpack.c.l.b16 %v3074
    %v3706 = vunpack.c.l.b16 %v3075
    %v3707 = vunpack.c.h.b16 %v3075
    %v3708 = vunpack.c.l.b16 %v3076
    %v3709 = vunpack.c.h.b16 %v3076
    %v3710 = vunpack.c.l.b16 %v3077
    %v3711 = vunpack.c.h.b16 %v3077
    %v3712 = vunpack.c.l.b16 %v3078
    %v3713 = vunpack.c.l.b16 %v3079
    %v3714 = vunpack.c.h.b16 %v3079
    %v3715 = vunpack.c.l.b16 %v3080
    %v3716 = vunpack.c.h.b16 %v3080
    %v3717 = vunpack.c.l.b16 %v3081
    %v3718 = vunpack.c.h.b16 %v3081
    %v3719 = vunpack.c.l.b16 %v3082
    %v3720 = vunpack.c.l.b16 %v3083
    %v3721 = vunpack.c.h.b16 %v3083
    %v3722 = vunpack.c.l.b16 %v3084
    %v3723 = vunpack.c.h.b16 %v3084
    %v3724 = vunpack.c.l.b16 %v3085
    %v3725 = vunpack.c.h.b16 %v3085
    %v3726 = vunpack.c.l.b16 %v3086
    %v3727 = vunpack.c.l.b16 %v3087
    %v3728 = vunpack.c.h.b16 %v3087
    %v3729 = vunpack.c.l.b16 %v3088
    %v3730 = vunpack.c.h.b16 %v3088
    %v3731 = vunpack.c.l.b16 %v3089
    %v3732 = vunpack.c.h.b16 %v3089
    %v3733 = vunpack.c.l.b16 %v3090
    %v3734 = vunpack.c.l.b16 %v3091
    %v3735 = vunpack.c.h.b16 %v3091
    %v3736 = vunpack.c.l.b16 %v3092
    %v3737 = vunpack.c.h.b16 %v3092
    %v3738 = vunpack.c.l.b16 %v3093
    %v3739 = vunpack.c.h.b16 %v3093
    %v3740 = vunpack.c.l.b16 %v3094
    %v3741 = vunpack.c.l.b16 %v3095
    %v3742 = vunpack.c.h.b16 %v3095
    %v3743 = vunpack.c.l.b16 %v3096
    %v3744 = vunpack.c.h.b16 %v3096
    %v3745 = vunpack.c.l.b16 %v3097
    %v3746 = vunpack.c.h.b16 %v3097
    %v3747 = vunpack.c.l.b16 %v3098
    %v3748 = vunpack.c.l.b16 %v3099
    %v3749 = vunpack.c.h.b16 %v3099
    %v3750 = vunpack.c.l.b16 %v3100
    %v3751 = vunpack.c.h.b16 %v3100
    %v3752 = vunpack.c.l.b16 %v3101
    %v3753 = vunpack.c.h.b16 %v3101
    %v3754 = vunpack.c.l.b16 %v3102
    %v3755 = vpack.c.b16 %v3538, %v3531
    %v3756 = vpack.c.b16 %v3539, %v3532
    %v3757 = vpack.c.b16 %v3540, %v3533
    %v3758 = vpack.c.b16 %v3541, %v3534
    %v3759 = vpack.c.b16 %v3542, %v3535
    %v3760 = vpack.c.b16 %v3543, %v3536
    %v3761 = vpack.c.b16 %v3544, %v3537
    %v3762 = vpack.c.b16 %v3552, %v3545
    %v3763 = vpack.c.b16 %v3553, %v3546
    %v3764 = vpack.c.b16 %v3554, %v3547
    %v3765 = vpack.c.b16 %v3555, %v3548
    %v3766 = vpack.c.b16 %v3556, %v3549
    %v3767 = vpack.c.b16 %v3557, %v3550
    %v3768 = vpack.c.b16 %v3558, %v3551
    %v3769 = vpack.c.b16 %v3566, %v3559
    %v3770 = vpack.c.b16 %v3567, %v3560
    %v3771 = vpack.c.b16 %v3568, %v3561
    %v3772 = vpack.c.b16 %v3569, %v3562
    %v3773 = vpack.c.b16 %v3570, %v3563
    %v3774 = vpack.c.b16 %v3571, %v3564
    %v3775 = vpack.c.b16 %v3572, %v3565
    %v3776 = vpack.c.b16 %v3580, %v3573
    %v3777 = vpack.c.b16 %v3581, %v3574
    %v3778 = vpack.c.b16 %v3582, %v3575
    %v3779 = vpack.c.b16 %v3583, %v3576
    %v3780 = vpack.c.b16 %v3584, %v3577
    %v3781 = vpack.c.b16 %v3585, %v3578
    %v3782 = vpack.c.b16 %v3586, %v3579
    %v3783 = vpack.c.b16 %v3594, %v3587
    %v3784 = vpack.c.b16 %v3595, %v3588
    %v3785 = vpack.c.b16 %v3596, %v3589
    %v3786 = vpack.c.b16 %v3597, %v3590
    %v3787 = vpack.c.b16 %v3598, %v3591
    %v3788 = vpack.c.b16 %v3599, %v3592
    %v3789 = vpack.c.b16 %v3600, %v3593
    %v3790 = vpack.c.b16 %v3608, %v3601
    %v3791 = vpack.c.b16 %v3609, %v3602
    %v3792 = vpack.c.b16 %v3610, %v3603
    %v3793 = vpack.c.b16 %v3611, %v3604
    %v3794 = vpack.c.b16 %v3612, %v3605
    %v3795 = vpack.c.b16 %v3613, %v3606
    %v3796 = vpack.c.b16 %v3614, %v3607
    %v3797 = vpack.c.b16 %v3622, %v3615
    %v3798 = vpack.c.b16 %v3623, %v3616
    %v3799 = vpack.c.b16 %v3624, %v3617
    %v3800 = vpack.c.b16 %v3625, %v3618
    %v3801 = vpack.c.b16 %v3626, %v3619
    %v3802 = vpack.c.b16 %v3627, %v3620
    %v3803 = vpack.c.b16 %v3628, %v3621
    %v3804 = vpack.c.b16 %v3636, %v3629
    %v3805 = vpack.c.b16 %v3637, %v3630
    %v3806 = vpack.c.b16 %v3638, %v3631
    %v3807 = vpack.c.b16 %v3639, %v3632
    %v3808 = vpack.c.b16 %v3640, %v3633
    %v3809 = vpack.c.b16 %v3641, %v3634
    %v3810 = vpack.c.b16 %v3642, %v3635
    %v3811 = vpack.c.b16 %v3650, %v3643
    %v3812 = vpack.c.b16 %v3651, %v3644
    %v3813 = vpack.c.b16 %v3652, %v3645
    %v3814 = vpack.c.b16 %v3653, %v3646
    %v3815 = vpack.c.b16 %v3654, %v3647
    %v3816 = vpack.c.b16 %v3655, %v3648
    %v3817 = vpack.c.b16 %v3656, %v3649
    %v3818 = vpack.c.b16 %v3664, %v3657
    %v3819 = vpack.c.b16 %v3665, %v3658
    %v3820 = vpack.c.b16 %v3666, %v3659
    %v3821 = vpack.c.b16 %v3667, %v3660
    %v3822 = vpack.c.b16 %v3668, %v3661
    %v3823 = vpack.c.b16 %v3669, %v3662
    %v3824 = vpack.c.b16 %v3670, %v3663
    %v3825 = vpack.c.b16 %v3678, %v3671
    %v3826 = vpack.c.b16 %v3679, %v3672
    %v3827 = vpack.c.b16 %v3680, %v3673
    %v3828 = vpack.c.b16 %v3681, %v3674
    %v3829 = vpack.c.b16 %v3682, %v3675
    %v3830 = vpack.c.b16 %v3683, %v3676
    %v3831 = vpack.c.b16 %v3684, %v3677
    %v3832 = vpack.c.b16 %v3692, %v3685
    %v3833 = vpack.c.b16 %v3693, %v3686
    %v3834 = vpack.c.b16 %v3694, %v3687
    %v3835 = vpack.c.b16 %v3695, %v3688
    %v3836 = vpack.c.b16 %v3696, %v3689
    %v3837 = vpack.c.b16 %v3697, %v3690
    %v3838 = vpack.c.b16 %v3698, %v3691
    %v3839 = vpack.c.b16 %v3706, %v3699
    %v3840 = vpack.c.b16 %v3707, %v3700
    %v3841 = vpack.c.b16 %v3708, %v3701
    %v3842 = vpack.c.b16 %v3709, %v3702
    %v3843 = vpack.c.b16 %v3710, %v3703
    %v3844 = vpack.c.b16 %v3711, %v3704
    %v3845 = vpack.c.b16 %v3712, %v3705
    %v3846 = vpack.c.b16 %v3720, %v3713
    %v3847 = vpack.c.b16 %v3721, %v3714
    %v3848 = vpack.c.b16 %v3722, %v3715
    %v3849 = vpack.c.b16 %v3723, %v3716
    %v3850 = vpack.c.b16 %v3724, %v3717
    %v3851 = vpack.c.b16 %v3725, %v3718
    %v3852 = vpack.c.b16 %v3726, %v3719
    %v3853 = vpack.c.b16 %v3734, %v3727
    %v3854 = vpack.c.b16 %v3735, %v3728
    %v3855 = vpack.c.b16 %v3736, %v3729
    %v3856 = vpack.c.b16 %v3737, %v3730
    %v3857 = vpack.c.b16 %v3738, %v3731
    %v3858 = vpack.c.b16 %v3739, %v3732
    %v3859 = vpack.c.b16 %v3740, %v3733
    %v3860 = vpack.c.b16 %v3748, %v3741
    %v3861 = vpack.c.b16 %v3749, %v3742
    %v3862 = vpack.c.b16 %v3750, %v3743
    %v3863 = vpack.c.b16 %v3751, %v3744
    %v3864 = vpack.c.b16 %v3752, %v3745
    %v3865 = vpack.c.b16 %v3753, %v3746
    %v3866 = vpack.c.b16 %v3754, %v3747
    %v4071 = vunpack.c.l.b16 %v3103
    %v4072 = vunpack.c.l.b16 %v3104
    %v4073 = vunpack.c.l.b16 %v3105
    %v4074 = vunpack.c.l.b16 %v3106
    %v4075 = vunpack.c.l.b16 %v3107
    %v4076 = vunpack.c.l.b16 %v3108
    %v4077 = vunpack.c.l.b16 %v3109
    %v4078 = vunpack.c.l.b16 %v3110
    %v4079 = vunpack.c.l.b16 %v3111
    %v4080 = vunpack.c.l.b16 %v3112
    %v4081 = vunpack.c.l.b16 %v3113
    %v4082 = vunpack.c.l.b16 %v3114
    %v4083 = vunpack.c.l.b16 %v3115
    %v4084 = vunpack.c.l.b16 %v3116
    %v4085 = vunpack.c.l.b16 %v3117
    %v4086 = vunpack.c.l.b16 %v3118
    %v4087 = vunpack.c.l.b16 %v3119
    %v4088 = vunpack.c.l.b16 %v3120
    %v4089 = vunpack.c.l.b16 %v3121
    %v4090 = vunpack.c.l.b16 %v3122
    %v4091 = vunpack.c.l.b16 %v3123
    %v4092 = vunpack.c.l.b16 %v3124
    %v4093 = vunpack.c.l.b16 %v3125
    %v4094 = vunpack.c.l.b16 %v3126
    %v4095 = vunpack.c.l.b16 %v3127
    %v4096 = vunpack.c.l.b16 %v3128
    %v4097 = vunpack.c.l.b16 %v3129
    %v4098 = vunpack.c.l.b16 %v3130
    %v4099 = vunpack.c.l.b16 %v3131
    %v4100 = vunpack.c.l.b16 %v3132
    %v4101 = vunpack.c.l.b16 %v3133
    %v4102 = vunpack.c.l.b16 %v3134
    %v4103 = vunpack.c.l.b16 %v3135
    %v4104 = vunpack.c.l.b16 %v3136
    %v4105 = vunpack.c.l.b16 %v3137
    %v4106 = vunpack.c.l.b16 %v3138
    %v4107 = vunpack.c.l.b16 %v3139
    %v4108 = vunpack.c.l.b16 %v3140
    %v4109 = vunpack.c.l.b16 %v3141
    %v4110 = vunpack.c.l.b16 %v3142
    %v4111 = vunpack.c.l.b16 %v3143
    %v4112 = vunpack.c.l.b16 %v3144
    %v4113 = vunpack.c.l.b16 %v3145
    %v4114 = vunpack.c.l.b16 %v3146
    %v4115 = vunpack.c.l.b16 %v3147
    %v4116 = vunpack.c.l.b16 %v3148
    %v4117 = vunpack.c.l.b16 %v3149
    %v4118 = vunpack.c.l.b16 %v3150
    %v4119 = vunpack.c.l.b16 %v3151
    %v4120 = vunpack.c.l.b16 %v3152
    %v4121 = vunpack.c.l.b16 %v3153
    %v4122 = vunpack.c.l.b16 %v3154
    %v4123 = vunpack.c.l.b16 %v3155
    %v4124 = vunpack.c.l.b16 %v3156
    %v4125 = vunpack.c.l.b16 %v3157
    %v4126 = vunpack.c.l.b16 %v3158
    %v4127 = vunpack.c.l.b16 %v3159
    %v4128 = vunpack.c.l.b16 %v3160
    %v4129 = vunpack.c.l.b16 %v3161
    %v4130 = vunpack.c.l.b16 %v3162
    %v4131 = vunpack.c.l.b16 %v3163
    %v4132 = vunpack.c.l.b16 %v3164
    %v4133 = vunpack.c.l.b16 %v3165
    %v4134 = vunpack.c.l.b16 %v3166
    %v4135 = vunpack.c.l.b16 %v3167
    %v4136 = vunpack.c.l.b16 %v3168
    %v4137 = vunpack.c.l.b16 %v3169
    %v4138 = vunpack.c.l.b16 %v3170
    %v4139 = vunpack.c.l.b16 %v3171
    %v4140 = vunpack.c.l.b16 %v3172
    %v4141 = vunpack.c.l.b16 %v3173
    %v4142 = vunpack.c.l.b16 %v3174
    %v4143 = vunpack.c.l.b16 %v3175
    %v4144 = vunpack.c.l.b16 %v3176
    %v4145 = vunpack.c.l.b16 %v3177
    %v4146 = vunpack.c.l.b16 %v3178
    %v4147 = vunpack.c.l.b16 %v3179
    %v4148 = vunpack.c.l.b16 %v3180
    %v4149 = vunpack.c.l.b16 %v3181
    %v4150 = vunpack.c.l.b16 %v3182
    %v4151 = vunpack.c.l.b16 %v3183
    %v4152 = vunpack.c.l.b16 %v3184
    %v4153 = vunpack.c.l.b16 %v3185
    %v4154 = vunpack.c.l.b16 %v3186
    %v4155 = vunpack.c.l.b16 %v3187
    %v4156 = vunpack.c.l.b16 %v3188
    %v4157 = vunpack.c.l.b16 %v3189
    %v4158 = vunpack.c.l.b16 %v3190
    %v4159 = vunpack.c.l.b16 %v3191
    %v4160 = vunpack.c.l.b16 %v3192
    %v4161 = vunpack.c.l.b16 %v3193
    %v4162 = vunpack.c.l.b16 %v3194
    %v4163 = vunpack.c.l.b16 %v3195
    %v4164 = vunpack.c.l.b16 %v3196
    %v4165 = vunpack.c.l.b16 %v3197
    %v4166 = vunpack.c.l.b16 %v3198
    %v4167 = vunpack.c.l.b16 %v3199
    %v4168 = vunpack.c.l.b16 %v3200
    %v4169 = vunpack.c.l.b16 %v3201
    %v4170 = vunpack.c.l.b16 %v3202
    %v4171 = vunpack.c.l.b16 %v3203
    %v4172 = vunpack.c.l.b16 %v3204
    %v4173 = vunpack.c.l.b16 %v3205
    %v4174 = vunpack.c.l.b16 %v3206
    %v4175 = vunpack.c.l.b16 %v3207
    %v4176 = vunpack.c.l.b16 %v3208
    %v4177 = vunpack.c.l.b16 %v3209
    %v4178 = vunpack.c.l.b16 %v3210
    %v4179 = vpack.c.b16 %v4072, %v4071
    %v4180 = vpack.c.b16 %v4074, %v4073
    %v4181 = vpack.c.b16 %v4076, %v4075
    %v4182 = vpack.c.b16 %v4078, %v4077
    %v4183 = vpack.c.b16 %v4080, %v4079
    %v4184 = vpack.c.b16 %v4082, %v4081
    %v4185 = vpack.c.b16 %v4084, %v4083
    %v4186 = vpack.c.b16 %v4086, %v4085
    %v4187 = vpack.c.b16 %v4088, %v4087
    %v4188 = vpack.c.b16 %v4090, %v4089
    %v4189 = vpack.c.b16 %v4092, %v4091
    %v4190 = vpack.c.b16 %v4094, %v4093
    %v4191 = vpack.c.b16 %v4096, %v4095
    %v4192 = vpack.c.b16 %v4098, %v4097
    %v4193 = vpack.c.b16 %v4100, %v4099
    %v4194 = vpack.c.b16 %v4102, %v4101
    %v4195 = vpack.c.b16 %v4104, %v4103
    %v4196 = vpack.c.b16 %v4106, %v4105
    %v4197 = vpack.c.b16 %v4108, %v4107
    %v4198 = vpack.c.b16 %v4110, %v4109
    %v4199 = vpack.c.b16 %v4112, %v4111
    %v4200 = vpack.c.b16 %v4114, %v4113
    %v4201 = vpack.c.b16 %v4116, %v4115
    %v4202 = vpack.c.b16 %v4118, %v4117
    %v4203 = vpack.c.b16 %v4120, %v4119
    %v4204 = vpack.c.b16 %v4122, %v4121
    %v4205 = vpack.c.b16 %v4124, %v4123
    %v4206 = vpack.c.b16 %v4126, %v4125
    %v4207 = vpack.c.b16 %v4128, %v4127
    %v4208 = vpack.c.b16 %v4130, %v4129
    %v4209 = vpack.c.b16 %v4132, %v4131
    %v4210 = vpack.c.b16 %v4134, %v4133
    %v4211 = vpack.c.b16 %v4136, %v4135
    %v4212 = vpack.c.b16 %v4138, %v4137
    %v4213 = vpack.c.b16 %v4140, %v4139
    %v4214 = vpack.c.b16 %v4142, %v4141
    %v4215 = vpack.c.b16 %v4144, %v4143
    %v4216 = vpack.c.b16 %v4146, %v4145
    %v4217 = vpack.c.b16 %v4148, %v4147
    %v4218 = vpack.c.b16 %v4150, %v4149
    %v4219 = vpack.c.b16 %v4152, %v4151
    %v4220 = vpack.c.b16 %v4154, %v4153
    %v4221 = vpack.c.b16 %v4156, %v4155
    %v4222 = vpack.c.b16 %v4158, %v4157
    %v4223 = vpack.c.b16 %v4160, %v4159
    %v4224 = vpack.c.b16 %v4162, %v4161
    %v4225 = vpack.c.b16 %v4164, %v4163
    %v4226 = vpack.c.b16 %v4166, %v4165
    %v4227 = vpack.c.b16 %v4168, %v4167
    %v4228 = vpack.c.b16 %v4170, %v4169
    %v4229 = vpack.c.b16 %v4172, %v4171
    %v4230 = vpack.c.b16 %v4174, %v4173
    %v4231 = vpack.c.b16 %v4176, %v4175
    %v4232 = vpack.c.b16 %v4178, %v4177
    %vm4287 = vcmask 785408
    %v4289 = vsel %vm4287, %v3761, 0
    %v4292 = vsel %vm4287, %v3768, 0
    %v4295 = vsel %vm4287, %v3775, 0
    %v4298 = vsel %vm4287, %v3782, 0
    %v4301 = vsel %vm4287, %v3789, 0
    %v4304 = vsel %vm4287, %v3796, 0
    %v4307 = vsel %vm4287, %v3803, 0
    %v4310 = vsel %vm4287, %v3810, 0
    %v4313 = vsel %vm4287, %v3817, 0
    %v4316 = vsel %vm4287, %v3824, 0
    %v4319 = vsel %vm4287, %v3831, 0
    %v4322 = vsel %vm4287, %v3838, 0
    %v4325 = vsel %vm4287, %v3845, 0
    %v4328 = vsel %vm4287, %v3852, 0
    %v4331 = vsel %vm4287, %v3859, 0
    %v4334 = vsel %vm4287, %v3866, 0
    %4336 = vmatprep.subr.bf16.mxu0 0
    %4337 = vmatpush1.bf16.msra.mxu0 %v4186
    %4338 = vmatprep.subr.bf16.mxu0 0
    %4339 = vmatpush1.bf16.msra.mxu0 %v4185
    %4340 = vmatprep.subr.bf16.mxu0 0
    %4341 = vmatpush1.bf16.msra.mxu0 %v4184
    %4342 = vmatprep.subr.bf16.mxu0 0
    %4343 = vmatpush1.bf16.msra.mxu0 %v4183
    %4344 = vmatprep.subr.bf16.mxu0 0
    %4345 = vmatpush1.bf16.msra.mxu0 %v4182
    %4346 = vmatprep.subr.bf16.mxu0 0
    %4347 = vmatpush1.bf16.msra.mxu0 %v4181
    %4348 = vmatprep.subr.bf16.mxu0 0
    %4349 = vmatpush1.bf16.msra.mxu0 %v4180
    %4350 = vmatprep.subr.bf16.mxu0 0
    %4351 = vmatpush1.bf16.msra.mxu0 %v4179
    %4352 = vmatprep.subr.bf16.mxu0 0
    %4353 = vmatpush2.bf16.msra.mxu0 %v4194
    %4354 = vmatprep.subr.bf16.mxu0 0
    %4355 = vmatpush2.bf16.msra.mxu0 %v4193
    %4356 = vmatprep.subr.bf16.mxu0 0
    %4357 = vmatpush2.bf16.msra.mxu0 %v4192
    %4358 = vmatprep.subr.bf16.mxu0 0
    %4359 = vmatpush2.bf16.msra.mxu0 %v4191
    %4360 = vmatprep.subr.bf16.mxu0 0
    %4361 = vmatpush2.bf16.msra.mxu0 %v4190
    %4362 = vmatprep.subr.bf16.mxu0 0
    %4363 = vmatpush2.bf16.msra.mxu0 %v4189
    %4364 = vmatprep.subr.bf16.mxu0 0
    %4365 = vmatpush2.bf16.msra.mxu0 %v4188
    %4366 = vmatprep.subr.bf16.mxu0 0
    %4367 = vmatpush2.bf16.msra.mxu0 %v4187
    %4368 = vmatprep.mubr.bf16.mxu0 %v3756
    %4369 = vmatmul.mubr.bf16.gmra.mxu0 %v3755
    %v4370 = vpop.f32.mrf.mxu0
    %v4371 = vadd.f32 %v3246, %v4370
    %v4372 = vpop.f32.mrf.mxu0
    %v4373 = vpop.f32.mrf.mxu0
    %v4374 = vadd.f32 %v3251, %v4373
    %v4375 = vpop.f32.mrf.mxu0
    %4376 = vmatprep.mubr.bf16.mxu0 %v3763
    %4377 = vmatmul.mubr.bf16.gmra.mxu0 %v3762
    %v4378 = vpop.f32.mrf.mxu0
    %v4379 = vadd.f32 %v3256, %v4378
    %v4380 = vpop.f32.mrf.mxu0
    %v4381 = vpop.f32.mrf.mxu0
    %v4382 = vadd.f32 %v3261, %v4381
    %v4383 = vpop.f32.mrf.mxu0
    %4384 = vmatprep.mubr.bf16.mxu0 %v3770
    %4385 = vmatmul.mubr.bf16.gmra.mxu0 %v3769
    %v4386 = vpop.f32.mrf.mxu0
    %v4387 = vadd.f32 %v3266, %v4386
    %v4388 = vpop.f32.mrf.mxu0
    %v4389 = vpop.f32.mrf.mxu0
    %v4390 = vadd.f32 %v3271, %v4389
    %v4391 = vpop.f32.mrf.mxu0
    %4392 = vmatprep.mubr.bf16.mxu0 %v3777
    %4393 = vmatmul.mubr.bf16.gmra.mxu0 %v3776
    %v4394 = vpop.f32.mrf.mxu0
    %v4395 = vadd.f32 %v3276, %v4394
    %v4396 = vpop.f32.mrf.mxu0
    %v4397 = vpop.f32.mrf.mxu0
    %v4398 = vadd.f32 %v3281, %v4397
    %v4399 = vpop.f32.mrf.mxu0
    %4400 = vmatprep.mubr.bf16.mxu0 %v3784
    %4401 = vmatmul.mubr.bf16.gmra.mxu0 %v3783
    %v4402 = vpop.f32.mrf.mxu0
    %v4403 = vadd.f32 %v3286, %v4402
    %v4404 = vpop.f32.mrf.mxu0
    %v4405 = vpop.f32.mrf.mxu0
    %v4406 = vadd.f32 %v3291, %v4405
    %v4407 = vpop.f32.mrf.mxu0
    %4408 = vmatprep.mubr.bf16.mxu0 %v3791
    %4409 = vmatmul.mubr.bf16.gmra.mxu0 %v3790
    %v4410 = vpop.f32.mrf.mxu0
    %v4411 = vadd.f32 %v3296, %v4410
    %v4412 = vpop.f32.mrf.mxu0
    %v4413 = vpop.f32.mrf.mxu0
    %v4414 = vadd.f32 %v3301, %v4413
    %v4415 = vpop.f32.mrf.mxu0
    %4416 = vmatprep.mubr.bf16.mxu0 %v3798
    %4417 = vmatmul.mubr.bf16.gmra.mxu0 %v3797
    %v4418 = vpop.f32.mrf.mxu0
    %v4419 = vadd.f32 %v3306, %v4418
    %v4420 = vpop.f32.mrf.mxu0
    %v4421 = vpop.f32.mrf.mxu0
    %v4422 = vadd.f32 %v3311, %v4421
    %v4423 = vpop.f32.mrf.mxu0
    %4424 = vmatprep.mubr.bf16.mxu0 %v3805
    %4425 = vmatmul.mubr.bf16.gmra.mxu0 %v3804
    %v4426 = vpop.f32.mrf.mxu0
    %v4427 = vadd.f32 %v3316, %v4426
    %v4428 = vpop.f32.mrf.mxu0
    %v4429 = vpop.f32.mrf.mxu0
    %v4430 = vadd.f32 %v3321, %v4429
    %v4431 = vpop.f32.mrf.mxu0
    %4432 = vmatprep.mubr.bf16.mxu0 %v3812
    %4433 = vmatmul.mubr.bf16.gmra.mxu0 %v3811
    %v4434 = vpop.f32.mrf.mxu0
    %v4435 = vadd.f32 %v3326, %v4434
    %v4436 = vpop.f32.mrf.mxu0
    %v4437 = vpop.f32.mrf.mxu0
    %v4438 = vadd.f32 %v3331, %v4437
    %v4439 = vpop.f32.mrf.mxu0
    %4440 = vmatprep.mubr.bf16.mxu0 %v3819
    %4441 = vmatmul.mubr.bf16.gmra.mxu0 %v3818
    %v4442 = vpop.f32.mrf.mxu0
    %v4443 = vadd.f32 %v3336, %v4442
    %v4444 = vpop.f32.mrf.mxu0
    %v4445 = vpop.f32.mrf.mxu0
    %v4446 = vadd.f32 %v3341, %v4445
    %v4447 = vpop.f32.mrf.mxu0
    %4448 = vmatprep.mubr.bf16.mxu0 %v3826
    %4449 = vmatmul.mubr.bf16.gmra.mxu0 %v3825
    %v4450 = vpop.f32.mrf.mxu0
    %v4451 = vadd.f32 %v3346, %v4450
    %v4452 = vpop.f32.mrf.mxu0
    %v4453 = vpop.f32.mrf.mxu0
    %v4454 = vadd.f32 %v3351, %v4453
    %v4455 = vpop.f32.mrf.mxu0
    %4456 = vmatprep.mubr.bf16.mxu0 %v3833
    %4457 = vmatmul.mubr.bf16.gmra.mxu0 %v3832
    %v4458 = vpop.f32.mrf.mxu0
    %v4459 = vadd.f32 %v3356, %v4458
    %v4460 = vpop.f32.mrf.mxu0
    %v4461 = vpop.f32.mrf.mxu0
    %v4462 = vadd.f32 %v3361, %v4461
    %v4463 = vpop.f32.mrf.mxu0
    %4464 = vmatprep.mubr.bf16.mxu0 %v3840
    %4465 = vmatmul.mubr.bf16.gmra.mxu0 %v3839
    %v4466 = vpop.f32.mrf.mxu0
    %v4467 = vadd.f32 %v3366, %v4466
    %v4468 = vpop.f32.mrf.mxu0
    %v4469 = vpop.f32.mrf.mxu0
    %v4470 = vadd.f32 %v3371, %v4469
    %v4471 = vpop.f32.mrf.mxu0
    %4472 = vmatprep.mubr.bf16.mxu0 %v3847
    %4473 = vmatmul.mubr.bf16.gmra.mxu0 %v3846
    %v4474 = vpop.f32.mrf.mxu0
    %v4475 = vadd.f32 %v3376, %v4474
    %v4476 = vpop.f32.mrf.mxu0
    %v4477 = vpop.f32.mrf.mxu0
    %v4478 = vadd.f32 %v3381, %v4477
    %v4479 = vpop.f32.mrf.mxu0
    %4480 = vmatprep.mubr.bf16.mxu0 %v3854
    %4481 = vmatmul.mubr.bf16.gmra.mxu0 %v3853
    %v4482 = vpop.f32.mrf.mxu0
    %v4483 = vadd.f32 %v3386, %v4482
    %v4484 = vpop.f32.mrf.mxu0
    %v4485 = vpop.f32.mrf.mxu0
    %v4486 = vadd.f32 %v3391, %v4485
    %v4487 = vpop.f32.mrf.mxu0
    %4488 = vmatprep.mubr.bf16.mxu0 %v3861
    %4489 = vmatmul.mubr.bf16.gmra.mxu0 %v3860
    %v4490 = vpop.f32.mrf.mxu0
    %v4491 = vadd.f32 %v3396, %v4490
    %v4492 = vpop.f32.mrf.mxu0
    %v4493 = vpop.f32.mrf.mxu0
    %v4494 = vadd.f32 %v3401, %v4493
    %v4495 = vpop.f32.mrf.mxu0
    %4496 = vdwg.mxu0
    %4497 = vmatprep.subr.bf16.mxu0 0
    %4498 = vmatpush1.bf16.msra.mxu0 %v4202
    %4499 = vmatprep.subr.bf16.mxu0 0
    %4500 = vmatpush1.bf16.msra.mxu0 %v4201
    %4501 = vmatprep.subr.bf16.mxu0 0
    %4502 = vmatpush1.bf16.msra.mxu0 %v4200
    %4503 = vmatprep.subr.bf16.mxu0 0
    %4504 = vmatpush1.bf16.msra.mxu0 %v4199
    %4505 = vmatprep.subr.bf16.mxu0 0
    %4506 = vmatpush1.bf16.msra.mxu0 %v4198
    %4507 = vmatprep.subr.bf16.mxu0 0
    %4508 = vmatpush1.bf16.msra.mxu0 %v4197
    %4509 = vmatprep.subr.bf16.mxu0 0
    %4510 = vmatpush1.bf16.msra.mxu0 %v4196
    %4511 = vmatprep.subr.bf16.mxu0 0
    %4512 = vmatpush1.bf16.msra.mxu0 %v4195
    %4513 = vmatprep.subr.bf16.mxu0 0
    %4514 = vmatpush2.bf16.msra.mxu0 %v4210
    %4515 = vmatprep.subr.bf16.mxu0 0
    %4516 = vmatpush2.bf16.msra.mxu0 %v4209
    %4517 = vmatprep.subr.bf16.mxu0 0
    %4518 = vmatpush2.bf16.msra.mxu0 %v4208
    %4519 = vmatprep.subr.bf16.mxu0 0
    %4520 = vmatpush2.bf16.msra.mxu0 %v4207
    %4521 = vmatprep.subr.bf16.mxu0 0
    %4522 = vmatpush2.bf16.msra.mxu0 %v4206
    %4523 = vmatprep.subr.bf16.mxu0 0
    %4524 = vmatpush2.bf16.msra.mxu0 %v4205
    %4525 = vmatprep.subr.bf16.mxu0 0
    %4526 = vmatpush2.bf16.msra.mxu0 %v4204
    %4527 = vmatprep.subr.bf16.mxu0 0
    %4528 = vmatpush2.bf16.msra.mxu0 %v4203
    %4529 = vmatprep.mubr.bf16.mxu0 %v3758
    %4530 = vmatmul.mubr.bf16.gmra.mxu0 %v3757
    %v4531 = vpop.f32.mrf.mxu0
    %v4532 = vadd.f32 %v4371, %v4531
    %v4533 = vpop.f32.mrf.mxu0
    %v4534 = vpop.f32.mrf.mxu0
    %v4535 = vadd.f32 %v4374, %v4534
    %v4536 = vpop.f32.mrf.mxu0
    %4537 = vmatprep.mubr.bf16.mxu0 %v3765
    %4538 = vmatmul.mubr.bf16.gmra.mxu0 %v3764
    %v4539 = vpop.f32.mrf.mxu0
    %v4540 = vadd.f32 %v4379, %v4539
    %v4541 = vpop.f32.mrf.mxu0
    %v4542 = vpop.f32.mrf.mxu0
    %v4543 = vadd.f32 %v4382, %v4542
    %v4544 = vpop.f32.mrf.mxu0
    %4545 = vmatprep.mubr.bf16.mxu0 %v3772
    %4546 = vmatmul.mubr.bf16.gmra.mxu0 %v3771
    %v4547 = vpop.f32.mrf.mxu0
    %v4548 = vadd.f32 %v4387, %v4547
    %v4549 = vpop.f32.mrf.mxu0
    %v4550 = vpop.f32.mrf.mxu0
    %v4551 = vadd.f32 %v4390, %v4550
    %v4552 = vpop.f32.mrf.mxu0
    %4553 = vmatprep.mubr.bf16.mxu0 %v3779
    %4554 = vmatmul.mubr.bf16.gmra.mxu0 %v3778
    %v4555 = vpop.f32.mrf.mxu0
    %v4556 = vadd.f32 %v4395, %v4555
    %v4557 = vpop.f32.mrf.mxu0
    %v4558 = vpop.f32.mrf.mxu0
    %v4559 = vadd.f32 %v4398, %v4558
    %v4560 = vpop.f32.mrf.mxu0
    %4561 = vmatprep.mubr.bf16.mxu0 %v3786
    %4562 = vmatmul.mubr.bf16.gmra.mxu0 %v3785
    %v4563 = vpop.f32.mrf.mxu0
    %v4564 = vadd.f32 %v4403, %v4563
    %v4565 = vpop.f32.mrf.mxu0
    %v4566 = vpop.f32.mrf.mxu0
    %v4567 = vadd.f32 %v4406, %v4566
    %v4568 = vpop.f32.mrf.mxu0
    %4569 = vmatprep.mubr.bf16.mxu0 %v3793
    %4570 = vmatmul.mubr.bf16.gmra.mxu0 %v3792
    %v4571 = vpop.f32.mrf.mxu0
    %v4572 = vadd.f32 %v4411, %v4571
    %v4573 = vpop.f32.mrf.mxu0
    %v4574 = vpop.f32.mrf.mxu0
    %v4575 = vadd.f32 %v4414, %v4574
    %v4576 = vpop.f32.mrf.mxu0
    %4577 = vmatprep.mubr.bf16.mxu0 %v3800
    %4578 = vmatmul.mubr.bf16.gmra.mxu0 %v3799
    %v4579 = vpop.f32.mrf.mxu0
    %v4580 = vadd.f32 %v4419, %v4579
    %v4581 = vpop.f32.mrf.mxu0
    %v4582 = vpop.f32.mrf.mxu0
    %v4583 = vadd.f32 %v4422, %v4582
    %v4584 = vpop.f32.mrf.mxu0
    %4585 = vmatprep.mubr.bf16.mxu0 %v3807
    %4586 = vmatmul.mubr.bf16.gmra.mxu0 %v3806
    %v4587 = vpop.f32.mrf.mxu0
    %v4588 = vadd.f32 %v4427, %v4587
    %v4589 = vpop.f32.mrf.mxu0
    %v4590 = vpop.f32.mrf.mxu0
    %v4591 = vadd.f32 %v4430, %v4590
    %v4592 = vpop.f32.mrf.mxu0
    %4593 = vmatprep.mubr.bf16.mxu0 %v3814
    %4594 = vmatmul.mubr.bf16.gmra.mxu0 %v3813
    %v4595 = vpop.f32.mrf.mxu0
    %v4596 = vadd.f32 %v4435, %v4595
    %v4597 = vpop.f32.mrf.mxu0
    %v4598 = vpop.f32.mrf.mxu0
    %v4599 = vadd.f32 %v4438, %v4598
    %v4600 = vpop.f32.mrf.mxu0
    %4601 = vmatprep.mubr.bf16.mxu0 %v3821
    %4602 = vmatmul.mubr.bf16.gmra.mxu0 %v3820
    %v4603 = vpop.f32.mrf.mxu0
    %v4604 = vadd.f32 %v4443, %v4603
    %v4605 = vpop.f32.mrf.mxu0
    %v4606 = vpop.f32.mrf.mxu0
    %v4607 = vadd.f32 %v4446, %v4606
    %v4608 = vpop.f32.mrf.mxu0
    %4609 = vmatprep.mubr.bf16.mxu0 %v3828
    %4610 = vmatmul.mubr.bf16.gmra.mxu0 %v3827
    %v4611 = vpop.f32.mrf.mxu0
    %v4612 = vadd.f32 %v4451, %v4611
    %v4613 = vpop.f32.mrf.mxu0
    %v4614 = vpop.f32.mrf.mxu0
    %v4615 = vadd.f32 %v4454, %v4614
    %v4616 = vpop.f32.mrf.mxu0
    %4617 = vmatprep.mubr.bf16.mxu0 %v3835
    %4618 = vmatmul.mubr.bf16.gmra.mxu0 %v3834
    %v4619 = vpop.f32.mrf.mxu0
    %v4620 = vadd.f32 %v4459, %v4619
    %v4621 = vpop.f32.mrf.mxu0
    %v4622 = vpop.f32.mrf.mxu0
    %v4623 = vadd.f32 %v4462, %v4622
    %v4624 = vpop.f32.mrf.mxu0
    %4625 = vmatprep.mubr.bf16.mxu0 %v3842
    %4626 = vmatmul.mubr.bf16.gmra.mxu0 %v3841
    %v4627 = vpop.f32.mrf.mxu0
    %v4628 = vadd.f32 %v4467, %v4627
    %v4629 = vpop.f32.mrf.mxu0
    %v4630 = vpop.f32.mrf.mxu0
    %v4631 = vadd.f32 %v4470, %v4630
    %v4632 = vpop.f32.mrf.mxu0
    %4633 = vmatprep.mubr.bf16.mxu0 %v3849
    %4634 = vmatmul.mubr.bf16.gmra.mxu0 %v3848
    %v4635 = vpop.f32.mrf.mxu0
    %v4636 = vadd.f32 %v4475, %v4635
    %v4637 = vpop.f32.mrf.mxu0
    %v4638 = vpop.f32.mrf.mxu0
    %v4639 = vadd.f32 %v4478, %v4638
    %v4640 = vpop.f32.mrf.mxu0
    %4641 = vmatprep.mubr.bf16.mxu0 %v3856
    %4642 = vmatmul.mubr.bf16.gmra.mxu0 %v3855
    %v4643 = vpop.f32.mrf.mxu0
    %v4644 = vadd.f32 %v4483, %v4643
    %v4645 = vpop.f32.mrf.mxu0
    %v4646 = vpop.f32.mrf.mxu0
    %v4647 = vadd.f32 %v4486, %v4646
    %v4648 = vpop.f32.mrf.mxu0
    %4649 = vmatprep.mubr.bf16.mxu0 %v3863
    %4650 = vmatmul.mubr.bf16.gmra.mxu0 %v3862
    %v4651 = vpop.f32.mrf.mxu0
    %v4652 = vadd.f32 %v4491, %v4651
    %v4653 = vpop.f32.mrf.mxu0
    %v4654 = vpop.f32.mrf.mxu0
    %v4655 = vadd.f32 %v4494, %v4654
    %v4656 = vpop.f32.mrf.mxu0
    %4657 = vdwg.mxu0
    %4658 = vmatprep.subr.bf16.mxu0 0
    %4659 = vmatpush1.bf16.msra.mxu0 %v4218
    %4660 = vmatprep.subr.bf16.mxu0 0
    %4661 = vmatpush1.bf16.msra.mxu0 %v4217
    %4662 = vmatprep.subr.bf16.mxu0 0
    %4663 = vmatpush1.bf16.msra.mxu0 %v4216
    %4664 = vmatprep.subr.bf16.mxu0 0
    %4665 = vmatpush1.bf16.msra.mxu0 %v4215
    %4666 = vmatprep.subr.bf16.mxu0 0
    %4667 = vmatpush1.bf16.msra.mxu0 %v4214
    %4668 = vmatprep.subr.bf16.mxu0 0
    %4669 = vmatpush1.bf16.msra.mxu0 %v4213
    %4670 = vmatprep.subr.bf16.mxu0 0
    %4671 = vmatpush1.bf16.msra.mxu0 %v4212
    %4672 = vmatprep.subr.bf16.mxu0 0
    %4673 = vmatpush1.bf16.msra.mxu0 %v4211
    %4674 = vmatprep.subr.bf16.mxu0 0
    %4675 = vmatpush2.bf16.msra.mxu0 %v4226
    %4676 = vmatprep.subr.bf16.mxu0 0
    %4677 = vmatpush2.bf16.msra.mxu0 %v4225
    %4678 = vmatprep.subr.bf16.mxu0 0
    %4679 = vmatpush2.bf16.msra.mxu0 %v4224
    %4680 = vmatprep.subr.bf16.mxu0 0
    %4681 = vmatpush2.bf16.msra.mxu0 %v4223
    %4682 = vmatprep.subr.bf16.mxu0 0
    %4683 = vmatpush2.bf16.msra.mxu0 %v4222
    %4684 = vmatprep.subr.bf16.mxu0 0
    %4685 = vmatpush2.bf16.msra.mxu0 %v4221
    %4686 = vmatprep.subr.bf16.mxu0 0
    %4687 = vmatpush2.bf16.msra.mxu0 %v4220
    %4688 = vmatprep.subr.bf16.mxu0 0
    %4689 = vmatpush2.bf16.msra.mxu0 %v4219
    %4690 = vmatprep.mubr.bf16.mxu0 %v3760
    %4691 = vmatmul.mubr.bf16.gmra.mxu0 %v3759
    %v4692 = vpop.f32.mrf.mxu0
    %v4693 = vadd.f32 %v4532, %v4692
    %v4694 = vpop.f32.mrf.mxu0
    %v4695 = vpop.f32.mrf.mxu0
    %v4696 = vadd.f32 %v4535, %v4695
    %v4697 = vpop.f32.mrf.mxu0
    %4698 = vmatprep.mubr.bf16.mxu0 %v3767
    %4699 = vmatmul.mubr.bf16.gmra.mxu0 %v3766
    %v4700 = vpop.f32.mrf.mxu0
    %v4701 = vadd.f32 %v4540, %v4700
    %v4702 = vpop.f32.mrf.mxu0
    %v4703 = vpop.f32.mrf.mxu0
    %v4704 = vadd.f32 %v4543, %v4703
    %v4705 = vpop.f32.mrf.mxu0
    %4706 = vmatprep.mubr.bf16.mxu0 %v3774
    %4707 = vmatmul.mubr.bf16.gmra.mxu0 %v3773
    %v4708 = vpop.f32.mrf.mxu0
    %v4709 = vadd.f32 %v4548, %v4708
    %v4710 = vpop.f32.mrf.mxu0
    %v4711 = vpop.f32.mrf.mxu0
    %v4712 = vadd.f32 %v4551, %v4711
    %v4713 = vpop.f32.mrf.mxu0
    %4714 = vmatprep.mubr.bf16.mxu0 %v3781
    %4715 = vmatmul.mubr.bf16.gmra.mxu0 %v3780
    %v4716 = vpop.f32.mrf.mxu0
    %v4717 = vadd.f32 %v4556, %v4716
    %v4718 = vpop.f32.mrf.mxu0
    %v4719 = vpop.f32.mrf.mxu0
    %v4720 = vadd.f32 %v4559, %v4719
    %v4721 = vpop.f32.mrf.mxu0
    %4722 = vmatprep.mubr.bf16.mxu0 %v3788
    %4723 = vmatmul.mubr.bf16.gmra.mxu0 %v3787
    %v4724 = vpop.f32.mrf.mxu0
    %v4725 = vadd.f32 %v4564, %v4724
    %v4726 = vpop.f32.mrf.mxu0
    %v4727 = vpop.f32.mrf.mxu0
    %v4728 = vadd.f32 %v4567, %v4727
    %v4729 = vpop.f32.mrf.mxu0
    %4730 = vmatprep.mubr.bf16.mxu0 %v3795
    %4731 = vmatmul.mubr.bf16.gmra.mxu0 %v3794
    %v4732 = vpop.f32.mrf.mxu0
    %v4733 = vadd.f32 %v4572, %v4732
    %v4734 = vpop.f32.mrf.mxu0
    %v4735 = vpop.f32.mrf.mxu0
    %v4736 = vadd.f32 %v4575, %v4735
    %v4737 = vpop.f32.mrf.mxu0
    %4738 = vmatprep.mubr.bf16.mxu0 %v3802
    %4739 = vmatmul.mubr.bf16.gmra.mxu0 %v3801
    %v4740 = vpop.f32.mrf.mxu0
    %v4741 = vadd.f32 %v4580, %v4740
    %v4742 = vpop.f32.mrf.mxu0
    %v4743 = vpop.f32.mrf.mxu0
    %v4744 = vadd.f32 %v4583, %v4743
    %v4745 = vpop.f32.mrf.mxu0
    %4746 = vmatprep.mubr.bf16.mxu0 %v3809
    %4747 = vmatmul.mubr.bf16.gmra.mxu0 %v3808
    %v4748 = vpop.f32.mrf.mxu0
    %v4749 = vadd.f32 %v4588, %v4748
    %v4750 = vpop.f32.mrf.mxu0
    %v4751 = vpop.f32.mrf.mxu0
    %v4752 = vadd.f32 %v4591, %v4751
    %v4753 = vpop.f32.mrf.mxu0
    %4754 = vmatprep.mubr.bf16.mxu0 %v3816
    %4755 = vmatmul.mubr.bf16.gmra.mxu0 %v3815
    %v4756 = vpop.f32.mrf.mxu0
    %v4757 = vadd.f32 %v4596, %v4756
    %v4758 = vpop.f32.mrf.mxu0
    %v4759 = vpop.f32.mrf.mxu0
    %v4760 = vadd.f32 %v4599, %v4759
    %v4761 = vpop.f32.mrf.mxu0
    %4762 = vmatprep.mubr.bf16.mxu0 %v3823
    %4763 = vmatmul.mubr.bf16.gmra.mxu0 %v3822
    %v4764 = vpop.f32.mrf.mxu0
    %v4765 = vadd.f32 %v4604, %v4764
    %v4766 = vpop.f32.mrf.mxu0
    %v4767 = vpop.f32.mrf.mxu0
    %v4768 = vadd.f32 %v4607, %v4767
    %v4769 = vpop.f32.mrf.mxu0
    %4770 = vmatprep.mubr.bf16.mxu0 %v3830
    %4771 = vmatmul.mubr.bf16.gmra.mxu0 %v3829
    %v4772 = vpop.f32.mrf.mxu0
    %v4773 = vadd.f32 %v4612, %v4772
    %v4774 = vpop.f32.mrf.mxu0
    %v4775 = vpop.f32.mrf.mxu0
    %v4776 = vadd.f32 %v4615, %v4775
    %v4777 = vpop.f32.mrf.mxu0
    %4778 = vmatprep.mubr.bf16.mxu0 %v3837
    %4779 = vmatmul.mubr.bf16.gmra.mxu0 %v3836
    %v4780 = vpop.f32.mrf.mxu0
    %v4781 = vadd.f32 %v4620, %v4780
    %v4782 = vpop.f32.mrf.mxu0
    %v4783 = vpop.f32.mrf.mxu0
    %v4784 = vadd.f32 %v4623, %v4783
    %v4785 = vpop.f32.mrf.mxu0
    %4786 = vmatprep.mubr.bf16.mxu0 %v3844
    %4787 = vmatmul.mubr.bf16.gmra.mxu0 %v3843
    %v4788 = vpop.f32.mrf.mxu0
    %v4789 = vadd.f32 %v4628, %v4788
    %v4790 = vpop.f32.mrf.mxu0
    %v4791 = vpop.f32.mrf.mxu0
    %v4792 = vadd.f32 %v4631, %v4791
    %v4793 = vpop.f32.mrf.mxu0
    %4794 = vmatprep.mubr.bf16.mxu0 %v3851
    %4795 = vmatmul.mubr.bf16.gmra.mxu0 %v3850
    %v4796 = vpop.f32.mrf.mxu0
    %v4797 = vadd.f32 %v4636, %v4796
    %v4798 = vpop.f32.mrf.mxu0
    %v4799 = vpop.f32.mrf.mxu0
    %v4800 = vadd.f32 %v4639, %v4799
    %v4801 = vpop.f32.mrf.mxu0
    %4802 = vmatprep.mubr.bf16.mxu0 %v3858
    %4803 = vmatmul.mubr.bf16.gmra.mxu0 %v3857
    %v4804 = vpop.f32.mrf.mxu0
    %v4805 = vadd.f32 %v4644, %v4804
    %v4806 = vpop.f32.mrf.mxu0
    %v4807 = vpop.f32.mrf.mxu0
    %v4808 = vadd.f32 %v4647, %v4807
    %v4809 = vpop.f32.mrf.mxu0
    %4810 = vmatprep.mubr.bf16.mxu0 %v3865
    %4811 = vmatmul.mubr.bf16.gmra.mxu0 %v3864
    %v4812 = vpop.f32.mrf.mxu0
    %v4813 = vadd.f32 %v4652, %v4812
    %v4814 = vpop.f32.mrf.mxu0
    %v4815 = vpop.f32.mrf.mxu0
    %v4816 = vadd.f32 %v4655, %v4815
    %v4817 = vpop.f32.mrf.mxu0
    %4818 = vdwg.mxu0
    %4819 = vmatprep.subr.bf16.mxu0 0
    %4820 = vmatpush1.bf16.msra.mxu0 0
    %4821 = vmatprep.subr.bf16.mxu0 0
    %4822 = vmatpush1.bf16.msra.mxu0 0
    %4823 = vmatprep.subr.bf16.mxu0 0
    %4824 = vmatpush1.bf16.msra.mxu0 %v4232
    %4825 = vmatprep.subr.bf16.mxu0 0
    %4826 = vmatpush1.bf16.msra.mxu0 %v4231
    %4827 = vmatprep.subr.bf16.mxu0 0
    %4828 = vmatpush1.bf16.msra.mxu0 %v4230
    %4829 = vmatprep.subr.bf16.mxu0 0
    %4830 = vmatpush1.bf16.msra.mxu0 %v4229
    %4831 = vmatprep.subr.bf16.mxu0 0
    %4832 = vmatpush1.bf16.msra.mxu0 %v4228
    %4833 = vmatprep.subr.bf16.mxu0 0
    %4834 = vmatpush1.bf16.msra.mxu0 %v4227
    %4835 = vmatprep.subr.bf16.mxu0 0
    %4836 = vmatpush2.bf16.msra.mxu0 0
    %4837 = vmatprep.subr.bf16.mxu0 0
    %4838 = vmatpush2.bf16.msra.mxu0 0
    %4839 = vmatprep.subr.bf16.mxu0 0
    %4840 = vmatpush2.bf16.msra.mxu0 0
    %4841 = vmatprep.subr.bf16.mxu0 0
    %4842 = vmatpush2.bf16.msra.mxu0 0
    %4843 = vmatprep.subr.bf16.mxu0 0
    %4844 = vmatpush2.bf16.msra.mxu0 0
    %4845 = vmatprep.subr.bf16.mxu0 0
    %4846 = vmatpush2.bf16.msra.mxu0 0
    %4847 = vmatprep.subr.bf16.mxu0 0
    %4848 = vmatpush2.bf16.msra.mxu0 0
    %4849 = vmatprep.subr.bf16.mxu0 0
    %4850 = vmatpush2.bf16.msra.mxu0 0
    %4851 = vmatprep.mubr.bf16.mxu0 0
    %4852 = vmatmul.mubr.bf16.gmra.mxu0 %v4289
    %v4853 = vpop.f32.mrf.mxu0
    %v4854 = vadd.f32 %v4693, %v4853
    %v4855 = vpop.f32.mrf.mxu0
    %v4856 = vpop.f32.mrf.mxu0
    %v4857 = vadd.f32 %v4696, %v4856
    %v4858 = vpop.f32.mrf.mxu0
    %4859 = vmatprep.mubr.bf16.mxu0 0
    %4860 = vmatmul.mubr.bf16.gmra.mxu0 %v4292
    %v4861 = vpop.f32.mrf.mxu0
    %v4862 = vadd.f32 %v4701, %v4861
    %v4863 = vpop.f32.mrf.mxu0
    %v4864 = vpop.f32.mrf.mxu0
    %v4865 = vadd.f32 %v4704, %v4864
    %v4866 = vpop.f32.mrf.mxu0
    %4867 = vmatprep.mubr.bf16.mxu0 0
    %4868 = vmatmul.mubr.bf16.gmra.mxu0 %v4295
    %v4869 = vpop.f32.mrf.mxu0
    %v4870 = vadd.f32 %v4709, %v4869
    %v4871 = vpop.f32.mrf.mxu0
    %v4872 = vpop.f32.mrf.mxu0
    %v4873 = vadd.f32 %v4712, %v4872
    %v4874 = vpop.f32.mrf.mxu0
    %4875 = vmatprep.mubr.bf16.mxu0 0
    %4876 = vmatmul.mubr.bf16.gmra.mxu0 %v4298
    %v4877 = vpop.f32.mrf.mxu0
    %v4878 = vadd.f32 %v4717, %v4877
    %v4879 = vpop.f32.mrf.mxu0
    %v4880 = vpop.f32.mrf.mxu0
    %v4881 = vadd.f32 %v4720, %v4880
    %v4882 = vpop.f32.mrf.mxu0
    %4883 = vmatprep.mubr.bf16.mxu0 0
    %4884 = vmatmul.mubr.bf16.gmra.mxu0 %v4301
    %v4885 = vpop.f32.mrf.mxu0
    %v4886 = vadd.f32 %v4725, %v4885
    %v4887 = vpop.f32.mrf.mxu0
    %v4888 = vpop.f32.mrf.mxu0
    %v4889 = vadd.f32 %v4728, %v4888
    %v4890 = vpop.f32.mrf.mxu0
    %4891 = vmatprep.mubr.bf16.mxu0 0
    %4892 = vmatmul.mubr.bf16.gmra.mxu0 %v4304
    %v4893 = vpop.f32.mrf.mxu0
    %v4894 = vadd.f32 %v4733, %v4893
    %v4895 = vpop.f32.mrf.mxu0
    %v4896 = vpop.f32.mrf.mxu0
    %v4897 = vadd.f32 %v4736, %v4896
    %v4898 = vpop.f32.mrf.mxu0
    %4899 = vmatprep.mubr.bf16.mxu0 0
    %4900 = vmatmul.mubr.bf16.gmra.mxu0 %v4307
    %v4901 = vpop.f32.mrf.mxu0
    %v4902 = vadd.f32 %v4741, %v4901
    %v4903 = vpop.f32.mrf.mxu0
    %v4904 = vpop.f32.mrf.mxu0
    %v4905 = vadd.f32 %v4744, %v4904
    %v4906 = vpop.f32.mrf.mxu0
    %4907 = vmatprep.mubr.bf16.mxu0 0
    %4908 = vmatmul.mubr.bf16.gmra.mxu0 %v4310
    %v4909 = vpop.f32.mrf.mxu0
    %v4910 = vadd.f32 %v4749, %v4909
    %v4911 = vpop.f32.mrf.mxu0
    %v4912 = vpop.f32.mrf.mxu0
    %v4913 = vadd.f32 %v4752, %v4912
    %v4914 = vpop.f32.mrf.mxu0
    %4915 = vmatprep.mubr.bf16.mxu0 0
    %4916 = vmatmul.mubr.bf16.gmra.mxu0 %v4313
    %v4917 = vpop.f32.mrf.mxu0
    %v4918 = vadd.f32 %v4757, %v4917
    %v4919 = vpop.f32.mrf.mxu0
    %v4920 = vpop.f32.mrf.mxu0
    %v4921 = vadd.f32 %v4760, %v4920
    %v4922 = vpop.f32.mrf.mxu0
    %4923 = vmatprep.mubr.bf16.mxu0 0
    %4924 = vmatmul.mubr.bf16.gmra.mxu0 %v4316
    %v4925 = vpop.f32.mrf.mxu0
    %v4926 = vadd.f32 %v4765, %v4925
    %v4927 = vpop.f32.mrf.mxu0
    %v4928 = vpop.f32.mrf.mxu0
    %v4929 = vadd.f32 %v4768, %v4928
    %v4930 = vpop.f32.mrf.mxu0
    %4931 = vmatprep.mubr.bf16.mxu0 0
    %4932 = vmatmul.mubr.bf16.gmra.mxu0 %v4319
    %v4933 = vpop.f32.mrf.mxu0
    %v4934 = vadd.f32 %v4773, %v4933
    %v4935 = vpop.f32.mrf.mxu0
    %v4936 = vpop.f32.mrf.mxu0
    %v4937 = vadd.f32 %v4776, %v4936
    %v4938 = vpop.f32.mrf.mxu0
    %4939 = vmatprep.mubr.bf16.mxu0 0
    %4940 = vmatmul.mubr.bf16.gmra.mxu0 %v4322
    %v4941 = vpop.f32.mrf.mxu0
    %v4942 = vadd.f32 %v4781, %v4941
    %v4943 = vpop.f32.mrf.mxu0
    %v4944 = vpop.f32.mrf.mxu0
    %v4945 = vadd.f32 %v4784, %v4944
    %v4946 = vpop.f32.mrf.mxu0
    %4947 = vmatprep.mubr.bf16.mxu0 0
    %4948 = vmatmul.mubr.bf16.gmra.mxu0 %v4325
    %v4949 = vpop.f32.mrf.mxu0
    %v4950 = vadd.f32 %v4789, %v4949
    %v4951 = vpop.f32.mrf.mxu0
    %v4952 = vpop.f32.mrf.mxu0
    %v4953 = vadd.f32 %v4792, %v4952
    %v4954 = vpop.f32.mrf.mxu0
    %4955 = vmatprep.mubr.bf16.mxu0 0
    %4956 = vmatmul.mubr.bf16.gmra.mxu0 %v4328
    %v4957 = vpop.f32.mrf.mxu0
    %v4958 = vadd.f32 %v4797, %v4957
    %v4959 = vpop.f32.mrf.mxu0
    %v4960 = vpop.f32.mrf.mxu0
    %v4961 = vadd.f32 %v4800, %v4960
    %v4962 = vpop.f32.mrf.mxu0
    %4963 = vmatprep.mubr.bf16.mxu0 0
    %4964 = vmatmul.mubr.bf16.gmra.mxu0 %v4331
    %v4965 = vpop.f32.mrf.mxu0
    %v4966 = vadd.f32 %v4805, %v4965
    %v4967 = vpop.f32.mrf.mxu0
    %v4968 = vpop.f32.mrf.mxu0
    %v4969 = vadd.f32 %v4808, %v4968
    %v4970 = vpop.f32.mrf.mxu0
    %4971 = vmatprep.mubr.bf16.mxu0 0
    %4972 = vmatmul.mubr.bf16.gmra.mxu0 %v4334
    %v4973 = vpop.f32.mrf.mxu0
    %v4974 = vadd.f32 %v4813, %v4973
    %v4975 = vpop.f32.mrf.mxu0
    %v4976 = vpop.f32.mrf.mxu0
    %v4977 = vadd.f32 %v4816, %v4976
    %v4978 = vpop.f32.mrf.mxu0
    %4979 = vdwg.mxu0
    %v4980 = vld [vmem:[%s19] sm:$0xff]
    %v4981 = vld [vmem:[%s19 + $0x8] sm:$0xff]
    %v4982 = vld [vmem:[%s19 + $0x10] sm:$0xff]
    %v4983 = vld [vmem:[%s19 + $0x18] sm:$0xff]
    %v4984 = vld [vmem:[%s19 + $0x20] sm:$0xff]
    %v4985 = vld [vmem:[%s19 + $0x28] sm:$0xff]
    %v4986 = vld [vmem:[%s19 + $0x30] sm:$0xff]
    %v4987 = vld [vmem:[%s19 + $0x38] sm:$0xff]
    %v4988 = vld [vmem:[%s19 + $0x40] sm:$0xff]
    %v4989 = vld [vmem:[%s19 + $0x48] sm:$0xff]
    %v4990 = vld [vmem:[%s19 + $0x50] sm:$0xff]
    %v4991 = vld [vmem:[%s19 + $0x58] sm:$0xff]
    %v4992 = vld [vmem:[%s19 + $0x60] sm:$0xff]
    %v4993 = vld [vmem:[%s19 + $0x68] sm:$0xff]
    %v4994 = vld [vmem:[%s19 + $0x70] sm:$0xff]
    %v4995 = vld [vmem:[%s19 + $0x78] sm:$0xff]
    %v4996 = vld [vmem:[%s19 + $0x80] sm:$0xff]
    %v4997 = vld [vmem:[%s19 + $0x88] sm:$0xff]
    %v4998 = vld [vmem:[%s19 + $0x90] sm:$0xff]
    %v4999 = vld [vmem:[%s19 + $0x98] sm:$0xff]
    %v5000 = vld [vmem:[%s19 + $0xa0] sm:$0xff]
    %v5001 = vld [vmem:[%s19 + $0xa8] sm:$0xff]
    %v5002 = vld [vmem:[%s19 + $0xb0] sm:$0xff]
    %v5003 = vld [vmem:[%s19 + $0xb8] sm:$0xff]
    %v5004 = vld [vmem:[%s19 + $0xc0] sm:$0xff]
    %v5005 = vld [vmem:[%s19 + $0xc8] sm:$0xff]
    %v5006 = vld [vmem:[%s19 + $0xd0] sm:$0xff]
    %v5007 = vld [vmem:[%s19 + $0xd8] sm:$0xff]
    %v5008 = vld [vmem:[%s19 + $0xe0] sm:$0xff]
    %v5009 = vld [vmem:[%s19 + $0xe8] sm:$0xff]
    %v5010 = vld [vmem:[%s19 + $0xf0] sm:$0xff]
    %v5011 = vld [vmem:[%s19 + $0xf8] sm:$0xff]
    %v5012 = vld [vmem:[%s20] sm:$0xff]
    %v5013 = vld [vmem:[%s20 + $0x8] sm:$0xff]
    %v5014 = vld [vmem:[%s20 + $0x10] sm:$0xff]
    %v5015 = vld [vmem:[%s20 + $0x18] sm:$0xff]
    %v5016 = vld [vmem:[%s20 + $0x20] sm:$0xf]
    %vm5017 = vcmask 293888
    %v5019 = vsel %vm5017, %v2959, 0
    %v5022 = vsel %vm5017, %v2960, 0
    %v5025 = vsel %vm5017, %v2961, 0
    %v5028 = vsel %vm5017, %v2962, 0
    %v5031 = vsel %vm5017, %v2963, 0
    %v5034 = vsel %vm5017, %v2964, 0
    %v5037 = vsel %vm5017, %v2965, 0
    %v5040 = vsel %vm5017, %v2966, 0
    %v5043 = vsel %vm5017, %v2967, 0
    %v5046 = vsel %vm5017, %v2968, 0
    %v5049 = vsel %vm5017, %v2969, 0
    %v5052 = vsel %vm5017, %v2970, 0
    %v5055 = vsel %vm5017, %v2971, 0
    %v5058 = vsel %vm5017, %v2972, 0
    %v5061 = vsel %vm5017, %v2973, 0
    %v5064 = vsel %vm5017, %v2974, 0
    %v5067 = vsel %vm636, %v5016, 0
    %5069 = vmatprep.subr.mxu0 0.0
    %5070 = vmatpush1.msra.mxu0 0.0
    %5071 = vmatprep.subr.mxu0 0.0
    %5072 = vmatpush1.msra.mxu0 0.0
    %5073 = vmatprep.subr.mxu0 0.0
    %5074 = vmatpush1.msra.mxu0 0.0
    %5075 = vmatprep.subr.mxu0 0.0
    %5076 = vmatpush1.msra.mxu0 0.0
    %5077 = vmatprep.subr.mxu0 0.0
    %5078 = vmatpush1.msra.mxu0 0.0
    %5079 = vmatprep.subr.mxu0 0.0
    %5080 = vmatpush1.msra.mxu0 0.0
    %5081 = vmatprep.subr.mxu0 0.0
    %5082 = vmatpush1.msra.mxu0 0.0
    %5083 = vmatprep.subr.mxu0 0.0
    %5084 = vmatpush1.msra.mxu0 0.0
    %5085 = vmatprep.subr.mxu0 0.0
    %5086 = vmatpush1.msra.mxu0 0.0
    %5087 = vmatprep.subr.mxu0 0.0
    %5088 = vmatpush1.msra.mxu0 0.0
    %5089 = vmatprep.subr.mxu0 0.0
    %5090 = vmatpush1.msra.mxu0 0.0
    %5091 = vmatprep.subr.mxu0 0.0
    %5092 = vmatpush1.msra.mxu0 %v5067
    %5093 = vmatprep.subr.mxu0 0.0
    %5094 = vmatpush1.msra.mxu0 %v5015
    %5095 = vmatprep.subr.mxu0 0.0
    %5096 = vmatpush1.msra.mxu0 %v5014
    %5097 = vmatprep.subr.mxu0 0.0
    %5098 = vmatpush1.msra.mxu0 %v5013
    %5099 = vmatprep.subr.mxu0 0.0
    %5100 = vmatpush1.msra.mxu0 %v5012
    %5101 = vmatprep.subr.mxu0 0.0
    %5102 = vmatpush2.msra.mxu0 0.0
    %5103 = vmatprep.subr.mxu0 0.0
    %5104 = vmatpush2.msra.mxu0 0.0
    %5105 = vmatprep.subr.mxu0 0.0
    %5106 = vmatpush2.msra.mxu0 0.0
    %5107 = vmatprep.subr.mxu0 0.0
    %5108 = vmatpush2.msra.mxu0 0.0
    %5109 = vmatprep.subr.mxu0 0.0
    %5110 = vmatpush2.msra.mxu0 0.0
    %5111 = vmatprep.subr.mxu0 0.0
    %5112 = vmatpush2.msra.mxu0 0.0
    %5113 = vmatprep.subr.mxu0 0.0
    %5114 = vmatpush2.msra.mxu0 0.0
    %5115 = vmatprep.subr.mxu0 0.0
    %5116 = vmatpush2.msra.mxu0 0.0
    %5117 = vmatprep.subr.mxu0 0.0
    %5118 = vmatpush2.msra.mxu0 0.0
    %5119 = vmatprep.subr.mxu0 0.0
    %5120 = vmatpush2.msra.mxu0 0.0
    %5121 = vmatprep.subr.mxu0 0.0
    %5122 = vmatpush2.msra.mxu0 0.0
    %5123 = vmatprep.subr.mxu0 0.0
    %5124 = vmatpush2.msra.mxu0 0.0
    %5125 = vmatprep.subr.mxu0 0.0
    %5126 = vmatpush2.msra.mxu0 0.0
    %5127 = vmatprep.subr.mxu0 0.0
    %5128 = vmatpush2.msra.mxu0 0.0
    %5129 = vmatprep.subr.mxu0 0.0
    %5130 = vmatpush2.msra.mxu0 0.0
    %5131 = vmatprep.subr.mxu0 0.0
    %5132 = vmatpush2.msra.mxu0 0.0
    %5133 = vmatprep.mubr.f32.mxu0 0.0
    %5134 = vmatmul.mubr.f32.gmra.mxu0 %v5019
    %v5135 = vpop.f32.mrf.mxu0
    %v5136 = vadd.f32 0.0, %v5135
    %v5137 = vpop.f32.mrf.mxu0
    %5138 = vmatprep.mubr.f32.mxu0 0.0
    %5139 = vmatmul.mubr.f32.gmra.mxu0 %v5022
    %v5140 = vpop.f32.mrf.mxu0
    %v5141 = vadd.f32 0.0, %v5140
    %v5142 = vpop.f32.mrf.mxu0
    %5143 = vmatprep.mubr.f32.mxu0 0.0
    %5144 = vmatmul.mubr.f32.gmra.mxu0 %v5025
    %v5145 = vpop.f32.mrf.mxu0
    %v5146 = vadd.f32 0.0, %v5145
    %v5147 = vpop.f32.mrf.mxu0
    %5148 = vmatprep.mubr.f32.mxu0 0.0
    %5149 = vmatmul.mubr.f32.gmra.mxu0 %v5028
    %v5150 = vpop.f32.mrf.mxu0
    %v5151 = vadd.f32 0.0, %v5150
    %v5152 = vpop.f32.mrf.mxu0
    %5153 = vmatprep.mubr.f32.mxu0 0.0
    %5154 = vmatmul.mubr.f32.gmra.mxu0 %v5031
    %v5155 = vpop.f32.mrf.mxu0
    %v5156 = vadd.f32 0.0, %v5155
    %v5157 = vpop.f32.mrf.mxu0
    %5158 = vmatprep.mubr.f32.mxu0 0.0
    %5159 = vmatmul.mubr.f32.gmra.mxu0 %v5034
    %v5160 = vpop.f32.mrf.mxu0
    %v5161 = vadd.f32 0.0, %v5160
    %v5162 = vpop.f32.mrf.mxu0
    %5163 = vmatprep.mubr.f32.mxu0 0.0
    %5164 = vmatmul.mubr.f32.gmra.mxu0 %v5037
    %v5165 = vpop.f32.mrf.mxu0
    %v5166 = vadd.f32 0.0, %v5165
    %v5167 = vpop.f32.mrf.mxu0
    %5168 = vmatprep.mubr.f32.mxu0 0.0
    %5169 = vmatmul.mubr.f32.gmra.mxu0 %v5040
    %v5170 = vpop.f32.mrf.mxu0
    %v5171 = vadd.f32 0.0, %v5170
    %v5172 = vpop.f32.mrf.mxu0
    %5173 = vmatprep.mubr.f32.mxu0 0.0
    %5174 = vmatmul.mubr.f32.gmra.mxu0 %v5043
    %v5175 = vpop.f32.mrf.mxu0
    %v5176 = vadd.f32 0.0, %v5175
    %v5177 = vpop.f32.mrf.mxu0
    %5178 = vmatprep.mubr.f32.mxu0 0.0
    %5179 = vmatmul.mubr.f32.gmra.mxu0 %v5046
    %v5180 = vpop.f32.mrf.mxu0
    %v5181 = vadd.f32 0.0, %v5180
    %v5182 = vpop.f32.mrf.mxu0
    %5183 = vmatprep.mubr.f32.mxu0 0.0
    %5184 = vmatmul.mubr.f32.gmra.mxu0 %v5049
    %v5185 = vpop.f32.mrf.mxu0
    %v5186 = vadd.f32 0.0, %v5185
    %v5187 = vpop.f32.mrf.mxu0
    %5188 = vmatprep.mubr.f32.mxu0 0.0
    %5189 = vmatmul.mubr.f32.gmra.mxu0 %v5052
    %v5190 = vpop.f32.mrf.mxu0
    %v5191 = vadd.f32 0.0, %v5190
    %v5192 = vpop.f32.mrf.mxu0
    %5193 = vmatprep.mubr.f32.mxu0 0.0
    %5194 = vmatmul.mubr.f32.gmra.mxu0 %v5055
    %v5195 = vpop.f32.mrf.mxu0
    %v5196 = vadd.f32 0.0, %v5195
    %v5197 = vpop.f32.mrf.mxu0
    %5198 = vmatprep.mubr.f32.mxu0 0.0
    %5199 = vmatmul.mubr.f32.gmra.mxu0 %v5058
    %v5200 = vpop.f32.mrf.mxu0
    %v5201 = vadd.f32 0.0, %v5200
    %v5202 = vpop.f32.mrf.mxu0
    %5203 = vmatprep.mubr.f32.mxu0 0.0
    %5204 = vmatmul.mubr.f32.gmra.mxu0 %v5061
    %v5205 = vpop.f32.mrf.mxu0
    %v5206 = vadd.f32 0.0, %v5205
    %v5207 = vpop.f32.mrf.mxu0
    %5208 = vmatprep.mubr.f32.mxu0 0.0
    %5209 = vmatmul.mubr.f32.gmra.mxu0 %v5064
    %v5210 = vpop.f32.mrf.mxu0
    %v5211 = vadd.f32 0.0, %v5210
    %v5212 = vpop.f32.mrf.mxu0
    %5213 = vdwg.mxu0
    %5214 = vmatprep.subr.mxu0 0.0
    %5215 = vmatpush1.msra.mxu0 %v5211
    %5216 = vmatprep.subr.mxu0 0.0
    %5217 = vmatpush1.msra.mxu0 %v5206
    %5218 = vmatprep.subr.mxu0 0.0
    %5219 = vmatpush1.msra.mxu0 %v5201
    %5220 = vmatprep.subr.mxu0 0.0
    %5221 = vmatpush1.msra.mxu0 %v5196
    %5222 = vmatprep.subr.mxu0 0.0
    %5223 = vmatpush1.msra.mxu0 %v5191
    %5224 = vmatprep.subr.mxu0 0.0
    %5225 = vmatpush1.msra.mxu0 %v5186
    %5226 = vmatprep.subr.mxu0 0.0
    %5227 = vmatpush1.msra.mxu0 %v5181
    %5228 = vmatprep.subr.mxu0 0.0
    %5229 = vmatpush1.msra.mxu0 %v5176
    %5230 = vmatprep.subr.mxu0 0.0
    %5231 = vmatpush1.msra.mxu0 %v5171
    %5232 = vmatprep.subr.mxu0 0.0
    %5233 = vmatpush1.msra.mxu0 %v5166
    %5234 = vmatprep.subr.mxu0 0.0
    %5235 = vmatpush1.msra.mxu0 %v5161
    %5236 = vmatprep.subr.mxu0 0.0
    %5237 = vmatpush1.msra.mxu0 %v5156
    %5238 = vmatprep.subr.mxu0 0.0
    %5239 = vmatpush1.msra.mxu0 %v5151
    %5240 = vmatprep.subr.mxu0 0.0
    %5241 = vmatpush1.msra.mxu0 %v5146
    %5242 = vmatprep.subr.mxu0 0.0
    %5243 = vmatpush1.msra.mxu0 %v5141
    %5244 = vmatprep.subr.mxu0 0.0
    %5245 = vmatpush1.msra.mxu0 %v5136
    %5246 = vmatprep.subr.mxu0 0.0
    %5247 = vmatpush2.msra.mxu0 0.0
    %5248 = vmatprep.subr.mxu0 0.0
    %5249 = vmatpush2.msra.mxu0 0.0
    %5250 = vmatprep.subr.mxu0 0.0
    %5251 = vmatpush2.msra.mxu0 0.0
    %5252 = vmatprep.subr.mxu0 0.0
    %5253 = vmatpush2.msra.mxu0 0.0
    %5254 = vmatprep.subr.mxu0 0.0
    %5255 = vmatpush2.msra.mxu0 0.0
    %5256 = vmatprep.subr.mxu0 0.0
    %5257 = vmatpush2.msra.mxu0 0.0
    %5258 = vmatprep.subr.mxu0 0.0
    %5259 = vmatpush2.msra.mxu0 0.0
    %5260 = vmatprep.subr.mxu0 0.0
    %5261 = vmatpush2.msra.mxu0 0.0
    %5262 = vmatprep.subr.mxu0 0.0
    %5263 = vmatpush2.msra.mxu0 0.0
    %5264 = vmatprep.subr.mxu0 0.0
    %5265 = vmatpush2.msra.mxu0 0.0
    %5266 = vmatprep.subr.mxu0 0.0
    %5267 = vmatpush2.msra.mxu0 0.0
    %5268 = vmatprep.subr.mxu0 0.0
    %5269 = vmatpush2.msra.mxu0 0.0
    %5270 = vmatprep.subr.mxu0 0.0
    %5271 = vmatpush2.msra.mxu0 0.0
    %5272 = vmatprep.subr.mxu0 0.0
    %5273 = vmatpush2.msra.mxu0 0.0
    %5274 = vmatprep.subr.mxu0 0.0
    %5275 = vmatpush2.msra.mxu0 0.0
    %5276 = vmatprep.subr.mxu0 0.0
    %5277 = vmatpush2.msra.mxu0 0.0
    %5278 = vmatprep.mubr.f32.mxu0 0.0
    %5279 = vmatmul.mubr.f32.gmra.mxu0 %v4980
    %v5280 = vpop.f32.mrf.mxu0
    %v5281 = vadd.f32 0.0, %v5280
    %v5282 = vpop.f32.mrf.mxu0
    %5283 = vmatprep.mubr.f32.mxu0 0.0
    %5284 = vmatmul.mubr.f32.gmra.mxu0 %v4981
    %v5285 = vpop.f32.mrf.mxu0
    %v5286 = vadd.f32 0.0, %v5285
    %v5287 = vpop.f32.mrf.mxu0
    %5288 = vmatprep.mubr.f32.mxu0 0.0
    %5289 = vmatmul.mubr.f32.gmra.mxu0 %v4982
    %v5290 = vpop.f32.mrf.mxu0
    %v5291 = vadd.f32 0.0, %v5290
    %v5292 = vpop.f32.mrf.mxu0
    %5293 = vmatprep.mubr.f32.mxu0 0.0
    %5294 = vmatmul.mubr.f32.gmra.mxu0 %v4983
    %v5295 = vpop.f32.mrf.mxu0
    %v5296 = vadd.f32 0.0, %v5295
    %v5297 = vpop.f32.mrf.mxu0
    %5298 = vmatprep.mubr.f32.mxu0 0.0
    %5299 = vmatmul.mubr.f32.gmra.mxu0 %v4984
    %v5300 = vpop.f32.mrf.mxu0
    %v5301 = vadd.f32 0.0, %v5300
    %v5302 = vpop.f32.mrf.mxu0
    %5303 = vmatprep.mubr.f32.mxu0 0.0
    %5304 = vmatmul.mubr.f32.gmra.mxu0 %v4985
    %v5305 = vpop.f32.mrf.mxu0
    %v5306 = vadd.f32 0.0, %v5305
    %v5307 = vpop.f32.mrf.mxu0
    %5308 = vmatprep.mubr.f32.mxu0 0.0
    %5309 = vmatmul.mubr.f32.gmra.mxu0 %v4986
    %v5310 = vpop.f32.mrf.mxu0
    %v5311 = vadd.f32 0.0, %v5310
    %v5312 = vpop.f32.mrf.mxu0
    %5313 = vmatprep.mubr.f32.mxu0 0.0
    %5314 = vmatmul.mubr.f32.gmra.mxu0 %v4987
    %v5315 = vpop.f32.mrf.mxu0
    %v5316 = vadd.f32 0.0, %v5315
    %v5317 = vpop.f32.mrf.mxu0
    %5318 = vmatprep.mubr.f32.mxu0 0.0
    %5319 = vmatmul.mubr.f32.gmra.mxu0 %v4988
    %v5320 = vpop.f32.mrf.mxu0
    %v5321 = vadd.f32 0.0, %v5320
    %v5322 = vpop.f32.mrf.mxu0
    %5323 = vmatprep.mubr.f32.mxu0 0.0
    %5324 = vmatmul.mubr.f32.gmra.mxu0 %v4989
    %v5325 = vpop.f32.mrf.mxu0
    %v5326 = vadd.f32 0.0, %v5325
    %v5327 = vpop.f32.mrf.mxu0
    %5328 = vmatprep.mubr.f32.mxu0 0.0
    %5329 = vmatmul.mubr.f32.gmra.mxu0 %v4990
    %v5330 = vpop.f32.mrf.mxu0
    %v5331 = vadd.f32 0.0, %v5330
    %v5332 = vpop.f32.mrf.mxu0
    %5333 = vmatprep.mubr.f32.mxu0 0.0
    %5334 = vmatmul.mubr.f32.gmra.mxu0 %v4991
    %v5335 = vpop.f32.mrf.mxu0
    %v5336 = vadd.f32 0.0, %v5335
    %v5337 = vpop.f32.mrf.mxu0
    %5338 = vmatprep.mubr.f32.mxu0 0.0
    %5339 = vmatmul.mubr.f32.gmra.mxu0 %v4992
    %v5340 = vpop.f32.mrf.mxu0
    %v5341 = vadd.f32 0.0, %v5340
    %v5342 = vpop.f32.mrf.mxu0
    %5343 = vmatprep.mubr.f32.mxu0 0.0
    %5344 = vmatmul.mubr.f32.gmra.mxu0 %v4993
    %v5345 = vpop.f32.mrf.mxu0
    %v5346 = vadd.f32 0.0, %v5345
    %v5347 = vpop.f32.mrf.mxu0
    %5348 = vmatprep.mubr.f32.mxu0 0.0
    %5349 = vmatmul.mubr.f32.gmra.mxu0 %v4994
    %v5350 = vpop.f32.mrf.mxu0
    %v5351 = vadd.f32 0.0, %v5350
    %v5352 = vpop.f32.mrf.mxu0
    %5353 = vmatprep.mubr.f32.mxu0 0.0
    %5354 = vmatmul.mubr.f32.gmra.mxu0 %v4995
    %v5355 = vpop.f32.mrf.mxu0
    %v5356 = vadd.f32 0.0, %v5355
    %v5357 = vpop.f32.mrf.mxu0
    %5358 = vmatprep.mubr.f32.mxu0 0.0
    %5359 = vmatmul.mubr.f32.gmra.mxu0 %v4996
    %v5360 = vpop.f32.mrf.mxu0
    %v5361 = vadd.f32 0.0, %v5360
    %v5362 = vpop.f32.mrf.mxu0
    %5363 = vmatprep.mubr.f32.mxu0 0.0
    %5364 = vmatmul.mubr.f32.gmra.mxu0 %v4997
    %v5365 = vpop.f32.mrf.mxu0
    %v5366 = vadd.f32 0.0, %v5365
    %v5367 = vpop.f32.mrf.mxu0
    %5368 = vmatprep.mubr.f32.mxu0 0.0
    %5369 = vmatmul.mubr.f32.gmra.mxu0 %v4998
    %v5370 = vpop.f32.mrf.mxu0
    %v5371 = vadd.f32 0.0, %v5370
    %v5372 = vpop.f32.mrf.mxu0
    %5373 = vmatprep.mubr.f32.mxu0 0.0
    %5374 = vmatmul.mubr.f32.gmra.mxu0 %v4999
    %v5375 = vpop.f32.mrf.mxu0
    %v5376 = vadd.f32 0.0, %v5375
    %v5377 = vpop.f32.mrf.mxu0
    %5378 = vmatprep.mubr.f32.mxu0 0.0
    %5379 = vmatmul.mubr.f32.gmra.mxu0 %v5000
    %v5380 = vpop.f32.mrf.mxu0
    %v5381 = vadd.f32 0.0, %v5380
    %v5382 = vpop.f32.mrf.mxu0
    %5383 = vmatprep.mubr.f32.mxu0 0.0
    %5384 = vmatmul.mubr.f32.gmra.mxu0 %v5001
    %v5385 = vpop.f32.mrf.mxu0
    %v5386 = vadd.f32 0.0, %v5385
    %v5387 = vpop.f32.mrf.mxu0
    %5388 = vmatprep.mubr.f32.mxu0 0.0
    %5389 = vmatmul.mubr.f32.gmra.mxu0 %v5002
    %v5390 = vpop.f32.mrf.mxu0
    %v5391 = vadd.f32 0.0, %v5390
    %v5392 = vpop.f32.mrf.mxu0
    %5393 = vmatprep.mubr.f32.mxu0 0.0
    %5394 = vmatmul.mubr.f32.gmra.mxu0 %v5003
    %v5395 = vpop.f32.mrf.mxu0
    %v5396 = vadd.f32 0.0, %v5395
    %v5397 = vpop.f32.mrf.mxu0
    %5398 = vmatprep.mubr.f32.mxu0 0.0
    %5399 = vmatmul.mubr.f32.gmra.mxu0 %v5004
    %v5400 = vpop.f32.mrf.mxu0
    %v5401 = vadd.f32 0.0, %v5400
    %v5402 = vpop.f32.mrf.mxu0
    %5403 = vmatprep.mubr.f32.mxu0 0.0
    %5404 = vmatmul.mubr.f32.gmra.mxu0 %v5005
    %v5405 = vpop.f32.mrf.mxu0
    %v5406 = vadd.f32 0.0, %v5405
    %v5407 = vpop.f32.mrf.mxu0
    %5408 = vmatprep.mubr.f32.mxu0 0.0
    %5409 = vmatmul.mubr.f32.gmra.mxu0 %v5006
    %v5410 = vpop.f32.mrf.mxu0
    %v5411 = vadd.f32 0.0, %v5410
    %v5412 = vpop.f32.mrf.mxu0
    %5413 = vmatprep.mubr.f32.mxu0 0.0
    %5414 = vmatmul.mubr.f32.gmra.mxu0 %v5007
    %v5415 = vpop.f32.mrf.mxu0
    %v5416 = vadd.f32 0.0, %v5415
    %v5417 = vpop.f32.mrf.mxu0
    %5418 = vmatprep.mubr.f32.mxu0 0.0
    %5419 = vmatmul.mubr.f32.gmra.mxu0 %v5008
    %v5420 = vpop.f32.mrf.mxu0
    %v5421 = vadd.f32 0.0, %v5420
    %v5422 = vpop.f32.mrf.mxu0
    %5423 = vmatprep.mubr.f32.mxu0 0.0
    %5424 = vmatmul.mubr.f32.gmra.mxu0 %v5009
    %v5425 = vpop.f32.mrf.mxu0
    %v5426 = vadd.f32 0.0, %v5425
    %v5427 = vpop.f32.mrf.mxu0
    %5428 = vmatprep.mubr.f32.mxu0 0.0
    %5429 = vmatmul.mubr.f32.gmra.mxu0 %v5010
    %v5430 = vpop.f32.mrf.mxu0
    %v5431 = vadd.f32 0.0, %v5430
    %v5432 = vpop.f32.mrf.mxu0
    %5433 = vmatprep.mubr.f32.mxu0 0.0
    %5434 = vmatmul.mubr.f32.gmra.mxu0 %v5011
    %v5435 = vpop.f32.mrf.mxu0
    %v5436 = vadd.f32 0.0, %v5435
    %v5437 = vpop.f32.mrf.mxu0
    %5438 = vdwg.mxu0
    %v5439 = vpack.c.bf16 %v5286, %v5281
    %v5440 = vpack.c.bf16 %v5296, %v5291
    %v5441 = vpack.c.bf16 %v5306, %v5301
    %v5442 = vpack.c.bf16 %v5316, %v5311
    %v5443 = vpack.c.bf16 %v5326, %v5321
    %v5444 = vpack.c.bf16 %v5336, %v5331
    %v5445 = vpack.c.bf16 %v5346, %v5341
    %v5446 = vpack.c.bf16 %v5356, %v5351
    %v5447 = vpack.c.bf16 %v5366, %v5361
    %v5448 = vpack.c.bf16 %v5376, %v5371
    %v5449 = vpack.c.bf16 %v5386, %v5381
    %v5450 = vpack.c.bf16 %v5396, %v5391
    %v5451 = vpack.c.bf16 %v5406, %v5401
    %v5452 = vpack.c.bf16 %v5416, %v5411
    %v5453 = vpack.c.bf16 %v5426, %v5421
    %v5454 = vpack.c.bf16 %v5436, %v5431
    %5471 = vrot.lane.b32.xlu0 %v5439, 61
    %v5472 = vpop.permute.xlu0 %5471
    %5473 = vrot.lane.b32.xlu0 %v5440, 61
    %v5474 = vpop.permute.xlu0 %5473
    %5475 = vrot.lane.b32.xlu0 %v5441, 61
    %v5476 = vpop.permute.xlu0 %5475
    %5477 = vrot.lane.b32.xlu0 %v5442, 61
    %v5478 = vpop.permute.xlu0 %5477
    %5479 = vrot.lane.b32.xlu0 %v5443, 61
    %v5480 = vpop.permute.xlu0 %5479
    %5481 = vrot.lane.b32.xlu0 %v5444, 61
    %v5482 = vpop.permute.xlu0 %5481
    %5483 = vrot.lane.b32.xlu0 %v5445, 61
    %v5484 = vpop.permute.xlu0 %5483
    %5485 = vrot.lane.b32.xlu0 %v5446, 61
    %v5486 = vpop.permute.xlu0 %5485
    %5487 = vrot.lane.b32.xlu0 %v5447, 61
    %v5488 = vpop.permute.xlu0 %5487
    %5489 = vrot.lane.b32.xlu0 %v5448, 61
    %v5490 = vpop.permute.xlu0 %5489
    %5491 = vrot.lane.b32.xlu0 %v5449, 61
    %v5492 = vpop.permute.xlu0 %5491
    %5493 = vrot.lane.b32.xlu0 %v5450, 61
    %v5494 = vpop.permute.xlu0 %5493
    %5495 = vrot.lane.b32.xlu0 %v5451, 61
    %v5496 = vpop.permute.xlu0 %5495
    %5497 = vrot.lane.b32.xlu0 %v5452, 61
    %v5498 = vpop.permute.xlu0 %5497
    %5499 = vrot.lane.b32.xlu0 %v5453, 61
    %v5500 = vpop.permute.xlu0 %5499
    %5501 = vrot.lane.b32.xlu0 %v5454, 61
    %v5502 = vpop.permute.xlu0 %5501
    %5503 = vrot.lane.b32.xlu0 %v5439, 1
    %v5504 = vpop.permute.xlu0 %5503
    %5505 = vrot.lane.b32.xlu0 %v5440, 1
    %v5506 = vpop.permute.xlu0 %5505
    %5507 = vrot.lane.b32.xlu0 %v5441, 1
    %v5508 = vpop.permute.xlu0 %5507
    %5509 = vrot.lane.b32.xlu0 %v5442, 1
    %v5510 = vpop.permute.xlu0 %5509
    %5511 = vrot.lane.b32.xlu0 %v5443, 1
    %v5512 = vpop.permute.xlu0 %5511
    %5513 = vrot.lane.b32.xlu0 %v5444, 1
    %v5514 = vpop.permute.xlu0 %5513
    %5515 = vrot.lane.b32.xlu0 %v5445, 1
    %v5516 = vpop.permute.xlu0 %5515
    %5517 = vrot.lane.b32.xlu0 %v5446, 1
    %v5518 = vpop.permute.xlu0 %5517
    %5519 = vrot.lane.b32.xlu0 %v5447, 1
    %v5520 = vpop.permute.xlu0 %5519
    %5521 = vrot.lane.b32.xlu0 %v5448, 1
    %v5522 = vpop.permute.xlu0 %5521
    %5523 = vrot.lane.b32.xlu0 %v5449, 1
    %v5524 = vpop.permute.xlu0 %5523
    %5525 = vrot.lane.b32.xlu0 %v5450, 1
    %v5526 = vpop.permute.xlu0 %5525
    %5527 = vrot.lane.b32.xlu0 %v5451, 1
    %v5528 = vpop.permute.xlu0 %5527
    %5529 = vrot.lane.b32.xlu0 %v5452, 1
    %v5530 = vpop.permute.xlu0 %5529
    %5531 = vrot.lane.b32.xlu0 %v5453, 1
    %v5532 = vpop.permute.xlu0 %5531
    %5533 = vrot.lane.b32.xlu0 %v5454, 1
    %v5534 = vpop.permute.xlu0 %5533
    %v5537 = vsel %vm1069, %v5472, %v5504
    %v5541 = vsel %vm1069, %v5474, %v5506
    %v5545 = vsel %vm1069, %v5476, %v5508
    %v5549 = vsel %vm1069, %v5478, %v5510
    %v5553 = vsel %vm1069, %v5480, %v5512
    %v5557 = vsel %vm1069, %v5482, %v5514
    %v5561 = vsel %vm1069, %v5484, %v5516
    %v5565 = vsel %vm1069, %v5486, %v5518
    %v5569 = vsel %vm1069, %v5488, %v5520
    %v5573 = vsel %vm1069, %v5490, %v5522
    %v5577 = vsel %vm1069, %v5492, %v5524
    %v5581 = vsel %vm1069, %v5494, %v5526
    %v5585 = vsel %vm1069, %v5496, %v5528
    %v5589 = vsel %vm1069, %v5498, %v5530
    %v5593 = vsel %vm1069, %v5500, %v5532
    %v5597 = vsel %vm1069, %v5502, %v5534
    %5599 = vrot.lane.b32.xlu0 %v5439, 127
    %v5600 = vpop.permute.xlu0 %5599
    %5601 = vrot.lane.b32.xlu0 %v5440, 127
    %v5602 = vpop.permute.xlu0 %5601
    %5603 = vrot.lane.b32.xlu0 %v5441, 127
    %v5604 = vpop.permute.xlu0 %5603
    %5605 = vrot.lane.b32.xlu0 %v5442, 127
    %v5606 = vpop.permute.xlu0 %5605
    %5607 = vrot.lane.b32.xlu0 %v5443, 127
    %v5608 = vpop.permute.xlu0 %5607
    %5609 = vrot.lane.b32.xlu0 %v5444, 127
    %v5610 = vpop.permute.xlu0 %5609
    %5611 = vrot.lane.b32.xlu0 %v5445, 127
    %v5612 = vpop.permute.xlu0 %5611
    %5613 = vrot.lane.b32.xlu0 %v5446, 127
    %v5614 = vpop.permute.xlu0 %5613
    %5615 = vrot.lane.b32.xlu0 %v5447, 127
    %v5616 = vpop.permute.xlu0 %5615
    %5617 = vrot.lane.b32.xlu0 %v5448, 127
    %v5618 = vpop.permute.xlu0 %5617
    %5619 = vrot.lane.b32.xlu0 %v5449, 127
    %v5620 = vpop.permute.xlu0 %5619
    %5621 = vrot.lane.b32.xlu0 %v5450, 127
    %v5622 = vpop.permute.xlu0 %5621
    %5623 = vrot.lane.b32.xlu0 %v5451, 127
    %v5624 = vpop.permute.xlu0 %5623
    %5625 = vrot.lane.b32.xlu0 %v5452, 127
    %v5626 = vpop.permute.xlu0 %5625
    %5627 = vrot.lane.b32.xlu0 %v5453, 127
    %v5628 = vpop.permute.xlu0 %5627
    %5629 = vrot.lane.b32.xlu0 %v5454, 127
    %v5630 = vpop.permute.xlu0 %5629
    %5631 = vrot.lane.b32.xlu0 %v5439, 67
    %v5632 = vpop.permute.xlu0 %5631
    %5633 = vrot.lane.b32.xlu0 %v5440, 67
    %v5634 = vpop.permute.xlu0 %5633
    %5635 = vrot.lane.b32.xlu0 %v5441, 67
    %v5636 = vpop.permute.xlu0 %5635
    %5637 = vrot.lane.b32.xlu0 %v5442, 67
    %v5638 = vpop.permute.xlu0 %5637
    %5639 = vrot.lane.b32.xlu0 %v5443, 67
    %v5640 = vpop.permute.xlu0 %5639
    %5641 = vrot.lane.b32.xlu0 %v5444, 67
    %v5642 = vpop.permute.xlu0 %5641
    %5643 = vrot.lane.b32.xlu0 %v5445, 67
    %v5644 = vpop.permute.xlu0 %5643
    %5645 = vrot.lane.b32.xlu0 %v5446, 67
    %v5646 = vpop.permute.xlu0 %5645
    %5647 = vrot.lane.b32.xlu0 %v5447, 67
    %v5648 = vpop.permute.xlu0 %5647
    %5649 = vrot.lane.b32.xlu0 %v5448, 67
    %v5650 = vpop.permute.xlu0 %5649
    %5651 = vrot.lane.b32.xlu0 %v5449, 67
    %v5652 = vpop.permute.xlu0 %5651
    %5653 = vrot.lane.b32.xlu0 %v5450, 67
    %v5654 = vpop.permute.xlu0 %5653
    %5655 = vrot.lane.b32.xlu0 %v5451, 67
    %v5656 = vpop.permute.xlu0 %5655
    %5657 = vrot.lane.b32.xlu0 %v5452, 67
    %v5658 = vpop.permute.xlu0 %5657
    %5659 = vrot.lane.b32.xlu0 %v5453, 67
    %v5660 = vpop.permute.xlu0 %5659
    %5661 = vrot.lane.b32.xlu0 %v5454, 67
    %v5662 = vpop.permute.xlu0 %5661
    %vm5663 = vcmask 547840
    %v5666 = vsel %vm5663, %v5600, %v5632
    %v5670 = vsel %vm5663, %v5602, %v5634
    %v5674 = vsel %vm5663, %v5604, %v5636
    %v5678 = vsel %vm5663, %v5606, %v5638
    %v5682 = vsel %vm5663, %v5608, %v5640
    %v5686 = vsel %vm5663, %v5610, %v5642
    %v5690 = vsel %vm5663, %v5612, %v5644
    %v5694 = vsel %vm5663, %v5614, %v5646
    %v5698 = vsel %vm5663, %v5616, %v5648
    %v5702 = vsel %vm5663, %v5618, %v5650
    %v5706 = vsel %vm5663, %v5620, %v5652
    %v5710 = vsel %vm5663, %v5622, %v5654
    %v5714 = vsel %vm5663, %v5624, %v5656
    %v5718 = vsel %vm5663, %v5626, %v5658
    %v5722 = vsel %vm5663, %v5628, %v5660
    %v5726 = vsel %vm5663, %v5630, %v5662
    %v5728 = vld [vmem:[%s16] sm:$0xff]
    %v5729 = vld [vmem:[%s16 + $0x8] sm:$0xff]
    %v5730 = vld [vmem:[%s16 + $0x10] sm:$0xff]
    %v5731 = vld [vmem:[%s16 + $0x18] sm:$0xff]
    %v5732 = vld [vmem:[%s16 + $0x20] sm:$0xff]
    %v5733 = vld [vmem:[%s16 + $0x28] sm:$0xff]
    %v5734 = vld [vmem:[%s16 + $0x30] sm:$0xff]
    %v5735 = vld [vmem:[%s16 + $0x38] sm:$0xff]
    %v5736 = vld [vmem:[%s16 + $0x40] sm:$0xff]
    %v5737 = vld [vmem:[%s16 + $0x48] sm:$0xff]
    %v5738 = vld [vmem:[%s16 + $0x50] sm:$0xff]
    %v5739 = vld [vmem:[%s16 + $0x58] sm:$0xff]
    %v5740 = vld [vmem:[%s16 + $0x60] sm:$0xff]
    %v5741 = vld [vmem:[%s16 + $0x68] sm:$0xff]
    %v5742 = vld [vmem:[%s16 + $0x70] sm:$0xff]
    %v5743 = vld [vmem:[%s16 + $0x78] sm:$0xff]
    %v5744 = vld [vmem:[%s16 + $0x80] sm:$0xff]
    %v5745 = vld [vmem:[%s16 + $0x88] sm:$0xff]
    %v5746 = vld [vmem:[%s16 + $0x90] sm:$0xff]
    %v5747 = vld [vmem:[%s16 + $0x98] sm:$0xff]
    %v5748 = vld [vmem:[%s16 + $0xa0] sm:$0xff]
    %v5749 = vld [vmem:[%s16 + $0xa8] sm:$0xff]
    %v5750 = vld [vmem:[%s16 + $0xb0] sm:$0xff]
    %v5751 = vld [vmem:[%s16 + $0xb8] sm:$0xff]
    %v5752 = vld [vmem:[%s16 + $0xc0] sm:$0xff]
    %v5753 = vld [vmem:[%s16 + $0xc8] sm:$0xff]
    %v5754 = vld [vmem:[%s16 + $0xd0] sm:$0xff]
    %v5755 = vld [vmem:[%s16 + $0xd8] sm:$0xff]
    %v5756 = vld [vmem:[%s16 + $0xe0] sm:$0xff]
    %v5757 = vld [vmem:[%s16 + $0xe8] sm:$0xff]
    %v5758 = vld [vmem:[%s16 + $0xf0] sm:$0xff]
    %v5759 = vld [vmem:[%s16 + $0xf8] sm:$0xff]
    %v5760 = vld [vmem:[%s16 + $0x100] sm:$0xff]
    %v5761 = vld [vmem:[%s16 + $0x108] sm:$0xff]
    %v5762 = vld [vmem:[%s16 + $0x110] sm:$0xff]
    %v5763 = vld [vmem:[%s16 + $0x118] sm:$0xff]
    %v5764 = vld [vmem:[%s16 + $0x120] sm:$0xff]
    %v5765 = vld [vmem:[%s16 + $0x128] sm:$0xff]
    %v5766 = vld [vmem:[%s16 + $0x130] sm:$0xff]
    %v5767 = vld [vmem:[%s16 + $0x138] sm:$0xff]
    %v5768 = vld [vmem:[%s16 + $0x140] sm:$0xff]
    %v5769 = vld [vmem:[%s16 + $0x148] sm:$0xff]
    %v5770 = vld [vmem:[%s16 + $0x150] sm:$0xff]
    %v5771 = vld [vmem:[%s16 + $0x158] sm:$0xff]
    %v5772 = vld [vmem:[%s16 + $0x160] sm:$0xff]
    %v5773 = vld [vmem:[%s16 + $0x168] sm:$0xff]
    %v5774 = vld [vmem:[%s16 + $0x170] sm:$0xff]
    %v5775 = vld [vmem:[%s16 + $0x178] sm:$0xff]
    %v5776 = vld [vmem:[%s16 + $0x180] sm:$0xff]
    %v5777 = vld [vmem:[%s16 + $0x188] sm:$0xff]
    %v5778 = vld [vmem:[%s16 + $0x190] sm:$0xff]
    %v5779 = vld [vmem:[%s16 + $0x198] sm:$0xff]
    %v5780 = vld [vmem:[%s16 + $0x1a0] sm:$0xff]
    %v5781 = vld [vmem:[%s16 + $0x1a8] sm:$0xff]
    %v5782 = vld [vmem:[%s16 + $0x1b0] sm:$0xff]
    %v5783 = vld [vmem:[%s16 + $0x1b8] sm:$0xff]
    %v5784 = vld [vmem:[%s16 + $0x1c0] sm:$0xff]
    %v5785 = vld [vmem:[%s16 + $0x1c8] sm:$0xff]
    %v5786 = vld [vmem:[%s16 + $0x1d0] sm:$0xff]
    %v5787 = vld [vmem:[%s16 + $0x1d8] sm:$0xff]
    %v5788 = vld [vmem:[%s16 + $0x1e0] sm:$0xff]
    %v5789 = vld [vmem:[%s16 + $0x1e8] sm:$0xff]
    %v5790 = vld [vmem:[%s16 + $0x1f0] sm:$0xff]
    %v5791 = vld [vmem:[%s16 + $0x1f8] sm:$0xff]
    %v5792 = vld [vmem:[%s16 + $0x200] sm:$0xff]
    %v5793 = vld [vmem:[%s16 + $0x208] sm:$0xff]
    %v5794 = vld [vmem:[%s16 + $0x210] sm:$0xff]
    %v5795 = vld [vmem:[%s16 + $0x218] sm:$0xff]
    %v5796 = vld [vmem:[%s16 + $0x220] sm:$0xff]
    %v5797 = vld [vmem:[%s16 + $0x228] sm:$0xff]
    %v5798 = vld [vmem:[%s16 + $0x230] sm:$0xff]
    %v5799 = vld [vmem:[%s16 + $0x238] sm:$0xff]
    %v5800 = vld [vmem:[%s16 + $0x240] sm:$0xff]
    %v5801 = vld [vmem:[%s16 + $0x248] sm:$0xff]
    %v5802 = vld [vmem:[%s16 + $0x250] sm:$0xff]
    %v5803 = vld [vmem:[%s16 + $0x258] sm:$0xff]
    %v5804 = vld [vmem:[%s16 + $0x260] sm:$0xff]
    %v5805 = vld [vmem:[%s16 + $0x268] sm:$0xff]
    %v5806 = vld [vmem:[%s16 + $0x270] sm:$0xff]
    %v5807 = vld [vmem:[%s16 + $0x278] sm:$0xff]
    %v5808 = vld [vmem:[%s16 + $0x280] sm:$0xff]
    %v5809 = vld [vmem:[%s16 + $0x288] sm:$0xff]
    %v5810 = vld [vmem:[%s16 + $0x290] sm:$0xff]
    %v5811 = vld [vmem:[%s16 + $0x298] sm:$0xff]
    %v5812 = vld [vmem:[%s16 + $0x2a0] sm:$0xff]
    %v5813 = vld [vmem:[%s16 + $0x2a8] sm:$0xff]
    %v5814 = vld [vmem:[%s16 + $0x2b0] sm:$0xff]
    %v5815 = vld [vmem:[%s16 + $0x2b8] sm:$0xff]
    %v5816 = vld [vmem:[%s16 + $0x2c0] sm:$0xff]
    %v5817 = vld [vmem:[%s16 + $0x2c8] sm:$0xff]
    %v5818 = vld [vmem:[%s16 + $0x2d0] sm:$0xff]
    %v5819 = vld [vmem:[%s16 + $0x2d8] sm:$0xff]
    %v5820 = vld [vmem:[%s16 + $0x2e0] sm:$0xff]
    %v5821 = vld [vmem:[%s16 + $0x2e8] sm:$0xff]
    %v5822 = vld [vmem:[%s16 + $0x2f0] sm:$0xff]
    %v5823 = vld [vmem:[%s16 + $0x2f8] sm:$0xff]
    %v5920 = vunpack.c.l.b16 %v5728
    %v5921 = vunpack.c.h.b16 %v5728
    %v5922 = vunpack.c.l.b16 %v5729
    %v5923 = vunpack.c.h.b16 %v5729
    %v5924 = vunpack.c.l.b16 %v5730
    %v5925 = vunpack.c.h.b16 %v5730
    %v5926 = vunpack.c.l.b16 %v5731
    %v5927 = vunpack.c.h.b16 %v5731
    %v5928 = vunpack.c.l.b16 %v5732
    %v5929 = vunpack.c.h.b16 %v5732
    %v5930 = vunpack.c.l.b16 %v5733
    %v5931 = vunpack.c.h.b16 %v5733
    %v5932 = vunpack.c.l.b16 %v5734
    %v5933 = vunpack.c.h.b16 %v5734
    %v5934 = vunpack.c.l.b16 %v5735
    %v5935 = vunpack.c.h.b16 %v5735
    %v5936 = vunpack.c.l.b16 %v5736
    %v5937 = vunpack.c.h.b16 %v5736
    %v5938 = vunpack.c.l.b16 %v5737
    %v5939 = vunpack.c.h.b16 %v5737
    %v5940 = vunpack.c.l.b16 %v5738
    %v5941 = vunpack.c.h.b16 %v5738
    %v5942 = vunpack.c.l.b16 %v5739
    %v5943 = vunpack.c.h.b16 %v5739
    %v5944 = vunpack.c.l.b16 %v5740
    %v5945 = vunpack.c.h.b16 %v5740
    %v5946 = vunpack.c.l.b16 %v5741
    %v5947 = vunpack.c.h.b16 %v5741
    %v5948 = vunpack.c.l.b16 %v5742
    %v5949 = vunpack.c.h.b16 %v5742
    %v5950 = vunpack.c.l.b16 %v5743
    %v5951 = vunpack.c.h.b16 %v5743
    %v5952 = vunpack.c.l.b16 %v5744
    %v5953 = vunpack.c.h.b16 %v5744
    %v5954 = vunpack.c.l.b16 %v5745
    %v5955 = vunpack.c.h.b16 %v5745
    %v5956 = vunpack.c.l.b16 %v5746
    %v5957 = vunpack.c.h.b16 %v5746
    %v5958 = vunpack.c.l.b16 %v5747
    %v5959 = vunpack.c.h.b16 %v5747
    %v5960 = vunpack.c.l.b16 %v5748
    %v5961 = vunpack.c.h.b16 %v5748
    %v5962 = vunpack.c.l.b16 %v5749
    %v5963 = vunpack.c.h.b16 %v5749
    %v5964 = vunpack.c.l.b16 %v5750
    %v5965 = vunpack.c.h.b16 %v5750
    %v5966 = vunpack.c.l.b16 %v5751
    %v5967 = vunpack.c.h.b16 %v5751
    %v5968 = vunpack.c.l.b16 %v5752
    %v5969 = vunpack.c.h.b16 %v5752
    %v5970 = vunpack.c.l.b16 %v5753
    %v5971 = vunpack.c.h.b16 %v5753
    %v5972 = vunpack.c.l.b16 %v5754
    %v5973 = vunpack.c.h.b16 %v5754
    %v5974 = vunpack.c.l.b16 %v5755
    %v5975 = vunpack.c.h.b16 %v5755
    %v5976 = vunpack.c.l.b16 %v5756
    %v5977 = vunpack.c.h.b16 %v5756
    %v5978 = vunpack.c.l.b16 %v5757
    %v5979 = vunpack.c.h.b16 %v5757
    %v5980 = vunpack.c.l.b16 %v5758
    %v5981 = vunpack.c.h.b16 %v5758
    %v5982 = vunpack.c.l.b16 %v5759
    %v5983 = vunpack.c.h.b16 %v5759
    %v5984 = vunpack.c.l.b16 %v5760
    %v5985 = vunpack.c.h.b16 %v5760
    %v5986 = vunpack.c.l.b16 %v5761
    %v5987 = vunpack.c.h.b16 %v5761
    %v5988 = vunpack.c.l.b16 %v5762
    %v5989 = vunpack.c.h.b16 %v5762
    %v5990 = vunpack.c.l.b16 %v5763
    %v5991 = vunpack.c.h.b16 %v5763
    %v5992 = vunpack.c.l.b16 %v5764
    %v5993 = vunpack.c.h.b16 %v5764
    %v5994 = vunpack.c.l.b16 %v5765
    %v5995 = vunpack.c.h.b16 %v5765
    %v5996 = vunpack.c.l.b16 %v5766
    %v5997 = vunpack.c.h.b16 %v5766
    %v5998 = vunpack.c.l.b16 %v5767
    %v5999 = vunpack.c.h.b16 %v5767
    %v6000 = vunpack.c.l.b16 %v5768
    %v6001 = vunpack.c.h.b16 %v5768
    %v6002 = vunpack.c.l.b16 %v5769
    %v6003 = vunpack.c.h.b16 %v5769
    %v6004 = vunpack.c.l.b16 %v5770
    %v6005 = vunpack.c.h.b16 %v5770
    %v6006 = vunpack.c.l.b16 %v5771
    %v6007 = vunpack.c.h.b16 %v5771
    %v6008 = vunpack.c.l.b16 %v5772
    %v6009 = vunpack.c.h.b16 %v5772
    %v6010 = vunpack.c.l.b16 %v5773
    %v6011 = vunpack.c.h.b16 %v5773
    %v6012 = vunpack.c.l.b16 %v5774
    %v6013 = vunpack.c.h.b16 %v5774
    %v6014 = vunpack.c.l.b16 %v5775
    %v6015 = vunpack.c.h.b16 %v5775
    %v6016 = vunpack.c.l.b16 %v5776
    %v6017 = vunpack.c.h.b16 %v5776
    %v6018 = vunpack.c.l.b16 %v5777
    %v6019 = vunpack.c.h.b16 %v5777
    %v6020 = vunpack.c.l.b16 %v5778
    %v6021 = vunpack.c.h.b16 %v5778
    %v6022 = vunpack.c.l.b16 %v5779
    %v6023 = vunpack.c.h.b16 %v5779
    %v6024 = vunpack.c.l.b16 %v5780
    %v6025 = vunpack.c.h.b16 %v5780
    %v6026 = vunpack.c.l.b16 %v5781
    %v6027 = vunpack.c.h.b16 %v5781
    %v6028 = vunpack.c.l.b16 %v5782
    %v6029 = vunpack.c.h.b16 %v5782
    %v6030 = vunpack.c.l.b16 %v5783
    %v6031 = vunpack.c.h.b16 %v5783
    %v6032 = vunpack.c.l.b16 %v5784
    %v6033 = vunpack.c.h.b16 %v5784
    %v6034 = vunpack.c.l.b16 %v5785
    %v6035 = vunpack.c.h.b16 %v5785
    %v6036 = vunpack.c.l.b16 %v5786
    %v6037 = vunpack.c.h.b16 %v5786
    %v6038 = vunpack.c.l.b16 %v5787
    %v6039 = vunpack.c.h.b16 %v5787
    %v6040 = vunpack.c.l.b16 %v5788
    %v6041 = vunpack.c.h.b16 %v5788
    %v6042 = vunpack.c.l.b16 %v5789
    %v6043 = vunpack.c.h.b16 %v5789
    %v6044 = vunpack.c.l.b16 %v5790
    %v6045 = vunpack.c.h.b16 %v5790
    %v6046 = vunpack.c.l.b16 %v5791
    %v6047 = vunpack.c.h.b16 %v5791
    %v6048 = vunpack.c.l.b16 %v5792
    %v6049 = vunpack.c.h.b16 %v5792
    %v6050 = vunpack.c.l.b16 %v5793
    %v6051 = vunpack.c.h.b16 %v5793
    %v6052 = vunpack.c.l.b16 %v5794
    %v6053 = vunpack.c.h.b16 %v5794
    %v6054 = vunpack.c.l.b16 %v5795
    %v6055 = vunpack.c.h.b16 %v5795
    %v6056 = vunpack.c.l.b16 %v5796
    %v6057 = vunpack.c.h.b16 %v5796
    %v6058 = vunpack.c.l.b16 %v5797
    %v6059 = vunpack.c.h.b16 %v5797
    %v6060 = vunpack.c.l.b16 %v5798
    %v6061 = vunpack.c.h.b16 %v5798
    %v6062 = vunpack.c.l.b16 %v5799
    %v6063 = vunpack.c.h.b16 %v5799
    %v6064 = vunpack.c.l.b16 %v5800
    %v6065 = vunpack.c.h.b16 %v5800
    %v6066 = vunpack.c.l.b16 %v5801
    %v6067 = vunpack.c.h.b16 %v5801
    %v6068 = vunpack.c.l.b16 %v5802
    %v6069 = vunpack.c.h.b16 %v5802
    %v6070 = vunpack.c.l.b16 %v5803
    %v6071 = vunpack.c.h.b16 %v5803
    %v6072 = vunpack.c.l.b16 %v5804
    %v6073 = vunpack.c.h.b16 %v5804
    %v6074 = vunpack.c.l.b16 %v5805
    %v6075 = vunpack.c.h.b16 %v5805
    %v6076 = vunpack.c.l.b16 %v5806
    %v6077 = vunpack.c.h.b16 %v5806
    %v6078 = vunpack.c.l.b16 %v5807
    %v6079 = vunpack.c.h.b16 %v5807
    %v6080 = vunpack.c.l.b16 %v5808
    %v6081 = vunpack.c.h.b16 %v5808
    %v6082 = vunpack.c.l.b16 %v5809
    %v6083 = vunpack.c.h.b16 %v5809
    %v6084 = vunpack.c.l.b16 %v5810
    %v6085 = vunpack.c.h.b16 %v5810
    %v6086 = vunpack.c.l.b16 %v5811
    %v6087 = vunpack.c.h.b16 %v5811
    %v6088 = vunpack.c.l.b16 %v5812
    %v6089 = vunpack.c.h.b16 %v5812
    %v6090 = vunpack.c.l.b16 %v5813
    %v6091 = vunpack.c.h.b16 %v5813
    %v6092 = vunpack.c.l.b16 %v5814
    %v6093 = vunpack.c.h.b16 %v5814
    %v6094 = vunpack.c.l.b16 %v5815
    %v6095 = vunpack.c.h.b16 %v5815
    %v6096 = vunpack.c.l.b16 %v5816
    %v6097 = vunpack.c.h.b16 %v5816
    %v6098 = vunpack.c.l.b16 %v5817
    %v6099 = vunpack.c.h.b16 %v5817
    %v6100 = vunpack.c.l.b16 %v5818
    %v6101 = vunpack.c.h.b16 %v5818
    %v6102 = vunpack.c.l.b16 %v5819
    %v6103 = vunpack.c.h.b16 %v5819
    %v6104 = vunpack.c.l.b16 %v5820
    %v6105 = vunpack.c.h.b16 %v5820
    %v6106 = vunpack.c.l.b16 %v5821
    %v6107 = vunpack.c.h.b16 %v5821
    %v6108 = vunpack.c.l.b16 %v5822
    %v6109 = vunpack.c.h.b16 %v5822
    %v6110 = vunpack.c.l.b16 %v5823
    %v6111 = vunpack.c.h.b16 %v5823
    %v6112 = vpack.c.b16 %v5926, %v5920
    %v6113 = vpack.c.b16 %v5927, %v5921
    %v6114 = vpack.c.b16 %v5928, %v5922
    %v6115 = vpack.c.b16 %v5929, %v5923
    %v6116 = vpack.c.b16 %v5930, %v5924
    %v6117 = vpack.c.b16 %v5931, %v5925
    %v6118 = vpack.c.b16 %v5938, %v5932
    %v6119 = vpack.c.b16 %v5939, %v5933
    %v6120 = vpack.c.b16 %v5940, %v5934
    %v6121 = vpack.c.b16 %v5941, %v5935
    %v6122 = vpack.c.b16 %v5942, %v5936
    %v6123 = vpack.c.b16 %v5943, %v5937
    %v6124 = vpack.c.b16 %v5950, %v5944
    %v6125 = vpack.c.b16 %v5951, %v5945
    %v6126 = vpack.c.b16 %v5952, %v5946
    %v6127 = vpack.c.b16 %v5953, %v5947
    %v6128 = vpack.c.b16 %v5954, %v5948
    %v6129 = vpack.c.b16 %v5955, %v5949
    %v6130 = vpack.c.b16 %v5962, %v5956
    %v6131 = vpack.c.b16 %v5963, %v5957
    %v6132 = vpack.c.b16 %v5964, %v5958
    %v6133 = vpack.c.b16 %v5965, %v5959
    %v6134 = vpack.c.b16 %v5966, %v5960
    %v6135 = vpack.c.b16 %v5967, %v5961
    %v6136 = vpack.c.b16 %v5974, %v5968
    %v6137 = vpack.c.b16 %v5975, %v5969
    %v6138 = vpack.c.b16 %v5976, %v5970
    %v6139 = vpack.c.b16 %v5977, %v5971
    %v6140 = vpack.c.b16 %v5978, %v5972
    %v6141 = vpack.c.b16 %v5979, %v5973
    %v6142 = vpack.c.b16 %v5986, %v5980
    %v6143 = vpack.c.b16 %v5987, %v5981
    %v6144 = vpack.c.b16 %v5988, %v5982
    %v6145 = vpack.c.b16 %v5989, %v5983
    %v6146 = vpack.c.b16 %v5990, %v5984
    %v6147 = vpack.c.b16 %v5991, %v5985
    %v6148 = vpack.c.b16 %v5998, %v5992
    %v6149 = vpack.c.b16 %v5999, %v5993
    %v6150 = vpack.c.b16 %v6000, %v5994
    %v6151 = vpack.c.b16 %v6001, %v5995
    %v6152 = vpack.c.b16 %v6002, %v5996
    %v6153 = vpack.c.b16 %v6003, %v5997
    %v6154 = vpack.c.b16 %v6010, %v6004
    %v6155 = vpack.c.b16 %v6011, %v6005
    %v6156 = vpack.c.b16 %v6012, %v6006
    %v6157 = vpack.c.b16 %v6013, %v6007
    %v6158 = vpack.c.b16 %v6014, %v6008
    %v6159 = vpack.c.b16 %v6015, %v6009
    %v6160 = vpack.c.b16 %v6022, %v6016
    %v6161 = vpack.c.b16 %v6023, %v6017
    %v6162 = vpack.c.b16 %v6024, %v6018
    %v6163 = vpack.c.b16 %v6025, %v6019
    %v6164 = vpack.c.b16 %v6026, %v6020
    %v6165 = vpack.c.b16 %v6027, %v6021
    %v6166 = vpack.c.b16 %v6034, %v6028
    %v6167 = vpack.c.b16 %v6035, %v6029
    %v6168 = vpack.c.b16 %v6036, %v6030
    %v6169 = vpack.c.b16 %v6037, %v6031
    %v6170 = vpack.c.b16 %v6038, %v6032
    %v6171 = vpack.c.b16 %v6039, %v6033
    %v6172 = vpack.c.b16 %v6046, %v6040
    %v6173 = vpack.c.b16 %v6047, %v6041
    %v6174 = vpack.c.b16 %v6048, %v6042
    %v6175 = vpack.c.b16 %v6049, %v6043
    %v6176 = vpack.c.b16 %v6050, %v6044
    %v6177 = vpack.c.b16 %v6051, %v6045
    %v6178 = vpack.c.b16 %v6058, %v6052
    %v6179 = vpack.c.b16 %v6059, %v6053
    %v6180 = vpack.c.b16 %v6060, %v6054
    %v6181 = vpack.c.b16 %v6061, %v6055
    %v6182 = vpack.c.b16 %v6062, %v6056
    %v6183 = vpack.c.b16 %v6063, %v6057
    %v6184 = vpack.c.b16 %v6070, %v6064
    %v6185 = vpack.c.b16 %v6071, %v6065
    %v6186 = vpack.c.b16 %v6072, %v6066
    %v6187 = vpack.c.b16 %v6073, %v6067
    %v6188 = vpack.c.b16 %v6074, %v6068
    %v6189 = vpack.c.b16 %v6075, %v6069
    %v6190 = vpack.c.b16 %v6082, %v6076
    %v6191 = vpack.c.b16 %v6083, %v6077
    %v6192 = vpack.c.b16 %v6084, %v6078
    %v6193 = vpack.c.b16 %v6085, %v6079
    %v6194 = vpack.c.b16 %v6086, %v6080
    %v6195 = vpack.c.b16 %v6087, %v6081
    %v6196 = vpack.c.b16 %v6094, %v6088
    %v6197 = vpack.c.b16 %v6095, %v6089
    %v6198 = vpack.c.b16 %v6096, %v6090
    %v6199 = vpack.c.b16 %v6097, %v6091
    %v6200 = vpack.c.b16 %v6098, %v6092
    %v6201 = vpack.c.b16 %v6099, %v6093
    %v6202 = vpack.c.b16 %v6106, %v6100
    %v6203 = vpack.c.b16 %v6107, %v6101
    %v6204 = vpack.c.b16 %v6108, %v6102
    %v6205 = vpack.c.b16 %v6109, %v6103
    %v6206 = vpack.c.b16 %v6110, %v6104
    %v6207 = vpack.c.b16 %v6111, %v6105
    %6304 = vmatprep.subr.bf16.mxu0 0
    %6305 = vmatpush1.bf16.msra.mxu0 %v5565
    %6306 = vmatprep.subr.bf16.mxu0 0
    %6307 = vmatpush1.bf16.msra.mxu0 %v5561
    %6308 = vmatprep.subr.bf16.mxu0 0
    %6309 = vmatpush1.bf16.msra.mxu0 %v5557
    %6310 = vmatprep.subr.bf16.mxu0 0
    %6311 = vmatpush1.bf16.msra.mxu0 %v5553
    %6312 = vmatprep.subr.bf16.mxu0 0
    %6313 = vmatpush1.bf16.msra.mxu0 %v5549
    %6314 = vmatprep.subr.bf16.mxu0 0
    %6315 = vmatpush1.bf16.msra.mxu0 %v5545
    %6316 = vmatprep.subr.bf16.mxu0 0
    %6317 = vmatpush1.bf16.msra.mxu0 %v5541
    %6318 = vmatprep.subr.bf16.mxu0 0
    %6319 = vmatpush1.bf16.msra.mxu0 %v5537
    %6320 = vmatprep.subr.bf16.mxu0 0
    %6321 = vmatpush2.bf16.msra.mxu0 %v5597
    %6322 = vmatprep.subr.bf16.mxu0 0
    %6323 = vmatpush2.bf16.msra.mxu0 %v5593
    %6324 = vmatprep.subr.bf16.mxu0 0
    %6325 = vmatpush2.bf16.msra.mxu0 %v5589
    %6326 = vmatprep.subr.bf16.mxu0 0
    %6327 = vmatpush2.bf16.msra.mxu0 %v5585
    %6328 = vmatprep.subr.bf16.mxu0 0
    %6329 = vmatpush2.bf16.msra.mxu0 %v5581
    %6330 = vmatprep.subr.bf16.mxu0 0
    %6331 = vmatpush2.bf16.msra.mxu0 %v5577
    %6332 = vmatprep.subr.bf16.mxu0 0
    %6333 = vmatpush2.bf16.msra.mxu0 %v5573
    %6334 = vmatprep.subr.bf16.mxu0 0
    %6335 = vmatpush2.bf16.msra.mxu0 %v5569
    %6336 = vmatprep.mubr.bf16.mxu0 %v6113
    %6337 = vmatmul.mubr.bf16.gmra.mxu0 %v6112
    %v6338 = vpop.f32.mrf.mxu0
    %v6339 = vadd.f32 0.0, %v6338
    %v6340 = vpop.f32.mrf.mxu0
    %v6341 = vpop.f32.mrf.mxu0
    %v6342 = vadd.f32 0.0, %v6341
    %v6343 = vpop.f32.mrf.mxu0
    %6344 = vmatprep.mubr.bf16.mxu0 %v6119
    %6345 = vmatmul.mubr.bf16.gmra.mxu0 %v6118
    %v6346 = vpop.f32.mrf.mxu0
    %v6347 = vadd.f32 0.0, %v6346
    %v6348 = vpop.f32.mrf.mxu0
    %v6349 = vpop.f32.mrf.mxu0
    %v6350 = vadd.f32 0.0, %v6349
    %v6351 = vpop.f32.mrf.mxu0
    %6352 = vmatprep.mubr.bf16.mxu0 %v6125
    %6353 = vmatmul.mubr.bf16.gmra.mxu0 %v6124
    %v6354 = vpop.f32.mrf.mxu0
    %v6355 = vadd.f32 0.0, %v6354
    %v6356 = vpop.f32.mrf.mxu0
    %v6357 = vpop.f32.mrf.mxu0
    %v6358 = vadd.f32 0.0, %v6357
    %v6359 = vpop.f32.mrf.mxu0
    %6360 = vmatprep.mubr.bf16.mxu0 %v6131
    %6361 = vmatmul.mubr.bf16.gmra.mxu0 %v6130
    %v6362 = vpop.f32.mrf.mxu0
    %v6363 = vadd.f32 0.0, %v6362
    %v6364 = vpop.f32.mrf.mxu0
    %v6365 = vpop.f32.mrf.mxu0
    %v6366 = vadd.f32 0.0, %v6365
    %v6367 = vpop.f32.mrf.mxu0
    %6368 = vmatprep.mubr.bf16.mxu0 %v6137
    %6369 = vmatmul.mubr.bf16.gmra.mxu0 %v6136
    %v6370 = vpop.f32.mrf.mxu0
    %v6371 = vadd.f32 0.0, %v6370
    %v6372 = vpop.f32.mrf.mxu0
    %v6373 = vpop.f32.mrf.mxu0
    %v6374 = vadd.f32 0.0, %v6373
    %v6375 = vpop.f32.mrf.mxu0
    %6376 = vmatprep.mubr.bf16.mxu0 %v6143
    %6377 = vmatmul.mubr.bf16.gmra.mxu0 %v6142
    %v6378 = vpop.f32.mrf.mxu0
    %v6379 = vadd.f32 0.0, %v6378
    %v6380 = vpop.f32.mrf.mxu0
    %v6381 = vpop.f32.mrf.mxu0
    %v6382 = vadd.f32 0.0, %v6381
    %v6383 = vpop.f32.mrf.mxu0
    %6384 = vmatprep.mubr.bf16.mxu0 %v6149
    %6385 = vmatmul.mubr.bf16.gmra.mxu0 %v6148
    %v6386 = vpop.f32.mrf.mxu0
    %v6387 = vadd.f32 0.0, %v6386
    %v6388 = vpop.f32.mrf.mxu0
    %v6389 = vpop.f32.mrf.mxu0
    %v6390 = vadd.f32 0.0, %v6389
    %v6391 = vpop.f32.mrf.mxu0
    %6392 = vmatprep.mubr.bf16.mxu0 %v6155
    %6393 = vmatmul.mubr.bf16.gmra.mxu0 %v6154
    %v6394 = vpop.f32.mrf.mxu0
    %v6395 = vadd.f32 0.0, %v6394
    %v6396 = vpop.f32.mrf.mxu0
    %v6397 = vpop.f32.mrf.mxu0
    %v6398 = vadd.f32 0.0, %v6397
    %v6399 = vpop.f32.mrf.mxu0
    %6400 = vmatprep.mubr.bf16.mxu0 %v6161
    %6401 = vmatmul.mubr.bf16.gmra.mxu0 %v6160
    %v6402 = vpop.f32.mrf.mxu0
    %v6403 = vadd.f32 0.0, %v6402
    %v6404 = vpop.f32.mrf.mxu0
    %v6405 = vpop.f32.mrf.mxu0
    %v6406 = vadd.f32 0.0, %v6405
    %v6407 = vpop.f32.mrf.mxu0
    %6408 = vmatprep.mubr.bf16.mxu0 %v6167
    %6409 = vmatmul.mubr.bf16.gmra.mxu0 %v6166
    %v6410 = vpop.f32.mrf.mxu0
    %v6411 = vadd.f32 0.0, %v6410
    %v6412 = vpop.f32.mrf.mxu0
    %v6413 = vpop.f32.mrf.mxu0
    %v6414 = vadd.f32 0.0, %v6413
    %v6415 = vpop.f32.mrf.mxu0
    %6416 = vmatprep.mubr.bf16.mxu0 %v6173
    %6417 = vmatmul.mubr.bf16.gmra.mxu0 %v6172
    %v6418 = vpop.f32.mrf.mxu0
    %v6419 = vadd.f32 0.0, %v6418
    %v6420 = vpop.f32.mrf.mxu0
    %v6421 = vpop.f32.mrf.mxu0
    %v6422 = vadd.f32 0.0, %v6421
    %v6423 = vpop.f32.mrf.mxu0
    %6424 = vmatprep.mubr.bf16.mxu0 %v6179
    %6425 = vmatmul.mubr.bf16.gmra.mxu0 %v6178
    %v6426 = vpop.f32.mrf.mxu0
    %v6427 = vadd.f32 0.0, %v6426
    %v6428 = vpop.f32.mrf.mxu0
    %v6429 = vpop.f32.mrf.mxu0
    %v6430 = vadd.f32 0.0, %v6429
    %v6431 = vpop.f32.mrf.mxu0
    %6432 = vmatprep.mubr.bf16.mxu0 %v6185
    %6433 = vmatmul.mubr.bf16.gmra.mxu0 %v6184
    %v6434 = vpop.f32.mrf.mxu0
    %v6435 = vadd.f32 0.0, %v6434
    %v6436 = vpop.f32.mrf.mxu0
    %v6437 = vpop.f32.mrf.mxu0
    %v6438 = vadd.f32 0.0, %v6437
    %v6439 = vpop.f32.mrf.mxu0
    %6440 = vmatprep.mubr.bf16.mxu0 %v6191
    %6441 = vmatmul.mubr.bf16.gmra.mxu0 %v6190
    %v6442 = vpop.f32.mrf.mxu0
    %v6443 = vadd.f32 0.0, %v6442
    %v6444 = vpop.f32.mrf.mxu0
    %v6445 = vpop.f32.mrf.mxu0
    %v6446 = vadd.f32 0.0, %v6445
    %v6447 = vpop.f32.mrf.mxu0
    %6448 = vmatprep.mubr.bf16.mxu0 %v6197
    %6449 = vmatmul.mubr.bf16.gmra.mxu0 %v6196
    %v6450 = vpop.f32.mrf.mxu0
    %v6451 = vadd.f32 0.0, %v6450
    %v6452 = vpop.f32.mrf.mxu0
    %v6453 = vpop.f32.mrf.mxu0
    %v6454 = vadd.f32 0.0, %v6453
    %v6455 = vpop.f32.mrf.mxu0
    %6456 = vmatprep.mubr.bf16.mxu0 %v6203
    %6457 = vmatmul.mubr.bf16.gmra.mxu0 %v6202
    %v6458 = vpop.f32.mrf.mxu0
    %v6459 = vadd.f32 0.0, %v6458
    %v6460 = vpop.f32.mrf.mxu0
    %v6461 = vpop.f32.mrf.mxu0
    %v6462 = vadd.f32 0.0, %v6461
    %v6463 = vpop.f32.mrf.mxu0
    %6464 = vdwg.mxu0
    %6465 = vmatprep.subr.bf16.mxu0 0
    %6466 = vmatpush1.bf16.msra.mxu0 %v5446
    %6467 = vmatprep.subr.bf16.mxu0 0
    %6468 = vmatpush1.bf16.msra.mxu0 %v5445
    %6469 = vmatprep.subr.bf16.mxu0 0
    %6470 = vmatpush1.bf16.msra.mxu0 %v5444
    %6471 = vmatprep.subr.bf16.mxu0 0
    %6472 = vmatpush1.bf16.msra.mxu0 %v5443
    %6473 = vmatprep.subr.bf16.mxu0 0
    %6474 = vmatpush1.bf16.msra.mxu0 %v5442
    %6475 = vmatprep.subr.bf16.mxu0 0
    %6476 = vmatpush1.bf16.msra.mxu0 %v5441
    %6477 = vmatprep.subr.bf16.mxu0 0
    %6478 = vmatpush1.bf16.msra.mxu0 %v5440
    %6479 = vmatprep.subr.bf16.mxu0 0
    %6480 = vmatpush1.bf16.msra.mxu0 %v5439
    %6481 = vmatprep.subr.bf16.mxu0 0
    %6482 = vmatpush2.bf16.msra.mxu0 %v5454
    %6483 = vmatprep.subr.bf16.mxu0 0
    %6484 = vmatpush2.bf16.msra.mxu0 %v5453
    %6485 = vmatprep.subr.bf16.mxu0 0
    %6486 = vmatpush2.bf16.msra.mxu0 %v5452
    %6487 = vmatprep.subr.bf16.mxu0 0
    %6488 = vmatpush2.bf16.msra.mxu0 %v5451
    %6489 = vmatprep.subr.bf16.mxu0 0
    %6490 = vmatpush2.bf16.msra.mxu0 %v5450
    %6491 = vmatprep.subr.bf16.mxu0 0
    %6492 = vmatpush2.bf16.msra.mxu0 %v5449
    %6493 = vmatprep.subr.bf16.mxu0 0
    %6494 = vmatpush2.bf16.msra.mxu0 %v5448
    %6495 = vmatprep.subr.bf16.mxu0 0
    %6496 = vmatpush2.bf16.msra.mxu0 %v5447
    %6497 = vmatprep.mubr.bf16.mxu0 %v6115
    %6498 = vmatmul.mubr.bf16.gmra.mxu0 %v6114
    %v6499 = vpop.f32.mrf.mxu0
    %v6500 = vadd.f32 %v6339, %v6499
    %v6501 = vpop.f32.mrf.mxu0
    %v6502 = vpop.f32.mrf.mxu0
    %v6503 = vadd.f32 %v6342, %v6502
    %v6504 = vpop.f32.mrf.mxu0
    %6505 = vmatprep.mubr.bf16.mxu0 %v6121
    %6506 = vmatmul.mubr.bf16.gmra.mxu0 %v6120
    %v6507 = vpop.f32.mrf.mxu0
    %v6508 = vadd.f32 %v6347, %v6507
    %v6509 = vpop.f32.mrf.mxu0
    %v6510 = vpop.f32.mrf.mxu0
    %v6511 = vadd.f32 %v6350, %v6510
    %v6512 = vpop.f32.mrf.mxu0
    %6513 = vmatprep.mubr.bf16.mxu0 %v6127
    %6514 = vmatmul.mubr.bf16.gmra.mxu0 %v6126
    %v6515 = vpop.f32.mrf.mxu0
    %v6516 = vadd.f32 %v6355, %v6515
    %v6517 = vpop.f32.mrf.mxu0
    %v6518 = vpop.f32.mrf.mxu0
    %v6519 = vadd.f32 %v6358, %v6518
    %v6520 = vpop.f32.mrf.mxu0
    %6521 = vmatprep.mubr.bf16.mxu0 %v6133
    %6522 = vmatmul.mubr.bf16.gmra.mxu0 %v6132
    %v6523 = vpop.f32.mrf.mxu0
    %v6524 = vadd.f32 %v6363, %v6523
    %v6525 = vpop.f32.mrf.mxu0
    %v6526 = vpop.f32.mrf.mxu0
    %v6527 = vadd.f32 %v6366, %v6526
    %v6528 = vpop.f32.mrf.mxu0
    %6529 = vmatprep.mubr.bf16.mxu0 %v6139
    %6530 = vmatmul.mubr.bf16.gmra.mxu0 %v6138
    %v6531 = vpop.f32.mrf.mxu0
    %v6532 = vadd.f32 %v6371, %v6531
    %v6533 = vpop.f32.mrf.mxu0
    %v6534 = vpop.f32.mrf.mxu0
    %v6535 = vadd.f32 %v6374, %v6534
    %v6536 = vpop.f32.mrf.mxu0
    %6537 = vmatprep.mubr.bf16.mxu0 %v6145
    %6538 = vmatmul.mubr.bf16.gmra.mxu0 %v6144
    %v6539 = vpop.f32.mrf.mxu0
    %v6540 = vadd.f32 %v6379, %v6539
    %v6541 = vpop.f32.mrf.mxu0
    %v6542 = vpop.f32.mrf.mxu0
    %v6543 = vadd.f32 %v6382, %v6542
    %v6544 = vpop.f32.mrf.mxu0
    %6545 = vmatprep.mubr.bf16.mxu0 %v6151
    %6546 = vmatmul.mubr.bf16.gmra.mxu0 %v6150
    %v6547 = vpop.f32.mrf.mxu0
    %v6548 = vadd.f32 %v6387, %v6547
    %v6549 = vpop.f32.mrf.mxu0
    %v6550 = vpop.f32.mrf.mxu0
    %v6551 = vadd.f32 %v6390, %v6550
    %v6552 = vpop.f32.mrf.mxu0
    %6553 = vmatprep.mubr.bf16.mxu0 %v6157
    %6554 = vmatmul.mubr.bf16.gmra.mxu0 %v6156
    %v6555 = vpop.f32.mrf.mxu0
    %v6556 = vadd.f32 %v6395, %v6555
    %v6557 = vpop.f32.mrf.mxu0
    %v6558 = vpop.f32.mrf.mxu0
    %v6559 = vadd.f32 %v6398, %v6558
    %v6560 = vpop.f32.mrf.mxu0
    %6561 = vmatprep.mubr.bf16.mxu0 %v6163
    %6562 = vmatmul.mubr.bf16.gmra.mxu0 %v6162
    %v6563 = vpop.f32.mrf.mxu0
    %v6564 = vadd.f32 %v6403, %v6563
    %v6565 = vpop.f32.mrf.mxu0
    %v6566 = vpop.f32.mrf.mxu0
    %v6567 = vadd.f32 %v6406, %v6566
    %v6568 = vpop.f32.mrf.mxu0
    %6569 = vmatprep.mubr.bf16.mxu0 %v6169
    %6570 = vmatmul.mubr.bf16.gmra.mxu0 %v6168
    %v6571 = vpop.f32.mrf.mxu0
    %v6572 = vadd.f32 %v6411, %v6571
    %v6573 = vpop.f32.mrf.mxu0
    %v6574 = vpop.f32.mrf.mxu0
    %v6575 = vadd.f32 %v6414, %v6574
    %v6576 = vpop.f32.mrf.mxu0
    %6577 = vmatprep.mubr.bf16.mxu0 %v6175
    %6578 = vmatmul.mubr.bf16.gmra.mxu0 %v6174
    %v6579 = vpop.f32.mrf.mxu0
    %v6580 = vadd.f32 %v6419, %v6579
    %v6581 = vpop.f32.mrf.mxu0
    %v6582 = vpop.f32.mrf.mxu0
    %v6583 = vadd.f32 %v6422, %v6582
    %v6584 = vpop.f32.mrf.mxu0
    %6585 = vmatprep.mubr.bf16.mxu0 %v6181
    %6586 = vmatmul.mubr.bf16.gmra.mxu0 %v6180
    %v6587 = vpop.f32.mrf.mxu0
    %v6588 = vadd.f32 %v6427, %v6587
    %v6589 = vpop.f32.mrf.mxu0
    %v6590 = vpop.f32.mrf.mxu0
    %v6591 = vadd.f32 %v6430, %v6590
    %v6592 = vpop.f32.mrf.mxu0
    %6593 = vmatprep.mubr.bf16.mxu0 %v6187
    %6594 = vmatmul.mubr.bf16.gmra.mxu0 %v6186
    %v6595 = vpop.f32.mrf.mxu0
    %v6596 = vadd.f32 %v6435, %v6595
    %v6597 = vpop.f32.mrf.mxu0
    %v6598 = vpop.f32.mrf.mxu0
    %v6599 = vadd.f32 %v6438, %v6598
    %v6600 = vpop.f32.mrf.mxu0
    %6601 = vmatprep.mubr.bf16.mxu0 %v6193
    %6602 = vmatmul.mubr.bf16.gmra.mxu0 %v6192
    %v6603 = vpop.f32.mrf.mxu0
    %v6604 = vadd.f32 %v6443, %v6603
    %v6605 = vpop.f32.mrf.mxu0
    %v6606 = vpop.f32.mrf.mxu0
    %v6607 = vadd.f32 %v6446, %v6606
    %v6608 = vpop.f32.mrf.mxu0
    %6609 = vmatprep.mubr.bf16.mxu0 %v6199
    %6610 = vmatmul.mubr.bf16.gmra.mxu0 %v6198
    %v6611 = vpop.f32.mrf.mxu0
    %v6612 = vadd.f32 %v6451, %v6611
    %v6613 = vpop.f32.mrf.mxu0
    %v6614 = vpop.f32.mrf.mxu0
    %v6615 = vadd.f32 %v6454, %v6614
    %v6616 = vpop.f32.mrf.mxu0
    %6617 = vmatprep.mubr.bf16.mxu0 %v6205
    %6618 = vmatmul.mubr.bf16.gmra.mxu0 %v6204
    %v6619 = vpop.f32.mrf.mxu0
    %v6620 = vadd.f32 %v6459, %v6619
    %v6621 = vpop.f32.mrf.mxu0
    %v6622 = vpop.f32.mrf.mxu0
    %v6623 = vadd.f32 %v6462, %v6622
    %v6624 = vpop.f32.mrf.mxu0
    %6625 = vdwg.mxu0
    %6626 = vmatprep.subr.bf16.mxu0 0
    %6627 = vmatpush1.bf16.msra.mxu0 %v5694
    %6628 = vmatprep.subr.bf16.mxu0 0
    %6629 = vmatpush1.bf16.msra.mxu0 %v5690
    %6630 = vmatprep.subr.bf16.mxu0 0
    %6631 = vmatpush1.bf16.msra.mxu0 %v5686
    %6632 = vmatprep.subr.bf16.mxu0 0
    %6633 = vmatpush1.bf16.msra.mxu0 %v5682
    %6634 = vmatprep.subr.bf16.mxu0 0
    %6635 = vmatpush1.bf16.msra.mxu0 %v5678
    %6636 = vmatprep.subr.bf16.mxu0 0
    %6637 = vmatpush1.bf16.msra.mxu0 %v5674
    %6638 = vmatprep.subr.bf16.mxu0 0
    %6639 = vmatpush1.bf16.msra.mxu0 %v5670
    %6640 = vmatprep.subr.bf16.mxu0 0
    %6641 = vmatpush1.bf16.msra.mxu0 %v5666
    %6642 = vmatprep.subr.bf16.mxu0 0
    %6643 = vmatpush2.bf16.msra.mxu0 %v5726
    %6644 = vmatprep.subr.bf16.mxu0 0
    %6645 = vmatpush2.bf16.msra.mxu0 %v5722
    %6646 = vmatprep.subr.bf16.mxu0 0
    %6647 = vmatpush2.bf16.msra.mxu0 %v5718
    %6648 = vmatprep.subr.bf16.mxu0 0
    %6649 = vmatpush2.bf16.msra.mxu0 %v5714
    %6650 = vmatprep.subr.bf16.mxu0 0
    %6651 = vmatpush2.bf16.msra.mxu0 %v5710
    %6652 = vmatprep.subr.bf16.mxu0 0
    %6653 = vmatpush2.bf16.msra.mxu0 %v5706
    %6654 = vmatprep.subr.bf16.mxu0 0
    %6655 = vmatpush2.bf16.msra.mxu0 %v5702
    %6656 = vmatprep.subr.bf16.mxu0 0
    %6657 = vmatpush2.bf16.msra.mxu0 %v5698
    %6658 = vmatprep.mubr.bf16.mxu0 %v6117
    %6659 = vmatmul.mubr.bf16.gmra.mxu0 %v6116
    %v6660 = vpop.f32.mrf.mxu0
    %v6661 = vadd.f32 %v6500, %v6660
    %v6662 = vpop.f32.mrf.mxu0
    %v6663 = vpop.f32.mrf.mxu0
    %v6664 = vadd.f32 %v6503, %v6663
    %v6665 = vpop.f32.mrf.mxu0
    %6666 = vmatprep.mubr.bf16.mxu0 %v6123
    %6667 = vmatmul.mubr.bf16.gmra.mxu0 %v6122
    %v6668 = vpop.f32.mrf.mxu0
    %v6669 = vadd.f32 %v6508, %v6668
    %v6670 = vpop.f32.mrf.mxu0
    %v6671 = vpop.f32.mrf.mxu0
    %v6672 = vadd.f32 %v6511, %v6671
    %v6673 = vpop.f32.mrf.mxu0
    %6674 = vmatprep.mubr.bf16.mxu0 %v6129
    %6675 = vmatmul.mubr.bf16.gmra.mxu0 %v6128
    %v6676 = vpop.f32.mrf.mxu0
    %v6677 = vadd.f32 %v6516, %v6676
    %v6678 = vpop.f32.mrf.mxu0
    %v6679 = vpop.f32.mrf.mxu0
    %v6680 = vadd.f32 %v6519, %v6679
    %v6681 = vpop.f32.mrf.mxu0
    %6682 = vmatprep.mubr.bf16.mxu0 %v6135
    %6683 = vmatmul.mubr.bf16.gmra.mxu0 %v6134
    %v6684 = vpop.f32.mrf.mxu0
    %v6685 = vadd.f32 %v6524, %v6684
    %v6686 = vpop.f32.mrf.mxu0
    %v6687 = vpop.f32.mrf.mxu0
    %v6688 = vadd.f32 %v6527, %v6687
    %v6689 = vpop.f32.mrf.mxu0
    %6690 = vmatprep.mubr.bf16.mxu0 %v6141
    %6691 = vmatmul.mubr.bf16.gmra.mxu0 %v6140
    %v6692 = vpop.f32.mrf.mxu0
    %v6693 = vadd.f32 %v6532, %v6692
    %v6694 = vpop.f32.mrf.mxu0
    %v6695 = vpop.f32.mrf.mxu0
    %v6696 = vadd.f32 %v6535, %v6695
    %v6697 = vpop.f32.mrf.mxu0
    %6698 = vmatprep.mubr.bf16.mxu0 %v6147
    %6699 = vmatmul.mubr.bf16.gmra.mxu0 %v6146
    %v6700 = vpop.f32.mrf.mxu0
    %v6701 = vadd.f32 %v6540, %v6700
    %v6702 = vpop.f32.mrf.mxu0
    %v6703 = vpop.f32.mrf.mxu0
    %v6704 = vadd.f32 %v6543, %v6703
    %v6705 = vpop.f32.mrf.mxu0
    %6706 = vmatprep.mubr.bf16.mxu0 %v6153
    %6707 = vmatmul.mubr.bf16.gmra.mxu0 %v6152
    %v6708 = vpop.f32.mrf.mxu0
    %v6709 = vadd.f32 %v6548, %v6708
    %v6710 = vpop.f32.mrf.mxu0
    %v6711 = vpop.f32.mrf.mxu0
    %v6712 = vadd.f32 %v6551, %v6711
    %v6713 = vpop.f32.mrf.mxu0
    %6714 = vmatprep.mubr.bf16.mxu0 %v6159
    %6715 = vmatmul.mubr.bf16.gmra.mxu0 %v6158
    %v6716 = vpop.f32.mrf.mxu0
    %v6717 = vadd.f32 %v6556, %v6716
    %v6718 = vpop.f32.mrf.mxu0
    %v6719 = vpop.f32.mrf.mxu0
    %v6720 = vadd.f32 %v6559, %v6719
    %v6721 = vpop.f32.mrf.mxu0
    %6722 = vmatprep.mubr.bf16.mxu0 %v6165
    %6723 = vmatmul.mubr.bf16.gmra.mxu0 %v6164
    %v6724 = vpop.f32.mrf.mxu0
    %v6725 = vadd.f32 %v6564, %v6724
    %v6726 = vpop.f32.mrf.mxu0
    %v6727 = vpop.f32.mrf.mxu0
    %v6728 = vadd.f32 %v6567, %v6727
    %v6729 = vpop.f32.mrf.mxu0
    %6730 = vmatprep.mubr.bf16.mxu0 %v6171
    %6731 = vmatmul.mubr.bf16.gmra.mxu0 %v6170
    %v6732 = vpop.f32.mrf.mxu0
    %v6733 = vadd.f32 %v6572, %v6732
    %v6734 = vpop.f32.mrf.mxu0
    %v6735 = vpop.f32.mrf.mxu0
    %v6736 = vadd.f32 %v6575, %v6735
    %v6737 = vpop.f32.mrf.mxu0
    %6738 = vmatprep.mubr.bf16.mxu0 %v6177
    %6739 = vmatmul.mubr.bf16.gmra.mxu0 %v6176
    %v6740 = vpop.f32.mrf.mxu0
    %v6741 = vadd.f32 %v6580, %v6740
    %v6742 = vpop.f32.mrf.mxu0
    %v6743 = vpop.f32.mrf.mxu0
    %v6744 = vadd.f32 %v6583, %v6743
    %v6745 = vpop.f32.mrf.mxu0
    %6746 = vmatprep.mubr.bf16.mxu0 %v6183
    %6747 = vmatmul.mubr.bf16.gmra.mxu0 %v6182
    %v6748 = vpop.f32.mrf.mxu0
    %v6749 = vadd.f32 %v6588, %v6748
    %v6750 = vpop.f32.mrf.mxu0
    %v6751 = vpop.f32.mrf.mxu0
    %v6752 = vadd.f32 %v6591, %v6751
    %v6753 = vpop.f32.mrf.mxu0
    %6754 = vmatprep.mubr.bf16.mxu0 %v6189
    %6755 = vmatmul.mubr.bf16.gmra.mxu0 %v6188
    %v6756 = vpop.f32.mrf.mxu0
    %v6757 = vadd.f32 %v6596, %v6756
    %v6758 = vpop.f32.mrf.mxu0
    %v6759 = vpop.f32.mrf.mxu0
    %v6760 = vadd.f32 %v6599, %v6759
    %v6761 = vpop.f32.mrf.mxu0
    %6762 = vmatprep.mubr.bf16.mxu0 %v6195
    %6763 = vmatmul.mubr.bf16.gmra.mxu0 %v6194
    %v6764 = vpop.f32.mrf.mxu0
    %v6765 = vadd.f32 %v6604, %v6764
    %v6766 = vpop.f32.mrf.mxu0
    %v6767 = vpop.f32.mrf.mxu0
    %v6768 = vadd.f32 %v6607, %v6767
    %v6769 = vpop.f32.mrf.mxu0
    %6770 = vmatprep.mubr.bf16.mxu0 %v6201
    %6771 = vmatmul.mubr.bf16.gmra.mxu0 %v6200
    %v6772 = vpop.f32.mrf.mxu0
    %v6773 = vadd.f32 %v6612, %v6772
    %v6774 = vpop.f32.mrf.mxu0
    %v6775 = vpop.f32.mrf.mxu0
    %v6776 = vadd.f32 %v6615, %v6775
    %v6777 = vpop.f32.mrf.mxu0
    %6778 = vmatprep.mubr.bf16.mxu0 %v6207
    %6779 = vmatmul.mubr.bf16.gmra.mxu0 %v6206
    %v6780 = vpop.f32.mrf.mxu0
    %v6781 = vadd.f32 %v6620, %v6780
    %v6782 = vpop.f32.mrf.mxu0
    %v6783 = vpop.f32.mrf.mxu0
    %v6784 = vadd.f32 %v6623, %v6783
    %v6785 = vpop.f32.mrf.mxu0
    %6786 = vdwg.mxu0
    %v6787 = vadd.f32 %v4854, %v6661
    %v6788 = vadd.f32 %v4857, %v6664
    %v6789 = vadd.f32 %v4862, %v6669
    %v6790 = vadd.f32 %v4865, %v6672
    %v6791 = vadd.f32 %v4870, %v6677
    %v6792 = vadd.f32 %v4873, %v6680
    %v6793 = vadd.f32 %v4878, %v6685
    %v6794 = vadd.f32 %v4881, %v6688
    %v6795 = vadd.f32 %v4886, %v6693
    %v6796 = vadd.f32 %v4889, %v6696
    %v6797 = vadd.f32 %v4894, %v6701
    %v6798 = vadd.f32 %v4897, %v6704
    %v6799 = vadd.f32 %v4902, %v6709
    %v6800 = vadd.f32 %v4905, %v6712
    %v6801 = vadd.f32 %v4910, %v6717
    %v6802 = vadd.f32 %v4913, %v6720
    %v6803 = vadd.f32 %v4918, %v6725
    %v6804 = vadd.f32 %v4921, %v6728
    %v6805 = vadd.f32 %v4926, %v6733
    %v6806 = vadd.f32 %v4929, %v6736
    %v6807 = vadd.f32 %v4934, %v6741
    %v6808 = vadd.f32 %v4937, %v6744
    %v6809 = vadd.f32 %v4942, %v6749
    %v6810 = vadd.f32 %v4945, %v6752
    %v6811 = vadd.f32 %v4950, %v6757
    %v6812 = vadd.f32 %v4953, %v6760
    %v6813 = vadd.f32 %v4958, %v6765
    %v6814 = vadd.f32 %v4961, %v6768
    %v6815 = vadd.f32 %v4966, %v6773
    %v6816 = vadd.f32 %v4969, %v6776
    %v6817 = vadd.f32 %v4974, %v6781
    %v6818 = vadd.f32 %v4977, %v6784
    %v6819 = vmax.f32 %v6787, 0.0
    %v6820 = vmax.f32 %v6788, 0.0
    %v6821 = vmax.f32 %v6789, 0.0
    %v6822 = vmax.f32 %v6790, 0.0
    %v6823 = vmax.f32 %v6791, 0.0
    %v6824 = vmax.f32 %v6792, 0.0
    %v6825 = vmax.f32 %v6793, 0.0
    %v6826 = vmax.f32 %v6794, 0.0
    %v6827 = vmax.f32 %v6795, 0.0
    %v6828 = vmax.f32 %v6796, 0.0
    %v6829 = vmax.f32 %v6797, 0.0
    %v6830 = vmax.f32 %v6798, 0.0
    %v6831 = vmax.f32 %v6799, 0.0
    %v6832 = vmax.f32 %v6800, 0.0
    %v6833 = vmax.f32 %v6801, 0.0
    %v6834 = vmax.f32 %v6802, 0.0
    %v6835 = vmax.f32 %v6803, 0.0
    %v6836 = vmax.f32 %v6804, 0.0
    %v6837 = vmax.f32 %v6805, 0.0
    %v6838 = vmax.f32 %v6806, 0.0
    %v6839 = vmax.f32 %v6807, 0.0
    %v6840 = vmax.f32 %v6808, 0.0
    %v6841 = vmax.f32 %v6809, 0.0
    %v6842 = vmax.f32 %v6810, 0.0
    %v6843 = vmax.f32 %v6811, 0.0
    %v6844 = vmax.f32 %v6812, 0.0
    %v6845 = vmax.f32 %v6813, 0.0
    %v6846 = vmax.f32 %v6814, 0.0
    %v6847 = vmax.f32 %v6815, 0.0
    %v6848 = vmax.f32 %v6816, 0.0
    %v6849 = vmax.f32 %v6817, 0.0
    %v6850 = vmax.f32 %v6818, 0.0
    %v6851 = vld [vmem:[%s21] sm:$0xff]
    %v6852 = vld [vmem:[%s21 + $0x8] sm:$0xff]
    %v6853 = vld [vmem:[%s21 + $0x10] sm:$0xff]
    %v6854 = vld [vmem:[%s21 + $0x18] sm:$0xff]
    %v6855 = vld [vmem:[%s21 + $0x20] sm:$0xff]
    %v6856 = vld [vmem:[%s21 + $0x28] sm:$0xff]
    %v6857 = vld [vmem:[%s21 + $0x30] sm:$0xff]
    %v6858 = vld [vmem:[%s21 + $0x38] sm:$0xff]
    %v6859 = vld [vmem:[%s21 + $0x40] sm:$0xff]
    %v6860 = vld [vmem:[%s21 + $0x48] sm:$0xff]
    %v6861 = vld [vmem:[%s21 + $0x50] sm:$0xff]
    %v6862 = vld [vmem:[%s21 + $0x58] sm:$0xff]
    %v6863 = vld [vmem:[%s21 + $0x60] sm:$0xff]
    %v6864 = vld [vmem:[%s21 + $0x68] sm:$0xff]
    %v6865 = vld [vmem:[%s21 + $0x70] sm:$0xff]
    %v6866 = vld [vmem:[%s21 + $0x78] sm:$0xff]
    %v6867 = vpack.c.bf16 %v6820, %v6819
    %v6868 = vpack.c.bf16 %v6822, %v6821
    %v6869 = vpack.c.bf16 %v6824, %v6823
    %v6870 = vpack.c.bf16 %v6826, %v6825
    %v6871 = vpack.c.bf16 %v6828, %v6827
    %v6872 = vpack.c.bf16 %v6830, %v6829
    %v6873 = vpack.c.bf16 %v6832, %v6831
    %v6874 = vpack.c.bf16 %v6834, %v6833
    %v6875 = vpack.c.bf16 %v6836, %v6835
    %v6876 = vpack.c.bf16 %v6838, %v6837
    %v6877 = vpack.c.bf16 %v6840, %v6839
    %v6878 = vpack.c.bf16 %v6842, %v6841
    %v6879 = vpack.c.bf16 %v6844, %v6843
    %v6880 = vpack.c.bf16 %v6846, %v6845
    %v6881 = vpack.c.bf16 %v6848, %v6847
    %v6882 = vpack.c.bf16 %v6850, %v6849
    %v6883 = vld [vmem:[%s22] sm:$0xff]
    %v6884 = vld [vmem:[%s22 + $0x8] sm:$0xff]
    %v6885 = vld [vmem:[%s22 + $0x10] sm:$0xff]
    %v6886 = vld [vmem:[%s22 + $0x18] sm:$0xff]
    %v6887 = vld [vmem:[%s22 + $0x20] sm:$0xff]
    %v6888 = vld [vmem:[%s22 + $0x28] sm:$0xff]
    %v6889 = vld [vmem:[%s22 + $0x30] sm:$0xff]
    %v6890 = vld [vmem:[%s22 + $0x38] sm:$0xff]
    %v6891 = vld [vmem:[%s22 + $0x40] sm:$0xff]
    %v6892 = vld [vmem:[%s22 + $0x48] sm:$0xff]
    %v6893 = vld [vmem:[%s22 + $0x50] sm:$0xff]
    %v6894 = vld [vmem:[%s22 + $0x58] sm:$0xff]
    %v6895 = vld [vmem:[%s22 + $0x60] sm:$0xff]
    %v6896 = vld [vmem:[%s22 + $0x68] sm:$0xff]
    %v6897 = vld [vmem:[%s22 + $0x70] sm:$0xff]
    %v6898 = vld [vmem:[%s22 + $0x78] sm:$0xff]
    %6900 = vset.pattern.permute.xlu0 0
    %6901 = vperm.xlu0 %6900, %v6883
    %v6902 = vpop.permute.xlu0 %6901
    %6905 = vset.pattern.permute.xlu0 0
    %6906 = vperm.xlu0 %6905, %v6884
    %v6907 = vpop.permute.xlu0 %6906
    %6910 = vset.pattern.permute.xlu0 0
    %6911 = vperm.xlu0 %6910, %v6885
    %v6912 = vpop.permute.xlu0 %6911
    %6915 = vset.pattern.permute.xlu0 0
    %6916 = vperm.xlu0 %6915, %v6886
    %v6917 = vpop.permute.xlu0 %6916
    %6920 = vset.pattern.permute.xlu0 0
    %6921 = vperm.xlu0 %6920, %v6887
    %v6922 = vpop.permute.xlu0 %6921
    %6925 = vset.pattern.permute.xlu0 0
    %6926 = vperm.xlu0 %6925, %v6888
    %v6927 = vpop.permute.xlu0 %6926
    %6930 = vset.pattern.permute.xlu0 0
    %6931 = vperm.xlu0 %6930, %v6889
    %v6932 = vpop.permute.xlu0 %6931
    %6935 = vset.pattern.permute.xlu0 0
    %6936 = vperm.xlu0 %6935, %v6890
    %v6937 = vpop.permute.xlu0 %6936
    %6940 = vset.pattern.permute.xlu0 0
    %6941 = vperm.xlu0 %6940, %v6891
    %v6942 = vpop.permute.xlu0 %6941
    %6945 = vset.pattern.permute.xlu0 0
    %6946 = vperm.xlu0 %6945, %v6892
    %v6947 = vpop.permute.xlu0 %6946
    %6950 = vset.pattern.permute.xlu0 0
    %6951 = vperm.xlu0 %6950, %v6893
    %v6952 = vpop.permute.xlu0 %6951
    %6955 = vset.pattern.permute.xlu0 0
    %6956 = vperm.xlu0 %6955, %v6894
    %v6957 = vpop.permute.xlu0 %6956
    %6960 = vset.pattern.permute.xlu0 0
    %6961 = vperm.xlu0 %6960, %v6895
    %v6962 = vpop.permute.xlu0 %6961
    %6965 = vset.pattern.permute.xlu0 0
    %6966 = vperm.xlu0 %6965, %v6896
    %v6967 = vpop.permute.xlu0 %6966
    %6970 = vset.pattern.permute.xlu0 0
    %6971 = vperm.xlu0 %6970, %v6897
    %v6972 = vpop.permute.xlu0 %6971
    %6975 = vset.pattern.permute.xlu0 0
    %6976 = vperm.xlu0 %6975, %v6898
    %v6977 = vpop.permute.xlu0 %6976
    %v6995 = vunpack.c.l.b16 %v6851
    %v6996 = vunpack.c.h.b16 %v6851
    %v6997 = vunpack.c.l.b16 %v6852
    %v6998 = vunpack.c.h.b16 %v6852
    %v6999 = vunpack.c.l.b16 %v6853
    %v7000 = vunpack.c.h.b16 %v6853
    %v7001 = vunpack.c.l.b16 %v6854
    %v7002 = vunpack.c.h.b16 %v6854
    %v7003 = vunpack.c.l.b16 %v6855
    %v7004 = vunpack.c.h.b16 %v6855
    %v7005 = vunpack.c.l.b16 %v6856
    %v7006 = vunpack.c.h.b16 %v6856
    %v7007 = vunpack.c.l.b16 %v6857
    %v7008 = vunpack.c.h.b16 %v6857
    %v7009 = vunpack.c.l.b16 %v6858
    %v7010 = vunpack.c.h.b16 %v6858
    %v7011 = vunpack.c.l.b16 %v6859
    %v7012 = vunpack.c.h.b16 %v6859
    %v7013 = vunpack.c.l.b16 %v6860
    %v7014 = vunpack.c.h.b16 %v6860
    %v7015 = vunpack.c.l.b16 %v6861
    %v7016 = vunpack.c.h.b16 %v6861
    %v7017 = vunpack.c.l.b16 %v6862
    %v7018 = vunpack.c.h.b16 %v6862
    %v7019 = vunpack.c.l.b16 %v6863
    %v7020 = vunpack.c.h.b16 %v6863
    %v7021 = vunpack.c.l.b16 %v6864
    %v7022 = vunpack.c.h.b16 %v6864
    %v7023 = vunpack.c.l.b16 %v6865
    %v7024 = vunpack.c.h.b16 %v6865
    %v7025 = vunpack.c.l.b16 %v6866
    %v7026 = vunpack.c.h.b16 %v6866
    %v7027 = vpack.c.b16 %v6997, %v6995
    %v7028 = vpack.c.b16 %v6998, %v6996
    %v7029 = vpack.c.b16 %v7001, %v6999
    %v7030 = vpack.c.b16 %v7002, %v7000
    %v7031 = vpack.c.b16 %v7005, %v7003
    %v7032 = vpack.c.b16 %v7006, %v7004
    %v7033 = vpack.c.b16 %v7009, %v7007
    %v7034 = vpack.c.b16 %v7010, %v7008
    %v7035 = vpack.c.b16 %v7013, %v7011
    %v7036 = vpack.c.b16 %v7014, %v7012
    %v7037 = vpack.c.b16 %v7017, %v7015
    %v7038 = vpack.c.b16 %v7018, %v7016
    %v7039 = vpack.c.b16 %v7021, %v7019
    %v7040 = vpack.c.b16 %v7022, %v7020
    %v7041 = vpack.c.b16 %v7025, %v7023
    %v7042 = vpack.c.b16 %v7026, %v7024
    %7059 = vmatprep.subr.bf16.mxu0 0
    %7060 = vmatpush1.bf16.msra.mxu0 %v6874
    %7061 = vmatprep.subr.bf16.mxu0 0
    %7062 = vmatpush1.bf16.msra.mxu0 %v6873
    %7063 = vmatprep.subr.bf16.mxu0 0
    %7064 = vmatpush1.bf16.msra.mxu0 %v6872
    %7065 = vmatprep.subr.bf16.mxu0 0
    %7066 = vmatpush1.bf16.msra.mxu0 %v6871
    %7067 = vmatprep.subr.bf16.mxu0 0
    %7068 = vmatpush1.bf16.msra.mxu0 %v6870
    %7069 = vmatprep.subr.bf16.mxu0 0
    %7070 = vmatpush1.bf16.msra.mxu0 %v6869
    %7071 = vmatprep.subr.bf16.mxu0 0
    %7072 = vmatpush1.bf16.msra.mxu0 %v6868
    %7073 = vmatprep.subr.bf16.mxu0 0
    %7074 = vmatpush1.bf16.msra.mxu0 %v6867
    %7075 = vmatprep.subr.bf16.mxu0 0
    %7076 = vmatpush2.bf16.msra.mxu0 %v6882
    %7077 = vmatprep.subr.bf16.mxu0 0
    %7078 = vmatpush2.bf16.msra.mxu0 %v6881
    %7079 = vmatprep.subr.bf16.mxu0 0
    %7080 = vmatpush2.bf16.msra.mxu0 %v6880
    %7081 = vmatprep.subr.bf16.mxu0 0
    %7082 = vmatpush2.bf16.msra.mxu0 %v6879
    %7083 = vmatprep.subr.bf16.mxu0 0
    %7084 = vmatpush2.bf16.msra.mxu0 %v6878
    %7085 = vmatprep.subr.bf16.mxu0 0
    %7086 = vmatpush2.bf16.msra.mxu0 %v6877
    %7087 = vmatprep.subr.bf16.mxu0 0
    %7088 = vmatpush2.bf16.msra.mxu0 %v6876
    %7089 = vmatprep.subr.bf16.mxu0 0
    %7090 = vmatpush2.bf16.msra.mxu0 %v6875
    %7091 = vmatprep.mubr.bf16.mxu0 %v7028
    %7092 = vmatmul.mubr.bf16.gmra.mxu0 %v7027
    %v7093 = vpop.f32.mrf.mxu0
    %v7094 = vadd.f32 %v6902, %v7093
    %v7095 = vpop.f32.mrf.mxu0
    %v7096 = vpop.f32.mrf.mxu0
    %v7097 = vadd.f32 %v6907, %v7096
    %v7098 = vpop.f32.mrf.mxu0
    %7099 = vmatprep.mubr.bf16.mxu0 %v7030
    %7100 = vmatmul.mubr.bf16.gmra.mxu0 %v7029
    %v7101 = vpop.f32.mrf.mxu0
    %v7102 = vadd.f32 %v6912, %v7101
    %v7103 = vpop.f32.mrf.mxu0
    %v7104 = vpop.f32.mrf.mxu0
    %v7105 = vadd.f32 %v6917, %v7104
    %v7106 = vpop.f32.mrf.mxu0
    %7107 = vmatprep.mubr.bf16.mxu0 %v7032
    %7108 = vmatmul.mubr.bf16.gmra.mxu0 %v7031
    %v7109 = vpop.f32.mrf.mxu0
    %v7110 = vadd.f32 %v6922, %v7109
    %v7111 = vpop.f32.mrf.mxu0
    %v7112 = vpop.f32.mrf.mxu0
    %v7113 = vadd.f32 %v6927, %v7112
    %v7114 = vpop.f32.mrf.mxu0
    %7115 = vmatprep.mubr.bf16.mxu0 %v7034
    %7116 = vmatmul.mubr.bf16.gmra.mxu0 %v7033
    %v7117 = vpop.f32.mrf.mxu0
    %v7118 = vadd.f32 %v6932, %v7117
    %v7119 = vpop.f32.mrf.mxu0
    %v7120 = vpop.f32.mrf.mxu0
    %v7121 = vadd.f32 %v6937, %v7120
    %v7122 = vpop.f32.mrf.mxu0
    %7123 = vmatprep.mubr.bf16.mxu0 %v7036
    %7124 = vmatmul.mubr.bf16.gmra.mxu0 %v7035
    %v7125 = vpop.f32.mrf.mxu0
    %v7126 = vadd.f32 %v6942, %v7125
    %v7127 = vpop.f32.mrf.mxu0
    %v7128 = vpop.f32.mrf.mxu0
    %v7129 = vadd.f32 %v6947, %v7128
    %v7130 = vpop.f32.mrf.mxu0
    %7131 = vmatprep.mubr.bf16.mxu0 %v7038
    %7132 = vmatmul.mubr.bf16.gmra.mxu0 %v7037
    %v7133 = vpop.f32.mrf.mxu0
    %v7134 = vadd.f32 %v6952, %v7133
    %v7135 = vpop.f32.mrf.mxu0
    %v7136 = vpop.f32.mrf.mxu0
    %v7137 = vadd.f32 %v6957, %v7136
    %v7138 = vpop.f32.mrf.mxu0
    %7139 = vmatprep.mubr.bf16.mxu0 %v7040
    %7140 = vmatmul.mubr.bf16.gmra.mxu0 %v7039
    %v7141 = vpop.f32.mrf.mxu0
    %v7142 = vadd.f32 %v6962, %v7141
    %v7143 = vpop.f32.mrf.mxu0
    %v7144 = vpop.f32.mrf.mxu0
    %v7145 = vadd.f32 %v6967, %v7144
    %v7146 = vpop.f32.mrf.mxu0
    %7147 = vmatprep.mubr.bf16.mxu0 %v7042
    %7148 = vmatmul.mubr.bf16.gmra.mxu0 %v7041
    %v7149 = vpop.f32.mrf.mxu0
    %v7150 = vadd.f32 %v6972, %v7149
    %v7151 = vpop.f32.mrf.mxu0
    %v7152 = vpop.f32.mrf.mxu0
    %v7153 = vadd.f32 %v6977, %v7152
    %v7154 = vpop.f32.mrf.mxu0
    %7155 = vdwg.mxu0
    %v7156 = vmax.f32 %v7094, 0.0
    %v7157 = vmax.f32 %v7097, 0.0
    %v7158 = vmax.f32 %v7102, 0.0
    %v7159 = vmax.f32 %v7105, 0.0
    %v7160 = vmax.f32 %v7110, 0.0
    %v7161 = vmax.f32 %v7113, 0.0
    %v7162 = vmax.f32 %v7118, 0.0
    %v7163 = vmax.f32 %v7121, 0.0
    %v7164 = vmax.f32 %v7126, 0.0
    %v7165 = vmax.f32 %v7129, 0.0
    %v7166 = vmax.f32 %v7134, 0.0
    %v7167 = vmax.f32 %v7137, 0.0
    %v7168 = vmax.f32 %v7142, 0.0
    %v7169 = vmax.f32 %v7145, 0.0
    %v7170 = vmax.f32 %v7150, 0.0
    %v7171 = vmax.f32 %v7153, 0.0
    %v7172 = vld [vmem:[%s23] sm:$0xff]
    %v7173 = vld [vmem:[%s23 + $0x8] sm:$0xff]
    %v7174 = vld [vmem:[%s23 + $0x10] sm:$0xff]
    %v7175 = vld [vmem:[%s23 + $0x18] sm:$0xff]
    %v7176 = vld [vmem:[%s23 + $0x20] sm:$0xff]
    %v7177 = vld [vmem:[%s23 + $0x28] sm:$0xff]
    %v7178 = vld [vmem:[%s23 + $0x30] sm:$0xff]
    %v7179 = vld [vmem:[%s23 + $0x38] sm:$0xff]
    %7180 = vmatprep.subr.mxu0 0.0
    %7181 = vmatpush1.msra.mxu0 %v7171
    %7182 = vmatprep.subr.mxu0 0.0
    %7183 = vmatpush1.msra.mxu0 %v7170
    %7184 = vmatprep.subr.mxu0 0.0
    %7185 = vmatpush1.msra.mxu0 %v7169
    %7186 = vmatprep.subr.mxu0 0.0
    %7187 = vmatpush1.msra.mxu0 %v7168
    %7188 = vmatprep.subr.mxu0 0.0
    %7189 = vmatpush1.msra.mxu0 %v7167
    %7190 = vmatprep.subr.mxu0 0.0
    %7191 = vmatpush1.msra.mxu0 %v7166
    %7192 = vmatprep.subr.mxu0 0.0
    %7193 = vmatpush1.msra.mxu0 %v7165
    %7194 = vmatprep.subr.mxu0 0.0
    %7195 = vmatpush1.msra.mxu0 %v7164
    %7196 = vmatprep.subr.mxu0 0.0
    %7197 = vmatpush1.msra.mxu0 %v7163
    %7198 = vmatprep.subr.mxu0 0.0
    %7199 = vmatpush1.msra.mxu0 %v7162
    %7200 = vmatprep.subr.mxu0 0.0
    %7201 = vmatpush1.msra.mxu0 %v7161
    %7202 = vmatprep.subr.mxu0 0.0
    %7203 = vmatpush1.msra.mxu0 %v7160
    %7204 = vmatprep.subr.mxu0 0.0
    %7205 = vmatpush1.msra.mxu0 %v7159
    %7206 = vmatprep.subr.mxu0 0.0
    %7207 = vmatpush1.msra.mxu0 %v7158
    %7208 = vmatprep.subr.mxu0 0.0
    %7209 = vmatpush1.msra.mxu0 %v7157
    %7210 = vmatprep.subr.mxu0 0.0
    %7211 = vmatpush1.msra.mxu0 %v7156
    %7212 = vmatprep.subr.mxu0 0.0
    %7213 = vmatpush2.msra.mxu0 0.0
    %7214 = vmatprep.subr.mxu0 0.0
    %7215 = vmatpush2.msra.mxu0 0.0
    %7216 = vmatprep.subr.mxu0 0.0
    %7217 = vmatpush2.msra.mxu0 0.0
    %7218 = vmatprep.subr.mxu0 0.0
    %7219 = vmatpush2.msra.mxu0 0.0
    %7220 = vmatprep.subr.mxu0 0.0
    %7221 = vmatpush2.msra.mxu0 0.0
    %7222 = vmatprep.subr.mxu0 0.0
    %7223 = vmatpush2.msra.mxu0 0.0
    %7224 = vmatprep.subr.mxu0 0.0
    %7225 = vmatpush2.msra.mxu0 0.0
    %7226 = vmatprep.subr.mxu0 0.0
    %7227 = vmatpush2.msra.mxu0 0.0
    %7228 = vmatprep.subr.mxu0 0.0
    %7229 = vmatpush2.msra.mxu0 0.0
    %7230 = vmatprep.subr.mxu0 0.0
    %7231 = vmatpush2.msra.mxu0 0.0
    %7232 = vmatprep.subr.mxu0 0.0
    %7233 = vmatpush2.msra.mxu0 0.0
    %7234 = vmatprep.subr.mxu0 0.0
    %7235 = vmatpush2.msra.mxu0 0.0
    %7236 = vmatprep.subr.mxu0 0.0
    %7237 = vmatpush2.msra.mxu0 0.0
    %7238 = vmatprep.subr.mxu0 0.0
    %7239 = vmatpush2.msra.mxu0 0.0
    %7240 = vmatprep.subr.mxu0 0.0
    %7241 = vmatpush2.msra.mxu0 0.0
    %7242 = vmatprep.subr.mxu0 0.0
    %7243 = vmatpush2.msra.mxu0 0.0
    %7244 = vmatprep.mubr.f32.mxu0 0.0
    %7245 = vmatmul.mubr.f32.gmra.mxu0 %v7172
    %v7246 = vpop.f32.mrf.mxu0
    %v7247 = vadd.f32 0.0, %v7246
    %v7248 = vpop.f32.mrf.mxu0
    %7249 = vmatprep.mubr.f32.mxu0 0.0
    %7250 = vmatmul.mubr.f32.gmra.mxu0 %v7173
    %v7251 = vpop.f32.mrf.mxu0
    %v7252 = vadd.f32 0.0, %v7251
    %v7253 = vpop.f32.mrf.mxu0
    %7254 = vmatprep.mubr.f32.mxu0 0.0
    %7255 = vmatmul.mubr.f32.gmra.mxu0 %v7174
    %v7256 = vpop.f32.mrf.mxu0
    %v7257 = vadd.f32 0.0, %v7256
    %v7258 = vpop.f32.mrf.mxu0
    %7259 = vmatprep.mubr.f32.mxu0 0.0
    %7260 = vmatmul.mubr.f32.gmra.mxu0 %v7175
    %v7261 = vpop.f32.mrf.mxu0
    %v7262 = vadd.f32 0.0, %v7261
    %v7263 = vpop.f32.mrf.mxu0
    %7264 = vmatprep.mubr.f32.mxu0 0.0
    %7265 = vmatmul.mubr.f32.gmra.mxu0 %v7176
    %v7266 = vpop.f32.mrf.mxu0
    %v7267 = vadd.f32 0.0, %v7266
    %v7268 = vpop.f32.mrf.mxu0
    %7269 = vmatprep.mubr.f32.mxu0 0.0
    %7270 = vmatmul.mubr.f32.gmra.mxu0 %v7177
    %v7271 = vpop.f32.mrf.mxu0
    %v7272 = vadd.f32 0.0, %v7271
    %v7273 = vpop.f32.mrf.mxu0
    %7274 = vmatprep.mubr.f32.mxu0 0.0
    %7275 = vmatmul.mubr.f32.gmra.mxu0 %v7178
    %v7276 = vpop.f32.mrf.mxu0
    %v7277 = vadd.f32 0.0, %v7276
    %v7278 = vpop.f32.mrf.mxu0
    %7279 = vmatprep.mubr.f32.mxu0 0.0
    %7280 = vmatmul.mubr.f32.gmra.mxu0 %v7179
    %v7281 = vpop.f32.mrf.mxu0
    %v7282 = vadd.f32 0.0, %v7281
    %v7283 = vpop.f32.mrf.mxu0
    %7284 = vdwg.mxu0
    %v7285 = vld [vmem:[%s24] sm:$0xff]
    %v7286 = vld [vmem:[%s24 + $0x8] sm:$0xff]
    %v7287 = vld [vmem:[%s24 + $0x10] sm:$0xff]
    %v7288 = vld [vmem:[%s24 + $0x18] sm:$0xff]
    %v7289 = vld [vmem:[%s24 + $0x20] sm:$0xff]
    %v7290 = vld [vmem:[%s24 + $0x28] sm:$0xff]
    %v7291 = vld [vmem:[%s24 + $0x30] sm:$0xff]
    %v7292 = vld [vmem:[%s24 + $0x38] sm:$0xff]
    %v7293 = vld [vmem:[%s24 + $0x40] sm:$0xf]
    %vm7294 = vcmask 556032
    %v7296 = vsel %vm7294, %v7247, 0
    %v7299 = vsel %vm7294, %v7252, 0
    %v7302 = vsel %vm7294, %v7257, 0
    %v7305 = vsel %vm7294, %v7262, 0
    %v7308 = vsel %vm7294, %v7267, 0
    %v7311 = vsel %vm7294, %v7272, 0
    %v7314 = vsel %vm7294, %v7277, 0
    %v7317 = vsel %vm7294, %v7282, 0
    %v7320 = vsel %vm636, %v7293, 0
    %7322 = vmatprep.subr.mxu0 0.0
    %7323 = vmatpush1.msra.mxu0 0.0
    %7324 = vmatprep.subr.mxu0 0.0
    %7325 = vmatpush1.msra.mxu0 0.0
    %7326 = vmatprep.subr.mxu0 0.0
    %7327 = vmatpush1.msra.mxu0 0.0
    %7328 = vmatprep.subr.mxu0 0.0
    %7329 = vmatpush1.msra.mxu0 0.0
    %7330 = vmatprep.subr.mxu0 0.0
    %7331 = vmatpush1.msra.mxu0 0.0
    %7332 = vmatprep.subr.mxu0 0.0
    %7333 = vmatpush1.msra.mxu0 0.0
    %7334 = vmatprep.subr.mxu0 0.0
    %7335 = vmatpush1.msra.mxu0 0.0
    %7336 = vmatprep.subr.mxu0 0.0
    %7337 = vmatpush1.msra.mxu0 %v7320
    %7338 = vmatprep.subr.mxu0 0.0
    %7339 = vmatpush1.msra.mxu0 %v7292
    %7340 = vmatprep.subr.mxu0 0.0
    %7341 = vmatpush1.msra.mxu0 %v7291
    %7342 = vmatprep.subr.mxu0 0.0
    %7343 = vmatpush1.msra.mxu0 %v7290
    %7344 = vmatprep.subr.mxu0 0.0
    %7345 = vmatpush1.msra.mxu0 %v7289
    %7346 = vmatprep.subr.mxu0 0.0
    %7347 = vmatpush1.msra.mxu0 %v7288
    %7348 = vmatprep.subr.mxu0 0.0
    %7349 = vmatpush1.msra.mxu0 %v7287
    %7350 = vmatprep.subr.mxu0 0.0
    %7351 = vmatpush1.msra.mxu0 %v7286
    %7352 = vmatprep.subr.mxu0 0.0
    %7353 = vmatpush1.msra.mxu0 %v7285
    %7354 = vmatprep.subr.mxu0 0.0
    %7355 = vmatpush2.msra.mxu0 0.0
    %7356 = vmatprep.subr.mxu0 0.0
    %7357 = vmatpush2.msra.mxu0 0.0
    %7358 = vmatprep.subr.mxu0 0.0
    %7359 = vmatpush2.msra.mxu0 0.0
    %7360 = vmatprep.subr.mxu0 0.0
    %7361 = vmatpush2.msra.mxu0 0.0
    %7362 = vmatprep.subr.mxu0 0.0
    %7363 = vmatpush2.msra.mxu0 0.0
    %7364 = vmatprep.subr.mxu0 0.0
    %7365 = vmatpush2.msra.mxu0 0.0
    %7366 = vmatprep.subr.mxu0 0.0
    %7367 = vmatpush2.msra.mxu0 0.0
    %7368 = vmatprep.subr.mxu0 0.0
    %7369 = vmatpush2.msra.mxu0 0.0
    %7370 = vmatprep.subr.mxu0 0.0
    %7371 = vmatpush2.msra.mxu0 0.0
    %7372 = vmatprep.subr.mxu0 0.0
    %7373 = vmatpush2.msra.mxu0 0.0
    %7374 = vmatprep.subr.mxu0 0.0
    %7375 = vmatpush2.msra.mxu0 0.0
    %7376 = vmatprep.subr.mxu0 0.0
    %7377 = vmatpush2.msra.mxu0 0.0
    %7378 = vmatprep.subr.mxu0 0.0
    %7379 = vmatpush2.msra.mxu0 0.0
    %7380 = vmatprep.subr.mxu0 0.0
    %7381 = vmatpush2.msra.mxu0 0.0
    %7382 = vmatprep.subr.mxu0 0.0
    %7383 = vmatpush2.msra.mxu0 0.0
    %7384 = vmatprep.subr.mxu0 0.0
    %7385 = vmatpush2.msra.mxu0 0.0
    %7386 = vmatprep.mubr.f32.mxu0 0.0
    %7387 = vmatmul.mubr.f32.gmra.mxu0 %v7296
    %v7388 = vpop.f32.mrf.mxu0
    %v7389 = vadd.f32 0.0, %v7388
    %v7390 = vpop.f32.mrf.mxu0
    %7391 = vmatprep.mubr.f32.mxu0 0.0
    %7392 = vmatmul.mubr.f32.gmra.mxu0 %v7299
    %v7393 = vpop.f32.mrf.mxu0
    %v7394 = vadd.f32 0.0, %v7393
    %v7395 = vpop.f32.mrf.mxu0
    %7396 = vmatprep.mubr.f32.mxu0 0.0
    %7397 = vmatmul.mubr.f32.gmra.mxu0 %v7302
    %v7398 = vpop.f32.mrf.mxu0
    %v7399 = vadd.f32 0.0, %v7398
    %v7400 = vpop.f32.mrf.mxu0
    %7401 = vmatprep.mubr.f32.mxu0 0.0
    %7402 = vmatmul.mubr.f32.gmra.mxu0 %v7305
    %v7403 = vpop.f32.mrf.mxu0
    %v7404 = vadd.f32 0.0, %v7403
    %v7405 = vpop.f32.mrf.mxu0
    %7406 = vmatprep.mubr.f32.mxu0 0.0
    %7407 = vmatmul.mubr.f32.gmra.mxu0 %v7308
    %v7408 = vpop.f32.mrf.mxu0
    %v7409 = vadd.f32 0.0, %v7408
    %v7410 = vpop.f32.mrf.mxu0
    %7411 = vmatprep.mubr.f32.mxu0 0.0
    %7412 = vmatmul.mubr.f32.gmra.mxu0 %v7311
    %v7413 = vpop.f32.mrf.mxu0
    %v7414 = vadd.f32 0.0, %v7413
    %v7415 = vpop.f32.mrf.mxu0
    %7416 = vmatprep.mubr.f32.mxu0 0.0
    %7417 = vmatmul.mubr.f32.gmra.mxu0 %v7314
    %v7418 = vpop.f32.mrf.mxu0
    %v7419 = vadd.f32 0.0, %v7418
    %v7420 = vpop.f32.mrf.mxu0
    %7421 = vmatprep.mubr.f32.mxu0 0.0
    %7422 = vmatmul.mubr.f32.gmra.mxu0 %v7317
    %v7423 = vpop.f32.mrf.mxu0
    %v7424 = vadd.f32 0.0, %v7423
    %v7425 = vpop.f32.mrf.mxu0
    %7426 = vdwg.mxu0
    %7427 = vst [vmem:[#allocation2] sm:$0xff] %v7389
    %7428 = vst [vmem:[#allocation2 + $0x8] sm:$0xff] %v7394
    %7429 = vst [vmem:[#allocation2 + $0x10] sm:$0xff] %v7399
    %7430 = vst [vmem:[#allocation2 + $0x18] sm:$0xff] %v7404
    %7431 = vst [vmem:[#allocation2 + $0x20] sm:$0xff] %v7409
    %7432 = vst [vmem:[#allocation2 + $0x28] sm:$0xff] %v7414
    %7433 = vst [vmem:[#allocation2 + $0x30] sm:$0xff] %v7419
    %7434 = vst [vmem:[#allocation2 + $0x38] sm:$0xff] %v7424
    // Predicated region
    $region102: #{tpu_custom_call.1} parent=1 // pred_check
      _
    $region103: #{tpu_custom_call.1} parent=1 // pred_check_branch
      %7436 = sbr.rel (0) target = $region105
    $region104: #{tpu_custom_call.1} parent=1 // pred_region
      %s7438 = ssub.s32 1024, 1024
      %7439 = vsyncadd [#allocation3], %s7438
      %s7440 = sshll.u32 [#allocation2], 4
      %s7441 = int_to_ptr.vmem [resolvable:$true] %s7440
      %7446 = dma.vmem_to_hbm [thread:$0]  %s7441, 1024, %s25, [#allocation3], 128, 128, 8
    $region105: #{tpu_custom_call.1} parent=1 // pred_fallthru
      _
    // Predicated region
    $region106: #{tpu_custom_call.1} parent=1 // pred_check
      _
    $region107: #{tpu_custom_call.1} parent=1 // pred_check_branch
      %7448 = sbr.rel (0) target = $region109
    $region108: #{tpu_custom_call.1} parent=1 // pred_region
      %7449 = dma.done [#allocation3], 1024
    $region109: #{tpu_custom_call.1} parent=1 // pred_fallthru
      _
    %7450 = vsyncpa [#allocation3], 1

</llo_original>
